<compile_context>
chip_gen: v6e
topology: v6e:2x2x1
jax: 0.10.0
libtpu: 0.0.40
codegen_flags: <defaults>
</compile_context>

<pallas_src>
import jax
import jax.numpy as jnp
import numpy as np
from jax.experimental import pallas as pl
from jax.experimental.pallas import tpu as pltpu

# --- model constants ---------------------------------------------------------
PREVIEW_COUNT = 2
MAX_HEIGHT = 16                       # H
COLUMN_COUNT = 16                     # W
C_IN = 1 + 1 + PREVIEW_COUNT          # 4 input channels
C_PAD = 8                             # channels zero-padded to a sublane-friendly 8
C_HID = 64
H, W = MAX_HEIGHT, COLUMN_COUNT
HW = H * W                            # 256
K1 = 9 * C_PAD                        # 72   (conv1 contraction)
K2 = 9 * C_HID                        # 576  (conv2 contraction)
F_FLAT = C_HID * HW                   # 16384
N_HEADS = COLUMN_COUNT + 1            # 16 policy logits + 1 value logit


# --- in-kernel helpers -------------------------------------------------------
def _shift_lanes(img, delta):
  """shifted[:, i] = img[:, (i + delta) mod HW], via static slices + concat.

  (Explicit slicing avoids any roll-direction ambiguity; Mosaic lowers it to
  cheap lane shifts on the XLU.)
  """
  d = delta % HW
  if d == 0:
    return img
  return jnp.concatenate([img[:, d:], img[:, :d]], axis=1)


def _conv_patches(img, hw_iota):
  """img (C, HW) -> 3x3 'same' patch matrix (9*C, HW), row order (kh, kw, c).

  Out-of-bounds taps are zeroed with boundary masks derived from the lane index
  (h = hw // 16, w = hw % 16) — no padded spatial buffer is ever materialized.
  """
  h_i = hw_iota >> 4          # hw // W   (W == 16)
  w_i = hw_iota & 15          # hw %  W
  pieces = []
  for kh in range(3):
    for kw in range(3):
      dh, dw = kh - 1, kw - 1
      shifted = _shift_lanes(img, dh * W + dw)
      valid = ((h_i + dh >= 0) & (h_i + dh < H) &
               (w_i + dw >= 0) & (w_i + dw < W))          # (1, HW) bool
      pieces.append(jnp.where(valid, shifted, 0.0))
  return jnp.concatenate(pieces, axis=0)                  # (9*C, HW)


# --- the fused kernel --------------------------------------------------------
def _simplenet_kernel(x_ref, w1_ref, b1_ref, w2_ref, b2_ref, wh_ref, bh_ref,
                      out_ref):
  """Per-sample fused forward.

  x_ref:  (1, C_IN, HW) f32   raw NCHW board (spatial dims pre-flattened)
  w1_ref: (C_HID, K1)   bf16  conv1 weight, columns (kh, kw, c_pad8)
  b1_ref: (C_HID, 1)    f32
  w2_ref: (C_HID, K2)   bf16  conv2 weight, columns (kh, kw, c)
  b2_ref: (C_HID, 1)    f32
  wh_ref: (F_FLAT, 17)  bf16  [policy | value] head weight, NCHW-flatten rows
  bh_ref: (1, 17)       f32
  out_ref:(1, 1, 17)    f32   16 policy logits + tanh(value)
  """
  hw_iota = jax.lax.broadcasted_iota(jnp.int32, (1, HW), 1)

  # --- conv1 + ReLU (weights as LHS -> activations stay in (C, HW) layout) ---
  x = x_ref[0]                                                   # (C_IN, HW) f32
  x = jnp.concatenate(
      [x, jnp.zeros((C_PAD - C_IN, HW), jnp.float32)], axis=0)   # pad 4 -> 8 ch
  p1 = _conv_patches(x, hw_iota).astype(jnp.bfloat16)            # (K1, HW)
  h1 = jnp.dot(w1_ref[...], p1, preferred_element_type=jnp.float32)
  h1 = jnp.maximum(h1 + b1_ref[...], 0.0)                        # (C_HID, HW) f32

  # --- conv2 + ReLU: single K=576 MXU matmul, no padded scratch, no tap loop ---
  p2 = _conv_patches(h1, hw_iota).astype(jnp.bfloat16)           # (K2, HW)
  h2 = jnp.dot(w2_ref[...], p2, preferred_element_type=jnp.float32)
  h2 = jnp.maximum(h2 + b2_ref[...], 0.0)                        # (C_HID, HW) f32

  # --- fused policy + value heads against the compact resident weight ---
  # (C, HW) row-major flatten == torch's NCHW flatten, so no permutation needed.
  xf = h2.astype(jnp.bfloat16).reshape(1, F_FLAT)                # (1, 16384)
  logits = jnp.dot(xf, wh_ref[...], preferred_element_type=jnp.float32)
  logits = logits + bh_ref[...]                                  # (1, 17)
  col = jax.lax.broadcasted_iota(jnp.int32, logits.shape, 1)
  out_ref[0] = jnp.where(col == COLUMN_COUNT, jnp.tanh(logits), logits)


# --- wrapper -----------------------------------------------------------------
@jax.jit
def simplenet_forward(x_nchw, params):
  """SimpleNet.forward: returns (policy_logits (N, 16), value (N,))."""
  N = x_nchw.shape[0]
  x = x_nchw.reshape(N, C_IN, HW)          # free reshape, stays NCHW order

  out = pl.pallas_call(
      _simplenet_kernel,
      out_shape=jax.ShapeDtypeStruct((N, 1, N_HEADS), jnp.float32),
      grid_spec=pltpu.PrefetchScalarGridSpec(
          num_scalar_prefetch=0,
          grid=(N,),
          in_specs=[
              pl.BlockSpec((1, C_IN, HW), lambda n: (n, 0, 0)),     # board
              pl.BlockSpec((C_HID, K1), lambda n: (0, 0)),          # resident
              pl.BlockSpec((C_HID, 1), lambda n: (0, 0)),           # resident
              pl.BlockSpec((C_HID, K2), lambda n: (0, 0)),          # resident
              pl.BlockSpec((C_HID, 1), lambda n: (0, 0)),           # resident
              pl.BlockSpec((F_FLAT, N_HEADS), lambda n: (0, 0)),    # resident
              pl.BlockSpec((1, N_HEADS), lambda n: (0, 0)),         # resident
          ],
          out_specs=pl.BlockSpec((1, 1, N_HEADS), lambda n: (n, 0, 0)),
      ),
      compiler_params=pltpu.CompilerParams(
          dimension_semantics=("parallel",),
          vmem_limit_bytes=32 * 1024 * 1024),
  )(x, params["w1"], params["b1"], params["w2"], params["b2"],
    params["wh"], params["bh"])

  logits = out[:, 0, :]
  return logits[:, :COLUMN_COUNT], logits[:, COLUMN_COUNT]


# --- parameters (synthetic, deterministic) ------------------------------------
def init_params(key):
  """Returns (kernel-layout params, raw torch-layout params for the reference)."""
  ks = jax.random.split(key, 8)
  raw = {
      "w1_t": jax.random.normal(ks[0], (C_HID, C_IN, 3, 3), jnp.float32) * 0.1,
      "w2_t": jax.random.normal(ks[1], (C_HID, C_HID, 3, 3), jnp.float32) * 0.05,
      "b1": jax.random.normal(ks[2], (C_HID,), jnp.float32) * 0.01,
      "b2": jax.random.normal(ks[3], (C_HID,), jnp.float32) * 0.01,
      "wp_t": jax.random.normal(ks[4], (COLUMN_COUNT, F_FLAT), jnp.float32) * 0.01,
      "wv_t": jax.random.normal(ks[5], (1, F_FLAT), jnp.float32) * 0.01,
      "bp": jax.random.normal(ks[6], (COLUMN_COUNT,), jnp.float32) * 0.01,
      "bv": jax.random.normal(ks[7], (1,), jnp.float32) * 0.01,
  }
  # conv1: (Cout,Cin,kh,kw) -> (Cout,kh,kw,Cin) -> zero-pad Cin 4->8 -> (64, 72)
  w1 = jnp.transpose(raw["w1_t"], (0, 2, 3, 1))
  w1 = jnp.pad(w1, ((0, 0), (0, 0), (0, 0), (0, C_PAD - C_IN))).reshape(C_HID, K1)
  # conv2: (Cout,Cin,kh,kw) -> (Cout,kh,kw,Cin) -> (64, 576)
  w2 = jnp.transpose(raw["w2_t"], (0, 2, 3, 1)).reshape(C_HID, K2)
  # heads: compact (16384, 17) bf16; NCHW-flatten rows already match the kernel.
  wh = jnp.concatenate([raw["wp_t"], raw["wv_t"]], axis=0).T
  bh = jnp.concatenate([raw["bp"], raw["bv"]]).reshape(1, N_HEADS)

  params = {
      "w1": w1.astype(jnp.bfloat16),
      "b1": raw["b1"].reshape(C_HID, 1),
      "w2": w2.astype(jnp.bfloat16),
      "b2": raw["b2"].reshape(C_HID, 1),
      "wh": wh.astype(jnp.bfloat16),
      "bh": bh,
  }
  return params, raw


def reference_forward(x_nchw, raw):
  """Pure-JAX f32 reference matching the PyTorch module."""
  def conv(x, w, b):
    y = jax.lax.conv_general_dilated(
        x, w, window_strides=(1, 1), padding="SAME",
        dimension_numbers=("NCHW", "OIHW", "NCHW"))
    return jax.nn.relu(y + b[None, :, None, None])

  h = conv(x_nchw, raw["w1_t"], raw["b1"])
  h = conv(h, raw["w2_t"], raw["b2"])
  flat = h.reshape(h.shape[0], -1)                       # torch.flatten(x, 1)
  policy = flat @ raw["wp_t"].T + raw["bp"]
  value = jnp.tanh(flat @ raw["wv_t"].T + raw["bv"])[:, 0]
  return policy, value


if __name__ == "__main__":
  key = jax.random.PRNGKey(0)
  k_x, k_p = jax.random.split(key)
  # Board encoding: (batch=2, channels=1+1+PREVIEW_COUNT=4, H=16, W=16)
  x = jax.random.uniform(k_x, (2, C_IN, MAX_HEIGHT, COLUMN_COUNT),
                         dtype=jnp.float32)
  params, raw = init_params(k_p)

  policy, value = jax.block_until_ready(simplenet_forward(x, params))
  assert policy.shape == (2, COLUMN_COUNT) and value.shape == (2,)

  # Loose tolerance: kernel uses bf16 MXU operands with f32 accumulation.
  policy_ref, value_ref = reference_forward(x, raw)
  np.testing.assert_allclose(np.asarray(policy), np.asarray(policy_ref),
                             atol=7.5e-2, rtol=7.5e-2)
  np.testing.assert_allclose(np.asarray(value), np.asarray(value_ref),
                             atol=7.5e-2, rtol=7.5e-2)
  print("KERNEL_OK")
</pallas_src>

<mosaic_0001>
module attributes {stable_mosaic.version = 11 : i64} {
  func.func @_simplenet_kernel(%arg0: i32, %arg1: memref<1x4x256xf32, #tpu.memory_space<vmem>>, %arg2: memref<64x72xbf16, #tpu.memory_space<vmem>>, %arg3: memref<64x1xf32, #tpu.memory_space<vmem>>, %arg4: memref<64x576xbf16, #tpu.memory_space<vmem>>, %arg5: memref<64x1xf32, #tpu.memory_space<vmem>>, %arg6: memref<16384x17xbf16, #tpu.memory_space<vmem>>, %arg7: memref<1x17xf32, #tpu.memory_space<vmem>>, %arg8: memref<1x1x17xf32, #tpu.memory_space<vmem>>) attributes {dimension_semantics = [#tpu.dimension_semantics<parallel>], iteration_bounds = array<i64: 2>, scalar_prefetch = 0 : i64, scratch_operands = 0 : i64, tpu.core_type = #tpu.core_type<tc>, window_params = [{transform_indices = @transform_0, window_bounds = array<i64: 1, 4, 256>}, {pipeline_mode = #tpu.pipeline_mode<synchronous>, transform_indices = @transform_1, window_bounds = array<i64: 64, 72>}, {pipeline_mode = #tpu.pipeline_mode<synchronous>, transform_indices = @transform_2, window_bounds = array<i64: 64, 1>}, {pipeline_mode = #tpu.pipeline_mode<synchronous>, transform_indices = @transform_3, window_bounds = array<i64: 64, 576>}, {pipeline_mode = #tpu.pipeline_mode<synchronous>, transform_indices = @transform_4, window_bounds = array<i64: 64, 1>}, {pipeline_mode = #tpu.pipeline_mode<synchronous>, transform_indices = @transform_5, window_bounds = array<i64: 16384, 17>}, {pipeline_mode = #tpu.pipeline_mode<synchronous>, transform_indices = @transform_6, window_bounds = array<i64: 1, 17>}, {transform_indices = @transform_7, window_bounds = array<i64: 1, 1, 17>}]} {
    %0 = tpu.iota {dimensions = array<i32: 1>} : vector<1x256xi32>
    %c0 = arith.constant 0 : index
    %c0_0 = arith.constant 0 : index
    %c0_1 = arith.constant 0 : index
    %1 = vector.load %arg1[%c0, %c0_0, %c0_1] : memref<1x4x256xf32, #tpu.memory_space<vmem>>, vector<1x4x256xf32>
    %2 = vector.shape_cast %1 : vector<1x4x256xf32> to vector<4x256xf32>
    %cst = arith.constant 0.000000e+00 : f32
    %3 = vector.broadcast %cst : f32 to vector<4x256xf32>
    %4 = tpu.concatenate %2, %3 in 0 : vector<4x256xf32>, vector<4x256xf32> -> vector<8x256xf32>
    %c4_i32 = arith.constant 4 : i32
    %5 = vector.broadcast %c4_i32 : i32 to vector<1x256xi32>
    %6 = arith.shrsi %0, %5 : vector<1x256xi32>
    %c15_i32 = arith.constant 15 : i32
    %7 = vector.broadcast %c15_i32 : i32 to vector<1x256xi32>
    %8 = arith.andi %0, %7 : vector<1x256xi32>
    %9 = vector.extract_strided_slice %4 {offsets = [0, 239], sizes = [8, 17], strides = [1, 1]} : vector<8x256xf32> to vector<8x17xf32>
    %10 = vector.extract_strided_slice %4 {offsets = [0, 0], sizes = [8, 239], strides = [1, 1]} : vector<8x256xf32> to vector<8x239xf32>
    %11 = tpu.concatenate %9, %10 in 1 : vector<8x17xf32>, vector<8x239xf32> -> vector<8x256xf32>
    %c-1_i32 = arith.constant -1 : i32
    %12 = vector.broadcast %c-1_i32 : i32 to vector<1x256xi32>
    %13 = arith.addi %6, %12 : vector<1x256xi32>
    %c0_i32 = arith.constant 0 : i32
    %14 = vector.broadcast %c0_i32 : i32 to vector<1x256xi32>
    %15 = arith.cmpi sge, %13, %14 : vector<1x256xi32>
    %c-1_i32_2 = arith.constant -1 : i32
    %16 = vector.broadcast %c-1_i32_2 : i32 to vector<1x256xi32>
    %17 = arith.addi %6, %16 : vector<1x256xi32>
    %c16_i32 = arith.constant 16 : i32
    %18 = vector.broadcast %c16_i32 : i32 to vector<1x256xi32>
    %19 = arith.cmpi slt, %17, %18 : vector<1x256xi32>
    %20 = arith.andi %15, %19 : vector<1x256xi1>
    %c-1_i32_3 = arith.constant -1 : i32
    %21 = vector.broadcast %c-1_i32_3 : i32 to vector<1x256xi32>
    %22 = arith.addi %8, %21 : vector<1x256xi32>
    %c0_i32_4 = arith.constant 0 : i32
    %23 = vector.broadcast %c0_i32_4 : i32 to vector<1x256xi32>
    %24 = arith.cmpi sge, %22, %23 : vector<1x256xi32>
    %25 = arith.andi %20, %24 : vector<1x256xi1>
    %c-1_i32_5 = arith.constant -1 : i32
    %26 = vector.broadcast %c-1_i32_5 : i32 to vector<1x256xi32>
    %27 = arith.addi %8, %26 : vector<1x256xi32>
    %c16_i32_6 = arith.constant 16 : i32
    %28 = vector.broadcast %c16_i32_6 : i32 to vector<1x256xi32>
    %29 = arith.cmpi slt, %27, %28 : vector<1x256xi32>
    %30 = arith.andi %25, %29 : vector<1x256xi1>
    %cst_7 = arith.constant 0.000000e+00 : f32
    %31 = vector.shape_cast %30 : vector<1x256xi1> to vector<1x256xi1>
    %32 = vector.broadcast %31 : vector<1x256xi1> to vector<8x256xi1>
    %33 = vector.broadcast %cst_7 : f32 to vector<8x256xf32>
    %34 = arith.select %32, %11, %33 : vector<8x256xi1>, vector<8x256xf32>
    %35 = vector.extract_strided_slice %4 {offsets = [0, 240], sizes = [8, 16], strides = [1, 1]} : vector<8x256xf32> to vector<8x16xf32>
    %36 = vector.extract_strided_slice %4 {offsets = [0, 0], sizes = [8, 240], strides = [1, 1]} : vector<8x256xf32> to vector<8x240xf32>
    %37 = tpu.concatenate %35, %36 in 1 : vector<8x16xf32>, vector<8x240xf32> -> vector<8x256xf32>
    %c-1_i32_8 = arith.constant -1 : i32
    %38 = vector.broadcast %c-1_i32_8 : i32 to vector<1x256xi32>
    %39 = arith.addi %6, %38 : vector<1x256xi32>
    %c0_i32_9 = arith.constant 0 : i32
    %40 = vector.broadcast %c0_i32_9 : i32 to vector<1x256xi32>
    %41 = arith.cmpi sge, %39, %40 : vector<1x256xi32>
    %c-1_i32_10 = arith.constant -1 : i32
    %42 = vector.broadcast %c-1_i32_10 : i32 to vector<1x256xi32>
    %43 = arith.addi %6, %42 : vector<1x256xi32>
    %c16_i32_11 = arith.constant 16 : i32
    %44 = vector.broadcast %c16_i32_11 : i32 to vector<1x256xi32>
    %45 = arith.cmpi slt, %43, %44 : vector<1x256xi32>
    %46 = arith.andi %41, %45 : vector<1x256xi1>
    %c0_i32_12 = arith.constant 0 : i32
    %47 = vector.broadcast %c0_i32_12 : i32 to vector<1x256xi32>
    %48 = arith.addi %8, %47 : vector<1x256xi32>
    %c0_i32_13 = arith.constant 0 : i32
    %49 = vector.broadcast %c0_i32_13 : i32 to vector<1x256xi32>
    %50 = arith.cmpi sge, %48, %49 : vector<1x256xi32>
    %51 = arith.andi %46, %50 : vector<1x256xi1>
    %c0_i32_14 = arith.constant 0 : i32
    %52 = vector.broadcast %c0_i32_14 : i32 to vector<1x256xi32>
    %53 = arith.addi %8, %52 : vector<1x256xi32>
    %c16_i32_15 = arith.constant 16 : i32
    %54 = vector.broadcast %c16_i32_15 : i32 to vector<1x256xi32>
    %55 = arith.cmpi slt, %53, %54 : vector<1x256xi32>
    %56 = arith.andi %51, %55 : vector<1x256xi1>
    %cst_16 = arith.constant 0.000000e+00 : f32
    %57 = vector.shape_cast %56 : vector<1x256xi1> to vector<1x256xi1>
    %58 = vector.broadcast %57 : vector<1x256xi1> to vector<8x256xi1>
    %59 = vector.broadcast %cst_16 : f32 to vector<8x256xf32>
    %60 = arith.select %58, %37, %59 : vector<8x256xi1>, vector<8x256xf32>
    %61 = vector.extract_strided_slice %4 {offsets = [0, 241], sizes = [8, 15], strides = [1, 1]} : vector<8x256xf32> to vector<8x15xf32>
    %62 = vector.extract_strided_slice %4 {offsets = [0, 0], sizes = [8, 241], strides = [1, 1]} : vector<8x256xf32> to vector<8x241xf32>
    %63 = tpu.concatenate %61, %62 in 1 : vector<8x15xf32>, vector<8x241xf32> -> vector<8x256xf32>
    %c-1_i32_17 = arith.constant -1 : i32
    %64 = vector.broadcast %c-1_i32_17 : i32 to vector<1x256xi32>
    %65 = arith.addi %6, %64 : vector<1x256xi32>
    %c0_i32_18 = arith.constant 0 : i32
    %66 = vector.broadcast %c0_i32_18 : i32 to vector<1x256xi32>
    %67 = arith.cmpi sge, %65, %66 : vector<1x256xi32>
    %c-1_i32_19 = arith.constant -1 : i32
    %68 = vector.broadcast %c-1_i32_19 : i32 to vector<1x256xi32>
    %69 = arith.addi %6, %68 : vector<1x256xi32>
    %c16_i32_20 = arith.constant 16 : i32
    %70 = vector.broadcast %c16_i32_20 : i32 to vector<1x256xi32>
    %71 = arith.cmpi slt, %69, %70 : vector<1x256xi32>
    %72 = arith.andi %67, %71 : vector<1x256xi1>
    %c1_i32 = arith.constant 1 : i32
    %73 = vector.broadcast %c1_i32 : i32 to vector<1x256xi32>
    %74 = arith.addi %8, %73 : vector<1x256xi32>
    %c0_i32_21 = arith.constant 0 : i32
    %75 = vector.broadcast %c0_i32_21 : i32 to vector<1x256xi32>
    %76 = arith.cmpi sge, %74, %75 : vector<1x256xi32>
    %77 = arith.andi %72, %76 : vector<1x256xi1>
    %c1_i32_22 = arith.constant 1 : i32
    %78 = vector.broadcast %c1_i32_22 : i32 to vector<1x256xi32>
    %79 = arith.addi %8, %78 : vector<1x256xi32>
    %c16_i32_23 = arith.constant 16 : i32
    %80 = vector.broadcast %c16_i32_23 : i32 to vector<1x256xi32>
    %81 = arith.cmpi slt, %79, %80 : vector<1x256xi32>
    %82 = arith.andi %77, %81 : vector<1x256xi1>
    %cst_24 = arith.constant 0.000000e+00 : f32
    %83 = vector.shape_cast %82 : vector<1x256xi1> to vector<1x256xi1>
    %84 = vector.broadcast %83 : vector<1x256xi1> to vector<8x256xi1>
    %85 = vector.broadcast %cst_24 : f32 to vector<8x256xf32>
    %86 = arith.select %84, %63, %85 : vector<8x256xi1>, vector<8x256xf32>
    %87 = vector.extract_strided_slice %4 {offsets = [0, 255], sizes = [8, 1], strides = [1, 1]} : vector<8x256xf32> to vector<8x1xf32>
    %88 = vector.extract_strided_slice %4 {offsets = [0, 0], sizes = [8, 255], strides = [1, 1]} : vector<8x256xf32> to vector<8x255xf32>
    %89 = tpu.concatenate %87, %88 in 1 : vector<8x1xf32>, vector<8x255xf32> -> vector<8x256xf32>
    %c0_i32_25 = arith.constant 0 : i32
    %90 = vector.broadcast %c0_i32_25 : i32 to vector<1x256xi32>
    %91 = arith.addi %6, %90 : vector<1x256xi32>
    %c0_i32_26 = arith.constant 0 : i32
    %92 = vector.broadcast %c0_i32_26 : i32 to vector<1x256xi32>
    %93 = arith.cmpi sge, %91, %92 : vector<1x256xi32>
    %c0_i32_27 = arith.constant 0 : i32
    %94 = vector.broadcast %c0_i32_27 : i32 to vector<1x256xi32>
    %95 = arith.addi %6, %94 : vector<1x256xi32>
    %c16_i32_28 = arith.constant 16 : i32
    %96 = vector.broadcast %c16_i32_28 : i32 to vector<1x256xi32>
    %97 = arith.cmpi slt, %95, %96 : vector<1x256xi32>
    %98 = arith.andi %93, %97 : vector<1x256xi1>
    %c-1_i32_29 = arith.constant -1 : i32
    %99 = vector.broadcast %c-1_i32_29 : i32 to vector<1x256xi32>
    %100 = arith.addi %8, %99 : vector<1x256xi32>
    %c0_i32_30 = arith.constant 0 : i32
    %101 = vector.broadcast %c0_i32_30 : i32 to vector<1x256xi32>
    %102 = arith.cmpi sge, %100, %101 : vector<1x256xi32>
    %103 = arith.andi %98, %102 : vector<1x256xi1>
    %c-1_i32_31 = arith.constant -1 : i32
    %104 = vector.broadcast %c-1_i32_31 : i32 to vector<1x256xi32>
    %105 = arith.addi %8, %104 : vector<1x256xi32>
    %c16_i32_32 = arith.constant 16 : i32
    %106 = vector.broadcast %c16_i32_32 : i32 to vector<1x256xi32>
    %107 = arith.cmpi slt, %105, %106 : vector<1x256xi32>
    %108 = arith.andi %103, %107 : vector<1x256xi1>
    %cst_33 = arith.constant 0.000000e+00 : f32
    %109 = vector.shape_cast %108 : vector<1x256xi1> to vector<1x256xi1>
    %110 = vector.broadcast %109 : vector<1x256xi1> to vector<8x256xi1>
    %111 = vector.broadcast %cst_33 : f32 to vector<8x256xf32>
    %112 = arith.select %110, %89, %111 : vector<8x256xi1>, vector<8x256xf32>
    %c0_i32_34 = arith.constant 0 : i32
    %113 = vector.broadcast %c0_i32_34 : i32 to vector<1x256xi32>
    %114 = arith.addi %6, %113 : vector<1x256xi32>
    %c0_i32_35 = arith.constant 0 : i32
    %115 = vector.broadcast %c0_i32_35 : i32 to vector<1x256xi32>
    %116 = arith.cmpi sge, %114, %115 : vector<1x256xi32>
    %c0_i32_36 = arith.constant 0 : i32
    %117 = vector.broadcast %c0_i32_36 : i32 to vector<1x256xi32>
    %118 = arith.addi %6, %117 : vector<1x256xi32>
    %c16_i32_37 = arith.constant 16 : i32
    %119 = vector.broadcast %c16_i32_37 : i32 to vector<1x256xi32>
    %120 = arith.cmpi slt, %118, %119 : vector<1x256xi32>
    %121 = arith.andi %116, %120 : vector<1x256xi1>
    %c0_i32_38 = arith.constant 0 : i32
    %122 = vector.broadcast %c0_i32_38 : i32 to vector<1x256xi32>
    %123 = arith.addi %8, %122 : vector<1x256xi32>
    %c0_i32_39 = arith.constant 0 : i32
    %124 = vector.broadcast %c0_i32_39 : i32 to vector<1x256xi32>
    %125 = arith.cmpi sge, %123, %124 : vector<1x256xi32>
    %126 = arith.andi %121, %125 : vector<1x256xi1>
    %c0_i32_40 = arith.constant 0 : i32
    %127 = vector.broadcast %c0_i32_40 : i32 to vector<1x256xi32>
    %128 = arith.addi %8, %127 : vector<1x256xi32>
    %c16_i32_41 = arith.constant 16 : i32
    %129 = vector.broadcast %c16_i32_41 : i32 to vector<1x256xi32>
    %130 = arith.cmpi slt, %128, %129 : vector<1x256xi32>
    %131 = arith.andi %126, %130 : vector<1x256xi1>
    %cst_42 = arith.constant 0.000000e+00 : f32
    %132 = vector.shape_cast %131 : vector<1x256xi1> to vector<1x256xi1>
    %133 = vector.broadcast %132 : vector<1x256xi1> to vector<8x256xi1>
    %134 = vector.broadcast %cst_42 : f32 to vector<8x256xf32>
    %135 = arith.select %133, %4, %134 : vector<8x256xi1>, vector<8x256xf32>
    %136 = vector.extract_strided_slice %4 {offsets = [0, 1], sizes = [8, 255], strides = [1, 1]} : vector<8x256xf32> to vector<8x255xf32>
    %137 = vector.extract_strided_slice %4 {offsets = [0, 0], sizes = [8, 1], strides = [1, 1]} : vector<8x256xf32> to vector<8x1xf32>
    %138 = tpu.concatenate %136, %137 in 1 : vector<8x255xf32>, vector<8x1xf32> -> vector<8x256xf32>
    %c0_i32_43 = arith.constant 0 : i32
    %139 = vector.broadcast %c0_i32_43 : i32 to vector<1x256xi32>
    %140 = arith.addi %6, %139 : vector<1x256xi32>
    %c0_i32_44 = arith.constant 0 : i32
    %141 = vector.broadcast %c0_i32_44 : i32 to vector<1x256xi32>
    %142 = arith.cmpi sge, %140, %141 : vector<1x256xi32>
    %c0_i32_45 = arith.constant 0 : i32
    %143 = vector.broadcast %c0_i32_45 : i32 to vector<1x256xi32>
    %144 = arith.addi %6, %143 : vector<1x256xi32>
    %c16_i32_46 = arith.constant 16 : i32
    %145 = vector.broadcast %c16_i32_46 : i32 to vector<1x256xi32>
    %146 = arith.cmpi slt, %144, %145 : vector<1x256xi32>
    %147 = arith.andi %142, %146 : vector<1x256xi1>
    %c1_i32_47 = arith.constant 1 : i32
    %148 = vector.broadcast %c1_i32_47 : i32 to vector<1x256xi32>
    %149 = arith.addi %8, %148 : vector<1x256xi32>
    %c0_i32_48 = arith.constant 0 : i32
    %150 = vector.broadcast %c0_i32_48 : i32 to vector<1x256xi32>
    %151 = arith.cmpi sge, %149, %150 : vector<1x256xi32>
    %152 = arith.andi %147, %151 : vector<1x256xi1>
    %c1_i32_49 = arith.constant 1 : i32
    %153 = vector.broadcast %c1_i32_49 : i32 to vector<1x256xi32>
    %154 = arith.addi %8, %153 : vector<1x256xi32>
    %c16_i32_50 = arith.constant 16 : i32
    %155 = vector.broadcast %c16_i32_50 : i32 to vector<1x256xi32>
    %156 = arith.cmpi slt, %154, %155 : vector<1x256xi32>
    %157 = arith.andi %152, %156 : vector<1x256xi1>
    %cst_51 = arith.constant 0.000000e+00 : f32
    %158 = vector.shape_cast %157 : vector<1x256xi1> to vector<1x256xi1>
    %159 = vector.broadcast %158 : vector<1x256xi1> to vector<8x256xi1>
    %160 = vector.broadcast %cst_51 : f32 to vector<8x256xf32>
    %161 = arith.select %159, %138, %160 : vector<8x256xi1>, vector<8x256xf32>
    %162 = vector.extract_strided_slice %4 {offsets = [0, 15], sizes = [8, 241], strides = [1, 1]} : vector<8x256xf32> to vector<8x241xf32>
    %163 = vector.extract_strided_slice %4 {offsets = [0, 0], sizes = [8, 15], strides = [1, 1]} : vector<8x256xf32> to vector<8x15xf32>
    %164 = tpu.concatenate %162, %163 in 1 : vector<8x241xf32>, vector<8x15xf32> -> vector<8x256xf32>
    %c1_i32_52 = arith.constant 1 : i32
    %165 = vector.broadcast %c1_i32_52 : i32 to vector<1x256xi32>
    %166 = arith.addi %6, %165 : vector<1x256xi32>
    %c0_i32_53 = arith.constant 0 : i32
    %167 = vector.broadcast %c0_i32_53 : i32 to vector<1x256xi32>
    %168 = arith.cmpi sge, %166, %167 : vector<1x256xi32>
    %c1_i32_54 = arith.constant 1 : i32
    %169 = vector.broadcast %c1_i32_54 : i32 to vector<1x256xi32>
    %170 = arith.addi %6, %169 : vector<1x256xi32>
    %c16_i32_55 = arith.constant 16 : i32
    %171 = vector.broadcast %c16_i32_55 : i32 to vector<1x256xi32>
    %172 = arith.cmpi slt, %170, %171 : vector<1x256xi32>
    %173 = arith.andi %168, %172 : vector<1x256xi1>
    %c-1_i32_56 = arith.constant -1 : i32
    %174 = vector.broadcast %c-1_i32_56 : i32 to vector<1x256xi32>
    %175 = arith.addi %8, %174 : vector<1x256xi32>
    %c0_i32_57 = arith.constant 0 : i32
    %176 = vector.broadcast %c0_i32_57 : i32 to vector<1x256xi32>
    %177 = arith.cmpi sge, %175, %176 : vector<1x256xi32>
    %178 = arith.andi %173, %177 : vector<1x256xi1>
    %c-1_i32_58 = arith.constant -1 : i32
    %179 = vector.broadcast %c-1_i32_58 : i32 to vector<1x256xi32>
    %180 = arith.addi %8, %179 : vector<1x256xi32>
    %c16_i32_59 = arith.constant 16 : i32
    %181 = vector.broadcast %c16_i32_59 : i32 to vector<1x256xi32>
    %182 = arith.cmpi slt, %180, %181 : vector<1x256xi32>
    %183 = arith.andi %178, %182 : vector<1x256xi1>
    %cst_60 = arith.constant 0.000000e+00 : f32
    %184 = vector.shape_cast %183 : vector<1x256xi1> to vector<1x256xi1>
    %185 = vector.broadcast %184 : vector<1x256xi1> to vector<8x256xi1>
    %186 = vector.broadcast %cst_60 : f32 to vector<8x256xf32>
    %187 = arith.select %185, %164, %186 : vector<8x256xi1>, vector<8x256xf32>
    %188 = vector.extract_strided_slice %4 {offsets = [0, 16], sizes = [8, 240], strides = [1, 1]} : vector<8x256xf32> to vector<8x240xf32>
    %189 = vector.extract_strided_slice %4 {offsets = [0, 0], sizes = [8, 16], strides = [1, 1]} : vector<8x256xf32> to vector<8x16xf32>
    %190 = tpu.concatenate %188, %189 in 1 : vector<8x240xf32>, vector<8x16xf32> -> vector<8x256xf32>
    %c1_i32_61 = arith.constant 1 : i32
    %191 = vector.broadcast %c1_i32_61 : i32 to vector<1x256xi32>
    %192 = arith.addi %6, %191 : vector<1x256xi32>
    %c0_i32_62 = arith.constant 0 : i32
    %193 = vector.broadcast %c0_i32_62 : i32 to vector<1x256xi32>
    %194 = arith.cmpi sge, %192, %193 : vector<1x256xi32>
    %c1_i32_63 = arith.constant 1 : i32
    %195 = vector.broadcast %c1_i32_63 : i32 to vector<1x256xi32>
    %196 = arith.addi %6, %195 : vector<1x256xi32>
    %c16_i32_64 = arith.constant 16 : i32
    %197 = vector.broadcast %c16_i32_64 : i32 to vector<1x256xi32>
    %198 = arith.cmpi slt, %196, %197 : vector<1x256xi32>
    %199 = arith.andi %194, %198 : vector<1x256xi1>
    %c0_i32_65 = arith.constant 0 : i32
    %200 = vector.broadcast %c0_i32_65 : i32 to vector<1x256xi32>
    %201 = arith.addi %8, %200 : vector<1x256xi32>
    %c0_i32_66 = arith.constant 0 : i32
    %202 = vector.broadcast %c0_i32_66 : i32 to vector<1x256xi32>
    %203 = arith.cmpi sge, %201, %202 : vector<1x256xi32>
    %204 = arith.andi %199, %203 : vector<1x256xi1>
    %c0_i32_67 = arith.constant 0 : i32
    %205 = vector.broadcast %c0_i32_67 : i32 to vector<1x256xi32>
    %206 = arith.addi %8, %205 : vector<1x256xi32>
    %c16_i32_68 = arith.constant 16 : i32
    %207 = vector.broadcast %c16_i32_68 : i32 to vector<1x256xi32>
    %208 = arith.cmpi slt, %206, %207 : vector<1x256xi32>
    %209 = arith.andi %204, %208 : vector<1x256xi1>
    %cst_69 = arith.constant 0.000000e+00 : f32
    %210 = vector.shape_cast %209 : vector<1x256xi1> to vector<1x256xi1>
    %211 = vector.broadcast %210 : vector<1x256xi1> to vector<8x256xi1>
    %212 = vector.broadcast %cst_69 : f32 to vector<8x256xf32>
    %213 = arith.select %211, %190, %212 : vector<8x256xi1>, vector<8x256xf32>
    %214 = vector.extract_strided_slice %4 {offsets = [0, 17], sizes = [8, 239], strides = [1, 1]} : vector<8x256xf32> to vector<8x239xf32>
    %215 = vector.extract_strided_slice %4 {offsets = [0, 0], sizes = [8, 17], strides = [1, 1]} : vector<8x256xf32> to vector<8x17xf32>
    %216 = tpu.concatenate %214, %215 in 1 : vector<8x239xf32>, vector<8x17xf32> -> vector<8x256xf32>
    %c1_i32_70 = arith.constant 1 : i32
    %217 = vector.broadcast %c1_i32_70 : i32 to vector<1x256xi32>
    %218 = arith.addi %6, %217 : vector<1x256xi32>
    %c0_i32_71 = arith.constant 0 : i32
    %219 = vector.broadcast %c0_i32_71 : i32 to vector<1x256xi32>
    %220 = arith.cmpi sge, %218, %219 : vector<1x256xi32>
    %c1_i32_72 = arith.constant 1 : i32
    %221 = vector.broadcast %c1_i32_72 : i32 to vector<1x256xi32>
    %222 = arith.addi %6, %221 : vector<1x256xi32>
    %c16_i32_73 = arith.constant 16 : i32
    %223 = vector.broadcast %c16_i32_73 : i32 to vector<1x256xi32>
    %224 = arith.cmpi slt, %222, %223 : vector<1x256xi32>
    %225 = arith.andi %220, %224 : vector<1x256xi1>
    %c1_i32_74 = arith.constant 1 : i32
    %226 = vector.broadcast %c1_i32_74 : i32 to vector<1x256xi32>
    %227 = arith.addi %8, %226 : vector<1x256xi32>
    %c0_i32_75 = arith.constant 0 : i32
    %228 = vector.broadcast %c0_i32_75 : i32 to vector<1x256xi32>
    %229 = arith.cmpi sge, %227, %228 : vector<1x256xi32>
    %230 = arith.andi %225, %229 : vector<1x256xi1>
    %c1_i32_76 = arith.constant 1 : i32
    %231 = vector.broadcast %c1_i32_76 : i32 to vector<1x256xi32>
    %232 = arith.addi %8, %231 : vector<1x256xi32>
    %c16_i32_77 = arith.constant 16 : i32
    %233 = vector.broadcast %c16_i32_77 : i32 to vector<1x256xi32>
    %234 = arith.cmpi slt, %232, %233 : vector<1x256xi32>
    %235 = arith.andi %230, %234 : vector<1x256xi1>
    %cst_78 = arith.constant 0.000000e+00 : f32
    %236 = vector.shape_cast %235 : vector<1x256xi1> to vector<1x256xi1>
    %237 = vector.broadcast %236 : vector<1x256xi1> to vector<8x256xi1>
    %238 = vector.broadcast %cst_78 : f32 to vector<8x256xf32>
    %239 = arith.select %237, %216, %238 : vector<8x256xi1>, vector<8x256xf32>
    %240 = tpu.concatenate %34, %60, %86, %112, %135, %161, %187, %213, %239 in 0 : vector<8x256xf32>, vector<8x256xf32>, vector<8x256xf32>, vector<8x256xf32>, vector<8x256xf32>, vector<8x256xf32>, vector<8x256xf32>, vector<8x256xf32>, vector<8x256xf32> -> vector<72x256xf32>
    %241 = arith.truncf %240 : vector<72x256xf32> to vector<72x256xbf16>
    %c0_79 = arith.constant 0 : index
    %c0_80 = arith.constant 0 : index
    %242 = vector.load %arg2[%c0_79, %c0_80] : memref<64x72xbf16, #tpu.memory_space<vmem>>, vector<64x72xbf16>
    %cst_81 = arith.constant dense<0.000000e+00> : vector<64x256xf32>
    %243 = tpu.matmul %242, %241, %cst_81 {dimension_numbers = #tpu.dot_dimension_numbers<[1], [0], [0], [1], [0, 0, 1, 1], [], []>} : vector<64x72xbf16>, vector<72x256xbf16>, vector<64x256xf32> -> vector<64x256xf32>
    %c0_82 = arith.constant 0 : index
    %c0_83 = arith.constant 0 : index
    %244 = vector.load %arg3[%c0_82, %c0_83] : memref<64x1xf32, #tpu.memory_space<vmem>>, vector<64x1xf32>
    %245 = vector.broadcast %244 : vector<64x1xf32> to vector<64x256xf32>
    %246 = arith.addf %243, %245 : vector<64x256xf32>
    %cst_84 = arith.constant 0.000000e+00 : f32
    %247 = vector.broadcast %cst_84 : f32 to vector<64x256xf32>
    %248 = arith.maximumf %246, %247 : vector<64x256xf32>
    %c4_i32_85 = arith.constant 4 : i32
    %249 = vector.broadcast %c4_i32_85 : i32 to vector<1x256xi32>
    %250 = arith.shrsi %0, %249 : vector<1x256xi32>
    %c15_i32_86 = arith.constant 15 : i32
    %251 = vector.broadcast %c15_i32_86 : i32 to vector<1x256xi32>
    %252 = arith.andi %0, %251 : vector<1x256xi32>
    %253 = vector.extract_strided_slice %248 {offsets = [0, 239], sizes = [64, 17], strides = [1, 1]} : vector<64x256xf32> to vector<64x17xf32>
    %254 = vector.extract_strided_slice %248 {offsets = [0, 0], sizes = [64, 239], strides = [1, 1]} : vector<64x256xf32> to vector<64x239xf32>
    %255 = tpu.concatenate %253, %254 in 1 : vector<64x17xf32>, vector<64x239xf32> -> vector<64x256xf32>
    %c-1_i32_87 = arith.constant -1 : i32
    %256 = vector.broadcast %c-1_i32_87 : i32 to vector<1x256xi32>
    %257 = arith.addi %250, %256 : vector<1x256xi32>
    %c0_i32_88 = arith.constant 0 : i32
    %258 = vector.broadcast %c0_i32_88 : i32 to vector<1x256xi32>
    %259 = arith.cmpi sge, %257, %258 : vector<1x256xi32>
    %c-1_i32_89 = arith.constant -1 : i32
    %260 = vector.broadcast %c-1_i32_89 : i32 to vector<1x256xi32>
    %261 = arith.addi %250, %260 : vector<1x256xi32>
    %c16_i32_90 = arith.constant 16 : i32
    %262 = vector.broadcast %c16_i32_90 : i32 to vector<1x256xi32>
    %263 = arith.cmpi slt, %261, %262 : vector<1x256xi32>
    %264 = arith.andi %259, %263 : vector<1x256xi1>
    %c-1_i32_91 = arith.constant -1 : i32
    %265 = vector.broadcast %c-1_i32_91 : i32 to vector<1x256xi32>
    %266 = arith.addi %252, %265 : vector<1x256xi32>
    %c0_i32_92 = arith.constant 0 : i32
    %267 = vector.broadcast %c0_i32_92 : i32 to vector<1x256xi32>
    %268 = arith.cmpi sge, %266, %267 : vector<1x256xi32>
    %269 = arith.andi %264, %268 : vector<1x256xi1>
    %c-1_i32_93 = arith.constant -1 : i32
    %270 = vector.broadcast %c-1_i32_93 : i32 to vector<1x256xi32>
    %271 = arith.addi %252, %270 : vector<1x256xi32>
    %c16_i32_94 = arith.constant 16 : i32
    %272 = vector.broadcast %c16_i32_94 : i32 to vector<1x256xi32>
    %273 = arith.cmpi slt, %271, %272 : vector<1x256xi32>
    %274 = arith.andi %269, %273 : vector<1x256xi1>
    %cst_95 = arith.constant 0.000000e+00 : f32
    %275 = vector.shape_cast %274 : vector<1x256xi1> to vector<1x256xi1>
    %276 = vector.broadcast %275 : vector<1x256xi1> to vector<64x256xi1>
    %277 = vector.broadcast %cst_95 : f32 to vector<64x256xf32>
    %278 = arith.select %276, %255, %277 : vector<64x256xi1>, vector<64x256xf32>
    %279 = vector.extract_strided_slice %248 {offsets = [0, 240], sizes = [64, 16], strides = [1, 1]} : vector<64x256xf32> to vector<64x16xf32>
    %280 = vector.extract_strided_slice %248 {offsets = [0, 0], sizes = [64, 240], strides = [1, 1]} : vector<64x256xf32> to vector<64x240xf32>
    %281 = tpu.concatenate %279, %280 in 1 : vector<64x16xf32>, vector<64x240xf32> -> vector<64x256xf32>
    %c-1_i32_96 = arith.constant -1 : i32
    %282 = vector.broadcast %c-1_i32_96 : i32 to vector<1x256xi32>
    %283 = arith.addi %250, %282 : vector<1x256xi32>
    %c0_i32_97 = arith.constant 0 : i32
    %284 = vector.broadcast %c0_i32_97 : i32 to vector<1x256xi32>
    %285 = arith.cmpi sge, %283, %284 : vector<1x256xi32>
    %c-1_i32_98 = arith.constant -1 : i32
    %286 = vector.broadcast %c-1_i32_98 : i32 to vector<1x256xi32>
    %287 = arith.addi %250, %286 : vector<1x256xi32>
    %c16_i32_99 = arith.constant 16 : i32
    %288 = vector.broadcast %c16_i32_99 : i32 to vector<1x256xi32>
    %289 = arith.cmpi slt, %287, %288 : vector<1x256xi32>
    %290 = arith.andi %285, %289 : vector<1x256xi1>
    %c0_i32_100 = arith.constant 0 : i32
    %291 = vector.broadcast %c0_i32_100 : i32 to vector<1x256xi32>
    %292 = arith.addi %252, %291 : vector<1x256xi32>
    %c0_i32_101 = arith.constant 0 : i32
    %293 = vector.broadcast %c0_i32_101 : i32 to vector<1x256xi32>
    %294 = arith.cmpi sge, %292, %293 : vector<1x256xi32>
    %295 = arith.andi %290, %294 : vector<1x256xi1>
    %c0_i32_102 = arith.constant 0 : i32
    %296 = vector.broadcast %c0_i32_102 : i32 to vector<1x256xi32>
    %297 = arith.addi %252, %296 : vector<1x256xi32>
    %c16_i32_103 = arith.constant 16 : i32
    %298 = vector.broadcast %c16_i32_103 : i32 to vector<1x256xi32>
    %299 = arith.cmpi slt, %297, %298 : vector<1x256xi32>
    %300 = arith.andi %295, %299 : vector<1x256xi1>
    %cst_104 = arith.constant 0.000000e+00 : f32
    %301 = vector.shape_cast %300 : vector<1x256xi1> to vector<1x256xi1>
    %302 = vector.broadcast %301 : vector<1x256xi1> to vector<64x256xi1>
    %303 = vector.broadcast %cst_104 : f32 to vector<64x256xf32>
    %304 = arith.select %302, %281, %303 : vector<64x256xi1>, vector<64x256xf32>
    %305 = vector.extract_strided_slice %248 {offsets = [0, 241], sizes = [64, 15], strides = [1, 1]} : vector<64x256xf32> to vector<64x15xf32>
    %306 = vector.extract_strided_slice %248 {offsets = [0, 0], sizes = [64, 241], strides = [1, 1]} : vector<64x256xf32> to vector<64x241xf32>
    %307 = tpu.concatenate %305, %306 in 1 : vector<64x15xf32>, vector<64x241xf32> -> vector<64x256xf32>
    %c-1_i32_105 = arith.constant -1 : i32
    %308 = vector.broadcast %c-1_i32_105 : i32 to vector<1x256xi32>
    %309 = arith.addi %250, %308 : vector<1x256xi32>
    %c0_i32_106 = arith.constant 0 : i32
    %310 = vector.broadcast %c0_i32_106 : i32 to vector<1x256xi32>
    %311 = arith.cmpi sge, %309, %310 : vector<1x256xi32>
    %c-1_i32_107 = arith.constant -1 : i32
    %312 = vector.broadcast %c-1_i32_107 : i32 to vector<1x256xi32>
    %313 = arith.addi %250, %312 : vector<1x256xi32>
    %c16_i32_108 = arith.constant 16 : i32
    %314 = vector.broadcast %c16_i32_108 : i32 to vector<1x256xi32>
    %315 = arith.cmpi slt, %313, %314 : vector<1x256xi32>
    %316 = arith.andi %311, %315 : vector<1x256xi1>
    %c1_i32_109 = arith.constant 1 : i32
    %317 = vector.broadcast %c1_i32_109 : i32 to vector<1x256xi32>
    %318 = arith.addi %252, %317 : vector<1x256xi32>
    %c0_i32_110 = arith.constant 0 : i32
    %319 = vector.broadcast %c0_i32_110 : i32 to vector<1x256xi32>
    %320 = arith.cmpi sge, %318, %319 : vector<1x256xi32>
    %321 = arith.andi %316, %320 : vector<1x256xi1>
    %c1_i32_111 = arith.constant 1 : i32
    %322 = vector.broadcast %c1_i32_111 : i32 to vector<1x256xi32>
    %323 = arith.addi %252, %322 : vector<1x256xi32>
    %c16_i32_112 = arith.constant 16 : i32
    %324 = vector.broadcast %c16_i32_112 : i32 to vector<1x256xi32>
    %325 = arith.cmpi slt, %323, %324 : vector<1x256xi32>
    %326 = arith.andi %321, %325 : vector<1x256xi1>
    %cst_113 = arith.constant 0.000000e+00 : f32
    %327 = vector.shape_cast %326 : vector<1x256xi1> to vector<1x256xi1>
    %328 = vector.broadcast %327 : vector<1x256xi1> to vector<64x256xi1>
    %329 = vector.broadcast %cst_113 : f32 to vector<64x256xf32>
    %330 = arith.select %328, %307, %329 : vector<64x256xi1>, vector<64x256xf32>
    %331 = vector.extract_strided_slice %248 {offsets = [0, 255], sizes = [64, 1], strides = [1, 1]} : vector<64x256xf32> to vector<64x1xf32>
    %332 = vector.extract_strided_slice %248 {offsets = [0, 0], sizes = [64, 255], strides = [1, 1]} : vector<64x256xf32> to vector<64x255xf32>
    %333 = tpu.concatenate %331, %332 in 1 : vector<64x1xf32>, vector<64x255xf32> -> vector<64x256xf32>
    %c0_i32_114 = arith.constant 0 : i32
    %334 = vector.broadcast %c0_i32_114 : i32 to vector<1x256xi32>
    %335 = arith.addi %250, %334 : vector<1x256xi32>
    %c0_i32_115 = arith.constant 0 : i32
    %336 = vector.broadcast %c0_i32_115 : i32 to vector<1x256xi32>
    %337 = arith.cmpi sge, %335, %336 : vector<1x256xi32>
    %c0_i32_116 = arith.constant 0 : i32
    %338 = vector.broadcast %c0_i32_116 : i32 to vector<1x256xi32>
    %339 = arith.addi %250, %338 : vector<1x256xi32>
    %c16_i32_117 = arith.constant 16 : i32
    %340 = vector.broadcast %c16_i32_117 : i32 to vector<1x256xi32>
    %341 = arith.cmpi slt, %339, %340 : vector<1x256xi32>
    %342 = arith.andi %337, %341 : vector<1x256xi1>
    %c-1_i32_118 = arith.constant -1 : i32
    %343 = vector.broadcast %c-1_i32_118 : i32 to vector<1x256xi32>
    %344 = arith.addi %252, %343 : vector<1x256xi32>
    %c0_i32_119 = arith.constant 0 : i32
    %345 = vector.broadcast %c0_i32_119 : i32 to vector<1x256xi32>
    %346 = arith.cmpi sge, %344, %345 : vector<1x256xi32>
    %347 = arith.andi %342, %346 : vector<1x256xi1>
    %c-1_i32_120 = arith.constant -1 : i32
    %348 = vector.broadcast %c-1_i32_120 : i32 to vector<1x256xi32>
    %349 = arith.addi %252, %348 : vector<1x256xi32>
    %c16_i32_121 = arith.constant 16 : i32
    %350 = vector.broadcast %c16_i32_121 : i32 to vector<1x256xi32>
    %351 = arith.cmpi slt, %349, %350 : vector<1x256xi32>
    %352 = arith.andi %347, %351 : vector<1x256xi1>
    %cst_122 = arith.constant 0.000000e+00 : f32
    %353 = vector.shape_cast %352 : vector<1x256xi1> to vector<1x256xi1>
    %354 = vector.broadcast %353 : vector<1x256xi1> to vector<64x256xi1>
    %355 = vector.broadcast %cst_122 : f32 to vector<64x256xf32>
    %356 = arith.select %354, %333, %355 : vector<64x256xi1>, vector<64x256xf32>
    %c0_i32_123 = arith.constant 0 : i32
    %357 = vector.broadcast %c0_i32_123 : i32 to vector<1x256xi32>
    %358 = arith.addi %250, %357 : vector<1x256xi32>
    %c0_i32_124 = arith.constant 0 : i32
    %359 = vector.broadcast %c0_i32_124 : i32 to vector<1x256xi32>
    %360 = arith.cmpi sge, %358, %359 : vector<1x256xi32>
    %c0_i32_125 = arith.constant 0 : i32
    %361 = vector.broadcast %c0_i32_125 : i32 to vector<1x256xi32>
    %362 = arith.addi %250, %361 : vector<1x256xi32>
    %c16_i32_126 = arith.constant 16 : i32
    %363 = vector.broadcast %c16_i32_126 : i32 to vector<1x256xi32>
    %364 = arith.cmpi slt, %362, %363 : vector<1x256xi32>
    %365 = arith.andi %360, %364 : vector<1x256xi1>
    %c0_i32_127 = arith.constant 0 : i32
    %366 = vector.broadcast %c0_i32_127 : i32 to vector<1x256xi32>
    %367 = arith.addi %252, %366 : vector<1x256xi32>
    %c0_i32_128 = arith.constant 0 : i32
    %368 = vector.broadcast %c0_i32_128 : i32 to vector<1x256xi32>
    %369 = arith.cmpi sge, %367, %368 : vector<1x256xi32>
    %370 = arith.andi %365, %369 : vector<1x256xi1>
    %c0_i32_129 = arith.constant 0 : i32
    %371 = vector.broadcast %c0_i32_129 : i32 to vector<1x256xi32>
    %372 = arith.addi %252, %371 : vector<1x256xi32>
    %c16_i32_130 = arith.constant 16 : i32
    %373 = vector.broadcast %c16_i32_130 : i32 to vector<1x256xi32>
    %374 = arith.cmpi slt, %372, %373 : vector<1x256xi32>
    %375 = arith.andi %370, %374 : vector<1x256xi1>
    %cst_131 = arith.constant 0.000000e+00 : f32
    %376 = vector.shape_cast %375 : vector<1x256xi1> to vector<1x256xi1>
    %377 = vector.broadcast %376 : vector<1x256xi1> to vector<64x256xi1>
    %378 = vector.broadcast %cst_131 : f32 to vector<64x256xf32>
    %379 = arith.select %377, %248, %378 : vector<64x256xi1>, vector<64x256xf32>
    %380 = vector.extract_strided_slice %248 {offsets = [0, 1], sizes = [64, 255], strides = [1, 1]} : vector<64x256xf32> to vector<64x255xf32>
    %381 = vector.extract_strided_slice %248 {offsets = [0, 0], sizes = [64, 1], strides = [1, 1]} : vector<64x256xf32> to vector<64x1xf32>
    %382 = tpu.concatenate %380, %381 in 1 : vector<64x255xf32>, vector<64x1xf32> -> vector<64x256xf32>
    %c0_i32_132 = arith.constant 0 : i32
    %383 = vector.broadcast %c0_i32_132 : i32 to vector<1x256xi32>
    %384 = arith.addi %250, %383 : vector<1x256xi32>
    %c0_i32_133 = arith.constant 0 : i32
    %385 = vector.broadcast %c0_i32_133 : i32 to vector<1x256xi32>
    %386 = arith.cmpi sge, %384, %385 : vector<1x256xi32>
    %c0_i32_134 = arith.constant 0 : i32
    %387 = vector.broadcast %c0_i32_134 : i32 to vector<1x256xi32>
    %388 = arith.addi %250, %387 : vector<1x256xi32>
    %c16_i32_135 = arith.constant 16 : i32
    %389 = vector.broadcast %c16_i32_135 : i32 to vector<1x256xi32>
    %390 = arith.cmpi slt, %388, %389 : vector<1x256xi32>
    %391 = arith.andi %386, %390 : vector<1x256xi1>
    %c1_i32_136 = arith.constant 1 : i32
    %392 = vector.broadcast %c1_i32_136 : i32 to vector<1x256xi32>
    %393 = arith.addi %252, %392 : vector<1x256xi32>
    %c0_i32_137 = arith.constant 0 : i32
    %394 = vector.broadcast %c0_i32_137 : i32 to vector<1x256xi32>
    %395 = arith.cmpi sge, %393, %394 : vector<1x256xi32>
    %396 = arith.andi %391, %395 : vector<1x256xi1>
    %c1_i32_138 = arith.constant 1 : i32
    %397 = vector.broadcast %c1_i32_138 : i32 to vector<1x256xi32>
    %398 = arith.addi %252, %397 : vector<1x256xi32>
    %c16_i32_139 = arith.constant 16 : i32
    %399 = vector.broadcast %c16_i32_139 : i32 to vector<1x256xi32>
    %400 = arith.cmpi slt, %398, %399 : vector<1x256xi32>
    %401 = arith.andi %396, %400 : vector<1x256xi1>
    %cst_140 = arith.constant 0.000000e+00 : f32
    %402 = vector.shape_cast %401 : vector<1x256xi1> to vector<1x256xi1>
    %403 = vector.broadcast %402 : vector<1x256xi1> to vector<64x256xi1>
    %404 = vector.broadcast %cst_140 : f32 to vector<64x256xf32>
    %405 = arith.select %403, %382, %404 : vector<64x256xi1>, vector<64x256xf32>
    %406 = vector.extract_strided_slice %248 {offsets = [0, 15], sizes = [64, 241], strides = [1, 1]} : vector<64x256xf32> to vector<64x241xf32>
    %407 = vector.extract_strided_slice %248 {offsets = [0, 0], sizes = [64, 15], strides = [1, 1]} : vector<64x256xf32> to vector<64x15xf32>
    %408 = tpu.concatenate %406, %407 in 1 : vector<64x241xf32>, vector<64x15xf32> -> vector<64x256xf32>
    %c1_i32_141 = arith.constant 1 : i32
    %409 = vector.broadcast %c1_i32_141 : i32 to vector<1x256xi32>
    %410 = arith.addi %250, %409 : vector<1x256xi32>
    %c0_i32_142 = arith.constant 0 : i32
    %411 = vector.broadcast %c0_i32_142 : i32 to vector<1x256xi32>
    %412 = arith.cmpi sge, %410, %411 : vector<1x256xi32>
    %c1_i32_143 = arith.constant 1 : i32
    %413 = vector.broadcast %c1_i32_143 : i32 to vector<1x256xi32>
    %414 = arith.addi %250, %413 : vector<1x256xi32>
    %c16_i32_144 = arith.constant 16 : i32
    %415 = vector.broadcast %c16_i32_144 : i32 to vector<1x256xi32>
    %416 = arith.cmpi slt, %414, %415 : vector<1x256xi32>
    %417 = arith.andi %412, %416 : vector<1x256xi1>
    %c-1_i32_145 = arith.constant -1 : i32
    %418 = vector.broadcast %c-1_i32_145 : i32 to vector<1x256xi32>
    %419 = arith.addi %252, %418 : vector<1x256xi32>
    %c0_i32_146 = arith.constant 0 : i32
    %420 = vector.broadcast %c0_i32_146 : i32 to vector<1x256xi32>
    %421 = arith.cmpi sge, %419, %420 : vector<1x256xi32>
    %422 = arith.andi %417, %421 : vector<1x256xi1>
    %c-1_i32_147 = arith.constant -1 : i32
    %423 = vector.broadcast %c-1_i32_147 : i32 to vector<1x256xi32>
    %424 = arith.addi %252, %423 : vector<1x256xi32>
    %c16_i32_148 = arith.constant 16 : i32
    %425 = vector.broadcast %c16_i32_148 : i32 to vector<1x256xi32>
    %426 = arith.cmpi slt, %424, %425 : vector<1x256xi32>
    %427 = arith.andi %422, %426 : vector<1x256xi1>
    %cst_149 = arith.constant 0.000000e+00 : f32
    %428 = vector.shape_cast %427 : vector<1x256xi1> to vector<1x256xi1>
    %429 = vector.broadcast %428 : vector<1x256xi1> to vector<64x256xi1>
    %430 = vector.broadcast %cst_149 : f32 to vector<64x256xf32>
    %431 = arith.select %429, %408, %430 : vector<64x256xi1>, vector<64x256xf32>
    %432 = vector.extract_strided_slice %248 {offsets = [0, 16], sizes = [64, 240], strides = [1, 1]} : vector<64x256xf32> to vector<64x240xf32>
    %433 = vector.extract_strided_slice %248 {offsets = [0, 0], sizes = [64, 16], strides = [1, 1]} : vector<64x256xf32> to vector<64x16xf32>
    %434 = tpu.concatenate %432, %433 in 1 : vector<64x240xf32>, vector<64x16xf32> -> vector<64x256xf32>
    %c1_i32_150 = arith.constant 1 : i32
    %435 = vector.broadcast %c1_i32_150 : i32 to vector<1x256xi32>
    %436 = arith.addi %250, %435 : vector<1x256xi32>
    %c0_i32_151 = arith.constant 0 : i32
    %437 = vector.broadcast %c0_i32_151 : i32 to vector<1x256xi32>
    %438 = arith.cmpi sge, %436, %437 : vector<1x256xi32>
    %c1_i32_152 = arith.constant 1 : i32
    %439 = vector.broadcast %c1_i32_152 : i32 to vector<1x256xi32>
    %440 = arith.addi %250, %439 : vector<1x256xi32>
    %c16_i32_153 = arith.constant 16 : i32
    %441 = vector.broadcast %c16_i32_153 : i32 to vector<1x256xi32>
    %442 = arith.cmpi slt, %440, %441 : vector<1x256xi32>
    %443 = arith.andi %438, %442 : vector<1x256xi1>
    %c0_i32_154 = arith.constant 0 : i32
    %444 = vector.broadcast %c0_i32_154 : i32 to vector<1x256xi32>
    %445 = arith.addi %252, %444 : vector<1x256xi32>
    %c0_i32_155 = arith.constant 0 : i32
    %446 = vector.broadcast %c0_i32_155 : i32 to vector<1x256xi32>
    %447 = arith.cmpi sge, %445, %446 : vector<1x256xi32>
    %448 = arith.andi %443, %447 : vector<1x256xi1>
    %c0_i32_156 = arith.constant 0 : i32
    %449 = vector.broadcast %c0_i32_156 : i32 to vector<1x256xi32>
    %450 = arith.addi %252, %449 : vector<1x256xi32>
    %c16_i32_157 = arith.constant 16 : i32
    %451 = vector.broadcast %c16_i32_157 : i32 to vector<1x256xi32>
    %452 = arith.cmpi slt, %450, %451 : vector<1x256xi32>
    %453 = arith.andi %448, %452 : vector<1x256xi1>
    %cst_158 = arith.constant 0.000000e+00 : f32
    %454 = vector.shape_cast %453 : vector<1x256xi1> to vector<1x256xi1>
    %455 = vector.broadcast %454 : vector<1x256xi1> to vector<64x256xi1>
    %456 = vector.broadcast %cst_158 : f32 to vector<64x256xf32>
    %457 = arith.select %455, %434, %456 : vector<64x256xi1>, vector<64x256xf32>
    %458 = vector.extract_strided_slice %248 {offsets = [0, 17], sizes = [64, 239], strides = [1, 1]} : vector<64x256xf32> to vector<64x239xf32>
    %459 = vector.extract_strided_slice %248 {offsets = [0, 0], sizes = [64, 17], strides = [1, 1]} : vector<64x256xf32> to vector<64x17xf32>
    %460 = tpu.concatenate %458, %459 in 1 : vector<64x239xf32>, vector<64x17xf32> -> vector<64x256xf32>
    %c1_i32_159 = arith.constant 1 : i32
    %461 = vector.broadcast %c1_i32_159 : i32 to vector<1x256xi32>
    %462 = arith.addi %250, %461 : vector<1x256xi32>
    %c0_i32_160 = arith.constant 0 : i32
    %463 = vector.broadcast %c0_i32_160 : i32 to vector<1x256xi32>
    %464 = arith.cmpi sge, %462, %463 : vector<1x256xi32>
    %c1_i32_161 = arith.constant 1 : i32
    %465 = vector.broadcast %c1_i32_161 : i32 to vector<1x256xi32>
    %466 = arith.addi %250, %465 : vector<1x256xi32>
    %c16_i32_162 = arith.constant 16 : i32
    %467 = vector.broadcast %c16_i32_162 : i32 to vector<1x256xi32>
    %468 = arith.cmpi slt, %466, %467 : vector<1x256xi32>
    %469 = arith.andi %464, %468 : vector<1x256xi1>
    %c1_i32_163 = arith.constant 1 : i32
    %470 = vector.broadcast %c1_i32_163 : i32 to vector<1x256xi32>
    %471 = arith.addi %252, %470 : vector<1x256xi32>
    %c0_i32_164 = arith.constant 0 : i32
    %472 = vector.broadcast %c0_i32_164 : i32 to vector<1x256xi32>
    %473 = arith.cmpi sge, %471, %472 : vector<1x256xi32>
    %474 = arith.andi %469, %473 : vector<1x256xi1>
    %c1_i32_165 = arith.constant 1 : i32
    %475 = vector.broadcast %c1_i32_165 : i32 to vector<1x256xi32>
    %476 = arith.addi %252, %475 : vector<1x256xi32>
    %c16_i32_166 = arith.constant 16 : i32
    %477 = vector.broadcast %c16_i32_166 : i32 to vector<1x256xi32>
    %478 = arith.cmpi slt, %476, %477 : vector<1x256xi32>
    %479 = arith.andi %474, %478 : vector<1x256xi1>
    %cst_167 = arith.constant 0.000000e+00 : f32
    %480 = vector.shape_cast %479 : vector<1x256xi1> to vector<1x256xi1>
    %481 = vector.broadcast %480 : vector<1x256xi1> to vector<64x256xi1>
    %482 = vector.broadcast %cst_167 : f32 to vector<64x256xf32>
    %483 = arith.select %481, %460, %482 : vector<64x256xi1>, vector<64x256xf32>
    %484 = tpu.concatenate %278, %304, %330, %356, %379, %405, %431, %457, %483 in 0 : vector<64x256xf32>, vector<64x256xf32>, vector<64x256xf32>, vector<64x256xf32>, vector<64x256xf32>, vector<64x256xf32>, vector<64x256xf32>, vector<64x256xf32>, vector<64x256xf32> -> vector<576x256xf32>
    %485 = arith.truncf %484 : vector<576x256xf32> to vector<576x256xbf16>
    %c0_168 = arith.constant 0 : index
    %c0_169 = arith.constant 0 : index
    %486 = vector.load %arg4[%c0_168, %c0_169] : memref<64x576xbf16, #tpu.memory_space<vmem>>, vector<64x576xbf16>
    %cst_170 = arith.constant dense<0.000000e+00> : vector<64x256xf32>
    %487 = tpu.matmul %486, %485, %cst_170 {dimension_numbers = #tpu.dot_dimension_numbers<[1], [0], [0], [1], [0, 0, 1, 1], [], []>} : vector<64x576xbf16>, vector<576x256xbf16>, vector<64x256xf32> -> vector<64x256xf32>
    %c0_171 = arith.constant 0 : index
    %c0_172 = arith.constant 0 : index
    %488 = vector.load %arg5[%c0_171, %c0_172] : memref<64x1xf32, #tpu.memory_space<vmem>>, vector<64x1xf32>
    %489 = vector.broadcast %488 : vector<64x1xf32> to vector<64x256xf32>
    %490 = arith.addf %487, %489 : vector<64x256xf32>
    %cst_173 = arith.constant 0.000000e+00 : f32
    %491 = vector.broadcast %cst_173 : f32 to vector<64x256xf32>
    %492 = arith.maximumf %490, %491 : vector<64x256xf32>
    %493 = arith.truncf %492 : vector<64x256xf32> to vector<64x256xbf16>
    %494 = vector.shape_cast %493 : vector<64x256xbf16> to vector<1x16384xbf16>
    %c0_174 = arith.constant 0 : index
    %c0_175 = arith.constant 0 : index
    %495 = vector.load %arg6[%c0_174, %c0_175] : memref<16384x17xbf16, #tpu.memory_space<vmem>>, vector<16384x17xbf16>
    %cst_176 = arith.constant dense<0.000000e+00> : vector<1x17xf32>
    %496 = tpu.matmul %494, %495, %cst_176 {dimension_numbers = #tpu.dot_dimension_numbers<[1], [0], [0], [1], [0, 0, 1, 1], [], []>} : vector<1x16384xbf16>, vector<16384x17xbf16>, vector<1x17xf32> -> vector<1x17xf32>
    %c0_177 = arith.constant 0 : index
    %c0_178 = arith.constant 0 : index
    %497 = vector.load %arg7[%c0_177, %c0_178] : memref<1x17xf32, #tpu.memory_space<vmem>>, vector<1x17xf32>
    %498 = arith.addf %496, %497 : vector<1x17xf32>
    %499 = tpu.iota {dimensions = array<i32: 1>} : vector<1x17xi32>
    %c16_i32_179 = arith.constant 16 : i32
    %500 = vector.broadcast %c16_i32_179 : i32 to vector<1x17xi32>
    %501 = arith.cmpi eq, %499, %500 : vector<1x17xi32>
    %502 = math.tanh %498 : vector<1x17xf32>
    %503 = arith.select %501, %502, %498 : vector<1x17xi1>, vector<1x17xf32>
    %c0_180 = arith.constant 0 : index
    %c0_181 = arith.constant 0 : index
    %c0_182 = arith.constant 0 : index
    %504 = vector.load %arg8[%c0_180, %c0_181, %c0_182] : memref<1x1x17xf32, #tpu.memory_space<vmem>>, vector<1x1x17xf32>
    %505 = vector.shape_cast %504 : vector<1x1x17xf32> to vector<1x17xf32>
    %506 = vector.shape_cast %503 : vector<1x17xf32> to vector<1x1x17xf32>
    tpu.vector_store %arg8[%c0_180, %c0_181, %c0_182], %506 {strides = array<i32>} : memref<1x1x17xf32, #tpu.memory_space<vmem>>, vector<1x1x17xf32>,
    return
  }
  func.func @transform_0(%arg0: i32) -> (i32, i32, i32) {
    %c0_i32 = arith.constant 0 : i32
    %c0_i32_0 = arith.constant 0 : i32
    %c0_i32_1 = arith.constant 0 : i32
    return %arg0, %c0_i32, %c0_i32_0 : i32, i32, i32
  }
  func.func @transform_1(%arg0: i32) -> (i32, i32) {
    %c0_i32 = arith.constant 0 : i32
    %c0_i32_0 = arith.constant 0 : i32
    %c0_i32_1 = arith.constant 0 : i32
    return %c0_i32, %c0_i32_0 : i32, i32
  }
  func.func @transform_2(%arg0: i32) -> (i32, i32) {
    %c0_i32 = arith.constant 0 : i32
    %c0_i32_0 = arith.constant 0 : i32
    %c0_i32_1 = arith.constant 0 : i32
    return %c0_i32, %c0_i32_0 : i32, i32
  }
  func.func @transform_3(%arg0: i32) -> (i32, i32) {
    %c0_i32 = arith.constant 0 : i32
    %c0_i32_0 = arith.constant 0 : i32
    %c0_i32_1 = arith.constant 0 : i32
    return %c0_i32, %c0_i32_0 : i32, i32
  }
  func.func @transform_4(%arg0: i32) -> (i32, i32) {
    %c0_i32 = arith.constant 0 : i32
    %c0_i32_0 = arith.constant 0 : i32
    %c0_i32_1 = arith.constant 0 : i32
    return %c0_i32, %c0_i32_0 : i32, i32
  }
  func.func @transform_5(%arg0: i32) -> (i32, i32) {
    %c0_i32 = arith.constant 0 : i32
    %c0_i32_0 = arith.constant 0 : i32
    %c0_i32_1 = arith.constant 0 : i32
    return %c0_i32, %c0_i32_0 : i32, i32
  }
  func.func @transform_6(%arg0: i32) -> (i32, i32) {
    %c0_i32 = arith.constant 0 : i32
    %c0_i32_0 = arith.constant 0 : i32
    %c0_i32_1 = arith.constant 0 : i32
    return %c0_i32, %c0_i32_0 : i32, i32
  }
  func.func @transform_7(%arg0: i32) -> (i32, i32, i32) {
    %c0_i32 = arith.constant 0 : i32
    %c0_i32_0 = arith.constant 0 : i32
    %c0_i32_1 = arith.constant 0 : i32
    return %arg0, %c0_i32, %c0_i32_0 : i32, i32, i32
  }
}

</mosaic_0001>

<llo_original>
// kernel: simplenet_forward.1
$region0: #{simplenet_forward.1}
  #allocation0 [shape = 'u32[]', space=smem, size = 0x4, offset = 0x4, fixed_abs, tag = 'smem constant byte address 0x4 - core index']
  #allocation1 [shape = 'u32[144,128]{1,0:T(1,128)}', space=vmem, size = 0x12000, scoped, tag = 'internal scratch']
  %s0 = inlined_call_operand.vmem [shape: f32[2,4,256], index: 0, kind: input, shape index: {}]
  %s1 = inlined_call_operand.vmem [shape: bf16[64,72], index: 1, kind: input, shape index: {}]
  %s2 = inlined_call_operand.vmem [shape: f32[64,1], index: 2, kind: input, shape index: {}]
  %s3 = inlined_call_operand.vmem [shape: bf16[64,576], index: 3, kind: input, shape index: {}]
  %s4 = inlined_call_operand.vmem [shape: f32[64,1], index: 4, kind: input, shape index: {}]
  %s5 = inlined_call_operand.vmem [shape: bf16[16384,17], index: 5, kind: input, shape index: {}]
  %s6 = inlined_call_operand.vmem [shape: f32[1,17], index: 6, kind: input, shape index: {}]
  %s7 = inlined_call_operand.vmem [shape: f32[2,1,17], index: 7, kind: output, shape index: {}]
  %s8 = sld [smem:[#allocation0]]
  $region61: #{simplenet_forward.1} parent=0
    _
  %s10 = ssub.s32 1, %s8
  %s11 = scalar_select 0, %s10, %s8
  loop: start=0, step=1, limit=4
  $region2: #{simplenet_forward.1} parent=0 // loop_pre_header
    _
  $region3: #{simplenet_forward.1} parent=0 // loop_header
    %s13 = sphi 0, %s17
    %p14 = scmp.ge.s32.totalorder %s13, 4
    %s23 = sphi 0, %s25
    %s26 = sphi 0, %s23
    %s27 = sphi 0, %s26
    %s43 = sphi 0, %s27
    %s47 = sphi 0, %s47
    %s49 = sphi 0, %s47
    %s50 = sphi 0, %s49
    %s64 = sphi 0, %s50
    %s68 = sphi 0, %s68
    %s70 = sphi 0, %s68
    %s71 = sphi 0, %s70
    %s85 = sphi 0, %s71
    %s89 = sphi 0, %s89
    %s91 = sphi 0, %s89
    %s92 = sphi 0, %s91
    %s106 = sphi 0, %s92
    %s110 = sphi 0, %s110
    %s112 = sphi 0, %s110
    %s113 = sphi 0, %s112
    %s127 = sphi 0, %s113
    %s131 = sphi 0, %s131
    %s133 = sphi 0, %s131
    %s134 = sphi 0, %s133
    %s148 = sphi 0, %s134
    %s152 = sphi 0, %s152
    %s154 = sphi 0, %s152
    %s155 = sphi 0, %s154
    %s169 = sphi 0, %s155
    %s175 = sphi 0, %s177
    %s178 = sphi 0, %s175
    %s179 = sphi 0, %s178
    %s195 = sphi 0, %s179
  $region4: #{simplenet_forward.1} parent=0 // loop_header_branch
    %16 = sbr.rel (%p14) target = $region8
  $region5: #{simplenet_forward.1} parent=0 // loop_body
    %s18 = ssub.s32 %s13, 1
    %s19 = ssub.s32 %s13, 2
    %s20 = sadd.s32 %s13, 1
    %s21 = ssub.s32 %s13, %s20
    %p22 = scmp.eq.s32.totalorder %s21, 0
    %s24 = sadd.s32 %s23, 1
    %s25 = scalar_select %p22, %s23, %s24
    %p28 = pneg %p22
    %p29 = scmp.eq.s32.totalorder %s13, 1
    %p30 = por %p28, %p29
    %p31 = scmp.ne.s32.totalorder %s23, %s26
    %p32 = scmp.eq.s32.totalorder %s13, 0
    %p33 = por %p31, %p32
    %p34 = scmp.ne.s32.totalorder %s23, %s26
    %p35 = scmp.eq.s32.totalorder %s18, 1
    %p36 = por %p34, %p35
    %p37 = scmp.ne.s32.totalorder %s26, %s27
    %p38 = scmp.eq.s32.totalorder %s18, 0
    %p39 = por %p37, %p38
    %p40 = scmp.ne.s32.totalorder %s26, %s27
    %p41 = scmp.eq.s32.totalorder %s19, 1
    %p42 = por %p40, %p41
    %p44 = scmp.ne.s32.totalorder %s27, %s43
    %p45 = scmp.eq.s32.totalorder %s19, 0
    %p46 = por %p44, %p45
    %s48 = sadd.s32 %s47, 1
    %p51 = scmp.eq.s32.totalorder %s13, 1
    %p52 = scmp.ne.s32.totalorder %s47, %s49
    %p53 = scmp.eq.s32.totalorder %s13, 0
    %p54 = por %p52, %p53
    %p55 = scmp.ne.s32.totalorder %s47, %s49
    %p56 = scmp.eq.s32.totalorder %s18, 1
    %p57 = por %p55, %p56
    %p58 = scmp.ne.s32.totalorder %s49, %s50
    %p59 = scmp.eq.s32.totalorder %s18, 0
    %p60 = por %p58, %p59
    %p61 = scmp.ne.s32.totalorder %s49, %s50
    %p62 = scmp.eq.s32.totalorder %s19, 1
    %p63 = por %p61, %p62
    %p65 = scmp.ne.s32.totalorder %s50, %s64
    %p66 = scmp.eq.s32.totalorder %s19, 0
    %p67 = por %p65, %p66
    %s69 = sadd.s32 %s68, 1
    %p72 = scmp.eq.s32.totalorder %s13, 1
    %p73 = scmp.ne.s32.totalorder %s68, %s70
    %p74 = scmp.eq.s32.totalorder %s13, 0
    %p75 = por %p73, %p74
    %p76 = scmp.ne.s32.totalorder %s68, %s70
    %p77 = scmp.eq.s32.totalorder %s18, 1
    %p78 = por %p76, %p77
    %p79 = scmp.ne.s32.totalorder %s70, %s71
    %p80 = scmp.eq.s32.totalorder %s18, 0
    %p81 = por %p79, %p80
    %p82 = scmp.ne.s32.totalorder %s70, %s71
    %p83 = scmp.eq.s32.totalorder %s19, 1
    %p84 = por %p82, %p83
    %p86 = scmp.ne.s32.totalorder %s71, %s85
    %p87 = scmp.eq.s32.totalorder %s19, 0
    %p88 = por %p86, %p87
    %s90 = sadd.s32 %s89, 1
    %p93 = scmp.eq.s32.totalorder %s13, 1
    %p94 = scmp.ne.s32.totalorder %s89, %s91
    %p95 = scmp.eq.s32.totalorder %s13, 0
    %p96 = por %p94, %p95
    %p97 = scmp.ne.s32.totalorder %s89, %s91
    %p98 = scmp.eq.s32.totalorder %s18, 1
    %p99 = por %p97, %p98
    %p100 = scmp.ne.s32.totalorder %s91, %s92
    %p101 = scmp.eq.s32.totalorder %s18, 0
    %p102 = por %p100, %p101
    %p103 = scmp.ne.s32.totalorder %s91, %s92
    %p104 = scmp.eq.s32.totalorder %s19, 1
    %p105 = por %p103, %p104
    %p107 = scmp.ne.s32.totalorder %s92, %s106
    %p108 = scmp.eq.s32.totalorder %s19, 0
    %p109 = por %p107, %p108
    %s111 = sadd.s32 %s110, 1
    %p114 = scmp.eq.s32.totalorder %s13, 1
    %p115 = scmp.ne.s32.totalorder %s110, %s112
    %p116 = scmp.eq.s32.totalorder %s13, 0
    %p117 = por %p115, %p116
    %p118 = scmp.ne.s32.totalorder %s110, %s112
    %p119 = scmp.eq.s32.totalorder %s18, 1
    %p120 = por %p118, %p119
    %p121 = scmp.ne.s32.totalorder %s112, %s113
    %p122 = scmp.eq.s32.totalorder %s18, 0
    %p123 = por %p121, %p122
    %p124 = scmp.ne.s32.totalorder %s112, %s113
    %p125 = scmp.eq.s32.totalorder %s19, 1
    %p126 = por %p124, %p125
    %p128 = scmp.ne.s32.totalorder %s113, %s127
    %p129 = scmp.eq.s32.totalorder %s19, 0
    %p130 = por %p128, %p129
    %s132 = sadd.s32 %s131, 1
    %p135 = scmp.eq.s32.totalorder %s13, 1
    %p136 = scmp.ne.s32.totalorder %s131, %s133
    %p137 = scmp.eq.s32.totalorder %s13, 0
    %p138 = por %p136, %p137
    %p139 = scmp.ne.s32.totalorder %s131, %s133
    %p140 = scmp.eq.s32.totalorder %s18, 1
    %p141 = por %p139, %p140
    %p142 = scmp.ne.s32.totalorder %s133, %s134
    %p143 = scmp.eq.s32.totalorder %s18, 0
    %p144 = por %p142, %p143
    %p145 = scmp.ne.s32.totalorder %s133, %s134
    %p146 = scmp.eq.s32.totalorder %s19, 1
    %p147 = por %p145, %p146
    %p149 = scmp.ne.s32.totalorder %s134, %s148
    %p150 = scmp.eq.s32.totalorder %s19, 0
    %p151 = por %p149, %p150
    %s153 = sadd.s32 %s152, 1
    %p156 = scmp.eq.s32.totalorder %s13, 1
    %p157 = scmp.ne.s32.totalorder %s152, %s154
    %p158 = scmp.eq.s32.totalorder %s13, 0
    %p159 = por %p157, %p158
    %p160 = scmp.ne.s32.totalorder %s152, %s154
    %p161 = scmp.eq.s32.totalorder %s18, 1
    %p162 = por %p160, %p161
    %p163 = scmp.ne.s32.totalorder %s154, %s155
    %p164 = scmp.eq.s32.totalorder %s18, 0
    %p165 = por %p163, %p164
    %p166 = scmp.ne.s32.totalorder %s154, %s155
    %p167 = scmp.eq.s32.totalorder %s19, 1
    %p168 = por %p166, %p167
    %p170 = scmp.ne.s32.totalorder %s155, %s169
    %p171 = scmp.eq.s32.totalorder %s19, 0
    %p172 = por %p170, %p171
    %s173 = ssub.s32 %s13, %s20
    %p174 = scmp.eq.s32.totalorder %s173, 0
    %s176 = sadd.s32 %s175, 1
    %s177 = scalar_select %p174, %s175, %s176
    %p180 = pneg %p174
    %p181 = scmp.eq.s32.totalorder %s13, 1
    %p182 = por %p180, %p181
    %p183 = scmp.ne.s32.totalorder %s175, %s178
    %p184 = scmp.eq.s32.totalorder %s13, 0
    %p185 = por %p183, %p184
    %p186 = scmp.ne.s32.totalorder %s175, %s178
    %p187 = scmp.eq.s32.totalorder %s18, 1
    %p188 = por %p186, %p187
    %p189 = scmp.ne.s32.totalorder %s178, %s179
    %p190 = scmp.eq.s32.totalorder %s18, 0
    %p191 = por %p189, %p190
    %p192 = scmp.ne.s32.totalorder %s178, %s179
    %p193 = scmp.eq.s32.totalorder %s19, 1
    %p194 = por %p192, %p193
    %p196 = scmp.ne.s32.totalorder %s179, %s195
    %p197 = scmp.eq.s32.totalorder %s19, 0
    %p198 = por %p196, %p197
    %p199 = scmp.le.s32.totalorder 1, %s13
    %p200 = scmp.lt.s32.totalorder %s13, 3
    %p201 = pnand %p199, %p200
    %p202 = pneg %p201
    // Predicated region
    $region9: #{simplenet_forward.1} parent=5 // pred_check
      _
    $region10: #{simplenet_forward.1} parent=5 // pred_check_branch
      %204 = sbr.rel (%p201) target = $region12
    $region11: #{simplenet_forward.1} parent=5 // pred_region
      %s205 = ssub.s32 %s13, 1
      // Predicated region
      $region13: #{simplenet_forward.1} parent=11 // pred_check
        %p206 = pneg %p60
      $region14: #{simplenet_forward.1} parent=11 // pred_check_branch
        %208 = sbr.rel (%p206) target = $region16
      $region15: #{simplenet_forward.1} parent=11 // pred_region
        _
      $region16: #{simplenet_forward.1} parent=11 // pred_fallthru
        _
      // Predicated region
      $region17: #{simplenet_forward.1} parent=11 // pred_check
        %p209 = pneg %p81
      $region18: #{simplenet_forward.1} parent=11 // pred_check_branch
        %211 = sbr.rel (%p209) target = $region20
      $region19: #{simplenet_forward.1} parent=11 // pred_region
        _
      $region20: #{simplenet_forward.1} parent=11 // pred_fallthru
        _
      // Predicated region
      $region21: #{simplenet_forward.1} parent=11 // pred_check
        %p212 = pneg %p102
      $region22: #{simplenet_forward.1} parent=11 // pred_check_branch
        %214 = sbr.rel (%p212) target = $region24
      $region23: #{simplenet_forward.1} parent=11 // pred_region
        _
      $region24: #{simplenet_forward.1} parent=11 // pred_fallthru
        _
      // Predicated region
      $region25: #{simplenet_forward.1} parent=11 // pred_check
        %p215 = pneg %p123
      $region26: #{simplenet_forward.1} parent=11 // pred_check_branch
        %217 = sbr.rel (%p215) target = $region28
      $region27: #{simplenet_forward.1} parent=11 // pred_region
        _
      $region28: #{simplenet_forward.1} parent=11 // pred_fallthru
        _
      // Predicated region
      $region29: #{simplenet_forward.1} parent=11 // pred_check
        %p218 = pneg %p144
      $region30: #{simplenet_forward.1} parent=11 // pred_check_branch
        %220 = sbr.rel (%p218) target = $region32
      $region31: #{simplenet_forward.1} parent=11 // pred_region
        _
      $region32: #{simplenet_forward.1} parent=11 // pred_fallthru
        _
      // Predicated region
      $region33: #{simplenet_forward.1} parent=11 // pred_check
        %p221 = pneg %p165
      $region34: #{simplenet_forward.1} parent=11 // pred_check_branch
        %223 = sbr.rel (%p221) target = $region36
      $region35: #{simplenet_forward.1} parent=11 // pred_region
        _
      $region36: #{simplenet_forward.1} parent=11 // pred_fallthru
        _
    $region12: #{simplenet_forward.1} parent=5 // pred_fallthru
      _
    %p224 = scmp.lt.s32.totalorder %s13, 2
    // Predicated region
    $region37: #{simplenet_forward.1} parent=5 // pred_check
      %p225 = pneg %p224
    $region38: #{simplenet_forward.1} parent=5 // pred_check_branch
      %227 = sbr.rel (%p225) target = $region40
    $region39: #{simplenet_forward.1} parent=5 // pred_region
      // Predicated region
      $region41: #{simplenet_forward.1} parent=39 // pred_check
        %p228 = pneg %p33
      $region42: #{simplenet_forward.1} parent=39 // pred_check_branch
        %230 = sbr.rel (%p228) target = $region44
      $region43: #{simplenet_forward.1} parent=39 // pred_region
        %p231 = scmp.lt.s32.totalorder %s13, 1
        %s232 = scalar_select %p231, %s13, 1
        %s233 = smul.addr %s232, 2
        %s234 = smul.addr %s233, 4
        %s235 = scalar_lea.vmem %s0, %s234
      $region44: #{simplenet_forward.1} parent=39 // pred_fallthru
        _
    $region40: #{simplenet_forward.1} parent=5 // pred_fallthru
      _
    %p236 = scmp.le.s32.totalorder 1, %s13
    %p237 = scmp.lt.s32.totalorder %s13, 3
    %p238 = pnand %p236, %p237
    %p239 = pneg %p238
    // Predicated region
    $region45: #{simplenet_forward.1} parent=5 // pred_check
      _
    $region46: #{simplenet_forward.1} parent=5 // pred_check_branch
      %241 = sbr.rel (%p238) target = $region48
    $region47: #{simplenet_forward.1} parent=5 // pred_region
      %s242 = ssub.s32 %s13, 1
      %p243 = scmp.lt.s32.totalorder %s18, 1
      %s244 = scalar_select %p243, %s18, 1
      %s245 = smul.addr %s244, 2
      %s246 = smul.addr %s245, 4
      %s247 = scalar_lea.vmem %s0, %s246
      %p248 = pneg %p39
      %p249 = pneg %p36
      %p250 = pneg %p60
      %p251 = pneg %p57
      %p252 = pneg %p81
      %p253 = pneg %p78
      %p254 = pneg %p102
      %p255 = pneg %p99
      %p256 = pneg %p123
      %p257 = pneg %p120
      %p258 = pneg %p144
      %p259 = pneg %p141
      %p260 = pneg %p165
      %p261 = pneg %p162
      %p262 = pneg %p191
      %p263 = pneg %p188
      %p264 = scmp.lt.s32.totalorder %s18, 1
      %s265 = scalar_select %p264, %s18, 1
      %s266 = scalar_lea.vmem %s7, %s265
      %p267 = scmp.lt.s32.totalorder %s18, 1
      %s268 = scalar_select %p267, %s18, 1
      %s269 = smul.addr %s268, 2
      %s270 = smul.addr %s269, 4
      %s271 = scalar_lea.vmem %s0, %s270
      %p272 = scmp.lt.s32.totalorder %s18, 1
      %s273 = scalar_select %p272, %s18, 1
      %s274 = scalar_lea.vmem %s7, %s273
      %v276 = vlaneseq
      %v277 = vand.u32 %v276, 127
      %v278 = vadd.s32 %v277, 128
      %v279 = vld [vmem:[%s271] sm:$0xff]
      %v281 = vcombine.high %v279, %v279
      %vm283 = vcmask 1043456
      %v284 = vsel %vm283, %v279, 0.0
      %v285 = vsel %vm283, %v281, 0.0
      %v286 = vshra.s32 %v277, 4
      %v287 = vshra.s32 %v278, 4
      %v288 = vand.u32 %v277, 15
      %v289 = vand.u32 %v278, 15
      %291 = vrot.lane.b32.xlu0 %v285, 17
      %v292 = vpop.permute.xlu0 %291
      %295 = vrot.lane.b32.xlu0 %v284, 17
      %v296 = vpop.permute.xlu0 %295
      %vm297 = vcmask 138240
      %v298 = vsel %vm297, %v296, %v292
      %v301 = vsel %vm297, %v292, %v296
      %v302 = vadd.s32 %v286, 4294967295
      %v303 = vadd.s32 %v287, 4294967295
      %vm304 = vcmp.ge.s32.totalorder %v302, 0
      %vm305 = vcmp.ge.s32.totalorder %v303, 0
      %vm306 = vcmp.lt.s32.totalorder %v302, 16
      %vm307 = vcmp.lt.s32.totalorder %v303, 16
      %vm308 = vmand %vm304, %vm306
      %vm309 = vmand %vm305, %vm307
      %v310 = vadd.s32 %v288, 4294967295
      %v311 = vadd.s32 %v289, 4294967295
      %vm312 = vcmp.ge.s32.totalorder %v310, 0
      %vm313 = vcmp.ge.s32.totalorder %v311, 0
      %vm314 = vmand %vm308, %vm312
      %vm315 = vmand %vm309, %vm313
      %vm316 = vcmp.lt.s32.totalorder %v310, 16
      %vm317 = vcmp.lt.s32.totalorder %v311, 16
      %vm318 = vmand %vm314, %vm316
      %vm319 = vmand %vm315, %vm317
      %v320 = vsel %vm318, 1, 0
      %v321 = vsel %vm319, 1, 0
      %vm322 = vcmp.eq.s32.totalorder %v320, 1
      %vm323 = vcmp.eq.s32.totalorder %v321, 1
      %v324 = vsel %vm322, %v301, 0.0
      %v325 = vsel %vm323, %v298, 0.0
      %326 = vrot.lane.b32.xlu0 %v285, 16
      %v327 = vpop.permute.xlu0 %326
      %329 = vrot.lane.b32.xlu0 %v284, 16
      %v330 = vpop.permute.xlu0 %329
      %vm331 = vcmask 130048
      %v332 = vsel %vm331, %v330, %v327
      %v335 = vsel %vm331, %v327, %v330
      %vm336 = vcmp.ge.s32.totalorder %v288, 0
      %vm337 = vcmp.ge.s32.totalorder %v289, 0
      %vm338 = vmand %vm308, %vm336
      %vm339 = vmand %vm309, %vm337
      %vm340 = vcmp.lt.s32.totalorder %v288, 16
      %vm341 = vcmp.lt.s32.totalorder %v289, 16
      %vm342 = vmand %vm338, %vm340
      %vm343 = vmand %vm339, %vm341
      %v344 = vsel %vm342, 1, 0
      %v345 = vsel %vm343, 1, 0
      %vm346 = vcmp.eq.s32.totalorder %v344, 1
      %vm347 = vcmp.eq.s32.totalorder %v345, 1
      %v348 = vsel %vm346, %v335, 0.0
      %v349 = vsel %vm347, %v332, 0.0
      %350 = vrot.lane.b32.xlu0 %v285, 15
      %v351 = vpop.permute.xlu0 %350
      %353 = vrot.lane.b32.xlu0 %v284, 15
      %v354 = vpop.permute.xlu0 %353
      %vm355 = vcmask 121856
      %v356 = vsel %vm355, %v354, %v351
      %v359 = vsel %vm355, %v351, %v354
      %v360 = vadd.s32 %v288, 1
      %v361 = vadd.s32 %v289, 1
      %vm362 = vcmp.ge.s32.totalorder %v360, 0
      %vm363 = vcmp.ge.s32.totalorder %v361, 0
      %vm364 = vmand %vm308, %vm362
      %vm365 = vmand %vm309, %vm363
      %vm366 = vcmp.lt.s32.totalorder %v360, 16
      %vm367 = vcmp.lt.s32.totalorder %v361, 16
      %vm368 = vmand %vm364, %vm366
      %vm369 = vmand %vm365, %vm367
      %v370 = vsel %vm368, 1, 0
      %v371 = vsel %vm369, 1, 0
      %vm372 = vcmp.eq.s32.totalorder %v370, 1
      %vm373 = vcmp.eq.s32.totalorder %v371, 1
      %v374 = vsel %vm372, %v359, 0.0
      %v375 = vsel %vm373, %v356, 0.0
      %376 = vrot.lane.b32.xlu0 %v285, 1
      %v377 = vpop.permute.xlu0 %376
      %379 = vrot.lane.b32.xlu0 %v284, 1
      %v380 = vpop.permute.xlu0 %379
      %vm381 = vcmask 7168
      %v382 = vsel %vm381, %v380, %v377
      %v385 = vsel %vm381, %v377, %v380
      %vm386 = vcmp.ge.s32.totalorder %v286, 0
      %vm387 = vcmp.ge.s32.totalorder %v287, 0
      %vm388 = vcmp.lt.s32.totalorder %v286, 16
      %vm389 = vcmp.lt.s32.totalorder %v287, 16
      %vm390 = vmand %vm386, %vm388
      %vm391 = vmand %vm387, %vm389
      %vm392 = vmand %vm390, %vm312
      %vm393 = vmand %vm391, %vm313
      %vm394 = vmand %vm392, %vm316
      %vm395 = vmand %vm393, %vm317
      %v396 = vsel %vm394, 1, 0
      %v397 = vsel %vm395, 1, 0
      %vm398 = vcmp.eq.s32.totalorder %v396, 1
      %vm399 = vcmp.eq.s32.totalorder %v397, 1
      %v400 = vsel %vm398, %v385, 0.0
      %v401 = vsel %vm399, %v382, 0.0
      %vm402 = vmand %vm390, %vm336
      %vm403 = vmand %vm391, %vm337
      %vm404 = vmand %vm402, %vm340
      %vm405 = vmand %vm403, %vm341
      %v406 = vsel %vm404, 1, 0
      %v407 = vsel %vm405, 1, 0
      %vm408 = vcmp.eq.s32.totalorder %v406, 1
      %vm409 = vcmp.eq.s32.totalorder %v407, 1
      %v410 = vsel %vm408, %v284, 0.0
      %v411 = vsel %vm409, %v285, 0.0
      %412 = vrot.lane.b32.xlu0 %v284, 127
      %v413 = vpop.permute.xlu0 %412
      %414 = vrot.lane.b32.xlu0 %v285, 127
      %v415 = vpop.permute.xlu0 %414
      %vm416 = vcmask 1039360
      %v417 = vsel %vm416, %v413, %v415
      %v421 = vsel %vm416, %v415, %v413
      %vm422 = vmand %vm390, %vm362
      %vm423 = vmand %vm391, %vm363
      %vm424 = vmand %vm422, %vm366
      %vm425 = vmand %vm423, %vm367
      %v426 = vsel %vm424, 1, 0
      %v427 = vsel %vm425, 1, 0
      %vm428 = vcmp.eq.s32.totalorder %v426, 1
      %vm429 = vcmp.eq.s32.totalorder %v427, 1
      %v430 = vsel %vm428, %v417, 0.0
      %v431 = vsel %vm429, %v421, 0.0
      %432 = vrot.lane.b32.xlu0 %v284, 113
      %v433 = vpop.permute.xlu0 %432
      %434 = vrot.lane.b32.xlu0 %v285, 113
      %v435 = vpop.permute.xlu0 %434
      %vm436 = vcmask 924672
      %v437 = vsel %vm436, %v433, %v435
      %v441 = vsel %vm436, %v435, %v433
      %v442 = vadd.s32 %v286, 1
      %v443 = vadd.s32 %v287, 1
      %vm444 = vcmp.ge.s32.totalorder %v442, 0
      %vm445 = vcmp.ge.s32.totalorder %v443, 0
      %vm446 = vcmp.lt.s32.totalorder %v442, 16
      %vm447 = vcmp.lt.s32.totalorder %v443, 16
      %vm448 = vmand %vm444, %vm446
      %vm449 = vmand %vm445, %vm447
      %vm450 = vmand %vm448, %vm312
      %vm451 = vmand %vm449, %vm313
      %vm452 = vmand %vm450, %vm316
      %vm453 = vmand %vm451, %vm317
      %v454 = vsel %vm452, 1, 0
      %v455 = vsel %vm453, 1, 0
      %vm456 = vcmp.eq.s32.totalorder %v454, 1
      %vm457 = vcmp.eq.s32.totalorder %v455, 1
      %v458 = vsel %vm456, %v437, 0.0
      %v459 = vsel %vm457, %v441, 0.0
      %460 = vrot.lane.b32.xlu0 %v284, 112
      %v461 = vpop.permute.xlu0 %460
      %462 = vrot.lane.b32.xlu0 %v285, 112
      %v463 = vpop.permute.xlu0 %462
      %vm464 = vcmask 916480
      %v465 = vsel %vm464, %v461, %v463
      %v469 = vsel %vm464, %v463, %v461
      %vm470 = vmand %vm448, %vm336
      %vm471 = vmand %vm449, %vm337
      %vm472 = vmand %vm470, %vm340
      %vm473 = vmand %vm471, %vm341
      %v474 = vsel %vm472, 1, 0
      %v475 = vsel %vm473, 1, 0
      %vm476 = vcmp.eq.s32.totalorder %v474, 1
      %vm477 = vcmp.eq.s32.totalorder %v475, 1
      %v478 = vsel %vm476, %v465, 0.0
      %v479 = vsel %vm477, %v469, 0.0
      %480 = vrot.lane.b32.xlu0 %v284, 111
      %v481 = vpop.permute.xlu0 %480
      %482 = vrot.lane.b32.xlu0 %v285, 111
      %v483 = vpop.permute.xlu0 %482
      %vm484 = vcmask 908288
      %v485 = vsel %vm484, %v481, %v483
      %v489 = vsel %vm484, %v483, %v481
      %vm490 = vmand %vm448, %vm362
      %vm491 = vmand %vm449, %vm363
      %vm492 = vmand %vm490, %vm366
      %vm493 = vmand %vm491, %vm367
      %v494 = vsel %vm492, 1, 0
      %v495 = vsel %vm493, 1, 0
      %vm496 = vcmp.eq.s32.totalorder %v494, 1
      %vm497 = vcmp.eq.s32.totalorder %v495, 1
      %v498 = vsel %vm496, %v485, 0.0
      %v499 = vsel %vm497, %v489, 0.0
      %v500 = vpack.c.bf16 %v348, %v324
      %v501 = vpack.c.bf16 %v349, %v325
      %v502 = vpack.c.bf16 %v400, %v374
      %v503 = vpack.c.bf16 %v401, %v375
      %v504 = vpack.c.bf16 %v430, %v410
      %v505 = vpack.c.bf16 %v431, %v411
      %v506 = vpack.c.bf16 %v478, %v458
      %v507 = vpack.c.bf16 %v479, %v459
      %v508 = vpack.c.bf16 %v498, %v498
      %v509 = vpack.c.bf16 %v499, %v499
      %v510 = vld [vmem:[%s1] sm:$0xf]
      %v511 = vld [vmem:[%s1 + $0x4] sm:$0xf]
      %v512 = vld [vmem:[%s1 + $0x8] sm:$0xf]
      %v513 = vld [vmem:[%s1 + $0xc] sm:$0xf]
      %v514 = vld [vmem:[%s1 + $0x10] sm:$0xf]
      %v515 = vld [vmem:[%s1 + $0x14] sm:$0xf]
      %v516 = vld [vmem:[%s1 + $0x18] sm:$0xf]
      %v517 = vld [vmem:[%s1 + $0x1c] sm:$0xf]
      %v518 = vld [vmem:[%s2] sm:$0xff]
      %v519 = vld [vmem:[%s2 + $0x8] sm:$0xff]
      %v520 = vld [vmem:[%s2 + $0x10] sm:$0xff]
      %v521 = vld [vmem:[%s2 + $0x18] sm:$0xff]
      %v522 = vld [vmem:[%s2 + $0x20] sm:$0xff]
      %v523 = vld [vmem:[%s2 + $0x28] sm:$0xff]
      %v524 = vld [vmem:[%s2 + $0x30] sm:$0xff]
      %v525 = vld [vmem:[%s2 + $0x38] sm:$0xff]
      %527 = vset.pattern.permute.xlu0 0
      %528 = vperm.xlu0 %527, %v518
      %v529 = vpop.permute.xlu0 %528
      %532 = vset.pattern.permute.xlu0 0
      %533 = vperm.xlu0 %532, %v519
      %v534 = vpop.permute.xlu0 %533
      %537 = vset.pattern.permute.xlu0 0
      %538 = vperm.xlu0 %537, %v520
      %v539 = vpop.permute.xlu0 %538
      %542 = vset.pattern.permute.xlu0 0
      %543 = vperm.xlu0 %542, %v521
      %v544 = vpop.permute.xlu0 %543
      %547 = vset.pattern.permute.xlu0 0
      %548 = vperm.xlu0 %547, %v522
      %v549 = vpop.permute.xlu0 %548
      %552 = vset.pattern.permute.xlu0 0
      %553 = vperm.xlu0 %552, %v523
      %v554 = vpop.permute.xlu0 %553
      %557 = vset.pattern.permute.xlu0 0
      %558 = vperm.xlu0 %557, %v524
      %v559 = vpop.permute.xlu0 %558
      %562 = vset.pattern.permute.xlu0 0
      %563 = vperm.xlu0 %562, %v525
      %v564 = vpop.permute.xlu0 %563
      %v574 = vunpack.c.l.b16 %v510
      %v575 = vunpack.c.l.b16 %v511
      %v576 = vunpack.c.l.b16 %v512
      %v577 = vunpack.c.l.b16 %v513
      %v578 = vunpack.c.l.b16 %v514
      %v579 = vunpack.c.l.b16 %v515
      %v580 = vunpack.c.l.b16 %v516
      %v581 = vunpack.c.l.b16 %v517
      %v582 = vpack.c.b16 %v575, %v574
      %v583 = vpack.c.b16 %v577, %v576
      %v584 = vpack.c.b16 %v579, %v578
      %v585 = vpack.c.b16 %v581, %v580
      %vm586 = vcmask 588800
      %v588 = vsel %vm586, %v582, 0
      %v591 = vsel %vm586, %v583, 0
      %v594 = vsel %vm586, %v584, 0
      %v597 = vsel %vm586, %v585, 0
      %v600 = vsel %vm283, %v508, 0
      %v603 = vsel %vm283, %v509, 0
      %605 = vmatprep.subr.bf16.mxu0 0
      %606 = vmatpush1.bf16.msra.mxu0 0
      %607 = vmatprep.subr.bf16.mxu0 0
      %608 = vmatpush1.bf16.msra.mxu0 0
      %609 = vmatprep.subr.bf16.mxu0 0
      %610 = vmatpush1.bf16.msra.mxu0 0
      %611 = vmatprep.subr.bf16.mxu0 %v603
      %612 = vmatpush1.bf16.msra.mxu0 %v600
      %613 = vmatprep.subr.bf16.mxu0 %v507
      %614 = vmatpush1.bf16.msra.mxu0 %v506
      %615 = vmatprep.subr.bf16.mxu0 %v505
      %616 = vmatpush1.bf16.msra.mxu0 %v504
      %617 = vmatprep.subr.bf16.mxu0 %v503
      %618 = vmatpush1.bf16.msra.mxu0 %v502
      %619 = vmatprep.subr.bf16.mxu0 %v501
      %620 = vmatpush1.bf16.msra.mxu0 %v500
      %621 = vmatprep.subr.bf16.mxu0 0
      %622 = vmatpush2.bf16.msra.mxu0 0
      %623 = vmatprep.subr.bf16.mxu0 0
      %624 = vmatpush2.bf16.msra.mxu0 0
      %625 = vmatprep.subr.bf16.mxu0 0
      %626 = vmatpush2.bf16.msra.mxu0 0
      %627 = vmatprep.subr.bf16.mxu0 0
      %628 = vmatpush2.bf16.msra.mxu0 0
      %629 = vmatprep.subr.bf16.mxu0 0
      %630 = vmatpush2.bf16.msra.mxu0 0
      %631 = vmatprep.subr.bf16.mxu0 0
      %632 = vmatpush2.bf16.msra.mxu0 0
      %633 = vmatprep.subr.bf16.mxu0 0
      %634 = vmatpush2.bf16.msra.mxu0 0
      %635 = vmatprep.subr.bf16.mxu0 0
      %636 = vmatpush2.bf16.msra.mxu0 0
      %637 = vmatprep.mubr.bf16.mxu0 0
      %638 = vmatmul.mubr.bf16.gmra.mxu0 %v588
      %v639 = vpop.f32.mrf.mxu0
      %v640 = vadd.f32 %v529, %v639
      %v641 = vpop.f32.mrf.mxu0
      %v642 = vadd.f32 %v529, %v641
      %v643 = vpop.f32.mrf.mxu0
      %v644 = vadd.f32 %v534, %v643
      %v645 = vpop.f32.mrf.mxu0
      %v646 = vadd.f32 %v534, %v645
      %647 = vmatprep.mubr.bf16.mxu0 0
      %648 = vmatmul.mubr.bf16.gmra.mxu0 %v591
      %v649 = vpop.f32.mrf.mxu0
      %v650 = vadd.f32 %v539, %v649
      %v651 = vpop.f32.mrf.mxu0
      %v652 = vadd.f32 %v539, %v651
      %v653 = vpop.f32.mrf.mxu0
      %v654 = vadd.f32 %v544, %v653
      %v655 = vpop.f32.mrf.mxu0
      %v656 = vadd.f32 %v544, %v655
      %657 = vmatprep.mubr.bf16.mxu0 0
      %658 = vmatmul.mubr.bf16.gmra.mxu0 %v594
      %v659 = vpop.f32.mrf.mxu0
      %v660 = vadd.f32 %v549, %v659
      %v661 = vpop.f32.mrf.mxu0
      %v662 = vadd.f32 %v549, %v661
      %v663 = vpop.f32.mrf.mxu0
      %v664 = vadd.f32 %v554, %v663
      %v665 = vpop.f32.mrf.mxu0
      %v666 = vadd.f32 %v554, %v665
      %667 = vmatprep.mubr.bf16.mxu0 0
      %668 = vmatmul.mubr.bf16.gmra.mxu0 %v597
      %v669 = vpop.f32.mrf.mxu0
      %v670 = vadd.f32 %v559, %v669
      %v671 = vpop.f32.mrf.mxu0
      %v672 = vadd.f32 %v559, %v671
      %v673 = vpop.f32.mrf.mxu0
      %v674 = vadd.f32 %v564, %v673
      %v675 = vpop.f32.mrf.mxu0
      %v676 = vadd.f32 %v564, %v675
      %677 = vdwg.mxu0
      %v678 = vmax.f32 %v640, 0.0
      %v679 = vmax.f32 %v642, 0.0
      %v680 = vmax.f32 %v644, 0.0
      %v681 = vmax.f32 %v646, 0.0
      %v682 = vmax.f32 %v650, 0.0
      %v683 = vmax.f32 %v652, 0.0
      %v684 = vmax.f32 %v654, 0.0
      %v685 = vmax.f32 %v656, 0.0
      %v686 = vmax.f32 %v660, 0.0
      %v687 = vmax.f32 %v662, 0.0
      %v688 = vmax.f32 %v664, 0.0
      %v689 = vmax.f32 %v666, 0.0
      %v690 = vmax.f32 %v670, 0.0
      %v691 = vmax.f32 %v672, 0.0
      %v692 = vmax.f32 %v674, 0.0
      %v693 = vmax.f32 %v676, 0.0
      %702 = vrot.lane.b32.xlu0 %v679, 17
      %v703 = vpop.permute.xlu0 %702
      %704 = vrot.lane.b32.xlu0 %v681, 17
      %v705 = vpop.permute.xlu0 %704
      %706 = vrot.lane.b32.xlu0 %v683, 17
      %v707 = vpop.permute.xlu0 %706
      %708 = vrot.lane.b32.xlu0 %v685, 17
      %v709 = vpop.permute.xlu0 %708
      %710 = vrot.lane.b32.xlu0 %v687, 17
      %v711 = vpop.permute.xlu0 %710
      %712 = vrot.lane.b32.xlu0 %v689, 17
      %v713 = vpop.permute.xlu0 %712
      %714 = vrot.lane.b32.xlu0 %v691, 17
      %v715 = vpop.permute.xlu0 %714
      %716 = vrot.lane.b32.xlu0 %v693, 17
      %v717 = vpop.permute.xlu0 %716
      %734 = vrot.lane.b32.xlu0 %v678, 17
      %v735 = vpop.permute.xlu0 %734
      %736 = vrot.lane.b32.xlu0 %v680, 17
      %v737 = vpop.permute.xlu0 %736
      %738 = vrot.lane.b32.xlu0 %v682, 17
      %v739 = vpop.permute.xlu0 %738
      %740 = vrot.lane.b32.xlu0 %v684, 17
      %v741 = vpop.permute.xlu0 %740
      %742 = vrot.lane.b32.xlu0 %v686, 17
      %v743 = vpop.permute.xlu0 %742
      %744 = vrot.lane.b32.xlu0 %v688, 17
      %v745 = vpop.permute.xlu0 %744
      %746 = vrot.lane.b32.xlu0 %v690, 17
      %v747 = vpop.permute.xlu0 %746
      %748 = vrot.lane.b32.xlu0 %v692, 17
      %v749 = vpop.permute.xlu0 %748
      %v750 = vsel %vm297, %v735, %v703
      %v751 = vsel %vm297, %v737, %v705
      %v752 = vsel %vm297, %v739, %v707
      %v753 = vsel %vm297, %v741, %v709
      %v754 = vsel %vm297, %v743, %v711
      %v755 = vsel %vm297, %v745, %v713
      %v756 = vsel %vm297, %v747, %v715
      %v757 = vsel %vm297, %v749, %v717
      %v774 = vsel %vm297, %v703, %v735
      %v775 = vsel %vm297, %v705, %v737
      %v776 = vsel %vm297, %v707, %v739
      %v777 = vsel %vm297, %v709, %v741
      %v778 = vsel %vm297, %v711, %v743
      %v779 = vsel %vm297, %v713, %v745
      %v780 = vsel %vm297, %v715, %v747
      %v781 = vsel %vm297, %v717, %v749
      %v782 = vsel %vm322, %v774, 0.0
      %v783 = vsel %vm323, %v750, 0.0
      %v784 = vsel %vm322, %v775, 0.0
      %v785 = vsel %vm323, %v751, 0.0
      %v786 = vsel %vm322, %v776, 0.0
      %v787 = vsel %vm323, %v752, 0.0
      %v788 = vsel %vm322, %v777, 0.0
      %v789 = vsel %vm323, %v753, 0.0
      %v790 = vsel %vm322, %v778, 0.0
      %v791 = vsel %vm323, %v754, 0.0
      %v792 = vsel %vm322, %v779, 0.0
      %v793 = vsel %vm323, %v755, 0.0
      %v794 = vsel %vm322, %v780, 0.0
      %v795 = vsel %vm323, %v756, 0.0
      %v796 = vsel %vm322, %v781, 0.0
      %v797 = vsel %vm323, %v757, 0.0
      %798 = vrot.lane.b32.xlu0 %v679, 16
      %v799 = vpop.permute.xlu0 %798
      %800 = vrot.lane.b32.xlu0 %v681, 16
      %v801 = vpop.permute.xlu0 %800
      %802 = vrot.lane.b32.xlu0 %v683, 16
      %v803 = vpop.permute.xlu0 %802
      %804 = vrot.lane.b32.xlu0 %v685, 16
      %v805 = vpop.permute.xlu0 %804
      %806 = vrot.lane.b32.xlu0 %v687, 16
      %v807 = vpop.permute.xlu0 %806
      %808 = vrot.lane.b32.xlu0 %v689, 16
      %v809 = vpop.permute.xlu0 %808
      %810 = vrot.lane.b32.xlu0 %v691, 16
      %v811 = vpop.permute.xlu0 %810
      %812 = vrot.lane.b32.xlu0 %v693, 16
      %v813 = vpop.permute.xlu0 %812
      %822 = vrot.lane.b32.xlu0 %v678, 16
      %v823 = vpop.permute.xlu0 %822
      %824 = vrot.lane.b32.xlu0 %v680, 16
      %v825 = vpop.permute.xlu0 %824
      %826 = vrot.lane.b32.xlu0 %v682, 16
      %v827 = vpop.permute.xlu0 %826
      %828 = vrot.lane.b32.xlu0 %v684, 16
      %v829 = vpop.permute.xlu0 %828
      %830 = vrot.lane.b32.xlu0 %v686, 16
      %v831 = vpop.permute.xlu0 %830
      %832 = vrot.lane.b32.xlu0 %v688, 16
      %v833 = vpop.permute.xlu0 %832
      %834 = vrot.lane.b32.xlu0 %v690, 16
      %v835 = vpop.permute.xlu0 %834
      %836 = vrot.lane.b32.xlu0 %v692, 16
      %v837 = vpop.permute.xlu0 %836
      %v838 = vsel %vm331, %v823, %v799
      %v839 = vsel %vm331, %v825, %v801
      %v840 = vsel %vm331, %v827, %v803
      %v841 = vsel %vm331, %v829, %v805
      %v842 = vsel %vm331, %v831, %v807
      %v843 = vsel %vm331, %v833, %v809
      %v844 = vsel %vm331, %v835, %v811
      %v845 = vsel %vm331, %v837, %v813
      %v862 = vsel %vm331, %v799, %v823
      %v863 = vsel %vm331, %v801, %v825
      %v864 = vsel %vm331, %v803, %v827
      %v865 = vsel %vm331, %v805, %v829
      %v866 = vsel %vm331, %v807, %v831
      %v867 = vsel %vm331, %v809, %v833
      %v868 = vsel %vm331, %v811, %v835
      %v869 = vsel %vm331, %v813, %v837
      %v870 = vsel %vm346, %v862, 0.0
      %v871 = vsel %vm347, %v838, 0.0
      %v872 = vsel %vm346, %v863, 0.0
      %v873 = vsel %vm347, %v839, 0.0
      %v874 = vsel %vm346, %v864, 0.0
      %v875 = vsel %vm347, %v840, 0.0
      %v876 = vsel %vm346, %v865, 0.0
      %v877 = vsel %vm347, %v841, 0.0
      %v878 = vsel %vm346, %v866, 0.0
      %v879 = vsel %vm347, %v842, 0.0
      %v880 = vsel %vm346, %v867, 0.0
      %v881 = vsel %vm347, %v843, 0.0
      %v882 = vsel %vm346, %v868, 0.0
      %v883 = vsel %vm347, %v844, 0.0
      %v884 = vsel %vm346, %v869, 0.0
      %v885 = vsel %vm347, %v845, 0.0
      %886 = vrot.lane.b32.xlu0 %v679, 15
      %v887 = vpop.permute.xlu0 %886
      %888 = vrot.lane.b32.xlu0 %v681, 15
      %v889 = vpop.permute.xlu0 %888
      %890 = vrot.lane.b32.xlu0 %v683, 15
      %v891 = vpop.permute.xlu0 %890
      %892 = vrot.lane.b32.xlu0 %v685, 15
      %v893 = vpop.permute.xlu0 %892
      %894 = vrot.lane.b32.xlu0 %v687, 15
      %v895 = vpop.permute.xlu0 %894
      %896 = vrot.lane.b32.xlu0 %v689, 15
      %v897 = vpop.permute.xlu0 %896
      %898 = vrot.lane.b32.xlu0 %v691, 15
      %v899 = vpop.permute.xlu0 %898
      %900 = vrot.lane.b32.xlu0 %v693, 15
      %v901 = vpop.permute.xlu0 %900
      %910 = vrot.lane.b32.xlu0 %v678, 15
      %v911 = vpop.permute.xlu0 %910
      %912 = vrot.lane.b32.xlu0 %v680, 15
      %v913 = vpop.permute.xlu0 %912
      %914 = vrot.lane.b32.xlu0 %v682, 15
      %v915 = vpop.permute.xlu0 %914
      %916 = vrot.lane.b32.xlu0 %v684, 15
      %v917 = vpop.permute.xlu0 %916
      %918 = vrot.lane.b32.xlu0 %v686, 15
      %v919 = vpop.permute.xlu0 %918
      %920 = vrot.lane.b32.xlu0 %v688, 15
      %v921 = vpop.permute.xlu0 %920
      %922 = vrot.lane.b32.xlu0 %v690, 15
      %v923 = vpop.permute.xlu0 %922
      %924 = vrot.lane.b32.xlu0 %v692, 15
      %v925 = vpop.permute.xlu0 %924
      %v926 = vsel %vm355, %v911, %v887
      %v927 = vsel %vm355, %v913, %v889
      %v928 = vsel %vm355, %v915, %v891
      %v929 = vsel %vm355, %v917, %v893
      %v930 = vsel %vm355, %v919, %v895
      %v931 = vsel %vm355, %v921, %v897
      %v932 = vsel %vm355, %v923, %v899
      %v933 = vsel %vm355, %v925, %v901
      %v950 = vsel %vm355, %v887, %v911
      %v951 = vsel %vm355, %v889, %v913
      %v952 = vsel %vm355, %v891, %v915
      %v953 = vsel %vm355, %v893, %v917
      %v954 = vsel %vm355, %v895, %v919
      %v955 = vsel %vm355, %v897, %v921
      %v956 = vsel %vm355, %v899, %v923
      %v957 = vsel %vm355, %v901, %v925
      %v958 = vsel %vm372, %v950, 0.0
      %v959 = vsel %vm373, %v926, 0.0
      %v960 = vsel %vm372, %v951, 0.0
      %v961 = vsel %vm373, %v927, 0.0
      %v962 = vsel %vm372, %v952, 0.0
      %v963 = vsel %vm373, %v928, 0.0
      %v964 = vsel %vm372, %v953, 0.0
      %v965 = vsel %vm373, %v929, 0.0
      %v966 = vsel %vm372, %v954, 0.0
      %v967 = vsel %vm373, %v930, 0.0
      %v968 = vsel %vm372, %v955, 0.0
      %v969 = vsel %vm373, %v931, 0.0
      %v970 = vsel %vm372, %v956, 0.0
      %v971 = vsel %vm373, %v932, 0.0
      %v972 = vsel %vm372, %v957, 0.0
      %v973 = vsel %vm373, %v933, 0.0
      %974 = vrot.lane.b32.xlu0 %v679, 1
      %v975 = vpop.permute.xlu0 %974
      %976 = vrot.lane.b32.xlu0 %v681, 1
      %v977 = vpop.permute.xlu0 %976
      %978 = vrot.lane.b32.xlu0 %v683, 1
      %v979 = vpop.permute.xlu0 %978
      %980 = vrot.lane.b32.xlu0 %v685, 1
      %v981 = vpop.permute.xlu0 %980
      %982 = vrot.lane.b32.xlu0 %v687, 1
      %v983 = vpop.permute.xlu0 %982
      %984 = vrot.lane.b32.xlu0 %v689, 1
      %v985 = vpop.permute.xlu0 %984
      %986 = vrot.lane.b32.xlu0 %v691, 1
      %v987 = vpop.permute.xlu0 %986
      %988 = vrot.lane.b32.xlu0 %v693, 1
      %v989 = vpop.permute.xlu0 %988
      %998 = vrot.lane.b32.xlu0 %v678, 1
      %v999 = vpop.permute.xlu0 %998
      %1000 = vrot.lane.b32.xlu0 %v680, 1
      %v1001 = vpop.permute.xlu0 %1000
      %1002 = vrot.lane.b32.xlu0 %v682, 1
      %v1003 = vpop.permute.xlu0 %1002
      %1004 = vrot.lane.b32.xlu0 %v684, 1
      %v1005 = vpop.permute.xlu0 %1004
      %1006 = vrot.lane.b32.xlu0 %v686, 1
      %v1007 = vpop.permute.xlu0 %1006
      %1008 = vrot.lane.b32.xlu0 %v688, 1
      %v1009 = vpop.permute.xlu0 %1008
      %1010 = vrot.lane.b32.xlu0 %v690, 1
      %v1011 = vpop.permute.xlu0 %1010
      %1012 = vrot.lane.b32.xlu0 %v692, 1
      %v1013 = vpop.permute.xlu0 %1012
      %v1014 = vsel %vm381, %v999, %v975
      %v1015 = vsel %vm381, %v1001, %v977
      %v1016 = vsel %vm381, %v1003, %v979
      %v1017 = vsel %vm381, %v1005, %v981
      %v1018 = vsel %vm381, %v1007, %v983
      %v1019 = vsel %vm381, %v1009, %v985
      %v1020 = vsel %vm381, %v1011, %v987
      %v1021 = vsel %vm381, %v1013, %v989
      %v1038 = vsel %vm381, %v975, %v999
      %v1039 = vsel %vm381, %v977, %v1001
      %v1040 = vsel %vm381, %v979, %v1003
      %v1041 = vsel %vm381, %v981, %v1005
      %v1042 = vsel %vm381, %v983, %v1007
      %v1043 = vsel %vm381, %v985, %v1009
      %v1044 = vsel %vm381, %v987, %v1011
      %v1045 = vsel %vm381, %v989, %v1013
      %v1046 = vsel %vm398, %v1038, 0.0
      %v1047 = vsel %vm399, %v1014, 0.0
      %v1048 = vsel %vm398, %v1039, 0.0
      %v1049 = vsel %vm399, %v1015, 0.0
      %v1050 = vsel %vm398, %v1040, 0.0
      %v1051 = vsel %vm399, %v1016, 0.0
      %v1052 = vsel %vm398, %v1041, 0.0
      %v1053 = vsel %vm399, %v1017, 0.0
      %v1054 = vsel %vm398, %v1042, 0.0
      %v1055 = vsel %vm399, %v1018, 0.0
      %v1056 = vsel %vm398, %v1043, 0.0
      %v1057 = vsel %vm399, %v1019, 0.0
      %v1058 = vsel %vm398, %v1044, 0.0
      %v1059 = vsel %vm399, %v1020, 0.0
      %v1060 = vsel %vm398, %v1045, 0.0
      %v1061 = vsel %vm399, %v1021, 0.0
      %v1062 = vsel %vm408, %v678, 0.0
      %v1063 = vsel %vm409, %v679, 0.0
      %v1064 = vsel %vm408, %v680, 0.0
      %v1065 = vsel %vm409, %v681, 0.0
      %v1066 = vsel %vm408, %v682, 0.0
      %v1067 = vsel %vm409, %v683, 0.0
      %v1068 = vsel %vm408, %v684, 0.0
      %v1069 = vsel %vm409, %v685, 0.0
      %v1070 = vsel %vm408, %v686, 0.0
      %v1071 = vsel %vm409, %v687, 0.0
      %v1072 = vsel %vm408, %v688, 0.0
      %v1073 = vsel %vm409, %v689, 0.0
      %v1074 = vsel %vm408, %v690, 0.0
      %v1075 = vsel %vm409, %v691, 0.0
      %v1076 = vsel %vm408, %v692, 0.0
      %v1077 = vsel %vm409, %v693, 0.0
      %1078 = vrot.lane.b32.xlu0 %v678, 127
      %v1079 = vpop.permute.xlu0 %1078
      %1080 = vrot.lane.b32.xlu0 %v679, 127
      %v1081 = vpop.permute.xlu0 %1080
      %1082 = vrot.lane.b32.xlu0 %v680, 127
      %v1083 = vpop.permute.xlu0 %1082
      %1084 = vrot.lane.b32.xlu0 %v681, 127
      %v1085 = vpop.permute.xlu0 %1084
      %1086 = vrot.lane.b32.xlu0 %v682, 127
      %v1087 = vpop.permute.xlu0 %1086
      %1088 = vrot.lane.b32.xlu0 %v683, 127
      %v1089 = vpop.permute.xlu0 %1088
      %1090 = vrot.lane.b32.xlu0 %v684, 127
      %v1091 = vpop.permute.xlu0 %1090
      %1092 = vrot.lane.b32.xlu0 %v685, 127
      %v1093 = vpop.permute.xlu0 %1092
      %1094 = vrot.lane.b32.xlu0 %v686, 127
      %v1095 = vpop.permute.xlu0 %1094
      %1096 = vrot.lane.b32.xlu0 %v687, 127
      %v1097 = vpop.permute.xlu0 %1096
      %1098 = vrot.lane.b32.xlu0 %v688, 127
      %v1099 = vpop.permute.xlu0 %1098
      %1100 = vrot.lane.b32.xlu0 %v689, 127
      %v1101 = vpop.permute.xlu0 %1100
      %1102 = vrot.lane.b32.xlu0 %v690, 127
      %v1103 = vpop.permute.xlu0 %1102
      %1104 = vrot.lane.b32.xlu0 %v691, 127
      %v1105 = vpop.permute.xlu0 %1104
      %1106 = vrot.lane.b32.xlu0 %v692, 127
      %v1107 = vpop.permute.xlu0 %1106
      %1108 = vrot.lane.b32.xlu0 %v693, 127
      %v1109 = vpop.permute.xlu0 %1108
      %v1110 = vsel %vm416, %v1079, %v1081
      %v1111 = vsel %vm416, %v1083, %v1085
      %v1112 = vsel %vm416, %v1087, %v1089
      %v1113 = vsel %vm416, %v1091, %v1093
      %v1114 = vsel %vm416, %v1095, %v1097
      %v1115 = vsel %vm416, %v1099, %v1101
      %v1116 = vsel %vm416, %v1103, %v1105
      %v1117 = vsel %vm416, %v1107, %v1109
      %v1142 = vsel %vm416, %v1081, %v1079
      %v1143 = vsel %vm416, %v1085, %v1083
      %v1144 = vsel %vm416, %v1089, %v1087
      %v1145 = vsel %vm416, %v1093, %v1091
      %v1146 = vsel %vm416, %v1097, %v1095
      %v1147 = vsel %vm416, %v1101, %v1099
      %v1148 = vsel %vm416, %v1105, %v1103
      %v1149 = vsel %vm416, %v1109, %v1107
      %v1150 = vsel %vm428, %v1110, 0.0
      %v1151 = vsel %vm429, %v1142, 0.0
      %v1152 = vsel %vm428, %v1111, 0.0
      %v1153 = vsel %vm429, %v1143, 0.0
      %v1154 = vsel %vm428, %v1112, 0.0
      %v1155 = vsel %vm429, %v1144, 0.0
      %v1156 = vsel %vm428, %v1113, 0.0
      %v1157 = vsel %vm429, %v1145, 0.0
      %v1158 = vsel %vm428, %v1114, 0.0
      %v1159 = vsel %vm429, %v1146, 0.0
      %v1160 = vsel %vm428, %v1115, 0.0
      %v1161 = vsel %vm429, %v1147, 0.0
      %v1162 = vsel %vm428, %v1116, 0.0
      %v1163 = vsel %vm429, %v1148, 0.0
      %v1164 = vsel %vm428, %v1117, 0.0
      %v1165 = vsel %vm429, %v1149, 0.0
      %1166 = vrot.lane.b32.xlu0 %v678, 113
      %v1167 = vpop.permute.xlu0 %1166
      %1168 = vrot.lane.b32.xlu0 %v679, 113
      %v1169 = vpop.permute.xlu0 %1168
      %1170 = vrot.lane.b32.xlu0 %v680, 113
      %v1171 = vpop.permute.xlu0 %1170
      %1172 = vrot.lane.b32.xlu0 %v681, 113
      %v1173 = vpop.permute.xlu0 %1172
      %1174 = vrot.lane.b32.xlu0 %v682, 113
      %v1175 = vpop.permute.xlu0 %1174
      %1176 = vrot.lane.b32.xlu0 %v683, 113
      %v1177 = vpop.permute.xlu0 %1176
      %1178 = vrot.lane.b32.xlu0 %v684, 113
      %v1179 = vpop.permute.xlu0 %1178
      %1180 = vrot.lane.b32.xlu0 %v685, 113
      %v1181 = vpop.permute.xlu0 %1180
      %1182 = vrot.lane.b32.xlu0 %v686, 113
      %v1183 = vpop.permute.xlu0 %1182
      %1184 = vrot.lane.b32.xlu0 %v687, 113
      %v1185 = vpop.permute.xlu0 %1184
      %1186 = vrot.lane.b32.xlu0 %v688, 113
      %v1187 = vpop.permute.xlu0 %1186
      %1188 = vrot.lane.b32.xlu0 %v689, 113
      %v1189 = vpop.permute.xlu0 %1188
      %1190 = vrot.lane.b32.xlu0 %v690, 113
      %v1191 = vpop.permute.xlu0 %1190
      %1192 = vrot.lane.b32.xlu0 %v691, 113
      %v1193 = vpop.permute.xlu0 %1192
      %1194 = vrot.lane.b32.xlu0 %v692, 113
      %v1195 = vpop.permute.xlu0 %1194
      %1196 = vrot.lane.b32.xlu0 %v693, 113
      %v1197 = vpop.permute.xlu0 %1196
      %v1198 = vsel %vm436, %v1167, %v1169
      %v1199 = vsel %vm436, %v1171, %v1173
      %v1200 = vsel %vm436, %v1175, %v1177
      %v1201 = vsel %vm436, %v1179, %v1181
      %v1202 = vsel %vm436, %v1183, %v1185
      %v1203 = vsel %vm436, %v1187, %v1189
      %v1204 = vsel %vm436, %v1191, %v1193
      %v1205 = vsel %vm436, %v1195, %v1197
      %v1230 = vsel %vm436, %v1169, %v1167
      %v1231 = vsel %vm436, %v1173, %v1171
      %v1232 = vsel %vm436, %v1177, %v1175
      %v1233 = vsel %vm436, %v1181, %v1179
      %v1234 = vsel %vm436, %v1185, %v1183
      %v1235 = vsel %vm436, %v1189, %v1187
      %v1236 = vsel %vm436, %v1193, %v1191
      %v1237 = vsel %vm436, %v1197, %v1195
      %v1238 = vsel %vm456, %v1198, 0.0
      %v1239 = vsel %vm457, %v1230, 0.0
      %v1240 = vsel %vm456, %v1199, 0.0
      %v1241 = vsel %vm457, %v1231, 0.0
      %v1242 = vsel %vm456, %v1200, 0.0
      %v1243 = vsel %vm457, %v1232, 0.0
      %v1244 = vsel %vm456, %v1201, 0.0
      %v1245 = vsel %vm457, %v1233, 0.0
      %v1246 = vsel %vm456, %v1202, 0.0
      %v1247 = vsel %vm457, %v1234, 0.0
      %v1248 = vsel %vm456, %v1203, 0.0
      %v1249 = vsel %vm457, %v1235, 0.0
      %v1250 = vsel %vm456, %v1204, 0.0
      %v1251 = vsel %vm457, %v1236, 0.0
      %v1252 = vsel %vm456, %v1205, 0.0
      %v1253 = vsel %vm457, %v1237, 0.0
      %1254 = vrot.lane.b32.xlu0 %v678, 112
      %v1255 = vpop.permute.xlu0 %1254
      %1256 = vrot.lane.b32.xlu0 %v679, 112
      %v1257 = vpop.permute.xlu0 %1256
      %1258 = vrot.lane.b32.xlu0 %v680, 112
      %v1259 = vpop.permute.xlu0 %1258
      %1260 = vrot.lane.b32.xlu0 %v681, 112
      %v1261 = vpop.permute.xlu0 %1260
      %1262 = vrot.lane.b32.xlu0 %v682, 112
      %v1263 = vpop.permute.xlu0 %1262
      %1264 = vrot.lane.b32.xlu0 %v683, 112
      %v1265 = vpop.permute.xlu0 %1264
      %1266 = vrot.lane.b32.xlu0 %v684, 112
      %v1267 = vpop.permute.xlu0 %1266
      %1268 = vrot.lane.b32.xlu0 %v685, 112
      %v1269 = vpop.permute.xlu0 %1268
      %1270 = vrot.lane.b32.xlu0 %v686, 112
      %v1271 = vpop.permute.xlu0 %1270
      %1272 = vrot.lane.b32.xlu0 %v687, 112
      %v1273 = vpop.permute.xlu0 %1272
      %1274 = vrot.lane.b32.xlu0 %v688, 112
      %v1275 = vpop.permute.xlu0 %1274
      %1276 = vrot.lane.b32.xlu0 %v689, 112
      %v1277 = vpop.permute.xlu0 %1276
      %1278 = vrot.lane.b32.xlu0 %v690, 112
      %v1279 = vpop.permute.xlu0 %1278
      %1280 = vrot.lane.b32.xlu0 %v691, 112
      %v1281 = vpop.permute.xlu0 %1280
      %1282 = vrot.lane.b32.xlu0 %v692, 112
      %v1283 = vpop.permute.xlu0 %1282
      %1284 = vrot.lane.b32.xlu0 %v693, 112
      %v1285 = vpop.permute.xlu0 %1284
      %v1286 = vsel %vm464, %v1255, %v1257
      %v1287 = vsel %vm464, %v1259, %v1261
      %v1288 = vsel %vm464, %v1263, %v1265
      %v1289 = vsel %vm464, %v1267, %v1269
      %v1290 = vsel %vm464, %v1271, %v1273
      %v1291 = vsel %vm464, %v1275, %v1277
      %v1292 = vsel %vm464, %v1279, %v1281
      %v1293 = vsel %vm464, %v1283, %v1285
      %v1318 = vsel %vm464, %v1257, %v1255
      %v1319 = vsel %vm464, %v1261, %v1259
      %v1320 = vsel %vm464, %v1265, %v1263
      %v1321 = vsel %vm464, %v1269, %v1267
      %v1322 = vsel %vm464, %v1273, %v1271
      %v1323 = vsel %vm464, %v1277, %v1275
      %v1324 = vsel %vm464, %v1281, %v1279
      %v1325 = vsel %vm464, %v1285, %v1283
      %v1326 = vsel %vm476, %v1286, 0.0
      %v1327 = vsel %vm477, %v1318, 0.0
      %v1328 = vsel %vm476, %v1287, 0.0
      %v1329 = vsel %vm477, %v1319, 0.0
      %v1330 = vsel %vm476, %v1288, 0.0
      %v1331 = vsel %vm477, %v1320, 0.0
      %v1332 = vsel %vm476, %v1289, 0.0
      %v1333 = vsel %vm477, %v1321, 0.0
      %v1334 = vsel %vm476, %v1290, 0.0
      %v1335 = vsel %vm477, %v1322, 0.0
      %v1336 = vsel %vm476, %v1291, 0.0
      %v1337 = vsel %vm477, %v1323, 0.0
      %v1338 = vsel %vm476, %v1292, 0.0
      %v1339 = vsel %vm477, %v1324, 0.0
      %v1340 = vsel %vm476, %v1293, 0.0
      %v1341 = vsel %vm477, %v1325, 0.0
      %1342 = vrot.lane.b32.xlu0 %v678, 111
      %v1343 = vpop.permute.xlu0 %1342
      %1344 = vrot.lane.b32.xlu0 %v679, 111
      %v1345 = vpop.permute.xlu0 %1344
      %1346 = vrot.lane.b32.xlu0 %v680, 111
      %v1347 = vpop.permute.xlu0 %1346
      %1348 = vrot.lane.b32.xlu0 %v681, 111
      %v1349 = vpop.permute.xlu0 %1348
      %1350 = vrot.lane.b32.xlu0 %v682, 111
      %v1351 = vpop.permute.xlu0 %1350
      %1352 = vrot.lane.b32.xlu0 %v683, 111
      %v1353 = vpop.permute.xlu0 %1352
      %1354 = vrot.lane.b32.xlu0 %v684, 111
      %v1355 = vpop.permute.xlu0 %1354
      %1356 = vrot.lane.b32.xlu0 %v685, 111
      %v1357 = vpop.permute.xlu0 %1356
      %1358 = vrot.lane.b32.xlu0 %v686, 111
      %v1359 = vpop.permute.xlu0 %1358
      %1360 = vrot.lane.b32.xlu0 %v687, 111
      %v1361 = vpop.permute.xlu0 %1360
      %1362 = vrot.lane.b32.xlu0 %v688, 111
      %v1363 = vpop.permute.xlu0 %1362
      %1364 = vrot.lane.b32.xlu0 %v689, 111
      %v1365 = vpop.permute.xlu0 %1364
      %1366 = vrot.lane.b32.xlu0 %v690, 111
      %v1367 = vpop.permute.xlu0 %1366
      %1368 = vrot.lane.b32.xlu0 %v691, 111
      %v1369 = vpop.permute.xlu0 %1368
      %1370 = vrot.lane.b32.xlu0 %v692, 111
      %v1371 = vpop.permute.xlu0 %1370
      %1372 = vrot.lane.b32.xlu0 %v693, 111
      %v1373 = vpop.permute.xlu0 %1372
      %v1374 = vsel %vm484, %v1343, %v1345
      %v1375 = vsel %vm484, %v1347, %v1349
      %v1376 = vsel %vm484, %v1351, %v1353
      %v1377 = vsel %vm484, %v1355, %v1357
      %v1378 = vsel %vm484, %v1359, %v1361
      %v1379 = vsel %vm484, %v1363, %v1365
      %v1380 = vsel %vm484, %v1367, %v1369
      %v1381 = vsel %vm484, %v1371, %v1373
      %v1406 = vsel %vm484, %v1345, %v1343
      %v1407 = vsel %vm484, %v1349, %v1347
      %v1408 = vsel %vm484, %v1353, %v1351
      %v1409 = vsel %vm484, %v1357, %v1355
      %v1410 = vsel %vm484, %v1361, %v1359
      %v1411 = vsel %vm484, %v1365, %v1363
      %v1412 = vsel %vm484, %v1369, %v1367
      %v1413 = vsel %vm484, %v1373, %v1371
      %v1414 = vsel %vm496, %v1374, 0.0
      %v1415 = vsel %vm497, %v1406, 0.0
      %v1416 = vsel %vm496, %v1375, 0.0
      %v1417 = vsel %vm497, %v1407, 0.0
      %v1418 = vsel %vm496, %v1376, 0.0
      %v1419 = vsel %vm497, %v1408, 0.0
      %v1420 = vsel %vm496, %v1377, 0.0
      %v1421 = vsel %vm497, %v1409, 0.0
      %v1422 = vsel %vm496, %v1378, 0.0
      %v1423 = vsel %vm497, %v1410, 0.0
      %v1424 = vsel %vm496, %v1379, 0.0
      %v1425 = vsel %vm497, %v1411, 0.0
      %v1426 = vsel %vm496, %v1380, 0.0
      %v1427 = vsel %vm497, %v1412, 0.0
      %v1428 = vsel %vm496, %v1381, 0.0
      %v1429 = vsel %vm497, %v1413, 0.0
      %v1430 = vpack.c.bf16 %v784, %v782
      %v1431 = vpack.c.bf16 %v785, %v783
      %v1432 = vpack.c.bf16 %v788, %v786
      %v1433 = vpack.c.bf16 %v789, %v787
      %v1434 = vpack.c.bf16 %v792, %v790
      %v1435 = vpack.c.bf16 %v793, %v791
      %v1436 = vpack.c.bf16 %v796, %v794
      %v1437 = vpack.c.bf16 %v797, %v795
      %v1438 = vpack.c.bf16 %v872, %v870
      %v1439 = vpack.c.bf16 %v873, %v871
      %v1440 = vpack.c.bf16 %v876, %v874
      %v1441 = vpack.c.bf16 %v877, %v875
      %v1442 = vpack.c.bf16 %v880, %v878
      %v1443 = vpack.c.bf16 %v881, %v879
      %v1444 = vpack.c.bf16 %v884, %v882
      %v1445 = vpack.c.bf16 %v885, %v883
      %v1446 = vpack.c.bf16 %v960, %v958
      %v1447 = vpack.c.bf16 %v961, %v959
      %v1448 = vpack.c.bf16 %v964, %v962
      %v1449 = vpack.c.bf16 %v965, %v963
      %v1450 = vpack.c.bf16 %v968, %v966
      %v1451 = vpack.c.bf16 %v969, %v967
      %v1452 = vpack.c.bf16 %v972, %v970
      %v1453 = vpack.c.bf16 %v973, %v971
      %v1454 = vpack.c.bf16 %v1048, %v1046
      %v1455 = vpack.c.bf16 %v1049, %v1047
      %v1456 = vpack.c.bf16 %v1052, %v1050
      %v1457 = vpack.c.bf16 %v1053, %v1051
      %v1458 = vpack.c.bf16 %v1056, %v1054
      %v1459 = vpack.c.bf16 %v1057, %v1055
      %v1460 = vpack.c.bf16 %v1060, %v1058
      %v1461 = vpack.c.bf16 %v1061, %v1059
      %v1462 = vpack.c.bf16 %v1064, %v1062
      %v1463 = vpack.c.bf16 %v1065, %v1063
      %v1464 = vpack.c.bf16 %v1068, %v1066
      %v1465 = vpack.c.bf16 %v1069, %v1067
      %v1466 = vpack.c.bf16 %v1072, %v1070
      %v1467 = vpack.c.bf16 %v1073, %v1071
      %v1468 = vpack.c.bf16 %v1076, %v1074
      %v1469 = vpack.c.bf16 %v1077, %v1075
      %v1470 = vpack.c.bf16 %v1152, %v1150
      %v1471 = vpack.c.bf16 %v1153, %v1151
      %v1472 = vpack.c.bf16 %v1156, %v1154
      %v1473 = vpack.c.bf16 %v1157, %v1155
      %v1474 = vpack.c.bf16 %v1160, %v1158
      %v1475 = vpack.c.bf16 %v1161, %v1159
      %v1476 = vpack.c.bf16 %v1164, %v1162
      %v1477 = vpack.c.bf16 %v1165, %v1163
      %v1478 = vpack.c.bf16 %v1240, %v1238
      %v1479 = vpack.c.bf16 %v1241, %v1239
      %v1480 = vpack.c.bf16 %v1244, %v1242
      %v1481 = vpack.c.bf16 %v1245, %v1243
      %v1482 = vpack.c.bf16 %v1248, %v1246
      %v1483 = vpack.c.bf16 %v1249, %v1247
      %v1484 = vpack.c.bf16 %v1252, %v1250
      %v1485 = vpack.c.bf16 %v1253, %v1251
      %v1486 = vpack.c.bf16 %v1328, %v1326
      %v1487 = vpack.c.bf16 %v1329, %v1327
      %v1488 = vpack.c.bf16 %v1332, %v1330
      %v1489 = vpack.c.bf16 %v1333, %v1331
      %v1490 = vpack.c.bf16 %v1336, %v1334
      %v1491 = vpack.c.bf16 %v1337, %v1335
      %v1492 = vpack.c.bf16 %v1340, %v1338
      %v1493 = vpack.c.bf16 %v1341, %v1339
      %v1494 = vpack.c.bf16 %v1416, %v1414
      %v1495 = vpack.c.bf16 %v1417, %v1415
      %v1496 = vpack.c.bf16 %v1420, %v1418
      %v1497 = vpack.c.bf16 %v1421, %v1419
      %v1498 = vpack.c.bf16 %v1424, %v1422
      %v1499 = vpack.c.bf16 %v1425, %v1423
      %v1500 = vpack.c.bf16 %v1428, %v1426
      %v1501 = vpack.c.bf16 %v1429, %v1427
      %v1502 = vld [vmem:[%s3] sm:$0xff]
      %v1503 = vld [vmem:[%s3 + $0x8] sm:$0xff]
      %v1504 = vld [vmem:[%s3 + $0x10] sm:$0xf]
      %v1505 = vld [vmem:[%s3 + $0x14] sm:$0xff]
      %v1506 = vld [vmem:[%s3 + $0x1c] sm:$0xff]
      %v1507 = vld [vmem:[%s3 + $0x24] sm:$0xf]
      %v1508 = vld [vmem:[%s3 + $0x28] sm:$0xff]
      %v1509 = vld [vmem:[%s3 + $0x30] sm:$0xff]
      %v1510 = vld [vmem:[%s3 + $0x38] sm:$0xf]
      %v1511 = vld [vmem:[%s3 + $0x3c] sm:$0xff]
      %v1512 = vld [vmem:[%s3 + $0x44] sm:$0xff]
      %v1513 = vld [vmem:[%s3 + $0x4c] sm:$0xf]
      %v1514 = vld [vmem:[%s3 + $0x50] sm:$0xff]
      %v1515 = vld [vmem:[%s3 + $0x58] sm:$0xff]
      %v1516 = vld [vmem:[%s3 + $0x60] sm:$0xf]
      %v1517 = vld [vmem:[%s3 + $0x64] sm:$0xff]
      %v1518 = vld [vmem:[%s3 + $0x6c] sm:$0xff]
      %v1519 = vld [vmem:[%s3 + $0x74] sm:$0xf]
      %v1520 = vld [vmem:[%s3 + $0x78] sm:$0xff]
      %v1521 = vld [vmem:[%s3 + $0x80] sm:$0xff]
      %v1522 = vld [vmem:[%s3 + $0x88] sm:$0xf]
      %v1523 = vld [vmem:[%s3 + $0x8c] sm:$0xff]
      %v1524 = vld [vmem:[%s3 + $0x94] sm:$0xff]
      %v1525 = vld [vmem:[%s3 + $0x9c] sm:$0xf]
      %v1526 = vld [vmem:[%s4] sm:$0xff]
      %v1527 = vld [vmem:[%s4 + $0x8] sm:$0xff]
      %v1528 = vld [vmem:[%s4 + $0x10] sm:$0xff]
      %v1529 = vld [vmem:[%s4 + $0x18] sm:$0xff]
      %v1530 = vld [vmem:[%s4 + $0x20] sm:$0xff]
      %v1531 = vld [vmem:[%s4 + $0x28] sm:$0xff]
      %v1532 = vld [vmem:[%s4 + $0x30] sm:$0xff]
      %v1533 = vld [vmem:[%s4 + $0x38] sm:$0xff]
      %1535 = vset.pattern.permute.xlu0 0
      %1536 = vperm.xlu0 %1535, %v1526
      %v1537 = vpop.permute.xlu0 %1536
      %1540 = vset.pattern.permute.xlu0 0
      %1541 = vperm.xlu0 %1540, %v1527
      %v1542 = vpop.permute.xlu0 %1541
      %1545 = vset.pattern.permute.xlu0 0
      %1546 = vperm.xlu0 %1545, %v1528
      %v1547 = vpop.permute.xlu0 %1546
      %1550 = vset.pattern.permute.xlu0 0
      %1551 = vperm.xlu0 %1550, %v1529
      %v1552 = vpop.permute.xlu0 %1551
      %1555 = vset.pattern.permute.xlu0 0
      %1556 = vperm.xlu0 %1555, %v1530
      %v1557 = vpop.permute.xlu0 %1556
      %1560 = vset.pattern.permute.xlu0 0
      %1561 = vperm.xlu0 %1560, %v1531
      %v1562 = vpop.permute.xlu0 %1561
      %1565 = vset.pattern.permute.xlu0 0
      %1566 = vperm.xlu0 %1565, %v1532
      %v1567 = vpop.permute.xlu0 %1566
      %1570 = vset.pattern.permute.xlu0 0
      %1571 = vperm.xlu0 %1570, %v1533
      %v1572 = vpop.permute.xlu0 %1571
      %v1598 = vunpack.c.l.b16 %v1502
      %v1599 = vunpack.c.h.b16 %v1502
      %v1600 = vunpack.c.l.b16 %v1503
      %v1601 = vunpack.c.h.b16 %v1503
      %v1602 = vunpack.c.l.b16 %v1504
      %v1603 = vunpack.c.l.b16 %v1505
      %v1604 = vunpack.c.h.b16 %v1505
      %v1605 = vunpack.c.l.b16 %v1506
      %v1606 = vunpack.c.h.b16 %v1506
      %v1607 = vunpack.c.l.b16 %v1507
      %v1608 = vunpack.c.l.b16 %v1508
      %v1609 = vunpack.c.h.b16 %v1508
      %v1610 = vunpack.c.l.b16 %v1509
      %v1611 = vunpack.c.h.b16 %v1509
      %v1612 = vunpack.c.l.b16 %v1510
      %v1613 = vunpack.c.l.b16 %v1511
      %v1614 = vunpack.c.h.b16 %v1511
      %v1615 = vunpack.c.l.b16 %v1512
      %v1616 = vunpack.c.h.b16 %v1512
      %v1617 = vunpack.c.l.b16 %v1513
      %v1618 = vunpack.c.l.b16 %v1514
      %v1619 = vunpack.c.h.b16 %v1514
      %v1620 = vunpack.c.l.b16 %v1515
      %v1621 = vunpack.c.h.b16 %v1515
      %v1622 = vunpack.c.l.b16 %v1516
      %v1623 = vunpack.c.l.b16 %v1517
      %v1624 = vunpack.c.h.b16 %v1517
      %v1625 = vunpack.c.l.b16 %v1518
      %v1626 = vunpack.c.h.b16 %v1518
      %v1627 = vunpack.c.l.b16 %v1519
      %v1628 = vunpack.c.l.b16 %v1520
      %v1629 = vunpack.c.h.b16 %v1520
      %v1630 = vunpack.c.l.b16 %v1521
      %v1631 = vunpack.c.h.b16 %v1521
      %v1632 = vunpack.c.l.b16 %v1522
      %v1633 = vunpack.c.l.b16 %v1523
      %v1634 = vunpack.c.h.b16 %v1523
      %v1635 = vunpack.c.l.b16 %v1524
      %v1636 = vunpack.c.h.b16 %v1524
      %v1637 = vunpack.c.l.b16 %v1525
      %v1638 = vpack.c.b16 %v1603, %v1598
      %v1639 = vpack.c.b16 %v1604, %v1599
      %v1640 = vpack.c.b16 %v1605, %v1600
      %v1641 = vpack.c.b16 %v1606, %v1601
      %v1642 = vpack.c.b16 %v1607, %v1602
      %v1643 = vpack.c.b16 %v1613, %v1608
      %v1644 = vpack.c.b16 %v1614, %v1609
      %v1645 = vpack.c.b16 %v1615, %v1610
      %v1646 = vpack.c.b16 %v1616, %v1611
      %v1647 = vpack.c.b16 %v1617, %v1612
      %v1648 = vpack.c.b16 %v1623, %v1618
      %v1649 = vpack.c.b16 %v1624, %v1619
      %v1650 = vpack.c.b16 %v1625, %v1620
      %v1651 = vpack.c.b16 %v1626, %v1621
      %v1652 = vpack.c.b16 %v1627, %v1622
      %v1653 = vpack.c.b16 %v1633, %v1628
      %v1654 = vpack.c.b16 %v1634, %v1629
      %v1655 = vpack.c.b16 %v1635, %v1630
      %v1656 = vpack.c.b16 %v1636, %v1631
      %v1657 = vpack.c.b16 %v1637, %v1632
      %vm1674 = vcmask 523264
      %v1676 = vsel %vm1674, %v1642, 0
      %v1679 = vsel %vm1674, %v1647, 0
      %v1682 = vsel %vm1674, %v1652, 0
      %v1685 = vsel %vm1674, %v1657, 0
      %1687 = vmatprep.subr.bf16.mxu0 %v1445
      %1688 = vmatpush1.bf16.msra.mxu0 %v1444
      %1689 = vmatprep.subr.bf16.mxu0 %v1443
      %1690 = vmatpush1.bf16.msra.mxu0 %v1442
      %1691 = vmatprep.subr.bf16.mxu0 %v1441
      %1692 = vmatpush1.bf16.msra.mxu0 %v1440
      %1693 = vmatprep.subr.bf16.mxu0 %v1439
      %1694 = vmatpush1.bf16.msra.mxu0 %v1438
      %1695 = vmatprep.subr.bf16.mxu0 %v1437
      %1696 = vmatpush1.bf16.msra.mxu0 %v1436
      %1697 = vmatprep.subr.bf16.mxu0 %v1435
      %1698 = vmatpush1.bf16.msra.mxu0 %v1434
      %1699 = vmatprep.subr.bf16.mxu0 %v1433
      %1700 = vmatpush1.bf16.msra.mxu0 %v1432
      %1701 = vmatprep.subr.bf16.mxu0 %v1431
      %1702 = vmatpush1.bf16.msra.mxu0 %v1430
      %1703 = vmatprep.subr.bf16.mxu0 %v1461
      %1704 = vmatpush2.bf16.msra.mxu0 %v1460
      %1705 = vmatprep.subr.bf16.mxu0 %v1459
      %1706 = vmatpush2.bf16.msra.mxu0 %v1458
      %1707 = vmatprep.subr.bf16.mxu0 %v1457
      %1708 = vmatpush2.bf16.msra.mxu0 %v1456
      %1709 = vmatprep.subr.bf16.mxu0 %v1455
      %1710 = vmatpush2.bf16.msra.mxu0 %v1454
      %1711 = vmatprep.subr.bf16.mxu0 %v1453
      %1712 = vmatpush2.bf16.msra.mxu0 %v1452
      %1713 = vmatprep.subr.bf16.mxu0 %v1451
      %1714 = vmatpush2.bf16.msra.mxu0 %v1450
      %1715 = vmatprep.subr.bf16.mxu0 %v1449
      %1716 = vmatpush2.bf16.msra.mxu0 %v1448
      %1717 = vmatprep.subr.bf16.mxu0 %v1447
      %1718 = vmatpush2.bf16.msra.mxu0 %v1446
      %1719 = vmatprep.mubr.bf16.mxu0 %v1639
      %1720 = vmatmul.mubr.bf16.gmra.mxu0 %v1638
      %v1721 = vpop.f32.mrf.mxu0
      %v1722 = vadd.f32 %v1537, %v1721
      %v1723 = vpop.f32.mrf.mxu0
      %v1724 = vadd.f32 %v1537, %v1723
      %v1725 = vpop.f32.mrf.mxu0
      %v1726 = vadd.f32 %v1542, %v1725
      %v1727 = vpop.f32.mrf.mxu0
      %v1728 = vadd.f32 %v1542, %v1727
      %1729 = vmatprep.mubr.bf16.mxu0 %v1644
      %1730 = vmatmul.mubr.bf16.gmra.mxu0 %v1643
      %v1731 = vpop.f32.mrf.mxu0
      %v1732 = vadd.f32 %v1547, %v1731
      %v1733 = vpop.f32.mrf.mxu0
      %v1734 = vadd.f32 %v1547, %v1733
      %v1735 = vpop.f32.mrf.mxu0
      %v1736 = vadd.f32 %v1552, %v1735
      %v1737 = vpop.f32.mrf.mxu0
      %v1738 = vadd.f32 %v1552, %v1737
      %1739 = vmatprep.mubr.bf16.mxu0 %v1649
      %1740 = vmatmul.mubr.bf16.gmra.mxu0 %v1648
      %v1741 = vpop.f32.mrf.mxu0
      %v1742 = vadd.f32 %v1557, %v1741
      %v1743 = vpop.f32.mrf.mxu0
      %v1744 = vadd.f32 %v1557, %v1743
      %v1745 = vpop.f32.mrf.mxu0
      %v1746 = vadd.f32 %v1562, %v1745
      %v1747 = vpop.f32.mrf.mxu0
      %v1748 = vadd.f32 %v1562, %v1747
      %1749 = vmatprep.mubr.bf16.mxu0 %v1654
      %1750 = vmatmul.mubr.bf16.gmra.mxu0 %v1653
      %v1751 = vpop.f32.mrf.mxu0
      %v1752 = vadd.f32 %v1567, %v1751
      %v1753 = vpop.f32.mrf.mxu0
      %v1754 = vadd.f32 %v1567, %v1753
      %v1755 = vpop.f32.mrf.mxu0
      %v1756 = vadd.f32 %v1572, %v1755
      %v1757 = vpop.f32.mrf.mxu0
      %v1758 = vadd.f32 %v1572, %v1757
      %1759 = vdwg.mxu0
      %1760 = vmatprep.subr.bf16.mxu0 %v1477
      %1761 = vmatpush1.bf16.msra.mxu0 %v1476
      %1762 = vmatprep.subr.bf16.mxu0 %v1475
      %1763 = vmatpush1.bf16.msra.mxu0 %v1474
      %1764 = vmatprep.subr.bf16.mxu0 %v1473
      %1765 = vmatpush1.bf16.msra.mxu0 %v1472
      %1766 = vmatprep.subr.bf16.mxu0 %v1471
      %1767 = vmatpush1.bf16.msra.mxu0 %v1470
      %1768 = vmatprep.subr.bf16.mxu0 %v1469
      %1769 = vmatpush1.bf16.msra.mxu0 %v1468
      %1770 = vmatprep.subr.bf16.mxu0 %v1467
      %1771 = vmatpush1.bf16.msra.mxu0 %v1466
      %1772 = vmatprep.subr.bf16.mxu0 %v1465
      %1773 = vmatpush1.bf16.msra.mxu0 %v1464
      %1774 = vmatprep.subr.bf16.mxu0 %v1463
      %1775 = vmatpush1.bf16.msra.mxu0 %v1462
      %1776 = vmatprep.subr.bf16.mxu0 %v1493
      %1777 = vmatpush2.bf16.msra.mxu0 %v1492
      %1778 = vmatprep.subr.bf16.mxu0 %v1491
      %1779 = vmatpush2.bf16.msra.mxu0 %v1490
      %1780 = vmatprep.subr.bf16.mxu0 %v1489
      %1781 = vmatpush2.bf16.msra.mxu0 %v1488
      %1782 = vmatprep.subr.bf16.mxu0 %v1487
      %1783 = vmatpush2.bf16.msra.mxu0 %v1486
      %1784 = vmatprep.subr.bf16.mxu0 %v1485
      %1785 = vmatpush2.bf16.msra.mxu0 %v1484
      %1786 = vmatprep.subr.bf16.mxu0 %v1483
      %1787 = vmatpush2.bf16.msra.mxu0 %v1482
      %1788 = vmatprep.subr.bf16.mxu0 %v1481
      %1789 = vmatpush2.bf16.msra.mxu0 %v1480
      %1790 = vmatprep.subr.bf16.mxu0 %v1479
      %1791 = vmatpush2.bf16.msra.mxu0 %v1478
      %1792 = vmatprep.mubr.bf16.mxu0 %v1641
      %1793 = vmatmul.mubr.bf16.gmra.mxu0 %v1640
      %v1794 = vpop.f32.mrf.mxu0
      %v1795 = vadd.f32 %v1722, %v1794
      %v1796 = vpop.f32.mrf.mxu0
      %v1797 = vadd.f32 %v1724, %v1796
      %v1798 = vpop.f32.mrf.mxu0
      %v1799 = vadd.f32 %v1726, %v1798
      %v1800 = vpop.f32.mrf.mxu0
      %v1801 = vadd.f32 %v1728, %v1800
      %1802 = vmatprep.mubr.bf16.mxu0 %v1646
      %1803 = vmatmul.mubr.bf16.gmra.mxu0 %v1645
      %v1804 = vpop.f32.mrf.mxu0
      %v1805 = vadd.f32 %v1732, %v1804
      %v1806 = vpop.f32.mrf.mxu0
      %v1807 = vadd.f32 %v1734, %v1806
      %v1808 = vpop.f32.mrf.mxu0
      %v1809 = vadd.f32 %v1736, %v1808
      %v1810 = vpop.f32.mrf.mxu0
      %v1811 = vadd.f32 %v1738, %v1810
      %1812 = vmatprep.mubr.bf16.mxu0 %v1651
      %1813 = vmatmul.mubr.bf16.gmra.mxu0 %v1650
      %v1814 = vpop.f32.mrf.mxu0
      %v1815 = vadd.f32 %v1742, %v1814
      %v1816 = vpop.f32.mrf.mxu0
      %v1817 = vadd.f32 %v1744, %v1816
      %v1818 = vpop.f32.mrf.mxu0
      %v1819 = vadd.f32 %v1746, %v1818
      %v1820 = vpop.f32.mrf.mxu0
      %v1821 = vadd.f32 %v1748, %v1820
      %1822 = vmatprep.mubr.bf16.mxu0 %v1656
      %1823 = vmatmul.mubr.bf16.gmra.mxu0 %v1655
      %v1824 = vpop.f32.mrf.mxu0
      %v1825 = vadd.f32 %v1752, %v1824
      %v1826 = vpop.f32.mrf.mxu0
      %v1827 = vadd.f32 %v1754, %v1826
      %v1828 = vpop.f32.mrf.mxu0
      %v1829 = vadd.f32 %v1756, %v1828
      %v1830 = vpop.f32.mrf.mxu0
      %v1831 = vadd.f32 %v1758, %v1830
      %1832 = vdwg.mxu0
      %1833 = vmatprep.subr.bf16.mxu0 0
      %1834 = vmatpush1.bf16.msra.mxu0 0
      %1835 = vmatprep.subr.bf16.mxu0 0
      %1836 = vmatpush1.bf16.msra.mxu0 0
      %1837 = vmatprep.subr.bf16.mxu0 0
      %1838 = vmatpush1.bf16.msra.mxu0 0
      %1839 = vmatprep.subr.bf16.mxu0 0
      %1840 = vmatpush1.bf16.msra.mxu0 0
      %1841 = vmatprep.subr.bf16.mxu0 %v1501
      %1842 = vmatpush1.bf16.msra.mxu0 %v1500
      %1843 = vmatprep.subr.bf16.mxu0 %v1499
      %1844 = vmatpush1.bf16.msra.mxu0 %v1498
      %1845 = vmatprep.subr.bf16.mxu0 %v1497
      %1846 = vmatpush1.bf16.msra.mxu0 %v1496
      %1847 = vmatprep.subr.bf16.mxu0 %v1495
      %1848 = vmatpush1.bf16.msra.mxu0 %v1494
      %1849 = vmatprep.subr.bf16.mxu0 0
      %1850 = vmatpush2.bf16.msra.mxu0 0
      %1851 = vmatprep.subr.bf16.mxu0 0
      %1852 = vmatpush2.bf16.msra.mxu0 0
      %1853 = vmatprep.subr.bf16.mxu0 0
      %1854 = vmatpush2.bf16.msra.mxu0 0
      %1855 = vmatprep.subr.bf16.mxu0 0
      %1856 = vmatpush2.bf16.msra.mxu0 0
      %1857 = vmatprep.subr.bf16.mxu0 0
      %1858 = vmatpush2.bf16.msra.mxu0 0
      %1859 = vmatprep.subr.bf16.mxu0 0
      %1860 = vmatpush2.bf16.msra.mxu0 0
      %1861 = vmatprep.subr.bf16.mxu0 0
      %1862 = vmatpush2.bf16.msra.mxu0 0
      %1863 = vmatprep.subr.bf16.mxu0 0
      %1864 = vmatpush2.bf16.msra.mxu0 0
      %1865 = vmatprep.mubr.bf16.mxu0 0
      %1866 = vmatmul.mubr.bf16.gmra.mxu0 %v1676
      %v1867 = vpop.f32.mrf.mxu0
      %v1868 = vadd.f32 %v1795, %v1867
      %v1869 = vpop.f32.mrf.mxu0
      %v1870 = vadd.f32 %v1797, %v1869
      %v1871 = vpop.f32.mrf.mxu0
      %v1872 = vadd.f32 %v1799, %v1871
      %v1873 = vpop.f32.mrf.mxu0
      %v1874 = vadd.f32 %v1801, %v1873
      %1875 = vmatprep.mubr.bf16.mxu0 0
      %1876 = vmatmul.mubr.bf16.gmra.mxu0 %v1679
      %v1877 = vpop.f32.mrf.mxu0
      %v1878 = vadd.f32 %v1805, %v1877
      %v1879 = vpop.f32.mrf.mxu0
      %v1880 = vadd.f32 %v1807, %v1879
      %v1881 = vpop.f32.mrf.mxu0
      %v1882 = vadd.f32 %v1809, %v1881
      %v1883 = vpop.f32.mrf.mxu0
      %v1884 = vadd.f32 %v1811, %v1883
      %1885 = vmatprep.mubr.bf16.mxu0 0
      %1886 = vmatmul.mubr.bf16.gmra.mxu0 %v1682
      %v1887 = vpop.f32.mrf.mxu0
      %v1888 = vadd.f32 %v1815, %v1887
      %v1889 = vpop.f32.mrf.mxu0
      %v1890 = vadd.f32 %v1817, %v1889
      %v1891 = vpop.f32.mrf.mxu0
      %v1892 = vadd.f32 %v1819, %v1891
      %v1893 = vpop.f32.mrf.mxu0
      %v1894 = vadd.f32 %v1821, %v1893
      %1895 = vmatprep.mubr.bf16.mxu0 0
      %1896 = vmatmul.mubr.bf16.gmra.mxu0 %v1685
      %v1897 = vpop.f32.mrf.mxu0
      %v1898 = vadd.f32 %v1825, %v1897
      %v1899 = vpop.f32.mrf.mxu0
      %v1900 = vadd.f32 %v1827, %v1899
      %v1901 = vpop.f32.mrf.mxu0
      %v1902 = vadd.f32 %v1829, %v1901
      %v1903 = vpop.f32.mrf.mxu0
      %v1904 = vadd.f32 %v1831, %v1903
      %1905 = vdwg.mxu0
      %v1906 = vmax.f32 %v1868, 0.0
      %v1907 = vmax.f32 %v1870, 0.0
      %v1908 = vmax.f32 %v1872, 0.0
      %v1909 = vmax.f32 %v1874, 0.0
      %v1910 = vmax.f32 %v1878, 0.0
      %v1911 = vmax.f32 %v1880, 0.0
      %v1912 = vmax.f32 %v1882, 0.0
      %v1913 = vmax.f32 %v1884, 0.0
      %v1914 = vmax.f32 %v1888, 0.0
      %v1915 = vmax.f32 %v1890, 0.0
      %v1916 = vmax.f32 %v1892, 0.0
      %v1917 = vmax.f32 %v1894, 0.0
      %v1918 = vmax.f32 %v1898, 0.0
      %v1919 = vmax.f32 %v1900, 0.0
      %v1920 = vmax.f32 %v1902, 0.0
      %v1921 = vmax.f32 %v1904, 0.0
      %v1922 = vpack.c.bf16 %v1908, %v1906
      %v1923 = vpack.c.bf16 %v1909, %v1907
      %v1924 = vpack.c.bf16 %v1912, %v1910
      %v1925 = vpack.c.bf16 %v1913, %v1911
      %v1926 = vpack.c.bf16 %v1916, %v1914
      %v1927 = vpack.c.bf16 %v1917, %v1915
      %v1928 = vpack.c.bf16 %v1920, %v1918
      %v1929 = vpack.c.bf16 %v1921, %v1919
      %v1938 = vunpack.c.l.b16 %v1922
      %v1939 = vunpack.c.l.b16 %v1923
      %v1940 = vunpack.c.h.b16 %v1922
      %v1941 = vunpack.c.h.b16 %v1923
      %v1942 = vunpack.c.l.b16 %v1924
      %v1943 = vunpack.c.l.b16 %v1925
      %v1944 = vunpack.c.h.b16 %v1924
      %v1945 = vunpack.c.h.b16 %v1925
      %v1946 = vunpack.c.l.b16 %v1926
      %v1947 = vunpack.c.l.b16 %v1927
      %v1948 = vunpack.c.h.b16 %v1926
      %v1949 = vunpack.c.h.b16 %v1927
      %v1950 = vunpack.c.l.b16 %v1928
      %v1951 = vunpack.c.l.b16 %v1929
      %v1952 = vunpack.c.h.b16 %v1928
      %v1953 = vunpack.c.h.b16 %v1929
      %v1954 = vpack.c.b16 %v1939, %v1938
      %v1955 = vpack.c.b16 %v1941, %v1940
      %v1956 = vpack.c.b16 %v1943, %v1942
      %v1957 = vpack.c.b16 %v1945, %v1944
      %v1958 = vpack.c.b16 %v1947, %v1946
      %v1959 = vpack.c.b16 %v1949, %v1948
      %v1960 = vpack.c.b16 %v1951, %v1950
      %v1961 = vpack.c.b16 %v1953, %v1952
      %v1962 = vunpack.i.l.s16 %v1954
      %v1963 = vunpack.i.h.s16 %v1954
      %v1964 = vpack.c.b16 %v1963, %v1962
      %v1965 = vunpack.i.l.s16 %v1964
      %v1966 = vunpack.i.h.s16 %v1964
      %v1967 = vpack.c.b16 %v1966, %v1965
      %v1968 = vunpack.i.l.s16 %v1967
      %v1969 = vunpack.i.h.s16 %v1967
      %v1970 = vunpack.i.l.s16 %v1955
      %v1971 = vunpack.i.h.s16 %v1955
      %v1972 = vpack.c.b16 %v1971, %v1970
      %v1973 = vunpack.i.l.s16 %v1972
      %v1974 = vunpack.i.h.s16 %v1972
      %v1975 = vpack.c.b16 %v1974, %v1973
      %v1976 = vunpack.i.l.s16 %v1975
      %v1977 = vunpack.i.h.s16 %v1975
      %v1978 = vunpack.i.l.s16 %v1956
      %v1979 = vunpack.i.h.s16 %v1956
      %v1980 = vpack.c.b16 %v1979, %v1978
      %v1981 = vunpack.i.l.s16 %v1980
      %v1982 = vunpack.i.h.s16 %v1980
      %v1983 = vpack.c.b16 %v1982, %v1981
      %v1984 = vunpack.i.l.s16 %v1983
      %v1985 = vunpack.i.h.s16 %v1983
      %v1986 = vunpack.i.l.s16 %v1957
      %v1987 = vunpack.i.h.s16 %v1957
      %v1988 = vpack.c.b16 %v1987, %v1986
      %v1989 = vunpack.i.l.s16 %v1988
      %v1990 = vunpack.i.h.s16 %v1988
      %v1991 = vpack.c.b16 %v1990, %v1989
      %v1992 = vunpack.i.l.s16 %v1991
      %v1993 = vunpack.i.h.s16 %v1991
      %v1994 = vunpack.i.l.s16 %v1958
      %v1995 = vunpack.i.h.s16 %v1958
      %v1996 = vpack.c.b16 %v1995, %v1994
      %v1997 = vunpack.i.l.s16 %v1996
      %v1998 = vunpack.i.h.s16 %v1996
      %v1999 = vpack.c.b16 %v1998, %v1997
      %v2000 = vunpack.i.l.s16 %v1999
      %v2001 = vunpack.i.h.s16 %v1999
      %v2002 = vunpack.i.l.s16 %v1959
      %v2003 = vunpack.i.h.s16 %v1959
      %v2004 = vpack.c.b16 %v2003, %v2002
      %v2005 = vunpack.i.l.s16 %v2004
      %v2006 = vunpack.i.h.s16 %v2004
      %v2007 = vpack.c.b16 %v2006, %v2005
      %v2008 = vunpack.i.l.s16 %v2007
      %v2009 = vunpack.i.h.s16 %v2007
      %v2010 = vunpack.i.l.s16 %v1960
      %v2011 = vunpack.i.h.s16 %v1960
      %v2012 = vpack.c.b16 %v2011, %v2010
      %v2013 = vunpack.i.l.s16 %v2012
      %v2014 = vunpack.i.h.s16 %v2012
      %v2015 = vpack.c.b16 %v2014, %v2013
      %v2016 = vunpack.i.l.s16 %v2015
      %v2017 = vunpack.i.h.s16 %v2015
      %v2018 = vunpack.i.l.s16 %v1961
      %v2019 = vunpack.i.h.s16 %v1961
      %v2020 = vpack.c.b16 %v2019, %v2018
      %v2021 = vunpack.i.l.s16 %v2020
      %v2022 = vunpack.i.h.s16 %v2020
      %v2023 = vpack.c.b16 %v2022, %v2021
      %v2024 = vunpack.i.l.s16 %v2023
      %v2025 = vunpack.i.h.s16 %v2023
      %v2026 = vld [vmem:[%s5] sm:$0xf]
      %v2027 = vld [vmem:[%s5 + $0x4] sm:$0xf]
      %v2028 = vld [vmem:[%s5 + $0x8] sm:$0xf]
      %v2029 = vld [vmem:[%s5 + $0xc] sm:$0xf]
      %v2030 = vld [vmem:[%s5 + $0x10] sm:$0xf]
      %v2031 = vld [vmem:[%s5 + $0x14] sm:$0xf]
      %v2032 = vld [vmem:[%s5 + $0x18] sm:$0xf]
      %v2033 = vld [vmem:[%s5 + $0x1c] sm:$0xf]
      %v2034 = vld [vmem:[%s5 + $0x20] sm:$0xf]
      %v2035 = vld [vmem:[%s5 + $0x24] sm:$0xf]
      %v2036 = vld [vmem:[%s5 + $0x28] sm:$0xf]
      %v2037 = vld [vmem:[%s5 + $0x2c] sm:$0xf]
      %v2038 = vld [vmem:[%s5 + $0x30] sm:$0xf]
      %v2039 = vld [vmem:[%s5 + $0x34] sm:$0xf]
      %v2040 = vld [vmem:[%s5 + $0x38] sm:$0xf]
      %v2041 = vld [vmem:[%s5 + $0x3c] sm:$0xf]
      %v2042 = vld [vmem:[%s5 + $0x40] sm:$0xf]
      %v2043 = vld [vmem:[%s5 + $0x44] sm:$0xf]
      %v2044 = vld [vmem:[%s5 + $0x48] sm:$0xf]
      %v2045 = vld [vmem:[%s5 + $0x4c] sm:$0xf]
      %v2046 = vld [vmem:[%s5 + $0x50] sm:$0xf]
      %v2047 = vld [vmem:[%s5 + $0x54] sm:$0xf]
      %v2048 = vld [vmem:[%s5 + $0x58] sm:$0xf]
      %v2049 = vld [vmem:[%s5 + $0x5c] sm:$0xf]
      %v2050 = vld [vmem:[%s5 + $0x60] sm:$0xf]
      %v2051 = vld [vmem:[%s5 + $0x64] sm:$0xf]
      %v2052 = vld [vmem:[%s5 + $0x68] sm:$0xf]
      %v2053 = vld [vmem:[%s5 + $0x6c] sm:$0xf]
      %v2054 = vld [vmem:[%s5 + $0x70] sm:$0xf]
      %v2055 = vld [vmem:[%s5 + $0x74] sm:$0xf]
      %v2056 = vld [vmem:[%s5 + $0x78] sm:$0xf]
      %v2057 = vld [vmem:[%s5 + $0x7c] sm:$0xf]
      %v2058 = vld [vmem:[%s5 + $0x80] sm:$0xf]
      %v2059 = vld [vmem:[%s5 + $0x84] sm:$0xf]
      %v2060 = vld [vmem:[%s5 + $0x88] sm:$0xf]
      %v2061 = vld [vmem:[%s5 + $0x8c] sm:$0xf]
      %v2062 = vld [vmem:[%s5 + $0x90] sm:$0xf]
      %v2063 = vld [vmem:[%s5 + $0x94] sm:$0xf]
      %v2064 = vld [vmem:[%s5 + $0x98] sm:$0xf]
      %v2065 = vld [vmem:[%s5 + $0x9c] sm:$0xf]
      %v2066 = vld [vmem:[%s5 + $0xa0] sm:$0xf]
      %v2067 = vld [vmem:[%s5 + $0xa4] sm:$0xf]
      %v2068 = vld [vmem:[%s5 + $0xa8] sm:$0xf]
      %v2069 = vld [vmem:[%s5 + $0xac] sm:$0xf]
      %v2070 = vld [vmem:[%s5 + $0xb0] sm:$0xf]
      %v2071 = vld [vmem:[%s5 + $0xb4] sm:$0xf]
      %v2072 = vld [vmem:[%s5 + $0xb8] sm:$0xf]
      %v2073 = vld [vmem:[%s5 + $0xbc] sm:$0xf]
      %v2074 = vld [vmem:[%s5 + $0xc0] sm:$0xf]
      %v2075 = vld [vmem:[%s5 + $0xc4] sm:$0xf]
      %v2076 = vld [vmem:[%s5 + $0xc8] sm:$0xf]
      %v2077 = vld [vmem:[%s5 + $0xcc] sm:$0xf]
      %v2078 = vld [vmem:[%s5 + $0xd0] sm:$0xf]
      %v2079 = vld [vmem:[%s5 + $0xd4] sm:$0xf]
      %v2080 = vld [vmem:[%s5 + $0xd8] sm:$0xf]
      %v2081 = vld [vmem:[%s5 + $0xdc] sm:$0xf]
      %v2082 = vld [vmem:[%s5 + $0xe0] sm:$0xf]
      %v2083 = vld [vmem:[%s5 + $0xe4] sm:$0xf]
      %v2084 = vld [vmem:[%s5 + $0xe8] sm:$0xf]
      %v2085 = vld [vmem:[%s5 + $0xec] sm:$0xf]
      %v2086 = vld [vmem:[%s5 + $0xf0] sm:$0xf]
      %v2087 = vld [vmem:[%s5 + $0xf4] sm:$0xf]
      %v2088 = vld [vmem:[%s5 + $0xf8] sm:$0xf]
      %v2089 = vld [vmem:[%s5 + $0xfc] sm:$0xf]
      %v2090 = vld [vmem:[%s5 + $0x100] sm:$0xf]
      %v2091 = vld [vmem:[%s5 + $0x104] sm:$0xf]
      %v2092 = vld [vmem:[%s5 + $0x108] sm:$0xf]
      %v2093 = vld [vmem:[%s5 + $0x10c] sm:$0xf]
      %v2094 = vld [vmem:[%s5 + $0x110] sm:$0xf]
      %v2095 = vld [vmem:[%s5 + $0x114] sm:$0xf]
      %v2096 = vld [vmem:[%s5 + $0x118] sm:$0xf]
      %v2097 = vld [vmem:[%s5 + $0x11c] sm:$0xf]
      %v2098 = vld [vmem:[%s5 + $0x120] sm:$0xf]
      %v2099 = vld [vmem:[%s5 + $0x124] sm:$0xf]
      %v2100 = vld [vmem:[%s5 + $0x128] sm:$0xf]
      %v2101 = vld [vmem:[%s5 + $0x12c] sm:$0xf]
      %v2102 = vld [vmem:[%s5 + $0x130] sm:$0xf]
      %v2103 = vld [vmem:[%s5 + $0x134] sm:$0xf]
      %v2104 = vld [vmem:[%s5 + $0x138] sm:$0xf]
      %v2105 = vld [vmem:[%s5 + $0x13c] sm:$0xf]
      %v2106 = vld [vmem:[%s5 + $0x140] sm:$0xf]
      %v2107 = vld [vmem:[%s5 + $0x144] sm:$0xf]
      %v2108 = vld [vmem:[%s5 + $0x148] sm:$0xf]
      %v2109 = vld [vmem:[%s5 + $0x14c] sm:$0xf]
      %v2110 = vld [vmem:[%s5 + $0x150] sm:$0xf]
      %v2111 = vld [vmem:[%s5 + $0x154] sm:$0xf]
      %v2112 = vld [vmem:[%s5 + $0x158] sm:$0xf]
      %v2113 = vld [vmem:[%s5 + $0x15c] sm:$0xf]
      %v2114 = vld [vmem:[%s5 + $0x160] sm:$0xf]
      %v2115 = vld [vmem:[%s5 + $0x164] sm:$0xf]
      %v2116 = vld [vmem:[%s5 + $0x168] sm:$0xf]
      %v2117 = vld [vmem:[%s5 + $0x16c] sm:$0xf]
      %v2118 = vld [vmem:[%s5 + $0x170] sm:$0xf]
      %v2119 = vld [vmem:[%s5 + $0x174] sm:$0xf]
      %v2120 = vld [vmem:[%s5 + $0x178] sm:$0xf]
      %v2121 = vld [vmem:[%s5 + $0x17c] sm:$0xf]
      %v2122 = vld [vmem:[%s5 + $0x180] sm:$0xf]
      %v2123 = vld [vmem:[%s5 + $0x184] sm:$0xf]
      %v2124 = vld [vmem:[%s5 + $0x188] sm:$0xf]
      %v2125 = vld [vmem:[%s5 + $0x18c] sm:$0xf]
      %v2126 = vld [vmem:[%s5 + $0x190] sm:$0xf]
      %v2127 = vld [vmem:[%s5 + $0x194] sm:$0xf]
      %v2128 = vld [vmem:[%s5 + $0x198] sm:$0xf]
      %v2129 = vld [vmem:[%s5 + $0x19c] sm:$0xf]
      %v2130 = vld [vmem:[%s5 + $0x1a0] sm:$0xf]
      %v2131 = vld [vmem:[%s5 + $0x1a4] sm:$0xf]
      %v2132 = vld [vmem:[%s5 + $0x1a8] sm:$0xf]
      %v2133 = vld [vmem:[%s5 + $0x1ac] sm:$0xf]
      %v2134 = vld [vmem:[%s5 + $0x1b0] sm:$0xf]
      %v2135 = vld [vmem:[%s5 + $0x1b4] sm:$0xf]
      %v2136 = vld [vmem:[%s5 + $0x1b8] sm:$0xf]
      %v2137 = vld [vmem:[%s5 + $0x1bc] sm:$0xf]
      %v2138 = vld [vmem:[%s5 + $0x1c0] sm:$0xf]
      %v2139 = vld [vmem:[%s5 + $0x1c4] sm:$0xf]
      %v2140 = vld [vmem:[%s5 + $0x1c8] sm:$0xf]
      %v2141 = vld [vmem:[%s5 + $0x1cc] sm:$0xf]
      %v2142 = vld [vmem:[%s5 + $0x1d0] sm:$0xf]
      %v2143 = vld [vmem:[%s5 + $0x1d4] sm:$0xf]
      %v2144 = vld [vmem:[%s5 + $0x1d8] sm:$0xf]
      %v2145 = vld [vmem:[%s5 + $0x1dc] sm:$0xf]
      %v2146 = vld [vmem:[%s5 + $0x1e0] sm:$0xf]
      %v2147 = vld [vmem:[%s5 + $0x1e4] sm:$0xf]
      %v2148 = vld [vmem:[%s5 + $0x1e8] sm:$0xf]
      %v2149 = vld [vmem:[%s5 + $0x1ec] sm:$0xf]
      %v2150 = vld [vmem:[%s5 + $0x1f0] sm:$0xf]
      %v2151 = vld [vmem:[%s5 + $0x1f4] sm:$0xf]
      %v2152 = vld [vmem:[%s5 + $0x1f8] sm:$0xf]
      %v2153 = vld [vmem:[%s5 + $0x1fc] sm:$0xf]
      %v2154 = vld [vmem:[%s5 + $0x200] sm:$0xf]
      %v2155 = vld [vmem:[%s5 + $0x204] sm:$0xf]
      %v2156 = vld [vmem:[%s5 + $0x208] sm:$0xf]
      %v2157 = vld [vmem:[%s5 + $0x20c] sm:$0xf]
      %v2158 = vld [vmem:[%s5 + $0x210] sm:$0xf]
      %v2159 = vld [vmem:[%s5 + $0x214] sm:$0xf]
      %v2160 = vld [vmem:[%s5 + $0x218] sm:$0xf]
      %v2161 = vld [vmem:[%s5 + $0x21c] sm:$0xf]
      %v2162 = vld [vmem:[%s5 + $0x220] sm:$0xf]
      %v2163 = vld [vmem:[%s5 + $0x224] sm:$0xf]
      %v2164 = vld [vmem:[%s5 + $0x228] sm:$0xf]
      %v2165 = vld [vmem:[%s5 + $0x22c] sm:$0xf]
      %v2166 = vld [vmem:[%s5 + $0x230] sm:$0xf]
      %v2167 = vld [vmem:[%s5 + $0x234] sm:$0xf]
      %v2168 = vld [vmem:[%s5 + $0x238] sm:$0xf]
      %v2169 = vld [vmem:[%s5 + $0x23c] sm:$0xf]
      %v2170 = vld [vmem:[%s5 + $0x240] sm:$0xf]
      %v2171 = vld [vmem:[%s5 + $0x244] sm:$0xf]
      %v2172 = vld [vmem:[%s5 + $0x248] sm:$0xf]
      %v2173 = vld [vmem:[%s5 + $0x24c] sm:$0xf]
      %v2174 = vld [vmem:[%s5 + $0x250] sm:$0xf]
      %v2175 = vld [vmem:[%s5 + $0x254] sm:$0xf]
      %v2176 = vld [vmem:[%s5 + $0x258] sm:$0xf]
      %v2177 = vld [vmem:[%s5 + $0x25c] sm:$0xf]
      %v2178 = vld [vmem:[%s5 + $0x260] sm:$0xf]
      %v2179 = vld [vmem:[%s5 + $0x264] sm:$0xf]
      %v2180 = vld [vmem:[%s5 + $0x268] sm:$0xf]
      %v2181 = vld [vmem:[%s5 + $0x26c] sm:$0xf]
      %v2182 = vld [vmem:[%s5 + $0x270] sm:$0xf]
      %v2183 = vld [vmem:[%s5 + $0x274] sm:$0xf]
      %v2184 = vld [vmem:[%s5 + $0x278] sm:$0xf]
      %v2185 = vld [vmem:[%s5 + $0x27c] sm:$0xf]
      %v2186 = vld [vmem:[%s5 + $0x280] sm:$0xf]
      %v2187 = vld [vmem:[%s5 + $0x284] sm:$0xf]
      %v2188 = vld [vmem:[%s5 + $0x288] sm:$0xf]
      %v2189 = vld [vmem:[%s5 + $0x28c] sm:$0xf]
      %v2190 = vld [vmem:[%s5 + $0x290] sm:$0xf]
      %v2191 = vld [vmem:[%s5 + $0x294] sm:$0xf]
      %v2192 = vld [vmem:[%s5 + $0x298] sm:$0xf]
      %v2193 = vld [vmem:[%s5 + $0x29c] sm:$0xf]
      %v2194 = vld [vmem:[%s5 + $0x2a0] sm:$0xf]
      %v2195 = vld [vmem:[%s5 + $0x2a4] sm:$0xf]
      %v2196 = vld [vmem:[%s5 + $0x2a8] sm:$0xf]
      %v2197 = vld [vmem:[%s5 + $0x2ac] sm:$0xf]
      %v2198 = vld [vmem:[%s5 + $0x2b0] sm:$0xf]
      %v2199 = vld [vmem:[%s5 + $0x2b4] sm:$0xf]
      %v2200 = vld [vmem:[%s5 + $0x2b8] sm:$0xf]
      %v2201 = vld [vmem:[%s5 + $0x2bc] sm:$0xf]
      %v2202 = vld [vmem:[%s5 + $0x2c0] sm:$0xf]
      %v2203 = vld [vmem:[%s5 + $0x2c4] sm:$0xf]
      %v2204 = vld [vmem:[%s5 + $0x2c8] sm:$0xf]
      %v2205 = vld [vmem:[%s5 + $0x2cc] sm:$0xf]
      %v2206 = vld [vmem:[%s5 + $0x2d0] sm:$0xf]
      %v2207 = vld [vmem:[%s5 + $0x2d4] sm:$0xf]
      %v2208 = vld [vmem:[%s5 + $0x2d8] sm:$0xf]
      %v2209 = vld [vmem:[%s5 + $0x2dc] sm:$0xf]
      %v2210 = vld [vmem:[%s5 + $0x2e0] sm:$0xf]
      %v2211 = vld [vmem:[%s5 + $0x2e4] sm:$0xf]
      %v2212 = vld [vmem:[%s5 + $0x2e8] sm:$0xf]
      %v2213 = vld [vmem:[%s5 + $0x2ec] sm:$0xf]
      %v2214 = vld [vmem:[%s5 + $0x2f0] sm:$0xf]
      %v2215 = vld [vmem:[%s5 + $0x2f4] sm:$0xf]
      %v2216 = vld [vmem:[%s5 + $0x2f8] sm:$0xf]
      %v2217 = vld [vmem:[%s5 + $0x2fc] sm:$0xf]
      %v2218 = vld [vmem:[%s5 + $0x300] sm:$0xf]
      %v2219 = vld [vmem:[%s5 + $0x304] sm:$0xf]
      %v2220 = vld [vmem:[%s5 + $0x308] sm:$0xf]
      %v2221 = vld [vmem:[%s5 + $0x30c] sm:$0xf]
      %v2222 = vld [vmem:[%s5 + $0x310] sm:$0xf]
      %v2223 = vld [vmem:[%s5 + $0x314] sm:$0xf]
      %v2224 = vld [vmem:[%s5 + $0x318] sm:$0xf]
      %v2225 = vld [vmem:[%s5 + $0x31c] sm:$0xf]
      %v2226 = vld [vmem:[%s5 + $0x320] sm:$0xf]
      %v2227 = vld [vmem:[%s5 + $0x324] sm:$0xf]
      %v2228 = vld [vmem:[%s5 + $0x328] sm:$0xf]
      %v2229 = vld [vmem:[%s5 + $0x32c] sm:$0xf]
      %v2230 = vld [vmem:[%s5 + $0x330] sm:$0xf]
      %v2231 = vld [vmem:[%s5 + $0x334] sm:$0xf]
      %v2232 = vld [vmem:[%s5 + $0x338] sm:$0xf]
      %v2233 = vld [vmem:[%s5 + $0x33c] sm:$0xf]
      %v2234 = vld [vmem:[%s5 + $0x340] sm:$0xf]
      %v2235 = vld [vmem:[%s5 + $0x344] sm:$0xf]
      %v2236 = vld [vmem:[%s5 + $0x348] sm:$0xf]
      %v2237 = vld [vmem:[%s5 + $0x34c] sm:$0xf]
      %v2238 = vld [vmem:[%s5 + $0x350] sm:$0xf]
      %v2239 = vld [vmem:[%s5 + $0x354] sm:$0xf]
      %v2240 = vld [vmem:[%s5 + $0x358] sm:$0xf]
      %v2241 = vld [vmem:[%s5 + $0x35c] sm:$0xf]
      %v2242 = vld [vmem:[%s5 + $0x360] sm:$0xf]
      %v2243 = vld [vmem:[%s5 + $0x364] sm:$0xf]
      %v2244 = vld [vmem:[%s5 + $0x368] sm:$0xf]
      %v2245 = vld [vmem:[%s5 + $0x36c] sm:$0xf]
      %v2246 = vld [vmem:[%s5 + $0x370] sm:$0xf]
      %v2247 = vld [vmem:[%s5 + $0x374] sm:$0xf]
      %v2248 = vld [vmem:[%s5 + $0x378] sm:$0xf]
      %v2249 = vld [vmem:[%s5 + $0x37c] sm:$0xf]
      %v2250 = vld [vmem:[%s5 + $0x380] sm:$0xf]
      %v2251 = vld [vmem:[%s5 + $0x384] sm:$0xf]
      %v2252 = vld [vmem:[%s5 + $0x388] sm:$0xf]
      %v2253 = vld [vmem:[%s5 + $0x38c] sm:$0xf]
      %v2254 = vld [vmem:[%s5 + $0x390] sm:$0xf]
      %v2255 = vld [vmem:[%s5 + $0x394] sm:$0xf]
      %v2256 = vld [vmem:[%s5 + $0x398] sm:$0xf]
      %v2257 = vld [vmem:[%s5 + $0x39c] sm:$0xf]
      %v2258 = vld [vmem:[%s5 + $0x3a0] sm:$0xf]
      %v2259 = vld [vmem:[%s5 + $0x3a4] sm:$0xf]
      %v2260 = vld [vmem:[%s5 + $0x3a8] sm:$0xf]
      %v2261 = vld [vmem:[%s5 + $0x3ac] sm:$0xf]
      %v2262 = vld [vmem:[%s5 + $0x3b0] sm:$0xf]
      %v2263 = vld [vmem:[%s5 + $0x3b4] sm:$0xf]
      %v2264 = vld [vmem:[%s5 + $0x3b8] sm:$0xf]
      %v2265 = vld [vmem:[%s5 + $0x3bc] sm:$0xf]
      %v2266 = vld [vmem:[%s5 + $0x3c0] sm:$0xf]
      %v2267 = vld [vmem:[%s5 + $0x3c4] sm:$0xf]
      %v2268 = vld [vmem:[%s5 + $0x3c8] sm:$0xf]
      %v2269 = vld [vmem:[%s5 + $0x3cc] sm:$0xf]
      %v2270 = vld [vmem:[%s5 + $0x3d0] sm:$0xf]
      %v2271 = vld [vmem:[%s5 + $0x3d4] sm:$0xf]
      %v2272 = vld [vmem:[%s5 + $0x3d8] sm:$0xf]
      %v2273 = vld [vmem:[%s5 + $0x3dc] sm:$0xf]
      %v2274 = vld [vmem:[%s5 + $0x3e0] sm:$0xf]
      %v2275 = vld [vmem:[%s5 + $0x3e4] sm:$0xf]
      %v2276 = vld [vmem:[%s5 + $0x3e8] sm:$0xf]
      %v2277 = vld [vmem:[%s5 + $0x3ec] sm:$0xf]
      %v2278 = vld [vmem:[%s5 + $0x3f0] sm:$0xf]
      %v2279 = vld [vmem:[%s5 + $0x3f4] sm:$0xf]
      %v2280 = vld [vmem:[%s5 + $0x3f8] sm:$0xf]
      %v2281 = vld [vmem:[%s5 + $0x3fc] sm:$0xf]
      %v2282 = vld [vmem:[%s5 + $0x400] sm:$0xf]
      %v2283 = vld [vmem:[%s5 + $0x404] sm:$0xf]
      %v2284 = vld [vmem:[%s5 + $0x408] sm:$0xf]
      %v2285 = vld [vmem:[%s5 + $0x40c] sm:$0xf]
      %v2286 = vld [vmem:[%s5 + $0x410] sm:$0xf]
      %v2287 = vld [vmem:[%s5 + $0x414] sm:$0xf]
      %v2288 = vld [vmem:[%s5 + $0x418] sm:$0xf]
      %v2289 = vld [vmem:[%s5 + $0x41c] sm:$0xf]
      %v2290 = vld [vmem:[%s5 + $0x420] sm:$0xf]
      %v2291 = vld [vmem:[%s5 + $0x424] sm:$0xf]
      %v2292 = vld [vmem:[%s5 + $0x428] sm:$0xf]
      %v2293 = vld [vmem:[%s5 + $0x42c] sm:$0xf]
      %v2294 = vld [vmem:[%s5 + $0x430] sm:$0xf]
      %v2295 = vld [vmem:[%s5 + $0x434] sm:$0xf]
      %v2296 = vld [vmem:[%s5 + $0x438] sm:$0xf]
      %v2297 = vld [vmem:[%s5 + $0x43c] sm:$0xf]
      %v2298 = vld [vmem:[%s5 + $0x440] sm:$0xf]
      %v2299 = vld [vmem:[%s5 + $0x444] sm:$0xf]
      %v2300 = vld [vmem:[%s5 + $0x448] sm:$0xf]
      %v2301 = vld [vmem:[%s5 + $0x44c] sm:$0xf]
      %v2302 = vld [vmem:[%s5 + $0x450] sm:$0xf]
      %v2303 = vld [vmem:[%s5 + $0x454] sm:$0xf]
      %v2304 = vld [vmem:[%s5 + $0x458] sm:$0xf]
      %v2305 = vld [vmem:[%s5 + $0x45c] sm:$0xf]
      %v2306 = vld [vmem:[%s5 + $0x460] sm:$0xf]
      %v2307 = vld [vmem:[%s5 + $0x464] sm:$0xf]
      %v2308 = vld [vmem:[%s5 + $0x468] sm:$0xf]
      %v2309 = vld [vmem:[%s5 + $0x46c] sm:$0xf]
      %v2310 = vld [vmem:[%s5 + $0x470] sm:$0xf]
      %v2311 = vld [vmem:[%s5 + $0x474] sm:$0xf]
      %v2312 = vld [vmem:[%s5 + $0x478] sm:$0xf]
      %v2313 = vld [vmem:[%s5 + $0x47c] sm:$0xf]
      %v2314 = vld [vmem:[%s5 + $0x480] sm:$0xf]
      %v2315 = vld [vmem:[%s5 + $0x484] sm:$0xf]
      %v2316 = vld [vmem:[%s5 + $0x488] sm:$0xf]
      %v2317 = vld [vmem:[%s5 + $0x48c] sm:$0xf]
      %v2318 = vld [vmem:[%s5 + $0x490] sm:$0xf]
      %v2319 = vld [vmem:[%s5 + $0x494] sm:$0xf]
      %v2320 = vld [vmem:[%s5 + $0x498] sm:$0xf]
      %v2321 = vld [vmem:[%s5 + $0x49c] sm:$0xf]
      %v2322 = vld [vmem:[%s5 + $0x4a0] sm:$0xf]
      %v2323 = vld [vmem:[%s5 + $0x4a4] sm:$0xf]
      %v2324 = vld [vmem:[%s5 + $0x4a8] sm:$0xf]
      %v2325 = vld [vmem:[%s5 + $0x4ac] sm:$0xf]
      %v2326 = vld [vmem:[%s5 + $0x4b0] sm:$0xf]
      %v2327 = vld [vmem:[%s5 + $0x4b4] sm:$0xf]
      %v2328 = vld [vmem:[%s5 + $0x4b8] sm:$0xf]
      %v2329 = vld [vmem:[%s5 + $0x4bc] sm:$0xf]
      %v2330 = vld [vmem:[%s5 + $0x4c0] sm:$0xf]
      %v2331 = vld [vmem:[%s5 + $0x4c4] sm:$0xf]
      %v2332 = vld [vmem:[%s5 + $0x4c8] sm:$0xf]
      %v2333 = vld [vmem:[%s5 + $0x4cc] sm:$0xf]
      %v2334 = vld [vmem:[%s5 + $0x4d0] sm:$0xf]
      %v2335 = vld [vmem:[%s5 + $0x4d4] sm:$0xf]
      %v2336 = vld [vmem:[%s5 + $0x4d8] sm:$0xf]
      %v2337 = vld [vmem:[%s5 + $0x4dc] sm:$0xf]
      %v2338 = vld [vmem:[%s5 + $0x4e0] sm:$0xf]
      %v2339 = vld [vmem:[%s5 + $0x4e4] sm:$0xf]
      %v2340 = vld [vmem:[%s5 + $0x4e8] sm:$0xf]
      %v2341 = vld [vmem:[%s5 + $0x4ec] sm:$0xf]
      %v2342 = vld [vmem:[%s5 + $0x4f0] sm:$0xf]
      %v2343 = vld [vmem:[%s5 + $0x4f4] sm:$0xf]
      %v2344 = vld [vmem:[%s5 + $0x4f8] sm:$0xf]
      %v2345 = vld [vmem:[%s5 + $0x4fc] sm:$0xf]
      %v2346 = vld [vmem:[%s5 + $0x500] sm:$0xf]
      %v2347 = vld [vmem:[%s5 + $0x504] sm:$0xf]
      %v2348 = vld [vmem:[%s5 + $0x508] sm:$0xf]
      %v2349 = vld [vmem:[%s5 + $0x50c] sm:$0xf]
      %v2350 = vld [vmem:[%s5 + $0x510] sm:$0xf]
      %v2351 = vld [vmem:[%s5 + $0x514] sm:$0xf]
      %v2352 = vld [vmem:[%s5 + $0x518] sm:$0xf]
      %v2353 = vld [vmem:[%s5 + $0x51c] sm:$0xf]
      %v2354 = vld [vmem:[%s5 + $0x520] sm:$0xf]
      %v2355 = vld [vmem:[%s5 + $0x524] sm:$0xf]
      %v2356 = vld [vmem:[%s5 + $0x528] sm:$0xf]
      %v2357 = vld [vmem:[%s5 + $0x52c] sm:$0xf]
      %v2358 = vld [vmem:[%s5 + $0x530] sm:$0xf]
      %v2359 = vld [vmem:[%s5 + $0x534] sm:$0xf]
      %v2360 = vld [vmem:[%s5 + $0x538] sm:$0xf]
      %v2361 = vld [vmem:[%s5 + $0x53c] sm:$0xf]
      %v2362 = vld [vmem:[%s5 + $0x540] sm:$0xf]
      %v2363 = vld [vmem:[%s5 + $0x544] sm:$0xf]
      %v2364 = vld [vmem:[%s5 + $0x548] sm:$0xf]
      %v2365 = vld [vmem:[%s5 + $0x54c] sm:$0xf]
      %v2366 = vld [vmem:[%s5 + $0x550] sm:$0xf]
      %v2367 = vld [vmem:[%s5 + $0x554] sm:$0xf]
      %v2368 = vld [vmem:[%s5 + $0x558] sm:$0xf]
      %v2369 = vld [vmem:[%s5 + $0x55c] sm:$0xf]
      %v2370 = vld [vmem:[%s5 + $0x560] sm:$0xf]
      %v2371 = vld [vmem:[%s5 + $0x564] sm:$0xf]
      %v2372 = vld [vmem:[%s5 + $0x568] sm:$0xf]
      %v2373 = vld [vmem:[%s5 + $0x56c] sm:$0xf]
      %v2374 = vld [vmem:[%s5 + $0x570] sm:$0xf]
      %v2375 = vld [vmem:[%s5 + $0x574] sm:$0xf]
      %v2376 = vld [vmem:[%s5 + $0x578] sm:$0xf]
      %v2377 = vld [vmem:[%s5 + $0x57c] sm:$0xf]
      %v2378 = vld [vmem:[%s5 + $0x580] sm:$0xf]
      %v2379 = vld [vmem:[%s5 + $0x584] sm:$0xf]
      %v2380 = vld [vmem:[%s5 + $0x588] sm:$0xf]
      %v2381 = vld [vmem:[%s5 + $0x58c] sm:$0xf]
      %v2382 = vld [vmem:[%s5 + $0x590] sm:$0xf]
      %v2383 = vld [vmem:[%s5 + $0x594] sm:$0xf]
      %v2384 = vld [vmem:[%s5 + $0x598] sm:$0xf]
      %v2385 = vld [vmem:[%s5 + $0x59c] sm:$0xf]
      %v2386 = vld [vmem:[%s5 + $0x5a0] sm:$0xf]
      %v2387 = vld [vmem:[%s5 + $0x5a4] sm:$0xf]
      %v2388 = vld [vmem:[%s5 + $0x5a8] sm:$0xf]
      %v2389 = vld [vmem:[%s5 + $0x5ac] sm:$0xf]
      %v2390 = vld [vmem:[%s5 + $0x5b0] sm:$0xf]
      %v2391 = vld [vmem:[%s5 + $0x5b4] sm:$0xf]
      %v2392 = vld [vmem:[%s5 + $0x5b8] sm:$0xf]
      %v2393 = vld [vmem:[%s5 + $0x5bc] sm:$0xf]
      %v2394 = vld [vmem:[%s5 + $0x5c0] sm:$0xf]
      %v2395 = vld [vmem:[%s5 + $0x5c4] sm:$0xf]
      %v2396 = vld [vmem:[%s5 + $0x5c8] sm:$0xf]
      %v2397 = vld [vmem:[%s5 + $0x5cc] sm:$0xf]
      %v2398 = vld [vmem:[%s5 + $0x5d0] sm:$0xf]
      %v2399 = vld [vmem:[%s5 + $0x5d4] sm:$0xf]
      %v2400 = vld [vmem:[%s5 + $0x5d8] sm:$0xf]
      %v2401 = vld [vmem:[%s5 + $0x5dc] sm:$0xf]
      %v2402 = vld [vmem:[%s5 + $0x5e0] sm:$0xf]
      %v2403 = vld [vmem:[%s5 + $0x5e4] sm:$0xf]
      %v2404 = vld [vmem:[%s5 + $0x5e8] sm:$0xf]
      %v2405 = vld [vmem:[%s5 + $0x5ec] sm:$0xf]
      %v2406 = vld [vmem:[%s5 + $0x5f0] sm:$0xf]
      %v2407 = vld [vmem:[%s5 + $0x5f4] sm:$0xf]
      %v2408 = vld [vmem:[%s5 + $0x5f8] sm:$0xf]
      %v2409 = vld [vmem:[%s5 + $0x5fc] sm:$0xf]
      %v2410 = vld [vmem:[%s5 + $0x600] sm:$0xf]
      %v2411 = vld [vmem:[%s5 + $0x604] sm:$0xf]
      %v2412 = vld [vmem:[%s5 + $0x608] sm:$0xf]
      %v2413 = vld [vmem:[%s5 + $0x60c] sm:$0xf]
      %v2414 = vld [vmem:[%s5 + $0x610] sm:$0xf]
      %v2415 = vld [vmem:[%s5 + $0x614] sm:$0xf]
      %v2416 = vld [vmem:[%s5 + $0x618] sm:$0xf]
      %v2417 = vld [vmem:[%s5 + $0x61c] sm:$0xf]
      %v2418 = vld [vmem:[%s5 + $0x620] sm:$0xf]
      %v2419 = vld [vmem:[%s5 + $0x624] sm:$0xf]
      %v2420 = vld [vmem:[%s5 + $0x628] sm:$0xf]
      %v2421 = vld [vmem:[%s5 + $0x62c] sm:$0xf]
      %v2422 = vld [vmem:[%s5 + $0x630] sm:$0xf]
      %v2423 = vld [vmem:[%s5 + $0x634] sm:$0xf]
      %v2424 = vld [vmem:[%s5 + $0x638] sm:$0xf]
      %v2425 = vld [vmem:[%s5 + $0x63c] sm:$0xf]
      %v2426 = vld [vmem:[%s5 + $0x640] sm:$0xf]
      %v2427 = vld [vmem:[%s5 + $0x644] sm:$0xf]
      %v2428 = vld [vmem:[%s5 + $0x648] sm:$0xf]
      %v2429 = vld [vmem:[%s5 + $0x64c] sm:$0xf]
      %v2430 = vld [vmem:[%s5 + $0x650] sm:$0xf]
      %v2431 = vld [vmem:[%s5 + $0x654] sm:$0xf]
      %v2432 = vld [vmem:[%s5 + $0x658] sm:$0xf]
      %v2433 = vld [vmem:[%s5 + $0x65c] sm:$0xf]
      %v2434 = vld [vmem:[%s5 + $0x660] sm:$0xf]
      %v2435 = vld [vmem:[%s5 + $0x664] sm:$0xf]
      %v2436 = vld [vmem:[%s5 + $0x668] sm:$0xf]
      %v2437 = vld [vmem:[%s5 + $0x66c] sm:$0xf]
      %v2438 = vld [vmem:[%s5 + $0x670] sm:$0xf]
      %v2439 = vld [vmem:[%s5 + $0x674] sm:$0xf]
      %v2440 = vld [vmem:[%s5 + $0x678] sm:$0xf]
      %v2441 = vld [vmem:[%s5 + $0x67c] sm:$0xf]
      %v2442 = vld [vmem:[%s5 + $0x680] sm:$0xf]
      %v2443 = vld [vmem:[%s5 + $0x684] sm:$0xf]
      %v2444 = vld [vmem:[%s5 + $0x688] sm:$0xf]
      %v2445 = vld [vmem:[%s5 + $0x68c] sm:$0xf]
      %v2446 = vld [vmem:[%s5 + $0x690] sm:$0xf]
      %v2447 = vld [vmem:[%s5 + $0x694] sm:$0xf]
      %v2448 = vld [vmem:[%s5 + $0x698] sm:$0xf]
      %v2449 = vld [vmem:[%s5 + $0x69c] sm:$0xf]
      %v2450 = vld [vmem:[%s5 + $0x6a0] sm:$0xf]
      %v2451 = vld [vmem:[%s5 + $0x6a4] sm:$0xf]
      %v2452 = vld [vmem:[%s5 + $0x6a8] sm:$0xf]
      %v2453 = vld [vmem:[%s5 + $0x6ac] sm:$0xf]
      %v2454 = vld [vmem:[%s5 + $0x6b0] sm:$0xf]
      %v2455 = vld [vmem:[%s5 + $0x6b4] sm:$0xf]
      %v2456 = vld [vmem:[%s5 + $0x6b8] sm:$0xf]
      %v2457 = vld [vmem:[%s5 + $0x6bc] sm:$0xf]
      %v2458 = vld [vmem:[%s5 + $0x6c0] sm:$0xf]
      %v2459 = vld [vmem:[%s5 + $0x6c4] sm:$0xf]
      %v2460 = vld [vmem:[%s5 + $0x6c8] sm:$0xf]
      %v2461 = vld [vmem:[%s5 + $0x6cc] sm:$0xf]
      %v2462 = vld [vmem:[%s5 + $0x6d0] sm:$0xf]
      %v2463 = vld [vmem:[%s5 + $0x6d4] sm:$0xf]
      %v2464 = vld [vmem:[%s5 + $0x6d8] sm:$0xf]
      %v2465 = vld [vmem:[%s5 + $0x6dc] sm:$0xf]
      %v2466 = vld [vmem:[%s5 + $0x6e0] sm:$0xf]
      %v2467 = vld [vmem:[%s5 + $0x6e4] sm:$0xf]
      %v2468 = vld [vmem:[%s5 + $0x6e8] sm:$0xf]
      %v2469 = vld [vmem:[%s5 + $0x6ec] sm:$0xf]
      %v2470 = vld [vmem:[%s5 + $0x6f0] sm:$0xf]
      %v2471 = vld [vmem:[%s5 + $0x6f4] sm:$0xf]
      %v2472 = vld [vmem:[%s5 + $0x6f8] sm:$0xf]
      %v2473 = vld [vmem:[%s5 + $0x6fc] sm:$0xf]
      %v2474 = vld [vmem:[%s5 + $0x700] sm:$0xf]
      %v2475 = vld [vmem:[%s5 + $0x704] sm:$0xf]
      %v2476 = vld [vmem:[%s5 + $0x708] sm:$0xf]
      %v2477 = vld [vmem:[%s5 + $0x70c] sm:$0xf]
      %v2478 = vld [vmem:[%s5 + $0x710] sm:$0xf]
      %v2479 = vld [vmem:[%s5 + $0x714] sm:$0xf]
      %v2480 = vld [vmem:[%s5 + $0x718] sm:$0xf]
      %v2481 = vld [vmem:[%s5 + $0x71c] sm:$0xf]
      %v2482 = vld [vmem:[%s5 + $0x720] sm:$0xf]
      %v2483 = vld [vmem:[%s5 + $0x724] sm:$0xf]
      %v2484 = vld [vmem:[%s5 + $0x728] sm:$0xf]
      %v2485 = vld [vmem:[%s5 + $0x72c] sm:$0xf]
      %v2486 = vld [vmem:[%s5 + $0x730] sm:$0xf]
      %v2487 = vld [vmem:[%s5 + $0x734] sm:$0xf]
      %v2488 = vld [vmem:[%s5 + $0x738] sm:$0xf]
      %v2489 = vld [vmem:[%s5 + $0x73c] sm:$0xf]
      %v2490 = vld [vmem:[%s5 + $0x740] sm:$0xf]
      %v2491 = vld [vmem:[%s5 + $0x744] sm:$0xf]
      %v2492 = vld [vmem:[%s5 + $0x748] sm:$0xf]
      %v2493 = vld [vmem:[%s5 + $0x74c] sm:$0xf]
      %v2494 = vld [vmem:[%s5 + $0x750] sm:$0xf]
      %v2495 = vld [vmem:[%s5 + $0x754] sm:$0xf]
      %v2496 = vld [vmem:[%s5 + $0x758] sm:$0xf]
      %v2497 = vld [vmem:[%s5 + $0x75c] sm:$0xf]
      %v2498 = vld [vmem:[%s5 + $0x760] sm:$0xf]
      %v2499 = vld [vmem:[%s5 + $0x764] sm:$0xf]
      %v2500 = vld [vmem:[%s5 + $0x768] sm:$0xf]
      %v2501 = vld [vmem:[%s5 + $0x76c] sm:$0xf]
      %v2502 = vld [vmem:[%s5 + $0x770] sm:$0xf]
      %v2503 = vld [vmem:[%s5 + $0x774] sm:$0xf]
      %v2504 = vld [vmem:[%s5 + $0x778] sm:$0xf]
      %v2505 = vld [vmem:[%s5 + $0x77c] sm:$0xf]
      %v2506 = vld [vmem:[%s5 + $0x780] sm:$0xf]
      %v2507 = vld [vmem:[%s5 + $0x784] sm:$0xf]
      %v2508 = vld [vmem:[%s5 + $0x788] sm:$0xf]
      %v2509 = vld [vmem:[%s5 + $0x78c] sm:$0xf]
      %v2510 = vld [vmem:[%s5 + $0x790] sm:$0xf]
      %v2511 = vld [vmem:[%s5 + $0x794] sm:$0xf]
      %v2512 = vld [vmem:[%s5 + $0x798] sm:$0xf]
      %v2513 = vld [vmem:[%s5 + $0x79c] sm:$0xf]
      %v2514 = vld [vmem:[%s5 + $0x7a0] sm:$0xf]
      %v2515 = vld [vmem:[%s5 + $0x7a4] sm:$0xf]
      %v2516 = vld [vmem:[%s5 + $0x7a8] sm:$0xf]
      %v2517 = vld [vmem:[%s5 + $0x7ac] sm:$0xf]
      %v2518 = vld [vmem:[%s5 + $0x7b0] sm:$0xf]
      %v2519 = vld [vmem:[%s5 + $0x7b4] sm:$0xf]
      %v2520 = vld [vmem:[%s5 + $0x7b8] sm:$0xf]
      %v2521 = vld [vmem:[%s5 + $0x7bc] sm:$0xf]
      %v2522 = vld [vmem:[%s5 + $0x7c0] sm:$0xf]
      %v2523 = vld [vmem:[%s5 + $0x7c4] sm:$0xf]
      %v2524 = vld [vmem:[%s5 + $0x7c8] sm:$0xf]
      %v2525 = vld [vmem:[%s5 + $0x7cc] sm:$0xf]
      %v2526 = vld [vmem:[%s5 + $0x7d0] sm:$0xf]
      %v2527 = vld [vmem:[%s5 + $0x7d4] sm:$0xf]
      %v2528 = vld [vmem:[%s5 + $0x7d8] sm:$0xf]
      %v2529 = vld [vmem:[%s5 + $0x7dc] sm:$0xf]
      %v2530 = vld [vmem:[%s5 + $0x7e0] sm:$0xf]
      %v2531 = vld [vmem:[%s5 + $0x7e4] sm:$0xf]
      %v2532 = vld [vmem:[%s5 + $0x7e8] sm:$0xf]
      %v2533 = vld [vmem:[%s5 + $0x7ec] sm:$0xf]
      %v2534 = vld [vmem:[%s5 + $0x7f0] sm:$0xf]
      %v2535 = vld [vmem:[%s5 + $0x7f4] sm:$0xf]
      %v2536 = vld [vmem:[%s5 + $0x7f8] sm:$0xf]
      %v2537 = vld [vmem:[%s5 + $0x7fc] sm:$0xf]
      %v2538 = vld [vmem:[%s5 + $0x800] sm:$0xf]
      %v2539 = vld [vmem:[%s5 + $0x804] sm:$0xf]
      %v2540 = vld [vmem:[%s5 + $0x808] sm:$0xf]
      %v2541 = vld [vmem:[%s5 + $0x80c] sm:$0xf]
      %v2542 = vld [vmem:[%s5 + $0x810] sm:$0xf]
      %v2543 = vld [vmem:[%s5 + $0x814] sm:$0xf]
      %v2544 = vld [vmem:[%s5 + $0x818] sm:$0xf]
      %v2545 = vld [vmem:[%s5 + $0x81c] sm:$0xf]
      %v2546 = vld [vmem:[%s5 + $0x820] sm:$0xf]
      %v2547 = vld [vmem:[%s5 + $0x824] sm:$0xf]
      %v2548 = vld [vmem:[%s5 + $0x828] sm:$0xf]
      %v2549 = vld [vmem:[%s5 + $0x82c] sm:$0xf]
      %v2550 = vld [vmem:[%s5 + $0x830] sm:$0xf]
      %v2551 = vld [vmem:[%s5 + $0x834] sm:$0xf]
      %v2552 = vld [vmem:[%s5 + $0x838] sm:$0xf]
      %v2553 = vld [vmem:[%s5 + $0x83c] sm:$0xf]
      %v2554 = vld [vmem:[%s5 + $0x840] sm:$0xf]
      %v2555 = vld [vmem:[%s5 + $0x844] sm:$0xf]
      %v2556 = vld [vmem:[%s5 + $0x848] sm:$0xf]
      %v2557 = vld [vmem:[%s5 + $0x84c] sm:$0xf]
      %v2558 = vld [vmem:[%s5 + $0x850] sm:$0xf]
      %v2559 = vld [vmem:[%s5 + $0x854] sm:$0xf]
      %v2560 = vld [vmem:[%s5 + $0x858] sm:$0xf]
      %v2561 = vld [vmem:[%s5 + $0x85c] sm:$0xf]
      %v2562 = vld [vmem:[%s5 + $0x860] sm:$0xf]
      %v2563 = vld [vmem:[%s5 + $0x864] sm:$0xf]
      %v2564 = vld [vmem:[%s5 + $0x868] sm:$0xf]
      %v2565 = vld [vmem:[%s5 + $0x86c] sm:$0xf]
      %v2566 = vld [vmem:[%s5 + $0x870] sm:$0xf]
      %v2567 = vld [vmem:[%s5 + $0x874] sm:$0xf]
      %v2568 = vld [vmem:[%s5 + $0x878] sm:$0xf]
      %v2569 = vld [vmem:[%s5 + $0x87c] sm:$0xf]
      %v2570 = vld [vmem:[%s5 + $0x880] sm:$0xf]
      %v2571 = vld [vmem:[%s5 + $0x884] sm:$0xf]
      %v2572 = vld [vmem:[%s5 + $0x888] sm:$0xf]
      %v2573 = vld [vmem:[%s5 + $0x88c] sm:$0xf]
      %v2574 = vld [vmem:[%s5 + $0x890] sm:$0xf]
      %v2575 = vld [vmem:[%s5 + $0x894] sm:$0xf]
      %v2576 = vld [vmem:[%s5 + $0x898] sm:$0xf]
      %v2577 = vld [vmem:[%s5 + $0x89c] sm:$0xf]
      %v2578 = vld [vmem:[%s5 + $0x8a0] sm:$0xf]
      %v2579 = vld [vmem:[%s5 + $0x8a4] sm:$0xf]
      %v2580 = vld [vmem:[%s5 + $0x8a8] sm:$0xf]
      %v2581 = vld [vmem:[%s5 + $0x8ac] sm:$0xf]
      %v2582 = vld [vmem:[%s5 + $0x8b0] sm:$0xf]
      %v2583 = vld [vmem:[%s5 + $0x8b4] sm:$0xf]
      %v2584 = vld [vmem:[%s5 + $0x8b8] sm:$0xf]
      %v2585 = vld [vmem:[%s5 + $0x8bc] sm:$0xf]
      %v2586 = vld [vmem:[%s5 + $0x8c0] sm:$0xf]
      %v2587 = vld [vmem:[%s5 + $0x8c4] sm:$0xf]
      %v2588 = vld [vmem:[%s5 + $0x8c8] sm:$0xf]
      %v2589 = vld [vmem:[%s5 + $0x8cc] sm:$0xf]
      %v2590 = vld [vmem:[%s5 + $0x8d0] sm:$0xf]
      %v2591 = vld [vmem:[%s5 + $0x8d4] sm:$0xf]
      %v2592 = vld [vmem:[%s5 + $0x8d8] sm:$0xf]
      %v2593 = vld [vmem:[%s5 + $0x8dc] sm:$0xf]
      %v2594 = vld [vmem:[%s5 + $0x8e0] sm:$0xf]
      %v2595 = vld [vmem:[%s5 + $0x8e4] sm:$0xf]
      %v2596 = vld [vmem:[%s5 + $0x8e8] sm:$0xf]
      %v2597 = vld [vmem:[%s5 + $0x8ec] sm:$0xf]
      %v2598 = vld [vmem:[%s5 + $0x8f0] sm:$0xf]
      %v2599 = vld [vmem:[%s5 + $0x8f4] sm:$0xf]
      %v2600 = vld [vmem:[%s5 + $0x8f8] sm:$0xf]
      %v2601 = vld [vmem:[%s5 + $0x8fc] sm:$0xf]
      %v2602 = vld [vmem:[%s5 + $0x900] sm:$0xf]
      %v2603 = vld [vmem:[%s5 + $0x904] sm:$0xf]
      %v2604 = vld [vmem:[%s5 + $0x908] sm:$0xf]
      %v2605 = vld [vmem:[%s5 + $0x90c] sm:$0xf]
      %v2606 = vld [vmem:[%s5 + $0x910] sm:$0xf]
      %v2607 = vld [vmem:[%s5 + $0x914] sm:$0xf]
      %v2608 = vld [vmem:[%s5 + $0x918] sm:$0xf]
      %v2609 = vld [vmem:[%s5 + $0x91c] sm:$0xf]
      %v2610 = vld [vmem:[%s5 + $0x920] sm:$0xf]
      %v2611 = vld [vmem:[%s5 + $0x924] sm:$0xf]
      %v2612 = vld [vmem:[%s5 + $0x928] sm:$0xf]
      %v2613 = vld [vmem:[%s5 + $0x92c] sm:$0xf]
      %v2614 = vld [vmem:[%s5 + $0x930] sm:$0xf]
      %v2615 = vld [vmem:[%s5 + $0x934] sm:$0xf]
      %v2616 = vld [vmem:[%s5 + $0x938] sm:$0xf]
      %v2617 = vld [vmem:[%s5 + $0x93c] sm:$0xf]
      %v2618 = vld [vmem:[%s5 + $0x940] sm:$0xf]
      %v2619 = vld [vmem:[%s5 + $0x944] sm:$0xf]
      %v2620 = vld [vmem:[%s5 + $0x948] sm:$0xf]
      %v2621 = vld [vmem:[%s5 + $0x94c] sm:$0xf]
      %v2622 = vld [vmem:[%s5 + $0x950] sm:$0xf]
      %v2623 = vld [vmem:[%s5 + $0x954] sm:$0xf]
      %v2624 = vld [vmem:[%s5 + $0x958] sm:$0xf]
      %v2625 = vld [vmem:[%s5 + $0x95c] sm:$0xf]
      %v2626 = vld [vmem:[%s5 + $0x960] sm:$0xf]
      %v2627 = vld [vmem:[%s5 + $0x964] sm:$0xf]
      %v2628 = vld [vmem:[%s5 + $0x968] sm:$0xf]
      %v2629 = vld [vmem:[%s5 + $0x96c] sm:$0xf]
      %v2630 = vld [vmem:[%s5 + $0x970] sm:$0xf]
      %v2631 = vld [vmem:[%s5 + $0x974] sm:$0xf]
      %v2632 = vld [vmem:[%s5 + $0x978] sm:$0xf]
      %v2633 = vld [vmem:[%s5 + $0x97c] sm:$0xf]
      %v2634 = vld [vmem:[%s5 + $0x980] sm:$0xf]
      %v2635 = vld [vmem:[%s5 + $0x984] sm:$0xf]
      %v2636 = vld [vmem:[%s5 + $0x988] sm:$0xf]
      %v2637 = vld [vmem:[%s5 + $0x98c] sm:$0xf]
      %v2638 = vld [vmem:[%s5 + $0x990] sm:$0xf]
      %v2639 = vld [vmem:[%s5 + $0x994] sm:$0xf]
      %v2640 = vld [vmem:[%s5 + $0x998] sm:$0xf]
      %v2641 = vld [vmem:[%s5 + $0x99c] sm:$0xf]
      %v2642 = vld [vmem:[%s5 + $0x9a0] sm:$0xf]
      %v2643 = vld [vmem:[%s5 + $0x9a4] sm:$0xf]
      %v2644 = vld [vmem:[%s5 + $0x9a8] sm:$0xf]
      %v2645 = vld [vmem:[%s5 + $0x9ac] sm:$0xf]
      %v2646 = vld [vmem:[%s5 + $0x9b0] sm:$0xf]
      %v2647 = vld [vmem:[%s5 + $0x9b4] sm:$0xf]
      %v2648 = vld [vmem:[%s5 + $0x9b8] sm:$0xf]
      %v2649 = vld [vmem:[%s5 + $0x9bc] sm:$0xf]
      %v2650 = vld [vmem:[%s5 + $0x9c0] sm:$0xf]
      %v2651 = vld [vmem:[%s5 + $0x9c4] sm:$0xf]
      %v2652 = vld [vmem:[%s5 + $0x9c8] sm:$0xf]
      %v2653 = vld [vmem:[%s5 + $0x9cc] sm:$0xf]
      %v2654 = vld [vmem:[%s5 + $0x9d0] sm:$0xf]
      %v2655 = vld [vmem:[%s5 + $0x9d4] sm:$0xf]
      %v2656 = vld [vmem:[%s5 + $0x9d8] sm:$0xf]
      %v2657 = vld [vmem:[%s5 + $0x9dc] sm:$0xf]
      %v2658 = vld [vmem:[%s5 + $0x9e0] sm:$0xf]
      %v2659 = vld [vmem:[%s5 + $0x9e4] sm:$0xf]
      %v2660 = vld [vmem:[%s5 + $0x9e8] sm:$0xf]
      %v2661 = vld [vmem:[%s5 + $0x9ec] sm:$0xf]
      %v2662 = vld [vmem:[%s5 + $0x9f0] sm:$0xf]
      %v2663 = vld [vmem:[%s5 + $0x9f4] sm:$0xf]
      %v2664 = vld [vmem:[%s5 + $0x9f8] sm:$0xf]
      %v2665 = vld [vmem:[%s5 + $0x9fc] sm:$0xf]
      %v2666 = vld [vmem:[%s5 + $0xa00] sm:$0xf]
      %v2667 = vld [vmem:[%s5 + $0xa04] sm:$0xf]
      %v2668 = vld [vmem:[%s5 + $0xa08] sm:$0xf]
      %v2669 = vld [vmem:[%s5 + $0xa0c] sm:$0xf]
      %v2670 = vld [vmem:[%s5 + $0xa10] sm:$0xf]
      %v2671 = vld [vmem:[%s5 + $0xa14] sm:$0xf]
      %v2672 = vld [vmem:[%s5 + $0xa18] sm:$0xf]
      %v2673 = vld [vmem:[%s5 + $0xa1c] sm:$0xf]
      %v2674 = vld [vmem:[%s5 + $0xa20] sm:$0xf]
      %v2675 = vld [vmem:[%s5 + $0xa24] sm:$0xf]
      %v2676 = vld [vmem:[%s5 + $0xa28] sm:$0xf]
      %v2677 = vld [vmem:[%s5 + $0xa2c] sm:$0xf]
      %v2678 = vld [vmem:[%s5 + $0xa30] sm:$0xf]
      %v2679 = vld [vmem:[%s5 + $0xa34] sm:$0xf]
      %v2680 = vld [vmem:[%s5 + $0xa38] sm:$0xf]
      %v2681 = vld [vmem:[%s5 + $0xa3c] sm:$0xf]
      %v2682 = vld [vmem:[%s5 + $0xa40] sm:$0xf]
      %v2683 = vld [vmem:[%s5 + $0xa44] sm:$0xf]
      %v2684 = vld [vmem:[%s5 + $0xa48] sm:$0xf]
      %v2685 = vld [vmem:[%s5 + $0xa4c] sm:$0xf]
      %v2686 = vld [vmem:[%s5 + $0xa50] sm:$0xf]
      %v2687 = vld [vmem:[%s5 + $0xa54] sm:$0xf]
      %v2688 = vld [vmem:[%s5 + $0xa58] sm:$0xf]
      %v2689 = vld [vmem:[%s5 + $0xa5c] sm:$0xf]
      %v2690 = vld [vmem:[%s5 + $0xa60] sm:$0xf]
      %v2691 = vld [vmem:[%s5 + $0xa64] sm:$0xf]
      %v2692 = vld [vmem:[%s5 + $0xa68] sm:$0xf]
      %v2693 = vld [vmem:[%s5 + $0xa6c] sm:$0xf]
      %v2694 = vld [vmem:[%s5 + $0xa70] sm:$0xf]
      %v2695 = vld [vmem:[%s5 + $0xa74] sm:$0xf]
      %v2696 = vld [vmem:[%s5 + $0xa78] sm:$0xf]
      %v2697 = vld [vmem:[%s5 + $0xa7c] sm:$0xf]
      %v2698 = vld [vmem:[%s5 + $0xa80] sm:$0xf]
      %v2699 = vld [vmem:[%s5 + $0xa84] sm:$0xf]
      %v2700 = vld [vmem:[%s5 + $0xa88] sm:$0xf]
      %v2701 = vld [vmem:[%s5 + $0xa8c] sm:$0xf]
      %v2702 = vld [vmem:[%s5 + $0xa90] sm:$0xf]
      %v2703 = vld [vmem:[%s5 + $0xa94] sm:$0xf]
      %v2704 = vld [vmem:[%s5 + $0xa98] sm:$0xf]
      %v2705 = vld [vmem:[%s5 + $0xa9c] sm:$0xf]
      %v2706 = vld [vmem:[%s5 + $0xaa0] sm:$0xf]
      %v2707 = vld [vmem:[%s5 + $0xaa4] sm:$0xf]
      %v2708 = vld [vmem:[%s5 + $0xaa8] sm:$0xf]
      %v2709 = vld [vmem:[%s5 + $0xaac] sm:$0xf]
      %v2710 = vld [vmem:[%s5 + $0xab0] sm:$0xf]
      %v2711 = vld [vmem:[%s5 + $0xab4] sm:$0xf]
      %v2712 = vld [vmem:[%s5 + $0xab8] sm:$0xf]
      %v2713 = vld [vmem:[%s5 + $0xabc] sm:$0xf]
      %v2714 = vld [vmem:[%s5 + $0xac0] sm:$0xf]
      %v2715 = vld [vmem:[%s5 + $0xac4] sm:$0xf]
      %v2716 = vld [vmem:[%s5 + $0xac8] sm:$0xf]
      %v2717 = vld [vmem:[%s5 + $0xacc] sm:$0xf]
      %v2718 = vld [vmem:[%s5 + $0xad0] sm:$0xf]
      %v2719 = vld [vmem:[%s5 + $0xad4] sm:$0xf]
      %v2720 = vld [vmem:[%s5 + $0xad8] sm:$0xf]
      %v2721 = vld [vmem:[%s5 + $0xadc] sm:$0xf]
      %v2722 = vld [vmem:[%s5 + $0xae0] sm:$0xf]
      %v2723 = vld [vmem:[%s5 + $0xae4] sm:$0xf]
      %v2724 = vld [vmem:[%s5 + $0xae8] sm:$0xf]
      %v2725 = vld [vmem:[%s5 + $0xaec] sm:$0xf]
      %v2726 = vld [vmem:[%s5 + $0xaf0] sm:$0xf]
      %v2727 = vld [vmem:[%s5 + $0xaf4] sm:$0xf]
      %v2728 = vld [vmem:[%s5 + $0xaf8] sm:$0xf]
      %v2729 = vld [vmem:[%s5 + $0xafc] sm:$0xf]
      %v2730 = vld [vmem:[%s5 + $0xb00] sm:$0xf]
      %v2731 = vld [vmem:[%s5 + $0xb04] sm:$0xf]
      %v2732 = vld [vmem:[%s5 + $0xb08] sm:$0xf]
      %v2733 = vld [vmem:[%s5 + $0xb0c] sm:$0xf]
      %v2734 = vld [vmem:[%s5 + $0xb10] sm:$0xf]
      %v2735 = vld [vmem:[%s5 + $0xb14] sm:$0xf]
      %v2736 = vld [vmem:[%s5 + $0xb18] sm:$0xf]
      %v2737 = vld [vmem:[%s5 + $0xb1c] sm:$0xf]
      %v2738 = vld [vmem:[%s5 + $0xb20] sm:$0xf]
      %v2739 = vld [vmem:[%s5 + $0xb24] sm:$0xf]
      %v2740 = vld [vmem:[%s5 + $0xb28] sm:$0xf]
      %v2741 = vld [vmem:[%s5 + $0xb2c] sm:$0xf]
      %v2742 = vld [vmem:[%s5 + $0xb30] sm:$0xf]
      %v2743 = vld [vmem:[%s5 + $0xb34] sm:$0xf]
      %v2744 = vld [vmem:[%s5 + $0xb38] sm:$0xf]
      %v2745 = vld [vmem:[%s5 + $0xb3c] sm:$0xf]
      %v2746 = vld [vmem:[%s5 + $0xb40] sm:$0xf]
      %v2747 = vld [vmem:[%s5 + $0xb44] sm:$0xf]
      %v2748 = vld [vmem:[%s5 + $0xb48] sm:$0xf]
      %v2749 = vld [vmem:[%s5 + $0xb4c] sm:$0xf]
      %v2750 = vld [vmem:[%s5 + $0xb50] sm:$0xf]
      %v2751 = vld [vmem:[%s5 + $0xb54] sm:$0xf]
      %v2752 = vld [vmem:[%s5 + $0xb58] sm:$0xf]
      %v2753 = vld [vmem:[%s5 + $0xb5c] sm:$0xf]
      %v2754 = vld [vmem:[%s5 + $0xb60] sm:$0xf]
      %v2755 = vld [vmem:[%s5 + $0xb64] sm:$0xf]
      %v2756 = vld [vmem:[%s5 + $0xb68] sm:$0xf]
      %v2757 = vld [vmem:[%s5 + $0xb6c] sm:$0xf]
      %v2758 = vld [vmem:[%s5 + $0xb70] sm:$0xf]
      %v2759 = vld [vmem:[%s5 + $0xb74] sm:$0xf]
      %v2760 = vld [vmem:[%s5 + $0xb78] sm:$0xf]
      %v2761 = vld [vmem:[%s5 + $0xb7c] sm:$0xf]
      %v2762 = vld [vmem:[%s5 + $0xb80] sm:$0xf]
      %v2763 = vld [vmem:[%s5 + $0xb84] sm:$0xf]
      %v2764 = vld [vmem:[%s5 + $0xb88] sm:$0xf]
      %v2765 = vld [vmem:[%s5 + $0xb8c] sm:$0xf]
      %v2766 = vld [vmem:[%s5 + $0xb90] sm:$0xf]
      %v2767 = vld [vmem:[%s5 + $0xb94] sm:$0xf]
      %v2768 = vld [vmem:[%s5 + $0xb98] sm:$0xf]
      %v2769 = vld [vmem:[%s5 + $0xb9c] sm:$0xf]
      %v2770 = vld [vmem:[%s5 + $0xba0] sm:$0xf]
      %v2771 = vld [vmem:[%s5 + $0xba4] sm:$0xf]
      %v2772 = vld [vmem:[%s5 + $0xba8] sm:$0xf]
      %v2773 = vld [vmem:[%s5 + $0xbac] sm:$0xf]
      %v2774 = vld [vmem:[%s5 + $0xbb0] sm:$0xf]
      %v2775 = vld [vmem:[%s5 + $0xbb4] sm:$0xf]
      %v2776 = vld [vmem:[%s5 + $0xbb8] sm:$0xf]
      %v2777 = vld [vmem:[%s5 + $0xbbc] sm:$0xf]
      %v2778 = vld [vmem:[%s5 + $0xbc0] sm:$0xf]
      %v2779 = vld [vmem:[%s5 + $0xbc4] sm:$0xf]
      %v2780 = vld [vmem:[%s5 + $0xbc8] sm:$0xf]
      %v2781 = vld [vmem:[%s5 + $0xbcc] sm:$0xf]
      %v2782 = vld [vmem:[%s5 + $0xbd0] sm:$0xf]
      %v2783 = vld [vmem:[%s5 + $0xbd4] sm:$0xf]
      %v2784 = vld [vmem:[%s5 + $0xbd8] sm:$0xf]
      %v2785 = vld [vmem:[%s5 + $0xbdc] sm:$0xf]
      %v2786 = vld [vmem:[%s5 + $0xbe0] sm:$0xf]
      %v2787 = vld [vmem:[%s5 + $0xbe4] sm:$0xf]
      %v2788 = vld [vmem:[%s5 + $0xbe8] sm:$0xf]
      %v2789 = vld [vmem:[%s5 + $0xbec] sm:$0xf]
      %v2790 = vld [vmem:[%s5 + $0xbf0] sm:$0xf]
      %v2791 = vld [vmem:[%s5 + $0xbf4] sm:$0xf]
      %v2792 = vld [vmem:[%s5 + $0xbf8] sm:$0xf]
      %v2793 = vld [vmem:[%s5 + $0xbfc] sm:$0xf]
      %v2794 = vld [vmem:[%s5 + $0xc00] sm:$0xf]
      %v2795 = vld [vmem:[%s5 + $0xc04] sm:$0xf]
      %v2796 = vld [vmem:[%s5 + $0xc08] sm:$0xf]
      %v2797 = vld [vmem:[%s5 + $0xc0c] sm:$0xf]
      %v2798 = vld [vmem:[%s5 + $0xc10] sm:$0xf]
      %v2799 = vld [vmem:[%s5 + $0xc14] sm:$0xf]
      %v2800 = vld [vmem:[%s5 + $0xc18] sm:$0xf]
      %v2801 = vld [vmem:[%s5 + $0xc1c] sm:$0xf]
      %v2802 = vld [vmem:[%s5 + $0xc20] sm:$0xf]
      %v2803 = vld [vmem:[%s5 + $0xc24] sm:$0xf]
      %v2804 = vld [vmem:[%s5 + $0xc28] sm:$0xf]
      %v2805 = vld [vmem:[%s5 + $0xc2c] sm:$0xf]
      %v2806 = vld [vmem:[%s5 + $0xc30] sm:$0xf]
      %v2807 = vld [vmem:[%s5 + $0xc34] sm:$0xf]
      %v2808 = vld [vmem:[%s5 + $0xc38] sm:$0xf]
      %v2809 = vld [vmem:[%s5 + $0xc3c] sm:$0xf]
      %v2810 = vld [vmem:[%s5 + $0xc40] sm:$0xf]
      %v2811 = vld [vmem:[%s5 + $0xc44] sm:$0xf]
      %v2812 = vld [vmem:[%s5 + $0xc48] sm:$0xf]
      %v2813 = vld [vmem:[%s5 + $0xc4c] sm:$0xf]
      %v2814 = vld [vmem:[%s5 + $0xc50] sm:$0xf]
      %v2815 = vld [vmem:[%s5 + $0xc54] sm:$0xf]
      %v2816 = vld [vmem:[%s5 + $0xc58] sm:$0xf]
      %v2817 = vld [vmem:[%s5 + $0xc5c] sm:$0xf]
      %v2818 = vld [vmem:[%s5 + $0xc60] sm:$0xf]
      %v2819 = vld [vmem:[%s5 + $0xc64] sm:$0xf]
      %v2820 = vld [vmem:[%s5 + $0xc68] sm:$0xf]
      %v2821 = vld [vmem:[%s5 + $0xc6c] sm:$0xf]
      %v2822 = vld [vmem:[%s5 + $0xc70] sm:$0xf]
      %v2823 = vld [vmem:[%s5 + $0xc74] sm:$0xf]
      %v2824 = vld [vmem:[%s5 + $0xc78] sm:$0xf]
      %v2825 = vld [vmem:[%s5 + $0xc7c] sm:$0xf]
      %v2826 = vld [vmem:[%s5 + $0xc80] sm:$0xf]
      %v2827 = vld [vmem:[%s5 + $0xc84] sm:$0xf]
      %v2828 = vld [vmem:[%s5 + $0xc88] sm:$0xf]
      %v2829 = vld [vmem:[%s5 + $0xc8c] sm:$0xf]
      %v2830 = vld [vmem:[%s5 + $0xc90] sm:$0xf]
      %v2831 = vld [vmem:[%s5 + $0xc94] sm:$0xf]
      %v2832 = vld [vmem:[%s5 + $0xc98] sm:$0xf]
      %v2833 = vld [vmem:[%s5 + $0xc9c] sm:$0xf]
      %v2834 = vld [vmem:[%s5 + $0xca0] sm:$0xf]
      %v2835 = vld [vmem:[%s5 + $0xca4] sm:$0xf]
      %v2836 = vld [vmem:[%s5 + $0xca8] sm:$0xf]
      %v2837 = vld [vmem:[%s5 + $0xcac] sm:$0xf]
      %v2838 = vld [vmem:[%s5 + $0xcb0] sm:$0xf]
      %v2839 = vld [vmem:[%s5 + $0xcb4] sm:$0xf]
      %v2840 = vld [vmem:[%s5 + $0xcb8] sm:$0xf]
      %v2841 = vld [vmem:[%s5 + $0xcbc] sm:$0xf]
      %v2842 = vld [vmem:[%s5 + $0xcc0] sm:$0xf]
      %v2843 = vld [vmem:[%s5 + $0xcc4] sm:$0xf]
      %v2844 = vld [vmem:[%s5 + $0xcc8] sm:$0xf]
      %v2845 = vld [vmem:[%s5 + $0xccc] sm:$0xf]
      %v2846 = vld [vmem:[%s5 + $0xcd0] sm:$0xf]
      %v2847 = vld [vmem:[%s5 + $0xcd4] sm:$0xf]
      %v2848 = vld [vmem:[%s5 + $0xcd8] sm:$0xf]
      %v2849 = vld [vmem:[%s5 + $0xcdc] sm:$0xf]
      %v2850 = vld [vmem:[%s5 + $0xce0] sm:$0xf]
      %v2851 = vld [vmem:[%s5 + $0xce4] sm:$0xf]
      %v2852 = vld [vmem:[%s5 + $0xce8] sm:$0xf]
      %v2853 = vld [vmem:[%s5 + $0xcec] sm:$0xf]
      %v2854 = vld [vmem:[%s5 + $0xcf0] sm:$0xf]
      %v2855 = vld [vmem:[%s5 + $0xcf4] sm:$0xf]
      %v2856 = vld [vmem:[%s5 + $0xcf8] sm:$0xf]
      %v2857 = vld [vmem:[%s5 + $0xcfc] sm:$0xf]
      %v2858 = vld [vmem:[%s5 + $0xd00] sm:$0xf]
      %v2859 = vld [vmem:[%s5 + $0xd04] sm:$0xf]
      %v2860 = vld [vmem:[%s5 + $0xd08] sm:$0xf]
      %v2861 = vld [vmem:[%s5 + $0xd0c] sm:$0xf]
      %v2862 = vld [vmem:[%s5 + $0xd10] sm:$0xf]
      %v2863 = vld [vmem:[%s5 + $0xd14] sm:$0xf]
      %v2864 = vld [vmem:[%s5 + $0xd18] sm:$0xf]
      %v2865 = vld [vmem:[%s5 + $0xd1c] sm:$0xf]
      %v2866 = vld [vmem:[%s5 + $0xd20] sm:$0xf]
      %v2867 = vld [vmem:[%s5 + $0xd24] sm:$0xf]
      %v2868 = vld [vmem:[%s5 + $0xd28] sm:$0xf]
      %v2869 = vld [vmem:[%s5 + $0xd2c] sm:$0xf]
      %v2870 = vld [vmem:[%s5 + $0xd30] sm:$0xf]
      %v2871 = vld [vmem:[%s5 + $0xd34] sm:$0xf]
      %v2872 = vld [vmem:[%s5 + $0xd38] sm:$0xf]
      %v2873 = vld [vmem:[%s5 + $0xd3c] sm:$0xf]
      %v2874 = vld [vmem:[%s5 + $0xd40] sm:$0xf]
      %v2875 = vld [vmem:[%s5 + $0xd44] sm:$0xf]
      %v2876 = vld [vmem:[%s5 + $0xd48] sm:$0xf]
      %v2877 = vld [vmem:[%s5 + $0xd4c] sm:$0xf]
      %v2878 = vld [vmem:[%s5 + $0xd50] sm:$0xf]
      %v2879 = vld [vmem:[%s5 + $0xd54] sm:$0xf]
      %v2880 = vld [vmem:[%s5 + $0xd58] sm:$0xf]
      %v2881 = vld [vmem:[%s5 + $0xd5c] sm:$0xf]
      %v2882 = vld [vmem:[%s5 + $0xd60] sm:$0xf]
      %v2883 = vld [vmem:[%s5 + $0xd64] sm:$0xf]
      %v2884 = vld [vmem:[%s5 + $0xd68] sm:$0xf]
      %v2885 = vld [vmem:[%s5 + $0xd6c] sm:$0xf]
      %v2886 = vld [vmem:[%s5 + $0xd70] sm:$0xf]
      %v2887 = vld [vmem:[%s5 + $0xd74] sm:$0xf]
      %v2888 = vld [vmem:[%s5 + $0xd78] sm:$0xf]
      %v2889 = vld [vmem:[%s5 + $0xd7c] sm:$0xf]
      %v2890 = vld [vmem:[%s5 + $0xd80] sm:$0xf]
      %v2891 = vld [vmem:[%s5 + $0xd84] sm:$0xf]
      %v2892 = vld [vmem:[%s5 + $0xd88] sm:$0xf]
      %v2893 = vld [vmem:[%s5 + $0xd8c] sm:$0xf]
      %v2894 = vld [vmem:[%s5 + $0xd90] sm:$0xf]
      %v2895 = vld [vmem:[%s5 + $0xd94] sm:$0xf]
      %v2896 = vld [vmem:[%s5 + $0xd98] sm:$0xf]
      %v2897 = vld [vmem:[%s5 + $0xd9c] sm:$0xf]
      %v2898 = vld [vmem:[%s5 + $0xda0] sm:$0xf]
      %v2899 = vld [vmem:[%s5 + $0xda4] sm:$0xf]
      %v2900 = vld [vmem:[%s5 + $0xda8] sm:$0xf]
      %v2901 = vld [vmem:[%s5 + $0xdac] sm:$0xf]
      %v2902 = vld [vmem:[%s5 + $0xdb0] sm:$0xf]
      %v2903 = vld [vmem:[%s5 + $0xdb4] sm:$0xf]
      %v2904 = vld [vmem:[%s5 + $0xdb8] sm:$0xf]
      %v2905 = vld [vmem:[%s5 + $0xdbc] sm:$0xf]
      %v2906 = vld [vmem:[%s5 + $0xdc0] sm:$0xf]
      %v2907 = vld [vmem:[%s5 + $0xdc4] sm:$0xf]
      %v2908 = vld [vmem:[%s5 + $0xdc8] sm:$0xf]
      %v2909 = vld [vmem:[%s5 + $0xdcc] sm:$0xf]
      %v2910 = vld [vmem:[%s5 + $0xdd0] sm:$0xf]
      %v2911 = vld [vmem:[%s5 + $0xdd4] sm:$0xf]
      %v2912 = vld [vmem:[%s5 + $0xdd8] sm:$0xf]
      %v2913 = vld [vmem:[%s5 + $0xddc] sm:$0xf]
      %v2914 = vld [vmem:[%s5 + $0xde0] sm:$0xf]
      %v2915 = vld [vmem:[%s5 + $0xde4] sm:$0xf]
      %v2916 = vld [vmem:[%s5 + $0xde8] sm:$0xf]
      %v2917 = vld [vmem:[%s5 + $0xdec] sm:$0xf]
      %v2918 = vld [vmem:[%s5 + $0xdf0] sm:$0xf]
      %v2919 = vld [vmem:[%s5 + $0xdf4] sm:$0xf]
      %v2920 = vld [vmem:[%s5 + $0xdf8] sm:$0xf]
      %v2921 = vld [vmem:[%s5 + $0xdfc] sm:$0xf]
      %v2922 = vld [vmem:[%s5 + $0xe00] sm:$0xf]
      %v2923 = vld [vmem:[%s5 + $0xe04] sm:$0xf]
      %v2924 = vld [vmem:[%s5 + $0xe08] sm:$0xf]
      %v2925 = vld [vmem:[%s5 + $0xe0c] sm:$0xf]
      %v2926 = vld [vmem:[%s5 + $0xe10] sm:$0xf]
      %v2927 = vld [vmem:[%s5 + $0xe14] sm:$0xf]
      %v2928 = vld [vmem:[%s5 + $0xe18] sm:$0xf]
      %v2929 = vld [vmem:[%s5 + $0xe1c] sm:$0xf]
      %v2930 = vld [vmem:[%s5 + $0xe20] sm:$0xf]
      %v2931 = vld [vmem:[%s5 + $0xe24] sm:$0xf]
      %v2932 = vld [vmem:[%s5 + $0xe28] sm:$0xf]
      %v2933 = vld [vmem:[%s5 + $0xe2c] sm:$0xf]
      %v2934 = vld [vmem:[%s5 + $0xe30] sm:$0xf]
      %v2935 = vld [vmem:[%s5 + $0xe34] sm:$0xf]
      %v2936 = vld [vmem:[%s5 + $0xe38] sm:$0xf]
      %v2937 = vld [vmem:[%s5 + $0xe3c] sm:$0xf]
      %v2938 = vld [vmem:[%s5 + $0xe40] sm:$0xf]
      %v2939 = vld [vmem:[%s5 + $0xe44] sm:$0xf]
      %v2940 = vld [vmem:[%s5 + $0xe48] sm:$0xf]
      %v2941 = vld [vmem:[%s5 + $0xe4c] sm:$0xf]
      %v2942 = vld [vmem:[%s5 + $0xe50] sm:$0xf]
      %v2943 = vld [vmem:[%s5 + $0xe54] sm:$0xf]
      %v2944 = vld [vmem:[%s5 + $0xe58] sm:$0xf]
      %v2945 = vld [vmem:[%s5 + $0xe5c] sm:$0xf]
      %v2946 = vld [vmem:[%s5 + $0xe60] sm:$0xf]
      %v2947 = vld [vmem:[%s5 + $0xe64] sm:$0xf]
      %v2948 = vld [vmem:[%s5 + $0xe68] sm:$0xf]
      %v2949 = vld [vmem:[%s5 + $0xe6c] sm:$0xf]
      %v2950 = vld [vmem:[%s5 + $0xe70] sm:$0xf]
      %v2951 = vld [vmem:[%s5 + $0xe74] sm:$0xf]
      %v2952 = vld [vmem:[%s5 + $0xe78] sm:$0xf]
      %v2953 = vld [vmem:[%s5 + $0xe7c] sm:$0xf]
      %v2954 = vld [vmem:[%s5 + $0xe80] sm:$0xf]
      %v2955 = vld [vmem:[%s5 + $0xe84] sm:$0xf]
      %v2956 = vld [vmem:[%s5 + $0xe88] sm:$0xf]
      %v2957 = vld [vmem:[%s5 + $0xe8c] sm:$0xf]
      %v2958 = vld [vmem:[%s5 + $0xe90] sm:$0xf]
      %v2959 = vld [vmem:[%s5 + $0xe94] sm:$0xf]
      %v2960 = vld [vmem:[%s5 + $0xe98] sm:$0xf]
      %v2961 = vld [vmem:[%s5 + $0xe9c] sm:$0xf]
      %v2962 = vld [vmem:[%s5 + $0xea0] sm:$0xf]
      %v2963 = vld [vmem:[%s5 + $0xea4] sm:$0xf]
      %v2964 = vld [vmem:[%s5 + $0xea8] sm:$0xf]
      %v2965 = vld [vmem:[%s5 + $0xeac] sm:$0xf]
      %v2966 = vld [vmem:[%s5 + $0xeb0] sm:$0xf]
      %v2967 = vld [vmem:[%s5 + $0xeb4] sm:$0xf]
      %v2968 = vld [vmem:[%s5 + $0xeb8] sm:$0xf]
      %v2969 = vld [vmem:[%s5 + $0xebc] sm:$0xf]
      %v2970 = vld [vmem:[%s5 + $0xec0] sm:$0xf]
      %v2971 = vld [vmem:[%s5 + $0xec4] sm:$0xf]
      %v2972 = vld [vmem:[%s5 + $0xec8] sm:$0xf]
      %v2973 = vld [vmem:[%s5 + $0xecc] sm:$0xf]
      %v2974 = vld [vmem:[%s5 + $0xed0] sm:$0xf]
      %v2975 = vld [vmem:[%s5 + $0xed4] sm:$0xf]
      %v2976 = vld [vmem:[%s5 + $0xed8] sm:$0xf]
      %v2977 = vld [vmem:[%s5 + $0xedc] sm:$0xf]
      %v2978 = vld [vmem:[%s5 + $0xee0] sm:$0xf]
      %v2979 = vld [vmem:[%s5 + $0xee4] sm:$0xf]
      %v2980 = vld [vmem:[%s5 + $0xee8] sm:$0xf]
      %v2981 = vld [vmem:[%s5 + $0xeec] sm:$0xf]
      %v2982 = vld [vmem:[%s5 + $0xef0] sm:$0xf]
      %v2983 = vld [vmem:[%s5 + $0xef4] sm:$0xf]
      %v2984 = vld [vmem:[%s5 + $0xef8] sm:$0xf]
      %v2985 = vld [vmem:[%s5 + $0xefc] sm:$0xf]
      %v2986 = vld [vmem:[%s5 + $0xf00] sm:$0xf]
      %v2987 = vld [vmem:[%s5 + $0xf04] sm:$0xf]
      %v2988 = vld [vmem:[%s5 + $0xf08] sm:$0xf]
      %v2989 = vld [vmem:[%s5 + $0xf0c] sm:$0xf]
      %v2990 = vld [vmem:[%s5 + $0xf10] sm:$0xf]
      %v2991 = vld [vmem:[%s5 + $0xf14] sm:$0xf]
      %v2992 = vld [vmem:[%s5 + $0xf18] sm:$0xf]
      %v2993 = vld [vmem:[%s5 + $0xf1c] sm:$0xf]
      %v2994 = vld [vmem:[%s5 + $0xf20] sm:$0xf]
      %v2995 = vld [vmem:[%s5 + $0xf24] sm:$0xf]
      %v2996 = vld [vmem:[%s5 + $0xf28] sm:$0xf]
      %v2997 = vld [vmem:[%s5 + $0xf2c] sm:$0xf]
      %v2998 = vld [vmem:[%s5 + $0xf30] sm:$0xf]
      %v2999 = vld [vmem:[%s5 + $0xf34] sm:$0xf]
      %v3000 = vld [vmem:[%s5 + $0xf38] sm:$0xf]
      %v3001 = vld [vmem:[%s5 + $0xf3c] sm:$0xf]
      %v3002 = vld [vmem:[%s5 + $0xf40] sm:$0xf]
      %v3003 = vld [vmem:[%s5 + $0xf44] sm:$0xf]
      %v3004 = vld [vmem:[%s5 + $0xf48] sm:$0xf]
      %v3005 = vld [vmem:[%s5 + $0xf4c] sm:$0xf]
      %v3006 = vld [vmem:[%s5 + $0xf50] sm:$0xf]
      %v3007 = vld [vmem:[%s5 + $0xf54] sm:$0xf]
      %v3008 = vld [vmem:[%s5 + $0xf58] sm:$0xf]
      %v3009 = vld [vmem:[%s5 + $0xf5c] sm:$0xf]
      %v3010 = vld [vmem:[%s5 + $0xf60] sm:$0xf]
      %v3011 = vld [vmem:[%s5 + $0xf64] sm:$0xf]
      %v3012 = vld [vmem:[%s5 + $0xf68] sm:$0xf]
      %v3013 = vld [vmem:[%s5 + $0xf6c] sm:$0xf]
      %v3014 = vld [vmem:[%s5 + $0xf70] sm:$0xf]
      %v3015 = vld [vmem:[%s5 + $0xf74] sm:$0xf]
      %v3016 = vld [vmem:[%s5 + $0xf78] sm:$0xf]
      %v3017 = vld [vmem:[%s5 + $0xf7c] sm:$0xf]
      %v3018 = vld [vmem:[%s5 + $0xf80] sm:$0xf]
      %v3019 = vld [vmem:[%s5 + $0xf84] sm:$0xf]
      %v3020 = vld [vmem:[%s5 + $0xf88] sm:$0xf]
      %v3021 = vld [vmem:[%s5 + $0xf8c] sm:$0xf]
      %v3022 = vld [vmem:[%s5 + $0xf90] sm:$0xf]
      %v3023 = vld [vmem:[%s5 + $0xf94] sm:$0xf]
      %v3024 = vld [vmem:[%s5 + $0xf98] sm:$0xf]
      %v3025 = vld [vmem:[%s5 + $0xf9c] sm:$0xf]
      %v3026 = vld [vmem:[%s5 + $0xfa0] sm:$0xf]
      %v3027 = vld [vmem:[%s5 + $0xfa4] sm:$0xf]
      %v3028 = vld [vmem:[%s5 + $0xfa8] sm:$0xf]
      %v3029 = vld [vmem:[%s5 + $0xfac] sm:$0xf]
      %v3030 = vld [vmem:[%s5 + $0xfb0] sm:$0xf]
      %v3031 = vld [vmem:[%s5 + $0xfb4] sm:$0xf]
      %v3032 = vld [vmem:[%s5 + $0xfb8] sm:$0xf]
      %v3033 = vld [vmem:[%s5 + $0xfbc] sm:$0xf]
      %v3034 = vld [vmem:[%s5 + $0xfc0] sm:$0xf]
      %v3035 = vld [vmem:[%s5 + $0xfc4] sm:$0xf]
      %v3036 = vld [vmem:[%s5 + $0xfc8] sm:$0xf]
      %v3037 = vld [vmem:[%s5 + $0xfcc] sm:$0xf]
      %v3038 = vld [vmem:[%s5 + $0xfd0] sm:$0xf]
      %v3039 = vld [vmem:[%s5 + $0xfd4] sm:$0xf]
      %v3040 = vld [vmem:[%s5 + $0xfd8] sm:$0xf]
      %v3041 = vld [vmem:[%s5 + $0xfdc] sm:$0xf]
      %v3042 = vld [vmem:[%s5 + $0xfe0] sm:$0xf]
      %v3043 = vld [vmem:[%s5 + $0xfe4] sm:$0xf]
      %v3044 = vld [vmem:[%s5 + $0xfe8] sm:$0xf]
      %v3045 = vld [vmem:[%s5 + $0xfec] sm:$0xf]
      %v3046 = vld [vmem:[%s5 + $0xff0] sm:$0xf]
      %v3047 = vld [vmem:[%s5 + $0xff4] sm:$0xf]
      %v3048 = vld [vmem:[%s5 + $0xff8] sm:$0xf]
      %v3049 = vld [vmem:[%s5 + $0xffc] sm:$0xf]
      %v3050 = vld [vmem:[%s5 + $0x1000] sm:$0xf]
      %v3051 = vld [vmem:[%s5 + $0x1004] sm:$0xf]
      %v3052 = vld [vmem:[%s5 + $0x1008] sm:$0xf]
      %v3053 = vld [vmem:[%s5 + $0x100c] sm:$0xf]
      %v3054 = vld [vmem:[%s5 + $0x1010] sm:$0xf]
      %v3055 = vld [vmem:[%s5 + $0x1014] sm:$0xf]
      %v3056 = vld [vmem:[%s5 + $0x1018] sm:$0xf]
      %v3057 = vld [vmem:[%s5 + $0x101c] sm:$0xf]
      %v3058 = vld [vmem:[%s5 + $0x1020] sm:$0xf]
      %v3059 = vld [vmem:[%s5 + $0x1024] sm:$0xf]
      %v3060 = vld [vmem:[%s5 + $0x1028] sm:$0xf]
      %v3061 = vld [vmem:[%s5 + $0x102c] sm:$0xf]
      %v3062 = vld [vmem:[%s5 + $0x1030] sm:$0xf]
      %v3063 = vld [vmem:[%s5 + $0x1034] sm:$0xf]
      %v3064 = vld [vmem:[%s5 + $0x1038] sm:$0xf]
      %v3065 = vld [vmem:[%s5 + $0x103c] sm:$0xf]
      %v3066 = vld [vmem:[%s5 + $0x1040] sm:$0xf]
      %v3067 = vld [vmem:[%s5 + $0x1044] sm:$0xf]
      %v3068 = vld [vmem:[%s5 + $0x1048] sm:$0xf]
      %v3069 = vld [vmem:[%s5 + $0x104c] sm:$0xf]
      %v3070 = vld [vmem:[%s5 + $0x1050] sm:$0xf]
      %v3071 = vld [vmem:[%s5 + $0x1054] sm:$0xf]
      %v3072 = vld [vmem:[%s5 + $0x1058] sm:$0xf]
      %v3073 = vld [vmem:[%s5 + $0x105c] sm:$0xf]
      %v3074 = vld [vmem:[%s5 + $0x1060] sm:$0xf]
      %v3075 = vld [vmem:[%s5 + $0x1064] sm:$0xf]
      %v3076 = vld [vmem:[%s5 + $0x1068] sm:$0xf]
      %v3077 = vld [vmem:[%s5 + $0x106c] sm:$0xf]
      %v3078 = vld [vmem:[%s5 + $0x1070] sm:$0xf]
      %v3079 = vld [vmem:[%s5 + $0x1074] sm:$0xf]
      %v3080 = vld [vmem:[%s5 + $0x1078] sm:$0xf]
      %v3081 = vld [vmem:[%s5 + $0x107c] sm:$0xf]
      %v3082 = vld [vmem:[%s5 + $0x1080] sm:$0xf]
      %v3083 = vld [vmem:[%s5 + $0x1084] sm:$0xf]
      %v3084 = vld [vmem:[%s5 + $0x1088] sm:$0xf]
      %v3085 = vld [vmem:[%s5 + $0x108c] sm:$0xf]
      %v3086 = vld [vmem:[%s5 + $0x1090] sm:$0xf]
      %v3087 = vld [vmem:[%s5 + $0x1094] sm:$0xf]
      %v3088 = vld [vmem:[%s5 + $0x1098] sm:$0xf]
      %v3089 = vld [vmem:[%s5 + $0x109c] sm:$0xf]
      %v3090 = vld [vmem:[%s5 + $0x10a0] sm:$0xf]
      %v3091 = vld [vmem:[%s5 + $0x10a4] sm:$0xf]
      %v3092 = vld [vmem:[%s5 + $0x10a8] sm:$0xf]
      %v3093 = vld [vmem:[%s5 + $0x10ac] sm:$0xf]
      %v3094 = vld [vmem:[%s5 + $0x10b0] sm:$0xf]
      %v3095 = vld [vmem:[%s5 + $0x10b4] sm:$0xf]
      %v3096 = vld [vmem:[%s5 + $0x10b8] sm:$0xf]
      %v3097 = vld [vmem:[%s5 + $0x10bc] sm:$0xf]
      %v3098 = vld [vmem:[%s5 + $0x10c0] sm:$0xf]
      %v3099 = vld [vmem:[%s5 + $0x10c4] sm:$0xf]
      %v3100 = vld [vmem:[%s5 + $0x10c8] sm:$0xf]
      %v3101 = vld [vmem:[%s5 + $0x10cc] sm:$0xf]
      %v3102 = vld [vmem:[%s5 + $0x10d0] sm:$0xf]
      %v3103 = vld [vmem:[%s5 + $0x10d4] sm:$0xf]
      %v3104 = vld [vmem:[%s5 + $0x10d8] sm:$0xf]
      %v3105 = vld [vmem:[%s5 + $0x10dc] sm:$0xf]
      %v3106 = vld [vmem:[%s5 + $0x10e0] sm:$0xf]
      %v3107 = vld [vmem:[%s5 + $0x10e4] sm:$0xf]
      %v3108 = vld [vmem:[%s5 + $0x10e8] sm:$0xf]
      %v3109 = vld [vmem:[%s5 + $0x10ec] sm:$0xf]
      %v3110 = vld [vmem:[%s5 + $0x10f0] sm:$0xf]
      %v3111 = vld [vmem:[%s5 + $0x10f4] sm:$0xf]
      %v3112 = vld [vmem:[%s5 + $0x10f8] sm:$0xf]
      %v3113 = vld [vmem:[%s5 + $0x10fc] sm:$0xf]
      %v3114 = vld [vmem:[%s5 + $0x1100] sm:$0xf]
      %v3115 = vld [vmem:[%s5 + $0x1104] sm:$0xf]
      %v3116 = vld [vmem:[%s5 + $0x1108] sm:$0xf]
      %v3117 = vld [vmem:[%s5 + $0x110c] sm:$0xf]
      %v3118 = vld [vmem:[%s5 + $0x1110] sm:$0xf]
      %v3119 = vld [vmem:[%s5 + $0x1114] sm:$0xf]
      %v3120 = vld [vmem:[%s5 + $0x1118] sm:$0xf]
      %v3121 = vld [vmem:[%s5 + $0x111c] sm:$0xf]
      %v3122 = vld [vmem:[%s5 + $0x1120] sm:$0xf]
      %v3123 = vld [vmem:[%s5 + $0x1124] sm:$0xf]
      %v3124 = vld [vmem:[%s5 + $0x1128] sm:$0xf]
      %v3125 = vld [vmem:[%s5 + $0x112c] sm:$0xf]
      %v3126 = vld [vmem:[%s5 + $0x1130] sm:$0xf]
      %v3127 = vld [vmem:[%s5 + $0x1134] sm:$0xf]
      %v3128 = vld [vmem:[%s5 + $0x1138] sm:$0xf]
      %v3129 = vld [vmem:[%s5 + $0x113c] sm:$0xf]
      %v3130 = vld [vmem:[%s5 + $0x1140] sm:$0xf]
      %v3131 = vld [vmem:[%s5 + $0x1144] sm:$0xf]
      %v3132 = vld [vmem:[%s5 + $0x1148] sm:$0xf]
      %v3133 = vld [vmem:[%s5 + $0x114c] sm:$0xf]
      %v3134 = vld [vmem:[%s5 + $0x1150] sm:$0xf]
      %v3135 = vld [vmem:[%s5 + $0x1154] sm:$0xf]
      %v3136 = vld [vmem:[%s5 + $0x1158] sm:$0xf]
      %v3137 = vld [vmem:[%s5 + $0x115c] sm:$0xf]
      %v3138 = vld [vmem:[%s5 + $0x1160] sm:$0xf]
      %v3139 = vld [vmem:[%s5 + $0x1164] sm:$0xf]
      %v3140 = vld [vmem:[%s5 + $0x1168] sm:$0xf]
      %v3141 = vld [vmem:[%s5 + $0x116c] sm:$0xf]
      %v3142 = vld [vmem:[%s5 + $0x1170] sm:$0xf]
      %v3143 = vld [vmem:[%s5 + $0x1174] sm:$0xf]
      %v3144 = vld [vmem:[%s5 + $0x1178] sm:$0xf]
      %v3145 = vld [vmem:[%s5 + $0x117c] sm:$0xf]
      %v3146 = vld [vmem:[%s5 + $0x1180] sm:$0xf]
      %v3147 = vld [vmem:[%s5 + $0x1184] sm:$0xf]
      %v3148 = vld [vmem:[%s5 + $0x1188] sm:$0xf]
      %v3149 = vld [vmem:[%s5 + $0x118c] sm:$0xf]
      %v3150 = vld [vmem:[%s5 + $0x1190] sm:$0xf]
      %v3151 = vld [vmem:[%s5 + $0x1194] sm:$0xf]
      %v3152 = vld [vmem:[%s5 + $0x1198] sm:$0xf]
      %v3153 = vld [vmem:[%s5 + $0x119c] sm:$0xf]
      %v3154 = vld [vmem:[%s5 + $0x11a0] sm:$0xf]
      %v3155 = vld [vmem:[%s5 + $0x11a4] sm:$0xf]
      %v3156 = vld [vmem:[%s5 + $0x11a8] sm:$0xf]
      %v3157 = vld [vmem:[%s5 + $0x11ac] sm:$0xf]
      %v3158 = vld [vmem:[%s5 + $0x11b0] sm:$0xf]
      %v3159 = vld [vmem:[%s5 + $0x11b4] sm:$0xf]
      %v3160 = vld [vmem:[%s5 + $0x11b8] sm:$0xf]
      %v3161 = vld [vmem:[%s5 + $0x11bc] sm:$0xf]
      %v3162 = vld [vmem:[%s5 + $0x11c0] sm:$0xf]
      %v3163 = vld [vmem:[%s5 + $0x11c4] sm:$0xf]
      %v3164 = vld [vmem:[%s5 + $0x11c8] sm:$0xf]
      %v3165 = vld [vmem:[%s5 + $0x11cc] sm:$0xf]
      %v3166 = vld [vmem:[%s5 + $0x11d0] sm:$0xf]
      %v3167 = vld [vmem:[%s5 + $0x11d4] sm:$0xf]
      %v3168 = vld [vmem:[%s5 + $0x11d8] sm:$0xf]
      %v3169 = vld [vmem:[%s5 + $0x11dc] sm:$0xf]
      %v3170 = vld [vmem:[%s5 + $0x11e0] sm:$0xf]
      %v3171 = vld [vmem:[%s5 + $0x11e4] sm:$0xf]
      %v3172 = vld [vmem:[%s5 + $0x11e8] sm:$0xf]
      %v3173 = vld [vmem:[%s5 + $0x11ec] sm:$0xf]
      %v3174 = vld [vmem:[%s5 + $0x11f0] sm:$0xf]
      %v3175 = vld [vmem:[%s5 + $0x11f4] sm:$0xf]
      %v3176 = vld [vmem:[%s5 + $0x11f8] sm:$0xf]
      %v3177 = vld [vmem:[%s5 + $0x11fc] sm:$0xf]
      %v3178 = vld [vmem:[%s5 + $0x1200] sm:$0xf]
      %v3179 = vld [vmem:[%s5 + $0x1204] sm:$0xf]
      %v3180 = vld [vmem:[%s5 + $0x1208] sm:$0xf]
      %v3181 = vld [vmem:[%s5 + $0x120c] sm:$0xf]
      %v3182 = vld [vmem:[%s5 + $0x1210] sm:$0xf]
      %v3183 = vld [vmem:[%s5 + $0x1214] sm:$0xf]
      %v3184 = vld [vmem:[%s5 + $0x1218] sm:$0xf]
      %v3185 = vld [vmem:[%s5 + $0x121c] sm:$0xf]
      %v3186 = vld [vmem:[%s5 + $0x1220] sm:$0xf]
      %v3187 = vld [vmem:[%s5 + $0x1224] sm:$0xf]
      %v3188 = vld [vmem:[%s5 + $0x1228] sm:$0xf]
      %v3189 = vld [vmem:[%s5 + $0x122c] sm:$0xf]
      %v3190 = vld [vmem:[%s5 + $0x1230] sm:$0xf]
      %v3191 = vld [vmem:[%s5 + $0x1234] sm:$0xf]
      %v3192 = vld [vmem:[%s5 + $0x1238] sm:$0xf]
      %v3193 = vld [vmem:[%s5 + $0x123c] sm:$0xf]
      %v3194 = vld [vmem:[%s5 + $0x1240] sm:$0xf]
      %v3195 = vld [vmem:[%s5 + $0x1244] sm:$0xf]
      %v3196 = vld [vmem:[%s5 + $0x1248] sm:$0xf]
      %v3197 = vld [vmem:[%s5 + $0x124c] sm:$0xf]
      %v3198 = vld [vmem:[%s5 + $0x1250] sm:$0xf]
      %v3199 = vld [vmem:[%s5 + $0x1254] sm:$0xf]
      %v3200 = vld [vmem:[%s5 + $0x1258] sm:$0xf]
      %v3201 = vld [vmem:[%s5 + $0x125c] sm:$0xf]
      %v3202 = vld [vmem:[%s5 + $0x1260] sm:$0xf]
      %v3203 = vld [vmem:[%s5 + $0x1264] sm:$0xf]
      %v3204 = vld [vmem:[%s5 + $0x1268] sm:$0xf]
      %v3205 = vld [vmem:[%s5 + $0x126c] sm:$0xf]
      %v3206 = vld [vmem:[%s5 + $0x1270] sm:$0xf]
      %v3207 = vld [vmem:[%s5 + $0x1274] sm:$0xf]
      %v3208 = vld [vmem:[%s5 + $0x1278] sm:$0xf]
      %v3209 = vld [vmem:[%s5 + $0x127c] sm:$0xf]
      %v3210 = vld [vmem:[%s5 + $0x1280] sm:$0xf]
      %v3211 = vld [vmem:[%s5 + $0x1284] sm:$0xf]
      %v3212 = vld [vmem:[%s5 + $0x1288] sm:$0xf]
      %v3213 = vld [vmem:[%s5 + $0x128c] sm:$0xf]
      %v3214 = vld [vmem:[%s5 + $0x1290] sm:$0xf]
      %v3215 = vld [vmem:[%s5 + $0x1294] sm:$0xf]
      %v3216 = vld [vmem:[%s5 + $0x1298] sm:$0xf]
      %v3217 = vld [vmem:[%s5 + $0x129c] sm:$0xf]
      %v3218 = vld [vmem:[%s5 + $0x12a0] sm:$0xf]
      %v3219 = vld [vmem:[%s5 + $0x12a4] sm:$0xf]
      %v3220 = vld [vmem:[%s5 + $0x12a8] sm:$0xf]
      %v3221 = vld [vmem:[%s5 + $0x12ac] sm:$0xf]
      %v3222 = vld [vmem:[%s5 + $0x12b0] sm:$0xf]
      %v3223 = vld [vmem:[%s5 + $0x12b4] sm:$0xf]
      %v3224 = vld [vmem:[%s5 + $0x12b8] sm:$0xf]
      %v3225 = vld [vmem:[%s5 + $0x12bc] sm:$0xf]
      %v3226 = vld [vmem:[%s5 + $0x12c0] sm:$0xf]
      %v3227 = vld [vmem:[%s5 + $0x12c4] sm:$0xf]
      %v3228 = vld [vmem:[%s5 + $0x12c8] sm:$0xf]
      %v3229 = vld [vmem:[%s5 + $0x12cc] sm:$0xf]
      %v3230 = vld [vmem:[%s5 + $0x12d0] sm:$0xf]
      %v3231 = vld [vmem:[%s5 + $0x12d4] sm:$0xf]
      %v3232 = vld [vmem:[%s5 + $0x12d8] sm:$0xf]
      %v3233 = vld [vmem:[%s5 + $0x12dc] sm:$0xf]
      %v3234 = vld [vmem:[%s5 + $0x12e0] sm:$0xf]
      %v3235 = vld [vmem:[%s5 + $0x12e4] sm:$0xf]
      %v3236 = vld [vmem:[%s5 + $0x12e8] sm:$0xf]
      %v3237 = vld [vmem:[%s5 + $0x12ec] sm:$0xf]
      %v3238 = vld [vmem:[%s5 + $0x12f0] sm:$0xf]
      %v3239 = vld [vmem:[%s5 + $0x12f4] sm:$0xf]
      %v3240 = vld [vmem:[%s5 + $0x12f8] sm:$0xf]
      %v3241 = vld [vmem:[%s5 + $0x12fc] sm:$0xf]
      %v3242 = vld [vmem:[%s5 + $0x1300] sm:$0xf]
      %v3243 = vld [vmem:[%s5 + $0x1304] sm:$0xf]
      %v3244 = vld [vmem:[%s5 + $0x1308] sm:$0xf]
      %v3245 = vld [vmem:[%s5 + $0x130c] sm:$0xf]
      %v3246 = vld [vmem:[%s5 + $0x1310] sm:$0xf]
      %v3247 = vld [vmem:[%s5 + $0x1314] sm:$0xf]
      %v3248 = vld [vmem:[%s5 + $0x1318] sm:$0xf]
      %v3249 = vld [vmem:[%s5 + $0x131c] sm:$0xf]
      %v3250 = vld [vmem:[%s5 + $0x1320] sm:$0xf]
      %v3251 = vld [vmem:[%s5 + $0x1324] sm:$0xf]
      %v3252 = vld [vmem:[%s5 + $0x1328] sm:$0xf]
      %v3253 = vld [vmem:[%s5 + $0x132c] sm:$0xf]
      %v3254 = vld [vmem:[%s5 + $0x1330] sm:$0xf]
      %v3255 = vld [vmem:[%s5 + $0x1334] sm:$0xf]
      %v3256 = vld [vmem:[%s5 + $0x1338] sm:$0xf]
      %v3257 = vld [vmem:[%s5 + $0x133c] sm:$0xf]
      %v3258 = vld [vmem:[%s5 + $0x1340] sm:$0xf]
      %v3259 = vld [vmem:[%s5 + $0x1344] sm:$0xf]
      %v3260 = vld [vmem:[%s5 + $0x1348] sm:$0xf]
      %v3261 = vld [vmem:[%s5 + $0x134c] sm:$0xf]
      %v3262 = vld [vmem:[%s5 + $0x1350] sm:$0xf]
      %v3263 = vld [vmem:[%s5 + $0x1354] sm:$0xf]
      %v3264 = vld [vmem:[%s5 + $0x1358] sm:$0xf]
      %v3265 = vld [vmem:[%s5 + $0x135c] sm:$0xf]
      %v3266 = vld [vmem:[%s5 + $0x1360] sm:$0xf]
      %v3267 = vld [vmem:[%s5 + $0x1364] sm:$0xf]
      %v3268 = vld [vmem:[%s5 + $0x1368] sm:$0xf]
      %v3269 = vld [vmem:[%s5 + $0x136c] sm:$0xf]
      %v3270 = vld [vmem:[%s5 + $0x1370] sm:$0xf]
      %v3271 = vld [vmem:[%s5 + $0x1374] sm:$0xf]
      %v3272 = vld [vmem:[%s5 + $0x1378] sm:$0xf]
      %v3273 = vld [vmem:[%s5 + $0x137c] sm:$0xf]
      %v3274 = vld [vmem:[%s5 + $0x1380] sm:$0xf]
      %v3275 = vld [vmem:[%s5 + $0x1384] sm:$0xf]
      %v3276 = vld [vmem:[%s5 + $0x1388] sm:$0xf]
      %v3277 = vld [vmem:[%s5 + $0x138c] sm:$0xf]
      %v3278 = vld [vmem:[%s5 + $0x1390] sm:$0xf]
      %v3279 = vld [vmem:[%s5 + $0x1394] sm:$0xf]
      %v3280 = vld [vmem:[%s5 + $0x1398] sm:$0xf]
      %v3281 = vld [vmem:[%s5 + $0x139c] sm:$0xf]
      %v3282 = vld [vmem:[%s5 + $0x13a0] sm:$0xf]
      %v3283 = vld [vmem:[%s5 + $0x13a4] sm:$0xf]
      %v3284 = vld [vmem:[%s5 + $0x13a8] sm:$0xf]
      %v3285 = vld [vmem:[%s5 + $0x13ac] sm:$0xf]
      %v3286 = vld [vmem:[%s5 + $0x13b0] sm:$0xf]
      %v3287 = vld [vmem:[%s5 + $0x13b4] sm:$0xf]
      %v3288 = vld [vmem:[%s5 + $0x13b8] sm:$0xf]
      %v3289 = vld [vmem:[%s5 + $0x13bc] sm:$0xf]
      %v3290 = vld [vmem:[%s5 + $0x13c0] sm:$0xf]
      %v3291 = vld [vmem:[%s5 + $0x13c4] sm:$0xf]
      %v3292 = vld [vmem:[%s5 + $0x13c8] sm:$0xf]
      %v3293 = vld [vmem:[%s5 + $0x13cc] sm:$0xf]
      %v3294 = vld [vmem:[%s5 + $0x13d0] sm:$0xf]
      %v3295 = vld [vmem:[%s5 + $0x13d4] sm:$0xf]
      %v3296 = vld [vmem:[%s5 + $0x13d8] sm:$0xf]
      %v3297 = vld [vmem:[%s5 + $0x13dc] sm:$0xf]
      %v3298 = vld [vmem:[%s5 + $0x13e0] sm:$0xf]
      %v3299 = vld [vmem:[%s5 + $0x13e4] sm:$0xf]
      %v3300 = vld [vmem:[%s5 + $0x13e8] sm:$0xf]
      %v3301 = vld [vmem:[%s5 + $0x13ec] sm:$0xf]
      %v3302 = vld [vmem:[%s5 + $0x13f0] sm:$0xf]
      %v3303 = vld [vmem:[%s5 + $0x13f4] sm:$0xf]
      %v3304 = vld [vmem:[%s5 + $0x13f8] sm:$0xf]
      %v3305 = vld [vmem:[%s5 + $0x13fc] sm:$0xf]
      %v3306 = vld [vmem:[%s5 + $0x1400] sm:$0xf]
      %v3307 = vld [vmem:[%s5 + $0x1404] sm:$0xf]
      %v3308 = vld [vmem:[%s5 + $0x1408] sm:$0xf]
      %v3309 = vld [vmem:[%s5 + $0x140c] sm:$0xf]
      %v3310 = vld [vmem:[%s5 + $0x1410] sm:$0xf]
      %v3311 = vld [vmem:[%s5 + $0x1414] sm:$0xf]
      %v3312 = vld [vmem:[%s5 + $0x1418] sm:$0xf]
      %v3313 = vld [vmem:[%s5 + $0x141c] sm:$0xf]
      %v3314 = vld [vmem:[%s5 + $0x1420] sm:$0xf]
      %v3315 = vld [vmem:[%s5 + $0x1424] sm:$0xf]
      %v3316 = vld [vmem:[%s5 + $0x1428] sm:$0xf]
      %v3317 = vld [vmem:[%s5 + $0x142c] sm:$0xf]
      %v3318 = vld [vmem:[%s5 + $0x1430] sm:$0xf]
      %v3319 = vld [vmem:[%s5 + $0x1434] sm:$0xf]
      %v3320 = vld [vmem:[%s5 + $0x1438] sm:$0xf]
      %v3321 = vld [vmem:[%s5 + $0x143c] sm:$0xf]
      %v3322 = vld [vmem:[%s5 + $0x1440] sm:$0xf]
      %v3323 = vld [vmem:[%s5 + $0x1444] sm:$0xf]
      %v3324 = vld [vmem:[%s5 + $0x1448] sm:$0xf]
      %v3325 = vld [vmem:[%s5 + $0x144c] sm:$0xf]
      %v3326 = vld [vmem:[%s5 + $0x1450] sm:$0xf]
      %v3327 = vld [vmem:[%s5 + $0x1454] sm:$0xf]
      %v3328 = vld [vmem:[%s5 + $0x1458] sm:$0xf]
      %v3329 = vld [vmem:[%s5 + $0x145c] sm:$0xf]
      %v3330 = vld [vmem:[%s5 + $0x1460] sm:$0xf]
      %v3331 = vld [vmem:[%s5 + $0x1464] sm:$0xf]
      %v3332 = vld [vmem:[%s5 + $0x1468] sm:$0xf]
      %v3333 = vld [vmem:[%s5 + $0x146c] sm:$0xf]
      %v3334 = vld [vmem:[%s5 + $0x1470] sm:$0xf]
      %v3335 = vld [vmem:[%s5 + $0x1474] sm:$0xf]
      %v3336 = vld [vmem:[%s5 + $0x1478] sm:$0xf]
      %v3337 = vld [vmem:[%s5 + $0x147c] sm:$0xf]
      %v3338 = vld [vmem:[%s5 + $0x1480] sm:$0xf]
      %v3339 = vld [vmem:[%s5 + $0x1484] sm:$0xf]
      %v3340 = vld [vmem:[%s5 + $0x1488] sm:$0xf]
      %v3341 = vld [vmem:[%s5 + $0x148c] sm:$0xf]
      %v3342 = vld [vmem:[%s5 + $0x1490] sm:$0xf]
      %v3343 = vld [vmem:[%s5 + $0x1494] sm:$0xf]
      %v3344 = vld [vmem:[%s5 + $0x1498] sm:$0xf]
      %v3345 = vld [vmem:[%s5 + $0x149c] sm:$0xf]
      %v3346 = vld [vmem:[%s5 + $0x14a0] sm:$0xf]
      %v3347 = vld [vmem:[%s5 + $0x14a4] sm:$0xf]
      %v3348 = vld [vmem:[%s5 + $0x14a8] sm:$0xf]
      %v3349 = vld [vmem:[%s5 + $0x14ac] sm:$0xf]
      %v3350 = vld [vmem:[%s5 + $0x14b0] sm:$0xf]
      %v3351 = vld [vmem:[%s5 + $0x14b4] sm:$0xf]
      %v3352 = vld [vmem:[%s5 + $0x14b8] sm:$0xf]
      %v3353 = vld [vmem:[%s5 + $0x14bc] sm:$0xf]
      %v3354 = vld [vmem:[%s5 + $0x14c0] sm:$0xf]
      %v3355 = vld [vmem:[%s5 + $0x14c4] sm:$0xf]
      %v3356 = vld [vmem:[%s5 + $0x14c8] sm:$0xf]
      %v3357 = vld [vmem:[%s5 + $0x14cc] sm:$0xf]
      %v3358 = vld [vmem:[%s5 + $0x14d0] sm:$0xf]
      %v3359 = vld [vmem:[%s5 + $0x14d4] sm:$0xf]
      %v3360 = vld [vmem:[%s5 + $0x14d8] sm:$0xf]
      %v3361 = vld [vmem:[%s5 + $0x14dc] sm:$0xf]
      %v3362 = vld [vmem:[%s5 + $0x14e0] sm:$0xf]
      %v3363 = vld [vmem:[%s5 + $0x14e4] sm:$0xf]
      %v3364 = vld [vmem:[%s5 + $0x14e8] sm:$0xf]
      %v3365 = vld [vmem:[%s5 + $0x14ec] sm:$0xf]
      %v3366 = vld [vmem:[%s5 + $0x14f0] sm:$0xf]
      %v3367 = vld [vmem:[%s5 + $0x14f4] sm:$0xf]
      %v3368 = vld [vmem:[%s5 + $0x14f8] sm:$0xf]
      %v3369 = vld [vmem:[%s5 + $0x14fc] sm:$0xf]
      %v3370 = vld [vmem:[%s5 + $0x1500] sm:$0xf]
      %v3371 = vld [vmem:[%s5 + $0x1504] sm:$0xf]
      %v3372 = vld [vmem:[%s5 + $0x1508] sm:$0xf]
      %v3373 = vld [vmem:[%s5 + $0x150c] sm:$0xf]
      %v3374 = vld [vmem:[%s5 + $0x1510] sm:$0xf]
      %v3375 = vld [vmem:[%s5 + $0x1514] sm:$0xf]
      %v3376 = vld [vmem:[%s5 + $0x1518] sm:$0xf]
      %v3377 = vld [vmem:[%s5 + $0x151c] sm:$0xf]
      %v3378 = vld [vmem:[%s5 + $0x1520] sm:$0xf]
      %v3379 = vld [vmem:[%s5 + $0x1524] sm:$0xf]
      %v3380 = vld [vmem:[%s5 + $0x1528] sm:$0xf]
      %v3381 = vld [vmem:[%s5 + $0x152c] sm:$0xf]
      %v3382 = vld [vmem:[%s5 + $0x1530] sm:$0xf]
      %v3383 = vld [vmem:[%s5 + $0x1534] sm:$0xf]
      %v3384 = vld [vmem:[%s5 + $0x1538] sm:$0xf]
      %v3385 = vld [vmem:[%s5 + $0x153c] sm:$0xf]
      %v3386 = vld [vmem:[%s5 + $0x1540] sm:$0xf]
      %v3387 = vld [vmem:[%s5 + $0x1544] sm:$0xf]
      %v3388 = vld [vmem:[%s5 + $0x1548] sm:$0xf]
      %v3389 = vld [vmem:[%s5 + $0x154c] sm:$0xf]
      %v3390 = vld [vmem:[%s5 + $0x1550] sm:$0xf]
      %v3391 = vld [vmem:[%s5 + $0x1554] sm:$0xf]
      %v3392 = vld [vmem:[%s5 + $0x1558] sm:$0xf]
      %v3393 = vld [vmem:[%s5 + $0x155c] sm:$0xf]
      %v3394 = vld [vmem:[%s5 + $0x1560] sm:$0xf]
      %v3395 = vld [vmem:[%s5 + $0x1564] sm:$0xf]
      %v3396 = vld [vmem:[%s5 + $0x1568] sm:$0xf]
      %v3397 = vld [vmem:[%s5 + $0x156c] sm:$0xf]
      %v3398 = vld [vmem:[%s5 + $0x1570] sm:$0xf]
      %v3399 = vld [vmem:[%s5 + $0x1574] sm:$0xf]
      %v3400 = vld [vmem:[%s5 + $0x1578] sm:$0xf]
      %v3401 = vld [vmem:[%s5 + $0x157c] sm:$0xf]
      %v3402 = vld [vmem:[%s5 + $0x1580] sm:$0xf]
      %v3403 = vld [vmem:[%s5 + $0x1584] sm:$0xf]
      %v3404 = vld [vmem:[%s5 + $0x1588] sm:$0xf]
      %v3405 = vld [vmem:[%s5 + $0x158c] sm:$0xf]
      %v3406 = vld [vmem:[%s5 + $0x1590] sm:$0xf]
      %v3407 = vld [vmem:[%s5 + $0x1594] sm:$0xf]
      %v3408 = vld [vmem:[%s5 + $0x1598] sm:$0xf]
      %v3409 = vld [vmem:[%s5 + $0x159c] sm:$0xf]
      %v3410 = vld [vmem:[%s5 + $0x15a0] sm:$0xf]
      %v3411 = vld [vmem:[%s5 + $0x15a4] sm:$0xf]
      %v3412 = vld [vmem:[%s5 + $0x15a8] sm:$0xf]
      %v3413 = vld [vmem:[%s5 + $0x15ac] sm:$0xf]
      %v3414 = vld [vmem:[%s5 + $0x15b0] sm:$0xf]
      %v3415 = vld [vmem:[%s5 + $0x15b4] sm:$0xf]
      %v3416 = vld [vmem:[%s5 + $0x15b8] sm:$0xf]
      %v3417 = vld [vmem:[%s5 + $0x15bc] sm:$0xf]
      %v3418 = vld [vmem:[%s5 + $0x15c0] sm:$0xf]
      %v3419 = vld [vmem:[%s5 + $0x15c4] sm:$0xf]
      %v3420 = vld [vmem:[%s5 + $0x15c8] sm:$0xf]
      %v3421 = vld [vmem:[%s5 + $0x15cc] sm:$0xf]
      %v3422 = vld [vmem:[%s5 + $0x15d0] sm:$0xf]
      %v3423 = vld [vmem:[%s5 + $0x15d4] sm:$0xf]
      %v3424 = vld [vmem:[%s5 + $0x15d8] sm:$0xf]
      %v3425 = vld [vmem:[%s5 + $0x15dc] sm:$0xf]
      %v3426 = vld [vmem:[%s5 + $0x15e0] sm:$0xf]
      %v3427 = vld [vmem:[%s5 + $0x15e4] sm:$0xf]
      %v3428 = vld [vmem:[%s5 + $0x15e8] sm:$0xf]
      %v3429 = vld [vmem:[%s5 + $0x15ec] sm:$0xf]
      %v3430 = vld [vmem:[%s5 + $0x15f0] sm:$0xf]
      %v3431 = vld [vmem:[%s5 + $0x15f4] sm:$0xf]
      %v3432 = vld [vmem:[%s5 + $0x15f8] sm:$0xf]
      %v3433 = vld [vmem:[%s5 + $0x15fc] sm:$0xf]
      %v3434 = vld [vmem:[%s5 + $0x1600] sm:$0xf]
      %v3435 = vld [vmem:[%s5 + $0x1604] sm:$0xf]
      %v3436 = vld [vmem:[%s5 + $0x1608] sm:$0xf]
      %v3437 = vld [vmem:[%s5 + $0x160c] sm:$0xf]
      %v3438 = vld [vmem:[%s5 + $0x1610] sm:$0xf]
      %v3439 = vld [vmem:[%s5 + $0x1614] sm:$0xf]
      %v3440 = vld [vmem:[%s5 + $0x1618] sm:$0xf]
      %v3441 = vld [vmem:[%s5 + $0x161c] sm:$0xf]
      %v3442 = vld [vmem:[%s5 + $0x1620] sm:$0xf]
      %v3443 = vld [vmem:[%s5 + $0x1624] sm:$0xf]
      %v3444 = vld [vmem:[%s5 + $0x1628] sm:$0xf]
      %v3445 = vld [vmem:[%s5 + $0x162c] sm:$0xf]
      %v3446 = vld [vmem:[%s5 + $0x1630] sm:$0xf]
      %v3447 = vld [vmem:[%s5 + $0x1634] sm:$0xf]
      %v3448 = vld [vmem:[%s5 + $0x1638] sm:$0xf]
      %v3449 = vld [vmem:[%s5 + $0x163c] sm:$0xf]
      %v3450 = vld [vmem:[%s5 + $0x1640] sm:$0xf]
      %v3451 = vld [vmem:[%s5 + $0x1644] sm:$0xf]
      %v3452 = vld [vmem:[%s5 + $0x1648] sm:$0xf]
      %v3453 = vld [vmem:[%s5 + $0x164c] sm:$0xf]
      %v3454 = vld [vmem:[%s5 + $0x1650] sm:$0xf]
      %v3455 = vld [vmem:[%s5 + $0x1654] sm:$0xf]
      %v3456 = vld [vmem:[%s5 + $0x1658] sm:$0xf]
      %v3457 = vld [vmem:[%s5 + $0x165c] sm:$0xf]
      %v3458 = vld [vmem:[%s5 + $0x1660] sm:$0xf]
      %v3459 = vld [vmem:[%s5 + $0x1664] sm:$0xf]
      %v3460 = vld [vmem:[%s5 + $0x1668] sm:$0xf]
      %v3461 = vld [vmem:[%s5 + $0x166c] sm:$0xf]
      %v3462 = vld [vmem:[%s5 + $0x1670] sm:$0xf]
      %v3463 = vld [vmem:[%s5 + $0x1674] sm:$0xf]
      %v3464 = vld [vmem:[%s5 + $0x1678] sm:$0xf]
      %v3465 = vld [vmem:[%s5 + $0x167c] sm:$0xf]
      %v3466 = vld [vmem:[%s5 + $0x1680] sm:$0xf]
      %v3467 = vld [vmem:[%s5 + $0x1684] sm:$0xf]
      %v3468 = vld [vmem:[%s5 + $0x1688] sm:$0xf]
      %v3469 = vld [vmem:[%s5 + $0x168c] sm:$0xf]
      %v3470 = vld [vmem:[%s5 + $0x1690] sm:$0xf]
      %v3471 = vld [vmem:[%s5 + $0x1694] sm:$0xf]
      %v3472 = vld [vmem:[%s5 + $0x1698] sm:$0xf]
      %v3473 = vld [vmem:[%s5 + $0x169c] sm:$0xf]
      %v3474 = vld [vmem:[%s5 + $0x16a0] sm:$0xf]
      %v3475 = vld [vmem:[%s5 + $0x16a4] sm:$0xf]
      %v3476 = vld [vmem:[%s5 + $0x16a8] sm:$0xf]
      %v3477 = vld [vmem:[%s5 + $0x16ac] sm:$0xf]
      %v3478 = vld [vmem:[%s5 + $0x16b0] sm:$0xf]
      %v3479 = vld [vmem:[%s5 + $0x16b4] sm:$0xf]
      %v3480 = vld [vmem:[%s5 + $0x16b8] sm:$0xf]
      %v3481 = vld [vmem:[%s5 + $0x16bc] sm:$0xf]
      %v3482 = vld [vmem:[%s5 + $0x16c0] sm:$0xf]
      %v3483 = vld [vmem:[%s5 + $0x16c4] sm:$0xf]
      %v3484 = vld [vmem:[%s5 + $0x16c8] sm:$0xf]
      %v3485 = vld [vmem:[%s5 + $0x16cc] sm:$0xf]
      %v3486 = vld [vmem:[%s5 + $0x16d0] sm:$0xf]
      %v3487 = vld [vmem:[%s5 + $0x16d4] sm:$0xf]
      %v3488 = vld [vmem:[%s5 + $0x16d8] sm:$0xf]
      %v3489 = vld [vmem:[%s5 + $0x16dc] sm:$0xf]
      %v3490 = vld [vmem:[%s5 + $0x16e0] sm:$0xf]
      %v3491 = vld [vmem:[%s5 + $0x16e4] sm:$0xf]
      %v3492 = vld [vmem:[%s5 + $0x16e8] sm:$0xf]
      %v3493 = vld [vmem:[%s5 + $0x16ec] sm:$0xf]
      %v3494 = vld [vmem:[%s5 + $0x16f0] sm:$0xf]
      %v3495 = vld [vmem:[%s5 + $0x16f4] sm:$0xf]
      %v3496 = vld [vmem:[%s5 + $0x16f8] sm:$0xf]
      %v3497 = vld [vmem:[%s5 + $0x16fc] sm:$0xf]
      %v3498 = vld [vmem:[%s5 + $0x1700] sm:$0xf]
      %v3499 = vld [vmem:[%s5 + $0x1704] sm:$0xf]
      %v3500 = vld [vmem:[%s5 + $0x1708] sm:$0xf]
      %v3501 = vld [vmem:[%s5 + $0x170c] sm:$0xf]
      %v3502 = vld [vmem:[%s5 + $0x1710] sm:$0xf]
      %v3503 = vld [vmem:[%s5 + $0x1714] sm:$0xf]
      %v3504 = vld [vmem:[%s5 + $0x1718] sm:$0xf]
      %v3505 = vld [vmem:[%s5 + $0x171c] sm:$0xf]
      %v3506 = vld [vmem:[%s5 + $0x1720] sm:$0xf]
      %v3507 = vld [vmem:[%s5 + $0x1724] sm:$0xf]
      %v3508 = vld [vmem:[%s5 + $0x1728] sm:$0xf]
      %v3509 = vld [vmem:[%s5 + $0x172c] sm:$0xf]
      %v3510 = vld [vmem:[%s5 + $0x1730] sm:$0xf]
      %v3511 = vld [vmem:[%s5 + $0x1734] sm:$0xf]
      %v3512 = vld [vmem:[%s5 + $0x1738] sm:$0xf]
      %v3513 = vld [vmem:[%s5 + $0x173c] sm:$0xf]
      %v3514 = vld [vmem:[%s5 + $0x1740] sm:$0xf]
      %v3515 = vld [vmem:[%s5 + $0x1744] sm:$0xf]
      %v3516 = vld [vmem:[%s5 + $0x1748] sm:$0xf]
      %v3517 = vld [vmem:[%s5 + $0x174c] sm:$0xf]
      %v3518 = vld [vmem:[%s5 + $0x1750] sm:$0xf]
      %v3519 = vld [vmem:[%s5 + $0x1754] sm:$0xf]
      %v3520 = vld [vmem:[%s5 + $0x1758] sm:$0xf]
      %v3521 = vld [vmem:[%s5 + $0x175c] sm:$0xf]
      %v3522 = vld [vmem:[%s5 + $0x1760] sm:$0xf]
      %v3523 = vld [vmem:[%s5 + $0x1764] sm:$0xf]
      %v3524 = vld [vmem:[%s5 + $0x1768] sm:$0xf]
      %v3525 = vld [vmem:[%s5 + $0x176c] sm:$0xf]
      %v3526 = vld [vmem:[%s5 + $0x1770] sm:$0xf]
      %v3527 = vld [vmem:[%s5 + $0x1774] sm:$0xf]
      %v3528 = vld [vmem:[%s5 + $0x1778] sm:$0xf]
      %v3529 = vld [vmem:[%s5 + $0x177c] sm:$0xf]
      %v3530 = vld [vmem:[%s5 + $0x1780] sm:$0xf]
      %v3531 = vld [vmem:[%s5 + $0x1784] sm:$0xf]
      %v3532 = vld [vmem:[%s5 + $0x1788] sm:$0xf]
      %v3533 = vld [vmem:[%s5 + $0x178c] sm:$0xf]
      %v3534 = vld [vmem:[%s5 + $0x1790] sm:$0xf]
      %v3535 = vld [vmem:[%s5 + $0x1794] sm:$0xf]
      %v3536 = vld [vmem:[%s5 + $0x1798] sm:$0xf]
      %v3537 = vld [vmem:[%s5 + $0x179c] sm:$0xf]
      %v3538 = vld [vmem:[%s5 + $0x17a0] sm:$0xf]
      %v3539 = vld [vmem:[%s5 + $0x17a4] sm:$0xf]
      %v3540 = vld [vmem:[%s5 + $0x17a8] sm:$0xf]
      %v3541 = vld [vmem:[%s5 + $0x17ac] sm:$0xf]
      %v3542 = vld [vmem:[%s5 + $0x17b0] sm:$0xf]
      %v3543 = vld [vmem:[%s5 + $0x17b4] sm:$0xf]
      %v3544 = vld [vmem:[%s5 + $0x17b8] sm:$0xf]
      %v3545 = vld [vmem:[%s5 + $0x17bc] sm:$0xf]
      %v3546 = vld [vmem:[%s5 + $0x17c0] sm:$0xf]
      %v3547 = vld [vmem:[%s5 + $0x17c4] sm:$0xf]
      %v3548 = vld [vmem:[%s5 + $0x17c8] sm:$0xf]
      %v3549 = vld [vmem:[%s5 + $0x17cc] sm:$0xf]
      %v3550 = vld [vmem:[%s5 + $0x17d0] sm:$0xf]
      %v3551 = vld [vmem:[%s5 + $0x17d4] sm:$0xf]
      %v3552 = vld [vmem:[%s5 + $0x17d8] sm:$0xf]
      %v3553 = vld [vmem:[%s5 + $0x17dc] sm:$0xf]
      %v3554 = vld [vmem:[%s5 + $0x17e0] sm:$0xf]
      %v3555 = vld [vmem:[%s5 + $0x17e4] sm:$0xf]
      %v3556 = vld [vmem:[%s5 + $0x17e8] sm:$0xf]
      %v3557 = vld [vmem:[%s5 + $0x17ec] sm:$0xf]
      %v3558 = vld [vmem:[%s5 + $0x17f0] sm:$0xf]
      %v3559 = vld [vmem:[%s5 + $0x17f4] sm:$0xf]
      %v3560 = vld [vmem:[%s5 + $0x17f8] sm:$0xf]
      %v3561 = vld [vmem:[%s5 + $0x17fc] sm:$0xf]
      %v3562 = vld [vmem:[%s5 + $0x1800] sm:$0xf]
      %v3563 = vld [vmem:[%s5 + $0x1804] sm:$0xf]
      %v3564 = vld [vmem:[%s5 + $0x1808] sm:$0xf]
      %v3565 = vld [vmem:[%s5 + $0x180c] sm:$0xf]
      %v3566 = vld [vmem:[%s5 + $0x1810] sm:$0xf]
      %v3567 = vld [vmem:[%s5 + $0x1814] sm:$0xf]
      %v3568 = vld [vmem:[%s5 + $0x1818] sm:$0xf]
      %v3569 = vld [vmem:[%s5 + $0x181c] sm:$0xf]
      %v3570 = vld [vmem:[%s5 + $0x1820] sm:$0xf]
      %v3571 = vld [vmem:[%s5 + $0x1824] sm:$0xf]
      %v3572 = vld [vmem:[%s5 + $0x1828] sm:$0xf]
      %v3573 = vld [vmem:[%s5 + $0x182c] sm:$0xf]
      %v3574 = vld [vmem:[%s5 + $0x1830] sm:$0xf]
      %v3575 = vld [vmem:[%s5 + $0x1834] sm:$0xf]
      %v3576 = vld [vmem:[%s5 + $0x1838] sm:$0xf]
      %v3577 = vld [vmem:[%s5 + $0x183c] sm:$0xf]
      %v3578 = vld [vmem:[%s5 + $0x1840] sm:$0xf]
      %v3579 = vld [vmem:[%s5 + $0x1844] sm:$0xf]
      %v3580 = vld [vmem:[%s5 + $0x1848] sm:$0xf]
      %v3581 = vld [vmem:[%s5 + $0x184c] sm:$0xf]
      %v3582 = vld [vmem:[%s5 + $0x1850] sm:$0xf]
      %v3583 = vld [vmem:[%s5 + $0x1854] sm:$0xf]
      %v3584 = vld [vmem:[%s5 + $0x1858] sm:$0xf]
      %v3585 = vld [vmem:[%s5 + $0x185c] sm:$0xf]
      %v3586 = vld [vmem:[%s5 + $0x1860] sm:$0xf]
      %v3587 = vld [vmem:[%s5 + $0x1864] sm:$0xf]
      %v3588 = vld [vmem:[%s5 + $0x1868] sm:$0xf]
      %v3589 = vld [vmem:[%s5 + $0x186c] sm:$0xf]
      %v3590 = vld [vmem:[%s5 + $0x1870] sm:$0xf]
      %v3591 = vld [vmem:[%s5 + $0x1874] sm:$0xf]
      %v3592 = vld [vmem:[%s5 + $0x1878] sm:$0xf]
      %v3593 = vld [vmem:[%s5 + $0x187c] sm:$0xf]
      %v3594 = vld [vmem:[%s5 + $0x1880] sm:$0xf]
      %v3595 = vld [vmem:[%s5 + $0x1884] sm:$0xf]
      %v3596 = vld [vmem:[%s5 + $0x1888] sm:$0xf]
      %v3597 = vld [vmem:[%s5 + $0x188c] sm:$0xf]
      %v3598 = vld [vmem:[%s5 + $0x1890] sm:$0xf]
      %v3599 = vld [vmem:[%s5 + $0x1894] sm:$0xf]
      %v3600 = vld [vmem:[%s5 + $0x1898] sm:$0xf]
      %v3601 = vld [vmem:[%s5 + $0x189c] sm:$0xf]
      %v3602 = vld [vmem:[%s5 + $0x18a0] sm:$0xf]
      %v3603 = vld [vmem:[%s5 + $0x18a4] sm:$0xf]
      %v3604 = vld [vmem:[%s5 + $0x18a8] sm:$0xf]
      %v3605 = vld [vmem:[%s5 + $0x18ac] sm:$0xf]
      %v3606 = vld [vmem:[%s5 + $0x18b0] sm:$0xf]
      %v3607 = vld [vmem:[%s5 + $0x18b4] sm:$0xf]
      %v3608 = vld [vmem:[%s5 + $0x18b8] sm:$0xf]
      %v3609 = vld [vmem:[%s5 + $0x18bc] sm:$0xf]
      %v3610 = vld [vmem:[%s5 + $0x18c0] sm:$0xf]
      %v3611 = vld [vmem:[%s5 + $0x18c4] sm:$0xf]
      %v3612 = vld [vmem:[%s5 + $0x18c8] sm:$0xf]
      %v3613 = vld [vmem:[%s5 + $0x18cc] sm:$0xf]
      %v3614 = vld [vmem:[%s5 + $0x18d0] sm:$0xf]
      %v3615 = vld [vmem:[%s5 + $0x18d4] sm:$0xf]
      %v3616 = vld [vmem:[%s5 + $0x18d8] sm:$0xf]
      %v3617 = vld [vmem:[%s5 + $0x18dc] sm:$0xf]
      %v3618 = vld [vmem:[%s5 + $0x18e0] sm:$0xf]
      %v3619 = vld [vmem:[%s5 + $0x18e4] sm:$0xf]
      %v3620 = vld [vmem:[%s5 + $0x18e8] sm:$0xf]
      %v3621 = vld [vmem:[%s5 + $0x18ec] sm:$0xf]
      %v3622 = vld [vmem:[%s5 + $0x18f0] sm:$0xf]
      %v3623 = vld [vmem:[%s5 + $0x18f4] sm:$0xf]
      %v3624 = vld [vmem:[%s5 + $0x18f8] sm:$0xf]
      %v3625 = vld [vmem:[%s5 + $0x18fc] sm:$0xf]
      %v3626 = vld [vmem:[%s5 + $0x1900] sm:$0xf]
      %v3627 = vld [vmem:[%s5 + $0x1904] sm:$0xf]
      %v3628 = vld [vmem:[%s5 + $0x1908] sm:$0xf]
      %v3629 = vld [vmem:[%s5 + $0x190c] sm:$0xf]
      %v3630 = vld [vmem:[%s5 + $0x1910] sm:$0xf]
      %v3631 = vld [vmem:[%s5 + $0x1914] sm:$0xf]
      %v3632 = vld [vmem:[%s5 + $0x1918] sm:$0xf]
      %v3633 = vld [vmem:[%s5 + $0x191c] sm:$0xf]
      %v3634 = vld [vmem:[%s5 + $0x1920] sm:$0xf]
      %v3635 = vld [vmem:[%s5 + $0x1924] sm:$0xf]
      %v3636 = vld [vmem:[%s5 + $0x1928] sm:$0xf]
      %v3637 = vld [vmem:[%s5 + $0x192c] sm:$0xf]
      %v3638 = vld [vmem:[%s5 + $0x1930] sm:$0xf]
      %v3639 = vld [vmem:[%s5 + $0x1934] sm:$0xf]
      %v3640 = vld [vmem:[%s5 + $0x1938] sm:$0xf]
      %v3641 = vld [vmem:[%s5 + $0x193c] sm:$0xf]
      %v3642 = vld [vmem:[%s5 + $0x1940] sm:$0xf]
      %v3643 = vld [vmem:[%s5 + $0x1944] sm:$0xf]
      %v3644 = vld [vmem:[%s5 + $0x1948] sm:$0xf]
      %v3645 = vld [vmem:[%s5 + $0x194c] sm:$0xf]
      %v3646 = vld [vmem:[%s5 + $0x1950] sm:$0xf]
      %v3647 = vld [vmem:[%s5 + $0x1954] sm:$0xf]
      %v3648 = vld [vmem:[%s5 + $0x1958] sm:$0xf]
      %v3649 = vld [vmem:[%s5 + $0x195c] sm:$0xf]
      %v3650 = vld [vmem:[%s5 + $0x1960] sm:$0xf]
      %v3651 = vld [vmem:[%s5 + $0x1964] sm:$0xf]
      %v3652 = vld [vmem:[%s5 + $0x1968] sm:$0xf]
      %v3653 = vld [vmem:[%s5 + $0x196c] sm:$0xf]
      %v3654 = vld [vmem:[%s5 + $0x1970] sm:$0xf]
      %v3655 = vld [vmem:[%s5 + $0x1974] sm:$0xf]
      %v3656 = vld [vmem:[%s5 + $0x1978] sm:$0xf]
      %v3657 = vld [vmem:[%s5 + $0x197c] sm:$0xf]
      %v3658 = vld [vmem:[%s5 + $0x1980] sm:$0xf]
      %v3659 = vld [vmem:[%s5 + $0x1984] sm:$0xf]
      %v3660 = vld [vmem:[%s5 + $0x1988] sm:$0xf]
      %v3661 = vld [vmem:[%s5 + $0x198c] sm:$0xf]
      %v3662 = vld [vmem:[%s5 + $0x1990] sm:$0xf]
      %v3663 = vld [vmem:[%s5 + $0x1994] sm:$0xf]
      %v3664 = vld [vmem:[%s5 + $0x1998] sm:$0xf]
      %v3665 = vld [vmem:[%s5 + $0x199c] sm:$0xf]
      %v3666 = vld [vmem:[%s5 + $0x19a0] sm:$0xf]
      %v3667 = vld [vmem:[%s5 + $0x19a4] sm:$0xf]
      %v3668 = vld [vmem:[%s5 + $0x19a8] sm:$0xf]
      %v3669 = vld [vmem:[%s5 + $0x19ac] sm:$0xf]
      %v3670 = vld [vmem:[%s5 + $0x19b0] sm:$0xf]
      %v3671 = vld [vmem:[%s5 + $0x19b4] sm:$0xf]
      %v3672 = vld [vmem:[%s5 + $0x19b8] sm:$0xf]
      %v3673 = vld [vmem:[%s5 + $0x19bc] sm:$0xf]
      %v3674 = vld [vmem:[%s5 + $0x19c0] sm:$0xf]
      %v3675 = vld [vmem:[%s5 + $0x19c4] sm:$0xf]
      %v3676 = vld [vmem:[%s5 + $0x19c8] sm:$0xf]
      %v3677 = vld [vmem:[%s5 + $0x19cc] sm:$0xf]
      %v3678 = vld [vmem:[%s5 + $0x19d0] sm:$0xf]
      %v3679 = vld [vmem:[%s5 + $0x19d4] sm:$0xf]
      %v3680 = vld [vmem:[%s5 + $0x19d8] sm:$0xf]
      %v3681 = vld [vmem:[%s5 + $0x19dc] sm:$0xf]
      %v3682 = vld [vmem:[%s5 + $0x19e0] sm:$0xf]
      %v3683 = vld [vmem:[%s5 + $0x19e4] sm:$0xf]
      %v3684 = vld [vmem:[%s5 + $0x19e8] sm:$0xf]
      %v3685 = vld [vmem:[%s5 + $0x19ec] sm:$0xf]
      %v3686 = vld [vmem:[%s5 + $0x19f0] sm:$0xf]
      %v3687 = vld [vmem:[%s5 + $0x19f4] sm:$0xf]
      %v3688 = vld [vmem:[%s5 + $0x19f8] sm:$0xf]
      %v3689 = vld [vmem:[%s5 + $0x19fc] sm:$0xf]
      %v3690 = vld [vmem:[%s5 + $0x1a00] sm:$0xf]
      %v3691 = vld [vmem:[%s5 + $0x1a04] sm:$0xf]
      %v3692 = vld [vmem:[%s5 + $0x1a08] sm:$0xf]
      %v3693 = vld [vmem:[%s5 + $0x1a0c] sm:$0xf]
      %v3694 = vld [vmem:[%s5 + $0x1a10] sm:$0xf]
      %v3695 = vld [vmem:[%s5 + $0x1a14] sm:$0xf]
      %v3696 = vld [vmem:[%s5 + $0x1a18] sm:$0xf]
      %v3697 = vld [vmem:[%s5 + $0x1a1c] sm:$0xf]
      %v3698 = vld [vmem:[%s5 + $0x1a20] sm:$0xf]
      %v3699 = vld [vmem:[%s5 + $0x1a24] sm:$0xf]
      %v3700 = vld [vmem:[%s5 + $0x1a28] sm:$0xf]
      %v3701 = vld [vmem:[%s5 + $0x1a2c] sm:$0xf]
      %v3702 = vld [vmem:[%s5 + $0x1a30] sm:$0xf]
      %v3703 = vld [vmem:[%s5 + $0x1a34] sm:$0xf]
      %v3704 = vld [vmem:[%s5 + $0x1a38] sm:$0xf]
      %v3705 = vld [vmem:[%s5 + $0x1a3c] sm:$0xf]
      %v3706 = vld [vmem:[%s5 + $0x1a40] sm:$0xf]
      %v3707 = vld [vmem:[%s5 + $0x1a44] sm:$0xf]
      %v3708 = vld [vmem:[%s5 + $0x1a48] sm:$0xf]
      %v3709 = vld [vmem:[%s5 + $0x1a4c] sm:$0xf]
      %v3710 = vld [vmem:[%s5 + $0x1a50] sm:$0xf]
      %v3711 = vld [vmem:[%s5 + $0x1a54] sm:$0xf]
      %v3712 = vld [vmem:[%s5 + $0x1a58] sm:$0xf]
      %v3713 = vld [vmem:[%s5 + $0x1a5c] sm:$0xf]
      %v3714 = vld [vmem:[%s5 + $0x1a60] sm:$0xf]
      %v3715 = vld [vmem:[%s5 + $0x1a64] sm:$0xf]
      %v3716 = vld [vmem:[%s5 + $0x1a68] sm:$0xf]
      %v3717 = vld [vmem:[%s5 + $0x1a6c] sm:$0xf]
      %v3718 = vld [vmem:[%s5 + $0x1a70] sm:$0xf]
      %v3719 = vld [vmem:[%s5 + $0x1a74] sm:$0xf]
      %v3720 = vld [vmem:[%s5 + $0x1a78] sm:$0xf]
      %v3721 = vld [vmem:[%s5 + $0x1a7c] sm:$0xf]
      %v3722 = vld [vmem:[%s5 + $0x1a80] sm:$0xf]
      %v3723 = vld [vmem:[%s5 + $0x1a84] sm:$0xf]
      %v3724 = vld [vmem:[%s5 + $0x1a88] sm:$0xf]
      %v3725 = vld [vmem:[%s5 + $0x1a8c] sm:$0xf]
      %v3726 = vld [vmem:[%s5 + $0x1a90] sm:$0xf]
      %v3727 = vld [vmem:[%s5 + $0x1a94] sm:$0xf]
      %v3728 = vld [vmem:[%s5 + $0x1a98] sm:$0xf]
      %v3729 = vld [vmem:[%s5 + $0x1a9c] sm:$0xf]
      %v3730 = vld [vmem:[%s5 + $0x1aa0] sm:$0xf]
      %v3731 = vld [vmem:[%s5 + $0x1aa4] sm:$0xf]
      %v3732 = vld [vmem:[%s5 + $0x1aa8] sm:$0xf]
      %v3733 = vld [vmem:[%s5 + $0x1aac] sm:$0xf]
      %v3734 = vld [vmem:[%s5 + $0x1ab0] sm:$0xf]
      %v3735 = vld [vmem:[%s5 + $0x1ab4] sm:$0xf]
      %v3736 = vld [vmem:[%s5 + $0x1ab8] sm:$0xf]
      %v3737 = vld [vmem:[%s5 + $0x1abc] sm:$0xf]
      %v3738 = vld [vmem:[%s5 + $0x1ac0] sm:$0xf]
      %v3739 = vld [vmem:[%s5 + $0x1ac4] sm:$0xf]
      %v3740 = vld [vmem:[%s5 + $0x1ac8] sm:$0xf]
      %v3741 = vld [vmem:[%s5 + $0x1acc] sm:$0xf]
      %v3742 = vld [vmem:[%s5 + $0x1ad0] sm:$0xf]
      %v3743 = vld [vmem:[%s5 + $0x1ad4] sm:$0xf]
      %v3744 = vld [vmem:[%s5 + $0x1ad8] sm:$0xf]
      %v3745 = vld [vmem:[%s5 + $0x1adc] sm:$0xf]
      %v3746 = vld [vmem:[%s5 + $0x1ae0] sm:$0xf]
      %v3747 = vld [vmem:[%s5 + $0x1ae4] sm:$0xf]
      %v3748 = vld [vmem:[%s5 + $0x1ae8] sm:$0xf]
      %v3749 = vld [vmem:[%s5 + $0x1aec] sm:$0xf]
      %v3750 = vld [vmem:[%s5 + $0x1af0] sm:$0xf]
      %v3751 = vld [vmem:[%s5 + $0x1af4] sm:$0xf]
      %v3752 = vld [vmem:[%s5 + $0x1af8] sm:$0xf]
      %v3753 = vld [vmem:[%s5 + $0x1afc] sm:$0xf]
      %v3754 = vld [vmem:[%s5 + $0x1b00] sm:$0xf]
      %v3755 = vld [vmem:[%s5 + $0x1b04] sm:$0xf]
      %v3756 = vld [vmem:[%s5 + $0x1b08] sm:$0xf]
      %v3757 = vld [vmem:[%s5 + $0x1b0c] sm:$0xf]
      %v3758 = vld [vmem:[%s5 + $0x1b10] sm:$0xf]
      %v3759 = vld [vmem:[%s5 + $0x1b14] sm:$0xf]
      %v3760 = vld [vmem:[%s5 + $0x1b18] sm:$0xf]
      %v3761 = vld [vmem:[%s5 + $0x1b1c] sm:$0xf]
      %v3762 = vld [vmem:[%s5 + $0x1b20] sm:$0xf]
      %v3763 = vld [vmem:[%s5 + $0x1b24] sm:$0xf]
      %v3764 = vld [vmem:[%s5 + $0x1b28] sm:$0xf]
      %v3765 = vld [vmem:[%s5 + $0x1b2c] sm:$0xf]
      %v3766 = vld [vmem:[%s5 + $0x1b30] sm:$0xf]
      %v3767 = vld [vmem:[%s5 + $0x1b34] sm:$0xf]
      %v3768 = vld [vmem:[%s5 + $0x1b38] sm:$0xf]
      %v3769 = vld [vmem:[%s5 + $0x1b3c] sm:$0xf]
      %v3770 = vld [vmem:[%s5 + $0x1b40] sm:$0xf]
      %v3771 = vld [vmem:[%s5 + $0x1b44] sm:$0xf]
      %v3772 = vld [vmem:[%s5 + $0x1b48] sm:$0xf]
      %v3773 = vld [vmem:[%s5 + $0x1b4c] sm:$0xf]
      %v3774 = vld [vmem:[%s5 + $0x1b50] sm:$0xf]
      %v3775 = vld [vmem:[%s5 + $0x1b54] sm:$0xf]
      %v3776 = vld [vmem:[%s5 + $0x1b58] sm:$0xf]
      %v3777 = vld [vmem:[%s5 + $0x1b5c] sm:$0xf]
      %v3778 = vld [vmem:[%s5 + $0x1b60] sm:$0xf]
      %v3779 = vld [vmem:[%s5 + $0x1b64] sm:$0xf]
      %v3780 = vld [vmem:[%s5 + $0x1b68] sm:$0xf]
      %v3781 = vld [vmem:[%s5 + $0x1b6c] sm:$0xf]
      %v3782 = vld [vmem:[%s5 + $0x1b70] sm:$0xf]
      %v3783 = vld [vmem:[%s5 + $0x1b74] sm:$0xf]
      %v3784 = vld [vmem:[%s5 + $0x1b78] sm:$0xf]
      %v3785 = vld [vmem:[%s5 + $0x1b7c] sm:$0xf]
      %v3786 = vld [vmem:[%s5 + $0x1b80] sm:$0xf]
      %v3787 = vld [vmem:[%s5 + $0x1b84] sm:$0xf]
      %v3788 = vld [vmem:[%s5 + $0x1b88] sm:$0xf]
      %v3789 = vld [vmem:[%s5 + $0x1b8c] sm:$0xf]
      %v3790 = vld [vmem:[%s5 + $0x1b90] sm:$0xf]
      %v3791 = vld [vmem:[%s5 + $0x1b94] sm:$0xf]
      %v3792 = vld [vmem:[%s5 + $0x1b98] sm:$0xf]
      %v3793 = vld [vmem:[%s5 + $0x1b9c] sm:$0xf]
      %v3794 = vld [vmem:[%s5 + $0x1ba0] sm:$0xf]
      %v3795 = vld [vmem:[%s5 + $0x1ba4] sm:$0xf]
      %v3796 = vld [vmem:[%s5 + $0x1ba8] sm:$0xf]
      %v3797 = vld [vmem:[%s5 + $0x1bac] sm:$0xf]
      %v3798 = vld [vmem:[%s5 + $0x1bb0] sm:$0xf]
      %v3799 = vld [vmem:[%s5 + $0x1bb4] sm:$0xf]
      %v3800 = vld [vmem:[%s5 + $0x1bb8] sm:$0xf]
      %v3801 = vld [vmem:[%s5 + $0x1bbc] sm:$0xf]
      %v3802 = vld [vmem:[%s5 + $0x1bc0] sm:$0xf]
      %v3803 = vld [vmem:[%s5 + $0x1bc4] sm:$0xf]
      %v3804 = vld [vmem:[%s5 + $0x1bc8] sm:$0xf]
      %v3805 = vld [vmem:[%s5 + $0x1bcc] sm:$0xf]
      %v3806 = vld [vmem:[%s5 + $0x1bd0] sm:$0xf]
      %v3807 = vld [vmem:[%s5 + $0x1bd4] sm:$0xf]
      %v3808 = vld [vmem:[%s5 + $0x1bd8] sm:$0xf]
      %v3809 = vld [vmem:[%s5 + $0x1bdc] sm:$0xf]
      %v3810 = vld [vmem:[%s5 + $0x1be0] sm:$0xf]
      %v3811 = vld [vmem:[%s5 + $0x1be4] sm:$0xf]
      %v3812 = vld [vmem:[%s5 + $0x1be8] sm:$0xf]
      %v3813 = vld [vmem:[%s5 + $0x1bec] sm:$0xf]
      %v3814 = vld [vmem:[%s5 + $0x1bf0] sm:$0xf]
      %v3815 = vld [vmem:[%s5 + $0x1bf4] sm:$0xf]
      %v3816 = vld [vmem:[%s5 + $0x1bf8] sm:$0xf]
      %v3817 = vld [vmem:[%s5 + $0x1bfc] sm:$0xf]
      %v3818 = vld [vmem:[%s5 + $0x1c00] sm:$0xf]
      %v3819 = vld [vmem:[%s5 + $0x1c04] sm:$0xf]
      %v3820 = vld [vmem:[%s5 + $0x1c08] sm:$0xf]
      %v3821 = vld [vmem:[%s5 + $0x1c0c] sm:$0xf]
      %v3822 = vld [vmem:[%s5 + $0x1c10] sm:$0xf]
      %v3823 = vld [vmem:[%s5 + $0x1c14] sm:$0xf]
      %v3824 = vld [vmem:[%s5 + $0x1c18] sm:$0xf]
      %v3825 = vld [vmem:[%s5 + $0x1c1c] sm:$0xf]
      %v3826 = vld [vmem:[%s5 + $0x1c20] sm:$0xf]
      %v3827 = vld [vmem:[%s5 + $0x1c24] sm:$0xf]
      %v3828 = vld [vmem:[%s5 + $0x1c28] sm:$0xf]
      %v3829 = vld [vmem:[%s5 + $0x1c2c] sm:$0xf]
      %v3830 = vld [vmem:[%s5 + $0x1c30] sm:$0xf]
      %v3831 = vld [vmem:[%s5 + $0x1c34] sm:$0xf]
      %v3832 = vld [vmem:[%s5 + $0x1c38] sm:$0xf]
      %v3833 = vld [vmem:[%s5 + $0x1c3c] sm:$0xf]
      %v3834 = vld [vmem:[%s5 + $0x1c40] sm:$0xf]
      %v3835 = vld [vmem:[%s5 + $0x1c44] sm:$0xf]
      %v3836 = vld [vmem:[%s5 + $0x1c48] sm:$0xf]
      %v3837 = vld [vmem:[%s5 + $0x1c4c] sm:$0xf]
      %v3838 = vld [vmem:[%s5 + $0x1c50] sm:$0xf]
      %v3839 = vld [vmem:[%s5 + $0x1c54] sm:$0xf]
      %v3840 = vld [vmem:[%s5 + $0x1c58] sm:$0xf]
      %v3841 = vld [vmem:[%s5 + $0x1c5c] sm:$0xf]
      %v3842 = vld [vmem:[%s5 + $0x1c60] sm:$0xf]
      %v3843 = vld [vmem:[%s5 + $0x1c64] sm:$0xf]
      %v3844 = vld [vmem:[%s5 + $0x1c68] sm:$0xf]
      %v3845 = vld [vmem:[%s5 + $0x1c6c] sm:$0xf]
      %v3846 = vld [vmem:[%s5 + $0x1c70] sm:$0xf]
      %v3847 = vld [vmem:[%s5 + $0x1c74] sm:$0xf]
      %v3848 = vld [vmem:[%s5 + $0x1c78] sm:$0xf]
      %v3849 = vld [vmem:[%s5 + $0x1c7c] sm:$0xf]
      %v3850 = vld [vmem:[%s5 + $0x1c80] sm:$0xf]
      %v3851 = vld [vmem:[%s5 + $0x1c84] sm:$0xf]
      %v3852 = vld [vmem:[%s5 + $0x1c88] sm:$0xf]
      %v3853 = vld [vmem:[%s5 + $0x1c8c] sm:$0xf]
      %v3854 = vld [vmem:[%s5 + $0x1c90] sm:$0xf]
      %v3855 = vld [vmem:[%s5 + $0x1c94] sm:$0xf]
      %v3856 = vld [vmem:[%s5 + $0x1c98] sm:$0xf]
      %v3857 = vld [vmem:[%s5 + $0x1c9c] sm:$0xf]
      %v3858 = vld [vmem:[%s5 + $0x1ca0] sm:$0xf]
      %v3859 = vld [vmem:[%s5 + $0x1ca4] sm:$0xf]
      %v3860 = vld [vmem:[%s5 + $0x1ca8] sm:$0xf]
      %v3861 = vld [vmem:[%s5 + $0x1cac] sm:$0xf]
      %v3862 = vld [vmem:[%s5 + $0x1cb0] sm:$0xf]
      %v3863 = vld [vmem:[%s5 + $0x1cb4] sm:$0xf]
      %v3864 = vld [vmem:[%s5 + $0x1cb8] sm:$0xf]
      %v3865 = vld [vmem:[%s5 + $0x1cbc] sm:$0xf]
      %v3866 = vld [vmem:[%s5 + $0x1cc0] sm:$0xf]
      %v3867 = vld [vmem:[%s5 + $0x1cc4] sm:$0xf]
      %v3868 = vld [vmem:[%s5 + $0x1cc8] sm:$0xf]
      %v3869 = vld [vmem:[%s5 + $0x1ccc] sm:$0xf]
      %v3870 = vld [vmem:[%s5 + $0x1cd0] sm:$0xf]
      %v3871 = vld [vmem:[%s5 + $0x1cd4] sm:$0xf]
      %v3872 = vld [vmem:[%s5 + $0x1cd8] sm:$0xf]
      %v3873 = vld [vmem:[%s5 + $0x1cdc] sm:$0xf]
      %v3874 = vld [vmem:[%s5 + $0x1ce0] sm:$0xf]
      %v3875 = vld [vmem:[%s5 + $0x1ce4] sm:$0xf]
      %v3876 = vld [vmem:[%s5 + $0x1ce8] sm:$0xf]
      %v3877 = vld [vmem:[%s5 + $0x1cec] sm:$0xf]
      %v3878 = vld [vmem:[%s5 + $0x1cf0] sm:$0xf]
      %v3879 = vld [vmem:[%s5 + $0x1cf4] sm:$0xf]
      %v3880 = vld [vmem:[%s5 + $0x1cf8] sm:$0xf]
      %v3881 = vld [vmem:[%s5 + $0x1cfc] sm:$0xf]
      %v3882 = vld [vmem:[%s5 + $0x1d00] sm:$0xf]
      %v3883 = vld [vmem:[%s5 + $0x1d04] sm:$0xf]
      %v3884 = vld [vmem:[%s5 + $0x1d08] sm:$0xf]
      %v3885 = vld [vmem:[%s5 + $0x1d0c] sm:$0xf]
      %v3886 = vld [vmem:[%s5 + $0x1d10] sm:$0xf]
      %v3887 = vld [vmem:[%s5 + $0x1d14] sm:$0xf]
      %v3888 = vld [vmem:[%s5 + $0x1d18] sm:$0xf]
      %v3889 = vld [vmem:[%s5 + $0x1d1c] sm:$0xf]
      %v3890 = vld [vmem:[%s5 + $0x1d20] sm:$0xf]
      %v3891 = vld [vmem:[%s5 + $0x1d24] sm:$0xf]
      %v3892 = vld [vmem:[%s5 + $0x1d28] sm:$0xf]
      %v3893 = vld [vmem:[%s5 + $0x1d2c] sm:$0xf]
      %v3894 = vld [vmem:[%s5 + $0x1d30] sm:$0xf]
      %v3895 = vld [vmem:[%s5 + $0x1d34] sm:$0xf]
      %v3896 = vld [vmem:[%s5 + $0x1d38] sm:$0xf]
      %v3897 = vld [vmem:[%s5 + $0x1d3c] sm:$0xf]
      %v3898 = vld [vmem:[%s5 + $0x1d40] sm:$0xf]
      %v3899 = vld [vmem:[%s5 + $0x1d44] sm:$0xf]
      %v3900 = vld [vmem:[%s5 + $0x1d48] sm:$0xf]
      %v3901 = vld [vmem:[%s5 + $0x1d4c] sm:$0xf]
      %v3902 = vld [vmem:[%s5 + $0x1d50] sm:$0xf]
      %v3903 = vld [vmem:[%s5 + $0x1d54] sm:$0xf]
      %v3904 = vld [vmem:[%s5 + $0x1d58] sm:$0xf]
      %v3905 = vld [vmem:[%s5 + $0x1d5c] sm:$0xf]
      %v3906 = vld [vmem:[%s5 + $0x1d60] sm:$0xf]
      %v3907 = vld [vmem:[%s5 + $0x1d64] sm:$0xf]
      %v3908 = vld [vmem:[%s5 + $0x1d68] sm:$0xf]
      %v3909 = vld [vmem:[%s5 + $0x1d6c] sm:$0xf]
      %v3910 = vld [vmem:[%s5 + $0x1d70] sm:$0xf]
      %v3911 = vld [vmem:[%s5 + $0x1d74] sm:$0xf]
      %v3912 = vld [vmem:[%s5 + $0x1d78] sm:$0xf]
      %v3913 = vld [vmem:[%s5 + $0x1d7c] sm:$0xf]
      %v3914 = vld [vmem:[%s5 + $0x1d80] sm:$0xf]
      %v3915 = vld [vmem:[%s5 + $0x1d84] sm:$0xf]
      %v3916 = vld [vmem:[%s5 + $0x1d88] sm:$0xf]
      %v3917 = vld [vmem:[%s5 + $0x1d8c] sm:$0xf]
      %v3918 = vld [vmem:[%s5 + $0x1d90] sm:$0xf]
      %v3919 = vld [vmem:[%s5 + $0x1d94] sm:$0xf]
      %v3920 = vld [vmem:[%s5 + $0x1d98] sm:$0xf]
      %v3921 = vld [vmem:[%s5 + $0x1d9c] sm:$0xf]
      %v3922 = vld [vmem:[%s5 + $0x1da0] sm:$0xf]
      %v3923 = vld [vmem:[%s5 + $0x1da4] sm:$0xf]
      %v3924 = vld [vmem:[%s5 + $0x1da8] sm:$0xf]
      %v3925 = vld [vmem:[%s5 + $0x1dac] sm:$0xf]
      %v3926 = vld [vmem:[%s5 + $0x1db0] sm:$0xf]
      %v3927 = vld [vmem:[%s5 + $0x1db4] sm:$0xf]
      %v3928 = vld [vmem:[%s5 + $0x1db8] sm:$0xf]
      %v3929 = vld [vmem:[%s5 + $0x1dbc] sm:$0xf]
      %v3930 = vld [vmem:[%s5 + $0x1dc0] sm:$0xf]
      %v3931 = vld [vmem:[%s5 + $0x1dc4] sm:$0xf]
      %v3932 = vld [vmem:[%s5 + $0x1dc8] sm:$0xf]
      %v3933 = vld [vmem:[%s5 + $0x1dcc] sm:$0xf]
      %v3934 = vld [vmem:[%s5 + $0x1dd0] sm:$0xf]
      %v3935 = vld [vmem:[%s5 + $0x1dd4] sm:$0xf]
      %v3936 = vld [vmem:[%s5 + $0x1dd8] sm:$0xf]
      %v3937 = vld [vmem:[%s5 + $0x1ddc] sm:$0xf]
      %v3938 = vld [vmem:[%s5 + $0x1de0] sm:$0xf]
      %v3939 = vld [vmem:[%s5 + $0x1de4] sm:$0xf]
      %v3940 = vld [vmem:[%s5 + $0x1de8] sm:$0xf]
      %v3941 = vld [vmem:[%s5 + $0x1dec] sm:$0xf]
      %v3942 = vld [vmem:[%s5 + $0x1df0] sm:$0xf]
      %v3943 = vld [vmem:[%s5 + $0x1df4] sm:$0xf]
      %v3944 = vld [vmem:[%s5 + $0x1df8] sm:$0xf]
      %v3945 = vld [vmem:[%s5 + $0x1dfc] sm:$0xf]
      %v3946 = vld [vmem:[%s5 + $0x1e00] sm:$0xf]
      %v3947 = vld [vmem:[%s5 + $0x1e04] sm:$0xf]
      %v3948 = vld [vmem:[%s5 + $0x1e08] sm:$0xf]
      %v3949 = vld [vmem:[%s5 + $0x1e0c] sm:$0xf]
      %v3950 = vld [vmem:[%s5 + $0x1e10] sm:$0xf]
      %v3951 = vld [vmem:[%s5 + $0x1e14] sm:$0xf]
      %v3952 = vld [vmem:[%s5 + $0x1e18] sm:$0xf]
      %v3953 = vld [vmem:[%s5 + $0x1e1c] sm:$0xf]
      %v3954 = vld [vmem:[%s5 + $0x1e20] sm:$0xf]
      %v3955 = vld [vmem:[%s5 + $0x1e24] sm:$0xf]
      %v3956 = vld [vmem:[%s5 + $0x1e28] sm:$0xf]
      %v3957 = vld [vmem:[%s5 + $0x1e2c] sm:$0xf]
      %v3958 = vld [vmem:[%s5 + $0x1e30] sm:$0xf]
      %v3959 = vld [vmem:[%s5 + $0x1e34] sm:$0xf]
      %v3960 = vld [vmem:[%s5 + $0x1e38] sm:$0xf]
      %v3961 = vld [vmem:[%s5 + $0x1e3c] sm:$0xf]
      %v3962 = vld [vmem:[%s5 + $0x1e40] sm:$0xf]
      %v3963 = vld [vmem:[%s5 + $0x1e44] sm:$0xf]
      %v3964 = vld [vmem:[%s5 + $0x1e48] sm:$0xf]
      %v3965 = vld [vmem:[%s5 + $0x1e4c] sm:$0xf]
      %v3966 = vld [vmem:[%s5 + $0x1e50] sm:$0xf]
      %v3967 = vld [vmem:[%s5 + $0x1e54] sm:$0xf]
      %v3968 = vld [vmem:[%s5 + $0x1e58] sm:$0xf]
      %v3969 = vld [vmem:[%s5 + $0x1e5c] sm:$0xf]
      %v3970 = vld [vmem:[%s5 + $0x1e60] sm:$0xf]
      %v3971 = vld [vmem:[%s5 + $0x1e64] sm:$0xf]
      %v3972 = vld [vmem:[%s5 + $0x1e68] sm:$0xf]
      %v3973 = vld [vmem:[%s5 + $0x1e6c] sm:$0xf]
      %v3974 = vld [vmem:[%s5 + $0x1e70] sm:$0xf]
      %v3975 = vld [vmem:[%s5 + $0x1e74] sm:$0xf]
      %v3976 = vld [vmem:[%s5 + $0x1e78] sm:$0xf]
      %v3977 = vld [vmem:[%s5 + $0x1e7c] sm:$0xf]
      %v3978 = vld [vmem:[%s5 + $0x1e80] sm:$0xf]
      %v3979 = vld [vmem:[%s5 + $0x1e84] sm:$0xf]
      %v3980 = vld [vmem:[%s5 + $0x1e88] sm:$0xf]
      %v3981 = vld [vmem:[%s5 + $0x1e8c] sm:$0xf]
      %v3982 = vld [vmem:[%s5 + $0x1e90] sm:$0xf]
      %v3983 = vld [vmem:[%s5 + $0x1e94] sm:$0xf]
      %v3984 = vld [vmem:[%s5 + $0x1e98] sm:$0xf]
      %v3985 = vld [vmem:[%s5 + $0x1e9c] sm:$0xf]
      %v3986 = vld [vmem:[%s5 + $0x1ea0] sm:$0xf]
      %v3987 = vld [vmem:[%s5 + $0x1ea4] sm:$0xf]
      %v3988 = vld [vmem:[%s5 + $0x1ea8] sm:$0xf]
      %v3989 = vld [vmem:[%s5 + $0x1eac] sm:$0xf]
      %v3990 = vld [vmem:[%s5 + $0x1eb0] sm:$0xf]
      %v3991 = vld [vmem:[%s5 + $0x1eb4] sm:$0xf]
      %v3992 = vld [vmem:[%s5 + $0x1eb8] sm:$0xf]
      %v3993 = vld [vmem:[%s5 + $0x1ebc] sm:$0xf]
      %v3994 = vld [vmem:[%s5 + $0x1ec0] sm:$0xf]
      %v3995 = vld [vmem:[%s5 + $0x1ec4] sm:$0xf]
      %v3996 = vld [vmem:[%s5 + $0x1ec8] sm:$0xf]
      %v3997 = vld [vmem:[%s5 + $0x1ecc] sm:$0xf]
      %v3998 = vld [vmem:[%s5 + $0x1ed0] sm:$0xf]
      %v3999 = vld [vmem:[%s5 + $0x1ed4] sm:$0xf]
      %v4000 = vld [vmem:[%s5 + $0x1ed8] sm:$0xf]
      %v4001 = vld [vmem:[%s5 + $0x1edc] sm:$0xf]
      %v4002 = vld [vmem:[%s5 + $0x1ee0] sm:$0xf]
      %v4003 = vld [vmem:[%s5 + $0x1ee4] sm:$0xf]
      %v4004 = vld [vmem:[%s5 + $0x1ee8] sm:$0xf]
      %v4005 = vld [vmem:[%s5 + $0x1eec] sm:$0xf]
      %v4006 = vld [vmem:[%s5 + $0x1ef0] sm:$0xf]
      %v4007 = vld [vmem:[%s5 + $0x1ef4] sm:$0xf]
      %v4008 = vld [vmem:[%s5 + $0x1ef8] sm:$0xf]
      %v4009 = vld [vmem:[%s5 + $0x1efc] sm:$0xf]
      %v4010 = vld [vmem:[%s5 + $0x1f00] sm:$0xf]
      %v4011 = vld [vmem:[%s5 + $0x1f04] sm:$0xf]
      %v4012 = vld [vmem:[%s5 + $0x1f08] sm:$0xf]
      %v4013 = vld [vmem:[%s5 + $0x1f0c] sm:$0xf]
      %v4014 = vld [vmem:[%s5 + $0x1f10] sm:$0xf]
      %v4015 = vld [vmem:[%s5 + $0x1f14] sm:$0xf]
      %v4016 = vld [vmem:[%s5 + $0x1f18] sm:$0xf]
      %v4017 = vld [vmem:[%s5 + $0x1f1c] sm:$0xf]
      %v4018 = vld [vmem:[%s5 + $0x1f20] sm:$0xf]
      %v4019 = vld [vmem:[%s5 + $0x1f24] sm:$0xf]
      %v4020 = vld [vmem:[%s5 + $0x1f28] sm:$0xf]
      %v4021 = vld [vmem:[%s5 + $0x1f2c] sm:$0xf]
      %v4022 = vld [vmem:[%s5 + $0x1f30] sm:$0xf]
      %v4023 = vld [vmem:[%s5 + $0x1f34] sm:$0xf]
      %v4024 = vld [vmem:[%s5 + $0x1f38] sm:$0xf]
      %v4025 = vld [vmem:[%s5 + $0x1f3c] sm:$0xf]
      %v4026 = vld [vmem:[%s5 + $0x1f40] sm:$0xf]
      %v4027 = vld [vmem:[%s5 + $0x1f44] sm:$0xf]
      %v4028 = vld [vmem:[%s5 + $0x1f48] sm:$0xf]
      %v4029 = vld [vmem:[%s5 + $0x1f4c] sm:$0xf]
      %v4030 = vld [vmem:[%s5 + $0x1f50] sm:$0xf]
      %v4031 = vld [vmem:[%s5 + $0x1f54] sm:$0xf]
      %v4032 = vld [vmem:[%s5 + $0x1f58] sm:$0xf]
      %v4033 = vld [vmem:[%s5 + $0x1f5c] sm:$0xf]
      %v4034 = vld [vmem:[%s5 + $0x1f60] sm:$0xf]
      %v4035 = vld [vmem:[%s5 + $0x1f64] sm:$0xf]
      %v4036 = vld [vmem:[%s5 + $0x1f68] sm:$0xf]
      %v4037 = vld [vmem:[%s5 + $0x1f6c] sm:$0xf]
      %v4038 = vld [vmem:[%s5 + $0x1f70] sm:$0xf]
      %v4039 = vld [vmem:[%s5 + $0x1f74] sm:$0xf]
      %v4040 = vld [vmem:[%s5 + $0x1f78] sm:$0xf]
      %v4041 = vld [vmem:[%s5 + $0x1f7c] sm:$0xf]
      %v4042 = vld [vmem:[%s5 + $0x1f80] sm:$0xf]
      %v4043 = vld [vmem:[%s5 + $0x1f84] sm:$0xf]
      %v4044 = vld [vmem:[%s5 + $0x1f88] sm:$0xf]
      %v4045 = vld [vmem:[%s5 + $0x1f8c] sm:$0xf]
      %v4046 = vld [vmem:[%s5 + $0x1f90] sm:$0xf]
      %v4047 = vld [vmem:[%s5 + $0x1f94] sm:$0xf]
      %v4048 = vld [vmem:[%s5 + $0x1f98] sm:$0xf]
      %v4049 = vld [vmem:[%s5 + $0x1f9c] sm:$0xf]
      %v4050 = vld [vmem:[%s5 + $0x1fa0] sm:$0xf]
      %v4051 = vld [vmem:[%s5 + $0x1fa4] sm:$0xf]
      %v4052 = vld [vmem:[%s5 + $0x1fa8] sm:$0xf]
      %v4053 = vld [vmem:[%s5 + $0x1fac] sm:$0xf]
      %v4054 = vld [vmem:[%s5 + $0x1fb0] sm:$0xf]
      %v4055 = vld [vmem:[%s5 + $0x1fb4] sm:$0xf]
      %v4056 = vld [vmem:[%s5 + $0x1fb8] sm:$0xf]
      %v4057 = vld [vmem:[%s5 + $0x1fbc] sm:$0xf]
      %v4058 = vld [vmem:[%s5 + $0x1fc0] sm:$0xf]
      %v4059 = vld [vmem:[%s5 + $0x1fc4] sm:$0xf]
      %v4060 = vld [vmem:[%s5 + $0x1fc8] sm:$0xf]
      %v4061 = vld [vmem:[%s5 + $0x1fcc] sm:$0xf]
      %v4062 = vld [vmem:[%s5 + $0x1fd0] sm:$0xf]
      %v4063 = vld [vmem:[%s5 + $0x1fd4] sm:$0xf]
      %v4064 = vld [vmem:[%s5 + $0x1fd8] sm:$0xf]
      %v4065 = vld [vmem:[%s5 + $0x1fdc] sm:$0xf]
      %v4066 = vld [vmem:[%s5 + $0x1fe0] sm:$0xf]
      %v4067 = vld [vmem:[%s5 + $0x1fe4] sm:$0xf]
      %v4068 = vld [vmem:[%s5 + $0x1fe8] sm:$0xf]
      %v4069 = vld [vmem:[%s5 + $0x1fec] sm:$0xf]
      %v4070 = vld [vmem:[%s5 + $0x1ff0] sm:$0xf]
      %v4071 = vld [vmem:[%s5 + $0x1ff4] sm:$0xf]
      %v4072 = vld [vmem:[%s5 + $0x1ff8] sm:$0xf]
      %v4073 = vld [vmem:[%s5 + $0x1ffc] sm:$0xf]
      %v4074 = vld [vmem:[%s6] sm:$0x1]
      %v4075 = vpack.i.b16 %v1968, %v1968
      %v4076 = vpack.i.b16 %v1969, %v1969
      %v4077 = vpack.i.b16 %v1976, %v1976
      %v4078 = vpack.i.b16 %v1977, %v1977
      %v4079 = vpack.i.b16 %v1984, %v1984
      %v4080 = vpack.i.b16 %v1985, %v1985
      %v4081 = vpack.i.b16 %v1992, %v1992
      %v4082 = vpack.i.b16 %v1993, %v1993
      %v4083 = vpack.i.b16 %v2000, %v2000
      %v4084 = vpack.i.b16 %v2001, %v2001
      %v4085 = vpack.i.b16 %v2008, %v2008
      %v4086 = vpack.i.b16 %v2009, %v2009
      %v4087 = vpack.i.b16 %v2016, %v2016
      %v4088 = vpack.i.b16 %v2017, %v2017
      %v4089 = vpack.i.b16 %v2024, %v2024
      %v4090 = vpack.i.b16 %v2025, %v2025
      %v4091 = vlaneseq
      %v4092 = vshrl.u32 %v4091, 7
      %v4093 = vsub.s32 0, %v4092
      %v4094 = vrot.slane %v4075, %v4093
      %v4095 = vlaneseq
      %v4096 = vshrl.u32 %v4095, 7
      %v4097 = vsub.s32 1, %v4096
      %v4098 = vrot.slane %v4075, %v4097
      %v4099 = vlaneseq
      %v4100 = vshrl.u32 %v4099, 7
      %v4101 = vsub.s32 2, %v4100
      %v4102 = vrot.slane %v4075, %v4101
      %v4103 = vlaneseq
      %v4104 = vshrl.u32 %v4103, 7
      %v4105 = vsub.s32 3, %v4104
      %v4106 = vrot.slane %v4075, %v4105
      %v4107 = vlaneseq
      %v4108 = vshrl.u32 %v4107, 7
      %v4109 = vsub.s32 4, %v4108
      %v4110 = vrot.slane %v4075, %v4109
      %v4111 = vlaneseq
      %v4112 = vshrl.u32 %v4111, 7
      %v4113 = vsub.s32 5, %v4112
      %v4114 = vrot.slane %v4075, %v4113
      %v4115 = vlaneseq
      %v4116 = vshrl.u32 %v4115, 7
      %v4117 = vsub.s32 6, %v4116
      %v4118 = vrot.slane %v4075, %v4117
      %v4119 = vlaneseq
      %v4120 = vshrl.u32 %v4119, 7
      %v4121 = vsub.s32 7, %v4120
      %v4122 = vrot.slane %v4075, %v4121
      %v4123 = vlaneseq
      %v4124 = vshrl.u32 %v4123, 7
      %v4125 = vsub.s32 0, %v4124
      %v4126 = vrot.slane %v4076, %v4125
      %v4127 = vlaneseq
      %v4128 = vshrl.u32 %v4127, 7
      %v4129 = vsub.s32 1, %v4128
      %v4130 = vrot.slane %v4076, %v4129
      %v4131 = vlaneseq
      %v4132 = vshrl.u32 %v4131, 7
      %v4133 = vsub.s32 2, %v4132
      %v4134 = vrot.slane %v4076, %v4133
      %v4135 = vlaneseq
      %v4136 = vshrl.u32 %v4135, 7
      %v4137 = vsub.s32 3, %v4136
      %v4138 = vrot.slane %v4076, %v4137
      %v4139 = vlaneseq
      %v4140 = vshrl.u32 %v4139, 7
      %v4141 = vsub.s32 4, %v4140
      %v4142 = vrot.slane %v4076, %v4141
      %v4143 = vlaneseq
      %v4144 = vshrl.u32 %v4143, 7
      %v4145 = vsub.s32 5, %v4144
      %v4146 = vrot.slane %v4076, %v4145
      %v4147 = vlaneseq
      %v4148 = vshrl.u32 %v4147, 7
      %v4149 = vsub.s32 6, %v4148
      %v4150 = vrot.slane %v4076, %v4149
      %v4151 = vlaneseq
      %v4152 = vshrl.u32 %v4151, 7
      %v4153 = vsub.s32 7, %v4152
      %v4154 = vrot.slane %v4076, %v4153
      %v4155 = vlaneseq
      %v4156 = vshrl.u32 %v4155, 7
      %v4157 = vsub.s32 0, %v4156
      %v4158 = vrot.slane %v4077, %v4157
      %v4159 = vlaneseq
      %v4160 = vshrl.u32 %v4159, 7
      %v4161 = vsub.s32 1, %v4160
      %v4162 = vrot.slane %v4077, %v4161
      %v4163 = vlaneseq
      %v4164 = vshrl.u32 %v4163, 7
      %v4165 = vsub.s32 2, %v4164
      %v4166 = vrot.slane %v4077, %v4165
      %v4167 = vlaneseq
      %v4168 = vshrl.u32 %v4167, 7
      %v4169 = vsub.s32 3, %v4168
      %v4170 = vrot.slane %v4077, %v4169
      %v4171 = vlaneseq
      %v4172 = vshrl.u32 %v4171, 7
      %v4173 = vsub.s32 4, %v4172
      %v4174 = vrot.slane %v4077, %v4173
      %v4175 = vlaneseq
      %v4176 = vshrl.u32 %v4175, 7
      %v4177 = vsub.s32 5, %v4176
      %v4178 = vrot.slane %v4077, %v4177
      %v4179 = vlaneseq
      %v4180 = vshrl.u32 %v4179, 7
      %v4181 = vsub.s32 6, %v4180
      %v4182 = vrot.slane %v4077, %v4181
      %v4183 = vlaneseq
      %v4184 = vshrl.u32 %v4183, 7
      %v4185 = vsub.s32 7, %v4184
      %v4186 = vrot.slane %v4077, %v4185
      %v4187 = vlaneseq
      %v4188 = vshrl.u32 %v4187, 7
      %v4189 = vsub.s32 0, %v4188
      %v4190 = vrot.slane %v4078, %v4189
      %v4191 = vlaneseq
      %v4192 = vshrl.u32 %v4191, 7
      %v4193 = vsub.s32 1, %v4192
      %v4194 = vrot.slane %v4078, %v4193
      %v4195 = vlaneseq
      %v4196 = vshrl.u32 %v4195, 7
      %v4197 = vsub.s32 2, %v4196
      %v4198 = vrot.slane %v4078, %v4197
      %v4199 = vlaneseq
      %v4200 = vshrl.u32 %v4199, 7
      %v4201 = vsub.s32 3, %v4200
      %v4202 = vrot.slane %v4078, %v4201
      %v4203 = vlaneseq
      %v4204 = vshrl.u32 %v4203, 7
      %v4205 = vsub.s32 4, %v4204
      %v4206 = vrot.slane %v4078, %v4205
      %v4207 = vlaneseq
      %v4208 = vshrl.u32 %v4207, 7
      %v4209 = vsub.s32 5, %v4208
      %v4210 = vrot.slane %v4078, %v4209
      %v4211 = vlaneseq
      %v4212 = vshrl.u32 %v4211, 7
      %v4213 = vsub.s32 6, %v4212
      %v4214 = vrot.slane %v4078, %v4213
      %v4215 = vlaneseq
      %v4216 = vshrl.u32 %v4215, 7
      %v4217 = vsub.s32 7, %v4216
      %v4218 = vrot.slane %v4078, %v4217
      %v4219 = vlaneseq
      %v4220 = vshrl.u32 %v4219, 7
      %v4221 = vsub.s32 0, %v4220
      %v4222 = vrot.slane %v4079, %v4221
      %v4223 = vlaneseq
      %v4224 = vshrl.u32 %v4223, 7
      %v4225 = vsub.s32 1, %v4224
      %v4226 = vrot.slane %v4079, %v4225
      %v4227 = vlaneseq
      %v4228 = vshrl.u32 %v4227, 7
      %v4229 = vsub.s32 2, %v4228
      %v4230 = vrot.slane %v4079, %v4229
      %v4231 = vlaneseq
      %v4232 = vshrl.u32 %v4231, 7
      %v4233 = vsub.s32 3, %v4232
      %v4234 = vrot.slane %v4079, %v4233
      %v4235 = vlaneseq
      %v4236 = vshrl.u32 %v4235, 7
      %v4237 = vsub.s32 4, %v4236
      %v4238 = vrot.slane %v4079, %v4237
      %v4239 = vlaneseq
      %v4240 = vshrl.u32 %v4239, 7
      %v4241 = vsub.s32 5, %v4240
      %v4242 = vrot.slane %v4079, %v4241
      %v4243 = vlaneseq
      %v4244 = vshrl.u32 %v4243, 7
      %v4245 = vsub.s32 6, %v4244
      %v4246 = vrot.slane %v4079, %v4245
      %v4247 = vlaneseq
      %v4248 = vshrl.u32 %v4247, 7
      %v4249 = vsub.s32 7, %v4248
      %v4250 = vrot.slane %v4079, %v4249
      %v4251 = vlaneseq
      %v4252 = vshrl.u32 %v4251, 7
      %v4253 = vsub.s32 0, %v4252
      %v4254 = vrot.slane %v4080, %v4253
      %v4255 = vlaneseq
      %v4256 = vshrl.u32 %v4255, 7
      %v4257 = vsub.s32 1, %v4256
      %v4258 = vrot.slane %v4080, %v4257
      %v4259 = vlaneseq
      %v4260 = vshrl.u32 %v4259, 7
      %v4261 = vsub.s32 2, %v4260
      %v4262 = vrot.slane %v4080, %v4261
      %v4263 = vlaneseq
      %v4264 = vshrl.u32 %v4263, 7
      %v4265 = vsub.s32 3, %v4264
      %v4266 = vrot.slane %v4080, %v4265
      %v4267 = vlaneseq
      %v4268 = vshrl.u32 %v4267, 7
      %v4269 = vsub.s32 4, %v4268
      %v4270 = vrot.slane %v4080, %v4269
      %v4271 = vlaneseq
      %v4272 = vshrl.u32 %v4271, 7
      %v4273 = vsub.s32 5, %v4272
      %v4274 = vrot.slane %v4080, %v4273
      %v4275 = vlaneseq
      %v4276 = vshrl.u32 %v4275, 7
      %v4277 = vsub.s32 6, %v4276
      %v4278 = vrot.slane %v4080, %v4277
      %v4279 = vlaneseq
      %v4280 = vshrl.u32 %v4279, 7
      %v4281 = vsub.s32 7, %v4280
      %v4282 = vrot.slane %v4080, %v4281
      %v4283 = vlaneseq
      %v4284 = vshrl.u32 %v4283, 7
      %v4285 = vsub.s32 0, %v4284
      %v4286 = vrot.slane %v4081, %v4285
      %v4287 = vlaneseq
      %v4288 = vshrl.u32 %v4287, 7
      %v4289 = vsub.s32 1, %v4288
      %v4290 = vrot.slane %v4081, %v4289
      %v4291 = vlaneseq
      %v4292 = vshrl.u32 %v4291, 7
      %v4293 = vsub.s32 2, %v4292
      %v4294 = vrot.slane %v4081, %v4293
      %v4295 = vlaneseq
      %v4296 = vshrl.u32 %v4295, 7
      %v4297 = vsub.s32 3, %v4296
      %v4298 = vrot.slane %v4081, %v4297
      %v4299 = vlaneseq
      %v4300 = vshrl.u32 %v4299, 7
      %v4301 = vsub.s32 4, %v4300
      %v4302 = vrot.slane %v4081, %v4301
      %v4303 = vlaneseq
      %v4304 = vshrl.u32 %v4303, 7
      %v4305 = vsub.s32 5, %v4304
      %v4306 = vrot.slane %v4081, %v4305
      %v4307 = vlaneseq
      %v4308 = vshrl.u32 %v4307, 7
      %v4309 = vsub.s32 6, %v4308
      %v4310 = vrot.slane %v4081, %v4309
      %v4311 = vlaneseq
      %v4312 = vshrl.u32 %v4311, 7
      %v4313 = vsub.s32 7, %v4312
      %v4314 = vrot.slane %v4081, %v4313
      %v4315 = vlaneseq
      %v4316 = vshrl.u32 %v4315, 7
      %v4317 = vsub.s32 0, %v4316
      %v4318 = vrot.slane %v4082, %v4317
      %v4319 = vlaneseq
      %v4320 = vshrl.u32 %v4319, 7
      %v4321 = vsub.s32 1, %v4320
      %v4322 = vrot.slane %v4082, %v4321
      %v4323 = vlaneseq
      %v4324 = vshrl.u32 %v4323, 7
      %v4325 = vsub.s32 2, %v4324
      %v4326 = vrot.slane %v4082, %v4325
      %v4327 = vlaneseq
      %v4328 = vshrl.u32 %v4327, 7
      %v4329 = vsub.s32 3, %v4328
      %v4330 = vrot.slane %v4082, %v4329
      %v4331 = vlaneseq
      %v4332 = vshrl.u32 %v4331, 7
      %v4333 = vsub.s32 4, %v4332
      %v4334 = vrot.slane %v4082, %v4333
      %v4335 = vlaneseq
      %v4336 = vshrl.u32 %v4335, 7
      %v4337 = vsub.s32 5, %v4336
      %v4338 = vrot.slane %v4082, %v4337
      %v4339 = vlaneseq
      %v4340 = vshrl.u32 %v4339, 7
      %v4341 = vsub.s32 6, %v4340
      %v4342 = vrot.slane %v4082, %v4341
      %v4343 = vlaneseq
      %v4344 = vshrl.u32 %v4343, 7
      %v4345 = vsub.s32 7, %v4344
      %v4346 = vrot.slane %v4082, %v4345
      %v4347 = vlaneseq
      %v4348 = vshrl.u32 %v4347, 7
      %v4349 = vsub.s32 0, %v4348
      %v4350 = vrot.slane %v4083, %v4349
      %v4351 = vlaneseq
      %v4352 = vshrl.u32 %v4351, 7
      %v4353 = vsub.s32 1, %v4352
      %v4354 = vrot.slane %v4083, %v4353
      %v4355 = vlaneseq
      %v4356 = vshrl.u32 %v4355, 7
      %v4357 = vsub.s32 2, %v4356
      %v4358 = vrot.slane %v4083, %v4357
      %v4359 = vlaneseq
      %v4360 = vshrl.u32 %v4359, 7
      %v4361 = vsub.s32 3, %v4360
      %v4362 = vrot.slane %v4083, %v4361
      %v4363 = vlaneseq
      %v4364 = vshrl.u32 %v4363, 7
      %v4365 = vsub.s32 4, %v4364
      %v4366 = vrot.slane %v4083, %v4365
      %v4367 = vlaneseq
      %v4368 = vshrl.u32 %v4367, 7
      %v4369 = vsub.s32 5, %v4368
      %v4370 = vrot.slane %v4083, %v4369
      %v4371 = vlaneseq
      %v4372 = vshrl.u32 %v4371, 7
      %v4373 = vsub.s32 6, %v4372
      %v4374 = vrot.slane %v4083, %v4373
      %v4375 = vlaneseq
      %v4376 = vshrl.u32 %v4375, 7
      %v4377 = vsub.s32 7, %v4376
      %v4378 = vrot.slane %v4083, %v4377
      %v4379 = vlaneseq
      %v4380 = vshrl.u32 %v4379, 7
      %v4381 = vsub.s32 0, %v4380
      %v4382 = vrot.slane %v4084, %v4381
      %v4383 = vlaneseq
      %v4384 = vshrl.u32 %v4383, 7
      %v4385 = vsub.s32 1, %v4384
      %v4386 = vrot.slane %v4084, %v4385
      %v4387 = vlaneseq
      %v4388 = vshrl.u32 %v4387, 7
      %v4389 = vsub.s32 2, %v4388
      %v4390 = vrot.slane %v4084, %v4389
      %v4391 = vlaneseq
      %v4392 = vshrl.u32 %v4391, 7
      %v4393 = vsub.s32 3, %v4392
      %v4394 = vrot.slane %v4084, %v4393
      %v4395 = vlaneseq
      %v4396 = vshrl.u32 %v4395, 7
      %v4397 = vsub.s32 4, %v4396
      %v4398 = vrot.slane %v4084, %v4397
      %v4399 = vlaneseq
      %v4400 = vshrl.u32 %v4399, 7
      %v4401 = vsub.s32 5, %v4400
      %v4402 = vrot.slane %v4084, %v4401
      %v4403 = vlaneseq
      %v4404 = vshrl.u32 %v4403, 7
      %v4405 = vsub.s32 6, %v4404
      %v4406 = vrot.slane %v4084, %v4405
      %v4407 = vlaneseq
      %v4408 = vshrl.u32 %v4407, 7
      %v4409 = vsub.s32 7, %v4408
      %v4410 = vrot.slane %v4084, %v4409
      %v4411 = vlaneseq
      %v4412 = vshrl.u32 %v4411, 7
      %v4413 = vsub.s32 0, %v4412
      %v4414 = vrot.slane %v4085, %v4413
      %v4415 = vlaneseq
      %v4416 = vshrl.u32 %v4415, 7
      %v4417 = vsub.s32 1, %v4416
      %v4418 = vrot.slane %v4085, %v4417
      %v4419 = vlaneseq
      %v4420 = vshrl.u32 %v4419, 7
      %v4421 = vsub.s32 2, %v4420
      %v4422 = vrot.slane %v4085, %v4421
      %v4423 = vlaneseq
      %v4424 = vshrl.u32 %v4423, 7
      %v4425 = vsub.s32 3, %v4424
      %v4426 = vrot.slane %v4085, %v4425
      %v4427 = vlaneseq
      %v4428 = vshrl.u32 %v4427, 7
      %v4429 = vsub.s32 4, %v4428
      %v4430 = vrot.slane %v4085, %v4429
      %v4431 = vlaneseq
      %v4432 = vshrl.u32 %v4431, 7
      %v4433 = vsub.s32 5, %v4432
      %v4434 = vrot.slane %v4085, %v4433
      %v4435 = vlaneseq
      %v4436 = vshrl.u32 %v4435, 7
      %v4437 = vsub.s32 6, %v4436
      %v4438 = vrot.slane %v4085, %v4437
      %v4439 = vlaneseq
      %v4440 = vshrl.u32 %v4439, 7
      %v4441 = vsub.s32 7, %v4440
      %v4442 = vrot.slane %v4085, %v4441
      %v4443 = vlaneseq
      %v4444 = vshrl.u32 %v4443, 7
      %v4445 = vsub.s32 0, %v4444
      %v4446 = vrot.slane %v4086, %v4445
      %v4447 = vlaneseq
      %v4448 = vshrl.u32 %v4447, 7
      %v4449 = vsub.s32 1, %v4448
      %v4450 = vrot.slane %v4086, %v4449
      %v4451 = vlaneseq
      %v4452 = vshrl.u32 %v4451, 7
      %v4453 = vsub.s32 2, %v4452
      %v4454 = vrot.slane %v4086, %v4453
      %v4455 = vlaneseq
      %v4456 = vshrl.u32 %v4455, 7
      %v4457 = vsub.s32 3, %v4456
      %v4458 = vrot.slane %v4086, %v4457
      %v4459 = vlaneseq
      %v4460 = vshrl.u32 %v4459, 7
      %v4461 = vsub.s32 4, %v4460
      %v4462 = vrot.slane %v4086, %v4461
      %v4463 = vlaneseq
      %v4464 = vshrl.u32 %v4463, 7
      %v4465 = vsub.s32 5, %v4464
      %v4466 = vrot.slane %v4086, %v4465
      %v4467 = vlaneseq
      %v4468 = vshrl.u32 %v4467, 7
      %v4469 = vsub.s32 6, %v4468
      %v4470 = vrot.slane %v4086, %v4469
      %v4471 = vlaneseq
      %v4472 = vshrl.u32 %v4471, 7
      %v4473 = vsub.s32 7, %v4472
      %v4474 = vrot.slane %v4086, %v4473
      %v4475 = vlaneseq
      %v4476 = vshrl.u32 %v4475, 7
      %v4477 = vsub.s32 0, %v4476
      %v4478 = vrot.slane %v4087, %v4477
      %v4479 = vlaneseq
      %v4480 = vshrl.u32 %v4479, 7
      %v4481 = vsub.s32 1, %v4480
      %v4482 = vrot.slane %v4087, %v4481
      %v4483 = vlaneseq
      %v4484 = vshrl.u32 %v4483, 7
      %v4485 = vsub.s32 2, %v4484
      %v4486 = vrot.slane %v4087, %v4485
      %v4487 = vlaneseq
      %v4488 = vshrl.u32 %v4487, 7
      %v4489 = vsub.s32 3, %v4488
      %v4490 = vrot.slane %v4087, %v4489
      %v4491 = vlaneseq
      %v4492 = vshrl.u32 %v4491, 7
      %v4493 = vsub.s32 4, %v4492
      %v4494 = vrot.slane %v4087, %v4493
      %v4495 = vlaneseq
      %v4496 = vshrl.u32 %v4495, 7
      %v4497 = vsub.s32 5, %v4496
      %v4498 = vrot.slane %v4087, %v4497
      %v4499 = vlaneseq
      %v4500 = vshrl.u32 %v4499, 7
      %v4501 = vsub.s32 6, %v4500
      %v4502 = vrot.slane %v4087, %v4501
      %v4503 = vlaneseq
      %v4504 = vshrl.u32 %v4503, 7
      %v4505 = vsub.s32 7, %v4504
      %v4506 = vrot.slane %v4087, %v4505
      %v4507 = vlaneseq
      %v4508 = vshrl.u32 %v4507, 7
      %v4509 = vsub.s32 0, %v4508
      %v4510 = vrot.slane %v4088, %v4509
      %v4511 = vlaneseq
      %v4512 = vshrl.u32 %v4511, 7
      %v4513 = vsub.s32 1, %v4512
      %v4514 = vrot.slane %v4088, %v4513
      %v4515 = vlaneseq
      %v4516 = vshrl.u32 %v4515, 7
      %v4517 = vsub.s32 2, %v4516
      %v4518 = vrot.slane %v4088, %v4517
      %v4519 = vlaneseq
      %v4520 = vshrl.u32 %v4519, 7
      %v4521 = vsub.s32 3, %v4520
      %v4522 = vrot.slane %v4088, %v4521
      %v4523 = vlaneseq
      %v4524 = vshrl.u32 %v4523, 7
      %v4525 = vsub.s32 4, %v4524
      %v4526 = vrot.slane %v4088, %v4525
      %v4527 = vlaneseq
      %v4528 = vshrl.u32 %v4527, 7
      %v4529 = vsub.s32 5, %v4528
      %v4530 = vrot.slane %v4088, %v4529
      %v4531 = vlaneseq
      %v4532 = vshrl.u32 %v4531, 7
      %v4533 = vsub.s32 6, %v4532
      %v4534 = vrot.slane %v4088, %v4533
      %v4535 = vlaneseq
      %v4536 = vshrl.u32 %v4535, 7
      %v4537 = vsub.s32 7, %v4536
      %v4538 = vrot.slane %v4088, %v4537
      %v4539 = vlaneseq
      %v4540 = vshrl.u32 %v4539, 7
      %v4541 = vsub.s32 0, %v4540
      %v4542 = vrot.slane %v4089, %v4541
      %v4543 = vlaneseq
      %v4544 = vshrl.u32 %v4543, 7
      %v4545 = vsub.s32 1, %v4544
      %v4546 = vrot.slane %v4089, %v4545
      %v4547 = vlaneseq
      %v4548 = vshrl.u32 %v4547, 7
      %v4549 = vsub.s32 2, %v4548
      %v4550 = vrot.slane %v4089, %v4549
      %v4551 = vlaneseq
      %v4552 = vshrl.u32 %v4551, 7
      %v4553 = vsub.s32 3, %v4552
      %v4554 = vrot.slane %v4089, %v4553
      %v4555 = vlaneseq
      %v4556 = vshrl.u32 %v4555, 7
      %v4557 = vsub.s32 4, %v4556
      %v4558 = vrot.slane %v4089, %v4557
      %v4559 = vlaneseq
      %v4560 = vshrl.u32 %v4559, 7
      %v4561 = vsub.s32 5, %v4560
      %v4562 = vrot.slane %v4089, %v4561
      %v4563 = vlaneseq
      %v4564 = vshrl.u32 %v4563, 7
      %v4565 = vsub.s32 6, %v4564
      %v4566 = vrot.slane %v4089, %v4565
      %v4567 = vlaneseq
      %v4568 = vshrl.u32 %v4567, 7
      %v4569 = vsub.s32 7, %v4568
      %v4570 = vrot.slane %v4089, %v4569
      %v4571 = vlaneseq
      %v4572 = vshrl.u32 %v4571, 7
      %v4573 = vsub.s32 0, %v4572
      %v4574 = vrot.slane %v4090, %v4573
      %v4575 = vlaneseq
      %v4576 = vshrl.u32 %v4575, 7
      %v4577 = vsub.s32 1, %v4576
      %v4578 = vrot.slane %v4090, %v4577
      %v4579 = vlaneseq
      %v4580 = vshrl.u32 %v4579, 7
      %v4581 = vsub.s32 2, %v4580
      %v4582 = vrot.slane %v4090, %v4581
      %v4583 = vlaneseq
      %v4584 = vshrl.u32 %v4583, 7
      %v4585 = vsub.s32 3, %v4584
      %v4586 = vrot.slane %v4090, %v4585
      %v4587 = vlaneseq
      %v4588 = vshrl.u32 %v4587, 7
      %v4589 = vsub.s32 4, %v4588
      %v4590 = vrot.slane %v4090, %v4589
      %v4591 = vlaneseq
      %v4592 = vshrl.u32 %v4591, 7
      %v4593 = vsub.s32 5, %v4592
      %v4594 = vrot.slane %v4090, %v4593
      %v4595 = vlaneseq
      %v4596 = vshrl.u32 %v4595, 7
      %v4597 = vsub.s32 6, %v4596
      %v4598 = vrot.slane %v4090, %v4597
      %v4599 = vlaneseq
      %v4600 = vshrl.u32 %v4599, 7
      %v4601 = vsub.s32 7, %v4600
      %v4602 = vrot.slane %v4090, %v4601
      %v6779 = vunpack.c.l.b16 %v2026
      %v6780 = vunpack.c.l.b16 %v2027
      %v6781 = vunpack.c.l.b16 %v2028
      %v6782 = vunpack.c.l.b16 %v2029
      %v6783 = vunpack.c.l.b16 %v2030
      %v6784 = vunpack.c.l.b16 %v2031
      %v6785 = vunpack.c.l.b16 %v2032
      %v6786 = vunpack.c.l.b16 %v2033
      %v6787 = vunpack.c.l.b16 %v2034
      %v6788 = vunpack.c.l.b16 %v2035
      %v6789 = vunpack.c.l.b16 %v2036
      %v6790 = vunpack.c.l.b16 %v2037
      %v6791 = vunpack.c.l.b16 %v2038
      %v6792 = vunpack.c.l.b16 %v2039
      %v6793 = vunpack.c.l.b16 %v2040
      %v6794 = vunpack.c.l.b16 %v2041
      %v6795 = vunpack.c.l.b16 %v2042
      %v6796 = vunpack.c.l.b16 %v2043
      %v6797 = vunpack.c.l.b16 %v2044
      %v6798 = vunpack.c.l.b16 %v2045
      %v6799 = vunpack.c.l.b16 %v2046
      %v6800 = vunpack.c.l.b16 %v2047
      %v6801 = vunpack.c.l.b16 %v2048
      %v6802 = vunpack.c.l.b16 %v2049
      %v6803 = vunpack.c.l.b16 %v2050
      %v6804 = vunpack.c.l.b16 %v2051
      %v6805 = vunpack.c.l.b16 %v2052
      %v6806 = vunpack.c.l.b16 %v2053
      %v6807 = vunpack.c.l.b16 %v2054
      %v6808 = vunpack.c.l.b16 %v2055
      %v6809 = vunpack.c.l.b16 %v2056
      %v6810 = vunpack.c.l.b16 %v2057
      %v6811 = vunpack.c.l.b16 %v2058
      %v6812 = vunpack.c.l.b16 %v2059
      %v6813 = vunpack.c.l.b16 %v2060
      %v6814 = vunpack.c.l.b16 %v2061
      %v6815 = vunpack.c.l.b16 %v2062
      %v6816 = vunpack.c.l.b16 %v2063
      %v6817 = vunpack.c.l.b16 %v2064
      %v6818 = vunpack.c.l.b16 %v2065
      %v6819 = vunpack.c.l.b16 %v2066
      %v6820 = vunpack.c.l.b16 %v2067
      %v6821 = vunpack.c.l.b16 %v2068
      %v6822 = vunpack.c.l.b16 %v2069
      %v6823 = vunpack.c.l.b16 %v2070
      %v6824 = vunpack.c.l.b16 %v2071
      %v6825 = vunpack.c.l.b16 %v2072
      %v6826 = vunpack.c.l.b16 %v2073
      %v6827 = vunpack.c.l.b16 %v2074
      %v6828 = vunpack.c.l.b16 %v2075
      %v6829 = vunpack.c.l.b16 %v2076
      %v6830 = vunpack.c.l.b16 %v2077
      %v6831 = vunpack.c.l.b16 %v2078
      %v6832 = vunpack.c.l.b16 %v2079
      %v6833 = vunpack.c.l.b16 %v2080
      %v6834 = vunpack.c.l.b16 %v2081
      %v6835 = vunpack.c.l.b16 %v2082
      %v6836 = vunpack.c.l.b16 %v2083
      %v6837 = vunpack.c.l.b16 %v2084
      %v6838 = vunpack.c.l.b16 %v2085
      %v6839 = vunpack.c.l.b16 %v2086
      %v6840 = vunpack.c.l.b16 %v2087
      %v6841 = vunpack.c.l.b16 %v2088
      %v6842 = vunpack.c.l.b16 %v2089
      %v6843 = vunpack.c.l.b16 %v2090
      %v6844 = vunpack.c.l.b16 %v2091
      %v6845 = vunpack.c.l.b16 %v2092
      %v6846 = vunpack.c.l.b16 %v2093
      %v6847 = vunpack.c.l.b16 %v2094
      %v6848 = vunpack.c.l.b16 %v2095
      %v6849 = vunpack.c.l.b16 %v2096
      %v6850 = vunpack.c.l.b16 %v2097
      %v6851 = vunpack.c.l.b16 %v2098
      %v6852 = vunpack.c.l.b16 %v2099
      %v6853 = vunpack.c.l.b16 %v2100
      %v6854 = vunpack.c.l.b16 %v2101
      %v6855 = vunpack.c.l.b16 %v2102
      %v6856 = vunpack.c.l.b16 %v2103
      %v6857 = vunpack.c.l.b16 %v2104
      %v6858 = vunpack.c.l.b16 %v2105
      %v6859 = vunpack.c.l.b16 %v2106
      %v6860 = vunpack.c.l.b16 %v2107
      %v6861 = vunpack.c.l.b16 %v2108
      %v6862 = vunpack.c.l.b16 %v2109
      %v6863 = vunpack.c.l.b16 %v2110
      %v6864 = vunpack.c.l.b16 %v2111
      %v6865 = vunpack.c.l.b16 %v2112
      %v6866 = vunpack.c.l.b16 %v2113
      %v6867 = vunpack.c.l.b16 %v2114
      %v6868 = vunpack.c.l.b16 %v2115
      %v6869 = vunpack.c.l.b16 %v2116
      %v6870 = vunpack.c.l.b16 %v2117
      %v6871 = vunpack.c.l.b16 %v2118
      %v6872 = vunpack.c.l.b16 %v2119
      %v6873 = vunpack.c.l.b16 %v2120
      %v6874 = vunpack.c.l.b16 %v2121
      %v6875 = vunpack.c.l.b16 %v2122
      %v6876 = vunpack.c.l.b16 %v2123
      %v6877 = vunpack.c.l.b16 %v2124
      %v6878 = vunpack.c.l.b16 %v2125
      %v6879 = vunpack.c.l.b16 %v2126
      %v6880 = vunpack.c.l.b16 %v2127
      %v6881 = vunpack.c.l.b16 %v2128
      %v6882 = vunpack.c.l.b16 %v2129
      %v6883 = vunpack.c.l.b16 %v2130
      %v6884 = vunpack.c.l.b16 %v2131
      %v6885 = vunpack.c.l.b16 %v2132
      %v6886 = vunpack.c.l.b16 %v2133
      %v6887 = vunpack.c.l.b16 %v2134
      %v6888 = vunpack.c.l.b16 %v2135
      %v6889 = vunpack.c.l.b16 %v2136
      %v6890 = vunpack.c.l.b16 %v2137
      %v6891 = vunpack.c.l.b16 %v2138
      %v6892 = vunpack.c.l.b16 %v2139
      %v6893 = vunpack.c.l.b16 %v2140
      %v6894 = vunpack.c.l.b16 %v2141
      %v6895 = vunpack.c.l.b16 %v2142
      %v6896 = vunpack.c.l.b16 %v2143
      %v6897 = vunpack.c.l.b16 %v2144
      %v6898 = vunpack.c.l.b16 %v2145
      %v6899 = vunpack.c.l.b16 %v2146
      %v6900 = vunpack.c.l.b16 %v2147
      %v6901 = vunpack.c.l.b16 %v2148
      %v6902 = vunpack.c.l.b16 %v2149
      %v6903 = vunpack.c.l.b16 %v2150
      %v6904 = vunpack.c.l.b16 %v2151
      %v6905 = vunpack.c.l.b16 %v2152
      %v6906 = vunpack.c.l.b16 %v2153
      %v6907 = vunpack.c.l.b16 %v2154
      %v6908 = vunpack.c.l.b16 %v2155
      %v6909 = vunpack.c.l.b16 %v2156
      %v6910 = vunpack.c.l.b16 %v2157
      %v6911 = vunpack.c.l.b16 %v2158
      %v6912 = vunpack.c.l.b16 %v2159
      %v6913 = vunpack.c.l.b16 %v2160
      %v6914 = vunpack.c.l.b16 %v2161
      %v6915 = vunpack.c.l.b16 %v2162
      %v6916 = vunpack.c.l.b16 %v2163
      %v6917 = vunpack.c.l.b16 %v2164
      %v6918 = vunpack.c.l.b16 %v2165
      %v6919 = vunpack.c.l.b16 %v2166
      %v6920 = vunpack.c.l.b16 %v2167
      %v6921 = vunpack.c.l.b16 %v2168
      %v6922 = vunpack.c.l.b16 %v2169
      %v6923 = vunpack.c.l.b16 %v2170
      %v6924 = vunpack.c.l.b16 %v2171
      %v6925 = vunpack.c.l.b16 %v2172
      %v6926 = vunpack.c.l.b16 %v2173
      %v6927 = vunpack.c.l.b16 %v2174
      %v6928 = vunpack.c.l.b16 %v2175
      %v6929 = vunpack.c.l.b16 %v2176
      %v6930 = vunpack.c.l.b16 %v2177
      %v6931 = vunpack.c.l.b16 %v2178
      %v6932 = vunpack.c.l.b16 %v2179
      %v6933 = vunpack.c.l.b16 %v2180
      %v6934 = vunpack.c.l.b16 %v2181
      %v6935 = vunpack.c.l.b16 %v2182
      %v6936 = vunpack.c.l.b16 %v2183
      %v6937 = vunpack.c.l.b16 %v2184
      %v6938 = vunpack.c.l.b16 %v2185
      %v6939 = vunpack.c.l.b16 %v2186
      %v6940 = vunpack.c.l.b16 %v2187
      %v6941 = vunpack.c.l.b16 %v2188
      %v6942 = vunpack.c.l.b16 %v2189
      %v6943 = vunpack.c.l.b16 %v2190
      %v6944 = vunpack.c.l.b16 %v2191
      %v6945 = vunpack.c.l.b16 %v2192
      %v6946 = vunpack.c.l.b16 %v2193
      %v6947 = vunpack.c.l.b16 %v2194
      %v6948 = vunpack.c.l.b16 %v2195
      %v6949 = vunpack.c.l.b16 %v2196
      %v6950 = vunpack.c.l.b16 %v2197
      %v6951 = vunpack.c.l.b16 %v2198
      %v6952 = vunpack.c.l.b16 %v2199
      %v6953 = vunpack.c.l.b16 %v2200
      %v6954 = vunpack.c.l.b16 %v2201
      %v6955 = vunpack.c.l.b16 %v2202
      %v6956 = vunpack.c.l.b16 %v2203
      %v6957 = vunpack.c.l.b16 %v2204
      %v6958 = vunpack.c.l.b16 %v2205
      %v6959 = vunpack.c.l.b16 %v2206
      %v6960 = vunpack.c.l.b16 %v2207
      %v6961 = vunpack.c.l.b16 %v2208
      %v6962 = vunpack.c.l.b16 %v2209
      %v6963 = vunpack.c.l.b16 %v2210
      %v6964 = vunpack.c.l.b16 %v2211
      %v6965 = vunpack.c.l.b16 %v2212
      %v6966 = vunpack.c.l.b16 %v2213
      %v6967 = vunpack.c.l.b16 %v2214
      %v6968 = vunpack.c.l.b16 %v2215
      %v6969 = vunpack.c.l.b16 %v2216
      %v6970 = vunpack.c.l.b16 %v2217
      %v6971 = vunpack.c.l.b16 %v2218
      %v6972 = vunpack.c.l.b16 %v2219
      %v6973 = vunpack.c.l.b16 %v2220
      %v6974 = vunpack.c.l.b16 %v2221
      %v6975 = vunpack.c.l.b16 %v2222
      %v6976 = vunpack.c.l.b16 %v2223
      %v6977 = vunpack.c.l.b16 %v2224
      %v6978 = vunpack.c.l.b16 %v2225
      %v6979 = vunpack.c.l.b16 %v2226
      %v6980 = vunpack.c.l.b16 %v2227
      %v6981 = vunpack.c.l.b16 %v2228
      %v6982 = vunpack.c.l.b16 %v2229
      %v6983 = vunpack.c.l.b16 %v2230
      %v6984 = vunpack.c.l.b16 %v2231
      %v6985 = vunpack.c.l.b16 %v2232
      %v6986 = vunpack.c.l.b16 %v2233
      %v6987 = vunpack.c.l.b16 %v2234
      %v6988 = vunpack.c.l.b16 %v2235
      %v6989 = vunpack.c.l.b16 %v2236
      %v6990 = vunpack.c.l.b16 %v2237
      %v6991 = vunpack.c.l.b16 %v2238
      %v6992 = vunpack.c.l.b16 %v2239
      %v6993 = vunpack.c.l.b16 %v2240
      %v6994 = vunpack.c.l.b16 %v2241
      %v6995 = vunpack.c.l.b16 %v2242
      %v6996 = vunpack.c.l.b16 %v2243
      %v6997 = vunpack.c.l.b16 %v2244
      %v6998 = vunpack.c.l.b16 %v2245
      %v6999 = vunpack.c.l.b16 %v2246
      %v7000 = vunpack.c.l.b16 %v2247
      %v7001 = vunpack.c.l.b16 %v2248
      %v7002 = vunpack.c.l.b16 %v2249
      %v7003 = vunpack.c.l.b16 %v2250
      %v7004 = vunpack.c.l.b16 %v2251
      %v7005 = vunpack.c.l.b16 %v2252
      %v7006 = vunpack.c.l.b16 %v2253
      %v7007 = vunpack.c.l.b16 %v2254
      %v7008 = vunpack.c.l.b16 %v2255
      %v7009 = vunpack.c.l.b16 %v2256
      %v7010 = vunpack.c.l.b16 %v2257
      %v7011 = vunpack.c.l.b16 %v2258
      %v7012 = vunpack.c.l.b16 %v2259
      %v7013 = vunpack.c.l.b16 %v2260
      %v7014 = vunpack.c.l.b16 %v2261
      %v7015 = vunpack.c.l.b16 %v2262
      %v7016 = vunpack.c.l.b16 %v2263
      %v7017 = vunpack.c.l.b16 %v2264
      %v7018 = vunpack.c.l.b16 %v2265
      %v7019 = vunpack.c.l.b16 %v2266
      %v7020 = vunpack.c.l.b16 %v2267
      %v7021 = vunpack.c.l.b16 %v2268
      %v7022 = vunpack.c.l.b16 %v2269
      %v7023 = vunpack.c.l.b16 %v2270
      %v7024 = vunpack.c.l.b16 %v2271
      %v7025 = vunpack.c.l.b16 %v2272
      %v7026 = vunpack.c.l.b16 %v2273
      %v7027 = vunpack.c.l.b16 %v2274
      %v7028 = vunpack.c.l.b16 %v2275
      %v7029 = vunpack.c.l.b16 %v2276
      %v7030 = vunpack.c.l.b16 %v2277
      %v7031 = vunpack.c.l.b16 %v2278
      %v7032 = vunpack.c.l.b16 %v2279
      %v7033 = vunpack.c.l.b16 %v2280
      %v7034 = vunpack.c.l.b16 %v2281
      %v7035 = vunpack.c.l.b16 %v2282
      %v7036 = vunpack.c.l.b16 %v2283
      %v7037 = vunpack.c.l.b16 %v2284
      %v7038 = vunpack.c.l.b16 %v2285
      %v7039 = vunpack.c.l.b16 %v2286
      %v7040 = vunpack.c.l.b16 %v2287
      %v7041 = vunpack.c.l.b16 %v2288
      %v7042 = vunpack.c.l.b16 %v2289
      %v7043 = vunpack.c.l.b16 %v2290
      %v7044 = vunpack.c.l.b16 %v2291
      %v7045 = vunpack.c.l.b16 %v2292
      %v7046 = vunpack.c.l.b16 %v2293
      %v7047 = vunpack.c.l.b16 %v2294
      %v7048 = vunpack.c.l.b16 %v2295
      %v7049 = vunpack.c.l.b16 %v2296
      %v7050 = vunpack.c.l.b16 %v2297
      %v7051 = vunpack.c.l.b16 %v2298
      %v7052 = vunpack.c.l.b16 %v2299
      %v7053 = vunpack.c.l.b16 %v2300
      %v7054 = vunpack.c.l.b16 %v2301
      %v7055 = vunpack.c.l.b16 %v2302
      %v7056 = vunpack.c.l.b16 %v2303
      %v7057 = vunpack.c.l.b16 %v2304
      %v7058 = vunpack.c.l.b16 %v2305
      %v7059 = vunpack.c.l.b16 %v2306
      %v7060 = vunpack.c.l.b16 %v2307
      %v7061 = vunpack.c.l.b16 %v2308
      %v7062 = vunpack.c.l.b16 %v2309
      %v7063 = vunpack.c.l.b16 %v2310
      %v7064 = vunpack.c.l.b16 %v2311
      %v7065 = vunpack.c.l.b16 %v2312
      %v7066 = vunpack.c.l.b16 %v2313
      %v7067 = vunpack.c.l.b16 %v2314
      %v7068 = vunpack.c.l.b16 %v2315
      %v7069 = vunpack.c.l.b16 %v2316
      %v7070 = vunpack.c.l.b16 %v2317
      %v7071 = vunpack.c.l.b16 %v2318
      %v7072 = vunpack.c.l.b16 %v2319
      %v7073 = vunpack.c.l.b16 %v2320
      %v7074 = vunpack.c.l.b16 %v2321
      %v7075 = vunpack.c.l.b16 %v2322
      %v7076 = vunpack.c.l.b16 %v2323
      %v7077 = vunpack.c.l.b16 %v2324
      %v7078 = vunpack.c.l.b16 %v2325
      %v7079 = vunpack.c.l.b16 %v2326
      %v7080 = vunpack.c.l.b16 %v2327
      %v7081 = vunpack.c.l.b16 %v2328
      %v7082 = vunpack.c.l.b16 %v2329
      %v7083 = vunpack.c.l.b16 %v2330
      %v7084 = vunpack.c.l.b16 %v2331
      %v7085 = vunpack.c.l.b16 %v2332
      %v7086 = vunpack.c.l.b16 %v2333
      %v7087 = vunpack.c.l.b16 %v2334
      %v7088 = vunpack.c.l.b16 %v2335
      %v7089 = vunpack.c.l.b16 %v2336
      %v7090 = vunpack.c.l.b16 %v2337
      %v7091 = vunpack.c.l.b16 %v2338
      %v7092 = vunpack.c.l.b16 %v2339
      %v7093 = vunpack.c.l.b16 %v2340
      %v7094 = vunpack.c.l.b16 %v2341
      %v7095 = vunpack.c.l.b16 %v2342
      %v7096 = vunpack.c.l.b16 %v2343
      %v7097 = vunpack.c.l.b16 %v2344
      %v7098 = vunpack.c.l.b16 %v2345
      %v7099 = vunpack.c.l.b16 %v2346
      %v7100 = vunpack.c.l.b16 %v2347
      %v7101 = vunpack.c.l.b16 %v2348
      %v7102 = vunpack.c.l.b16 %v2349
      %v7103 = vunpack.c.l.b16 %v2350
      %v7104 = vunpack.c.l.b16 %v2351
      %v7105 = vunpack.c.l.b16 %v2352
      %v7106 = vunpack.c.l.b16 %v2353
      %v7107 = vunpack.c.l.b16 %v2354
      %v7108 = vunpack.c.l.b16 %v2355
      %v7109 = vunpack.c.l.b16 %v2356
      %v7110 = vunpack.c.l.b16 %v2357
      %v7111 = vunpack.c.l.b16 %v2358
      %v7112 = vunpack.c.l.b16 %v2359
      %v7113 = vunpack.c.l.b16 %v2360
      %v7114 = vunpack.c.l.b16 %v2361
      %v7115 = vunpack.c.l.b16 %v2362
      %v7116 = vunpack.c.l.b16 %v2363
      %v7117 = vunpack.c.l.b16 %v2364
      %v7118 = vunpack.c.l.b16 %v2365
      %v7119 = vunpack.c.l.b16 %v2366
      %v7120 = vunpack.c.l.b16 %v2367
      %v7121 = vunpack.c.l.b16 %v2368
      %v7122 = vunpack.c.l.b16 %v2369
      %v7123 = vunpack.c.l.b16 %v2370
      %v7124 = vunpack.c.l.b16 %v2371
      %v7125 = vunpack.c.l.b16 %v2372
      %v7126 = vunpack.c.l.b16 %v2373
      %v7127 = vunpack.c.l.b16 %v2374
      %v7128 = vunpack.c.l.b16 %v2375
      %v7129 = vunpack.c.l.b16 %v2376
      %v7130 = vunpack.c.l.b16 %v2377
      %v7131 = vunpack.c.l.b16 %v2378
      %v7132 = vunpack.c.l.b16 %v2379
      %v7133 = vunpack.c.l.b16 %v2380
      %v7134 = vunpack.c.l.b16 %v2381
      %v7135 = vunpack.c.l.b16 %v2382
      %v7136 = vunpack.c.l.b16 %v2383
      %v7137 = vunpack.c.l.b16 %v2384
      %v7138 = vunpack.c.l.b16 %v2385
      %v7139 = vunpack.c.l.b16 %v2386
      %v7140 = vunpack.c.l.b16 %v2387
      %v7141 = vunpack.c.l.b16 %v2388
      %v7142 = vunpack.c.l.b16 %v2389
      %v7143 = vunpack.c.l.b16 %v2390
      %v7144 = vunpack.c.l.b16 %v2391
      %v7145 = vunpack.c.l.b16 %v2392
      %v7146 = vunpack.c.l.b16 %v2393
      %v7147 = vunpack.c.l.b16 %v2394
      %v7148 = vunpack.c.l.b16 %v2395
      %v7149 = vunpack.c.l.b16 %v2396
      %v7150 = vunpack.c.l.b16 %v2397
      %v7151 = vunpack.c.l.b16 %v2398
      %v7152 = vunpack.c.l.b16 %v2399
      %v7153 = vunpack.c.l.b16 %v2400
      %v7154 = vunpack.c.l.b16 %v2401
      %v7155 = vunpack.c.l.b16 %v2402
      %v7156 = vunpack.c.l.b16 %v2403
      %v7157 = vunpack.c.l.b16 %v2404
      %v7158 = vunpack.c.l.b16 %v2405
      %v7159 = vunpack.c.l.b16 %v2406
      %v7160 = vunpack.c.l.b16 %v2407
      %v7161 = vunpack.c.l.b16 %v2408
      %v7162 = vunpack.c.l.b16 %v2409
      %v7163 = vunpack.c.l.b16 %v2410
      %v7164 = vunpack.c.l.b16 %v2411
      %v7165 = vunpack.c.l.b16 %v2412
      %v7166 = vunpack.c.l.b16 %v2413
      %v7167 = vunpack.c.l.b16 %v2414
      %v7168 = vunpack.c.l.b16 %v2415
      %v7169 = vunpack.c.l.b16 %v2416
      %v7170 = vunpack.c.l.b16 %v2417
      %v7171 = vunpack.c.l.b16 %v2418
      %v7172 = vunpack.c.l.b16 %v2419
      %v7173 = vunpack.c.l.b16 %v2420
      %v7174 = vunpack.c.l.b16 %v2421
      %v7175 = vunpack.c.l.b16 %v2422
      %v7176 = vunpack.c.l.b16 %v2423
      %v7177 = vunpack.c.l.b16 %v2424
      %v7178 = vunpack.c.l.b16 %v2425
      %v7179 = vunpack.c.l.b16 %v2426
      %v7180 = vunpack.c.l.b16 %v2427
      %v7181 = vunpack.c.l.b16 %v2428
      %v7182 = vunpack.c.l.b16 %v2429
      %v7183 = vunpack.c.l.b16 %v2430
      %v7184 = vunpack.c.l.b16 %v2431
      %v7185 = vunpack.c.l.b16 %v2432
      %v7186 = vunpack.c.l.b16 %v2433
      %v7187 = vunpack.c.l.b16 %v2434
      %v7188 = vunpack.c.l.b16 %v2435
      %v7189 = vunpack.c.l.b16 %v2436
      %v7190 = vunpack.c.l.b16 %v2437
      %v7191 = vunpack.c.l.b16 %v2438
      %v7192 = vunpack.c.l.b16 %v2439
      %v7193 = vunpack.c.l.b16 %v2440
      %v7194 = vunpack.c.l.b16 %v2441
      %v7195 = vunpack.c.l.b16 %v2442
      %v7196 = vunpack.c.l.b16 %v2443
      %v7197 = vunpack.c.l.b16 %v2444
      %v7198 = vunpack.c.l.b16 %v2445
      %v7199 = vunpack.c.l.b16 %v2446
      %v7200 = vunpack.c.l.b16 %v2447
      %v7201 = vunpack.c.l.b16 %v2448
      %v7202 = vunpack.c.l.b16 %v2449
      %v7203 = vunpack.c.l.b16 %v2450
      %v7204 = vunpack.c.l.b16 %v2451
      %v7205 = vunpack.c.l.b16 %v2452
      %v7206 = vunpack.c.l.b16 %v2453
      %v7207 = vunpack.c.l.b16 %v2454
      %v7208 = vunpack.c.l.b16 %v2455
      %v7209 = vunpack.c.l.b16 %v2456
      %v7210 = vunpack.c.l.b16 %v2457
      %v7211 = vunpack.c.l.b16 %v2458
      %v7212 = vunpack.c.l.b16 %v2459
      %v7213 = vunpack.c.l.b16 %v2460
      %v7214 = vunpack.c.l.b16 %v2461
      %v7215 = vunpack.c.l.b16 %v2462
      %v7216 = vunpack.c.l.b16 %v2463
      %v7217 = vunpack.c.l.b16 %v2464
      %v7218 = vunpack.c.l.b16 %v2465
      %v7219 = vunpack.c.l.b16 %v2466
      %v7220 = vunpack.c.l.b16 %v2467
      %v7221 = vunpack.c.l.b16 %v2468
      %v7222 = vunpack.c.l.b16 %v2469
      %v7223 = vunpack.c.l.b16 %v2470
      %v7224 = vunpack.c.l.b16 %v2471
      %v7225 = vunpack.c.l.b16 %v2472
      %v7226 = vunpack.c.l.b16 %v2473
      %v7227 = vunpack.c.l.b16 %v2474
      %v7228 = vunpack.c.l.b16 %v2475
      %v7229 = vunpack.c.l.b16 %v2476
      %v7230 = vunpack.c.l.b16 %v2477
      %v7231 = vunpack.c.l.b16 %v2478
      %v7232 = vunpack.c.l.b16 %v2479
      %v7233 = vunpack.c.l.b16 %v2480
      %v7234 = vunpack.c.l.b16 %v2481
      %v7235 = vunpack.c.l.b16 %v2482
      %v7236 = vunpack.c.l.b16 %v2483
      %v7237 = vunpack.c.l.b16 %v2484
      %v7238 = vunpack.c.l.b16 %v2485
      %v7239 = vunpack.c.l.b16 %v2486
      %v7240 = vunpack.c.l.b16 %v2487
      %v7241 = vunpack.c.l.b16 %v2488
      %v7242 = vunpack.c.l.b16 %v2489
      %v7243 = vunpack.c.l.b16 %v2490
      %v7244 = vunpack.c.l.b16 %v2491
      %v7245 = vunpack.c.l.b16 %v2492
      %v7246 = vunpack.c.l.b16 %v2493
      %v7247 = vunpack.c.l.b16 %v2494
      %v7248 = vunpack.c.l.b16 %v2495
      %v7249 = vunpack.c.l.b16 %v2496
      %v7250 = vunpack.c.l.b16 %v2497
      %v7251 = vunpack.c.l.b16 %v2498
      %v7252 = vunpack.c.l.b16 %v2499
      %v7253 = vunpack.c.l.b16 %v2500
      %v7254 = vunpack.c.l.b16 %v2501
      %v7255 = vunpack.c.l.b16 %v2502
      %v7256 = vunpack.c.l.b16 %v2503
      %v7257 = vunpack.c.l.b16 %v2504
      %v7258 = vunpack.c.l.b16 %v2505
      %v7259 = vunpack.c.l.b16 %v2506
      %v7260 = vunpack.c.l.b16 %v2507
      %v7261 = vunpack.c.l.b16 %v2508
      %v7262 = vunpack.c.l.b16 %v2509
      %v7263 = vunpack.c.l.b16 %v2510
      %v7264 = vunpack.c.l.b16 %v2511
      %v7265 = vunpack.c.l.b16 %v2512
      %v7266 = vunpack.c.l.b16 %v2513
      %v7267 = vunpack.c.l.b16 %v2514
      %v7268 = vunpack.c.l.b16 %v2515
      %v7269 = vunpack.c.l.b16 %v2516
      %v7270 = vunpack.c.l.b16 %v2517
      %v7271 = vunpack.c.l.b16 %v2518
      %v7272 = vunpack.c.l.b16 %v2519
      %v7273 = vunpack.c.l.b16 %v2520
      %v7274 = vunpack.c.l.b16 %v2521
      %v7275 = vunpack.c.l.b16 %v2522
      %v7276 = vunpack.c.l.b16 %v2523
      %v7277 = vunpack.c.l.b16 %v2524
      %v7278 = vunpack.c.l.b16 %v2525
      %v7279 = vunpack.c.l.b16 %v2526
      %v7280 = vunpack.c.l.b16 %v2527
      %v7281 = vunpack.c.l.b16 %v2528
      %v7282 = vunpack.c.l.b16 %v2529
      %v7283 = vunpack.c.l.b16 %v2530
      %v7284 = vunpack.c.l.b16 %v2531
      %v7285 = vunpack.c.l.b16 %v2532
      %v7286 = vunpack.c.l.b16 %v2533
      %v7287 = vunpack.c.l.b16 %v2534
      %v7288 = vunpack.c.l.b16 %v2535
      %v7289 = vunpack.c.l.b16 %v2536
      %v7290 = vunpack.c.l.b16 %v2537
      %v7291 = vunpack.c.l.b16 %v2538
      %v7292 = vunpack.c.l.b16 %v2539
      %v7293 = vunpack.c.l.b16 %v2540
      %v7294 = vunpack.c.l.b16 %v2541
      %v7295 = vunpack.c.l.b16 %v2542
      %v7296 = vunpack.c.l.b16 %v2543
      %v7297 = vunpack.c.l.b16 %v2544
      %v7298 = vunpack.c.l.b16 %v2545
      %v7299 = vunpack.c.l.b16 %v2546
      %v7300 = vunpack.c.l.b16 %v2547
      %v7301 = vunpack.c.l.b16 %v2548
      %v7302 = vunpack.c.l.b16 %v2549
      %v7303 = vunpack.c.l.b16 %v2550
      %v7304 = vunpack.c.l.b16 %v2551
      %v7305 = vunpack.c.l.b16 %v2552
      %v7306 = vunpack.c.l.b16 %v2553
      %v7307 = vunpack.c.l.b16 %v2554
      %v7308 = vunpack.c.l.b16 %v2555
      %v7309 = vunpack.c.l.b16 %v2556
      %v7310 = vunpack.c.l.b16 %v2557
      %v7311 = vunpack.c.l.b16 %v2558
      %v7312 = vunpack.c.l.b16 %v2559
      %v7313 = vunpack.c.l.b16 %v2560
      %v7314 = vunpack.c.l.b16 %v2561
      %v7315 = vunpack.c.l.b16 %v2562
      %v7316 = vunpack.c.l.b16 %v2563
      %v7317 = vunpack.c.l.b16 %v2564
      %v7318 = vunpack.c.l.b16 %v2565
      %v7319 = vunpack.c.l.b16 %v2566
      %v7320 = vunpack.c.l.b16 %v2567
      %v7321 = vunpack.c.l.b16 %v2568
      %v7322 = vunpack.c.l.b16 %v2569
      %v7323 = vunpack.c.l.b16 %v2570
      %v7324 = vunpack.c.l.b16 %v2571
      %v7325 = vunpack.c.l.b16 %v2572
      %v7326 = vunpack.c.l.b16 %v2573
      %v7327 = vunpack.c.l.b16 %v2574
      %v7328 = vunpack.c.l.b16 %v2575
      %v7329 = vunpack.c.l.b16 %v2576
      %v7330 = vunpack.c.l.b16 %v2577
      %v7331 = vunpack.c.l.b16 %v2578
      %v7332 = vunpack.c.l.b16 %v2579
      %v7333 = vunpack.c.l.b16 %v2580
      %v7334 = vunpack.c.l.b16 %v2581
      %v7335 = vunpack.c.l.b16 %v2582
      %v7336 = vunpack.c.l.b16 %v2583
      %v7337 = vunpack.c.l.b16 %v2584
      %v7338 = vunpack.c.l.b16 %v2585
      %v7339 = vunpack.c.l.b16 %v2586
      %v7340 = vunpack.c.l.b16 %v2587
      %v7341 = vunpack.c.l.b16 %v2588
      %v7342 = vunpack.c.l.b16 %v2589
      %v7343 = vunpack.c.l.b16 %v2590
      %v7344 = vunpack.c.l.b16 %v2591
      %v7345 = vunpack.c.l.b16 %v2592
      %v7346 = vunpack.c.l.b16 %v2593
      %v7347 = vunpack.c.l.b16 %v2594
      %v7348 = vunpack.c.l.b16 %v2595
      %v7349 = vunpack.c.l.b16 %v2596
      %v7350 = vunpack.c.l.b16 %v2597
      %v7351 = vunpack.c.l.b16 %v2598
      %v7352 = vunpack.c.l.b16 %v2599
      %v7353 = vunpack.c.l.b16 %v2600
      %v7354 = vunpack.c.l.b16 %v2601
      %v7355 = vunpack.c.l.b16 %v2602
      %v7356 = vunpack.c.l.b16 %v2603
      %v7357 = vunpack.c.l.b16 %v2604
      %v7358 = vunpack.c.l.b16 %v2605
      %v7359 = vunpack.c.l.b16 %v2606
      %v7360 = vunpack.c.l.b16 %v2607
      %v7361 = vunpack.c.l.b16 %v2608
      %v7362 = vunpack.c.l.b16 %v2609
      %v7363 = vunpack.c.l.b16 %v2610
      %v7364 = vunpack.c.l.b16 %v2611
      %v7365 = vunpack.c.l.b16 %v2612
      %v7366 = vunpack.c.l.b16 %v2613
      %v7367 = vunpack.c.l.b16 %v2614
      %v7368 = vunpack.c.l.b16 %v2615
      %v7369 = vunpack.c.l.b16 %v2616
      %v7370 = vunpack.c.l.b16 %v2617
      %v7371 = vunpack.c.l.b16 %v2618
      %v7372 = vunpack.c.l.b16 %v2619
      %v7373 = vunpack.c.l.b16 %v2620
      %v7374 = vunpack.c.l.b16 %v2621
      %v7375 = vunpack.c.l.b16 %v2622
      %v7376 = vunpack.c.l.b16 %v2623
      %v7377 = vunpack.c.l.b16 %v2624
      %v7378 = vunpack.c.l.b16 %v2625
      %v7379 = vunpack.c.l.b16 %v2626
      %v7380 = vunpack.c.l.b16 %v2627
      %v7381 = vunpack.c.l.b16 %v2628
      %v7382 = vunpack.c.l.b16 %v2629
      %v7383 = vunpack.c.l.b16 %v2630
      %v7384 = vunpack.c.l.b16 %v2631
      %v7385 = vunpack.c.l.b16 %v2632
      %v7386 = vunpack.c.l.b16 %v2633
      %v7387 = vunpack.c.l.b16 %v2634
      %v7388 = vunpack.c.l.b16 %v2635
      %v7389 = vunpack.c.l.b16 %v2636
      %v7390 = vunpack.c.l.b16 %v2637
      %v7391 = vunpack.c.l.b16 %v2638
      %v7392 = vunpack.c.l.b16 %v2639
      %v7393 = vunpack.c.l.b16 %v2640
      %v7394 = vunpack.c.l.b16 %v2641
      %v7395 = vunpack.c.l.b16 %v2642
      %v7396 = vunpack.c.l.b16 %v2643
      %v7397 = vunpack.c.l.b16 %v2644
      %v7398 = vunpack.c.l.b16 %v2645
      %v7399 = vunpack.c.l.b16 %v2646
      %v7400 = vunpack.c.l.b16 %v2647
      %v7401 = vunpack.c.l.b16 %v2648
      %v7402 = vunpack.c.l.b16 %v2649
      %v7403 = vunpack.c.l.b16 %v2650
      %v7404 = vunpack.c.l.b16 %v2651
      %v7405 = vunpack.c.l.b16 %v2652
      %v7406 = vunpack.c.l.b16 %v2653
      %v7407 = vunpack.c.l.b16 %v2654
      %v7408 = vunpack.c.l.b16 %v2655
      %v7409 = vunpack.c.l.b16 %v2656
      %v7410 = vunpack.c.l.b16 %v2657
      %v7411 = vunpack.c.l.b16 %v2658
      %v7412 = vunpack.c.l.b16 %v2659
      %v7413 = vunpack.c.l.b16 %v2660
      %v7414 = vunpack.c.l.b16 %v2661
      %v7415 = vunpack.c.l.b16 %v2662
      %v7416 = vunpack.c.l.b16 %v2663
      %v7417 = vunpack.c.l.b16 %v2664
      %v7418 = vunpack.c.l.b16 %v2665
      %v7419 = vunpack.c.l.b16 %v2666
      %v7420 = vunpack.c.l.b16 %v2667
      %v7421 = vunpack.c.l.b16 %v2668
      %v7422 = vunpack.c.l.b16 %v2669
      %v7423 = vunpack.c.l.b16 %v2670
      %v7424 = vunpack.c.l.b16 %v2671
      %v7425 = vunpack.c.l.b16 %v2672
      %v7426 = vunpack.c.l.b16 %v2673
      %v7427 = vunpack.c.l.b16 %v2674
      %v7428 = vunpack.c.l.b16 %v2675
      %v7429 = vunpack.c.l.b16 %v2676
      %v7430 = vunpack.c.l.b16 %v2677
      %v7431 = vunpack.c.l.b16 %v2678
      %v7432 = vunpack.c.l.b16 %v2679
      %v7433 = vunpack.c.l.b16 %v2680
      %v7434 = vunpack.c.l.b16 %v2681
      %v7435 = vunpack.c.l.b16 %v2682
      %v7436 = vunpack.c.l.b16 %v2683
      %v7437 = vunpack.c.l.b16 %v2684
      %v7438 = vunpack.c.l.b16 %v2685
      %v7439 = vunpack.c.l.b16 %v2686
      %v7440 = vunpack.c.l.b16 %v2687
      %v7441 = vunpack.c.l.b16 %v2688
      %v7442 = vunpack.c.l.b16 %v2689
      %v7443 = vunpack.c.l.b16 %v2690
      %v7444 = vunpack.c.l.b16 %v2691
      %v7445 = vunpack.c.l.b16 %v2692
      %v7446 = vunpack.c.l.b16 %v2693
      %v7447 = vunpack.c.l.b16 %v2694
      %v7448 = vunpack.c.l.b16 %v2695
      %v7449 = vunpack.c.l.b16 %v2696
      %v7450 = vunpack.c.l.b16 %v2697
      %v7451 = vunpack.c.l.b16 %v2698
      %v7452 = vunpack.c.l.b16 %v2699
      %v7453 = vunpack.c.l.b16 %v2700
      %v7454 = vunpack.c.l.b16 %v2701
      %v7455 = vunpack.c.l.b16 %v2702
      %v7456 = vunpack.c.l.b16 %v2703
      %v7457 = vunpack.c.l.b16 %v2704
      %v7458 = vunpack.c.l.b16 %v2705
      %v7459 = vunpack.c.l.b16 %v2706
      %v7460 = vunpack.c.l.b16 %v2707
      %v7461 = vunpack.c.l.b16 %v2708
      %v7462 = vunpack.c.l.b16 %v2709
      %v7463 = vunpack.c.l.b16 %v2710
      %v7464 = vunpack.c.l.b16 %v2711
      %v7465 = vunpack.c.l.b16 %v2712
      %v7466 = vunpack.c.l.b16 %v2713
      %v7467 = vunpack.c.l.b16 %v2714
      %v7468 = vunpack.c.l.b16 %v2715
      %v7469 = vunpack.c.l.b16 %v2716
      %v7470 = vunpack.c.l.b16 %v2717
      %v7471 = vunpack.c.l.b16 %v2718
      %v7472 = vunpack.c.l.b16 %v2719
      %v7473 = vunpack.c.l.b16 %v2720
      %v7474 = vunpack.c.l.b16 %v2721
      %v7475 = vunpack.c.l.b16 %v2722
      %v7476 = vunpack.c.l.b16 %v2723
      %v7477 = vunpack.c.l.b16 %v2724
      %v7478 = vunpack.c.l.b16 %v2725
      %v7479 = vunpack.c.l.b16 %v2726
      %v7480 = vunpack.c.l.b16 %v2727
      %v7481 = vunpack.c.l.b16 %v2728
      %v7482 = vunpack.c.l.b16 %v2729
      %v7483 = vunpack.c.l.b16 %v2730
      %v7484 = vunpack.c.l.b16 %v2731
      %v7485 = vunpack.c.l.b16 %v2732
      %v7486 = vunpack.c.l.b16 %v2733
      %v7487 = vunpack.c.l.b16 %v2734
      %v7488 = vunpack.c.l.b16 %v2735
      %v7489 = vunpack.c.l.b16 %v2736
      %v7490 = vunpack.c.l.b16 %v2737
      %v7491 = vunpack.c.l.b16 %v2738
      %v7492 = vunpack.c.l.b16 %v2739
      %v7493 = vunpack.c.l.b16 %v2740
      %v7494 = vunpack.c.l.b16 %v2741
      %v7495 = vunpack.c.l.b16 %v2742
      %v7496 = vunpack.c.l.b16 %v2743
      %v7497 = vunpack.c.l.b16 %v2744
      %v7498 = vunpack.c.l.b16 %v2745
      %v7499 = vunpack.c.l.b16 %v2746
      %v7500 = vunpack.c.l.b16 %v2747
      %v7501 = vunpack.c.l.b16 %v2748
      %v7502 = vunpack.c.l.b16 %v2749
      %v7503 = vunpack.c.l.b16 %v2750
      %v7504 = vunpack.c.l.b16 %v2751
      %v7505 = vunpack.c.l.b16 %v2752
      %v7506 = vunpack.c.l.b16 %v2753
      %v7507 = vunpack.c.l.b16 %v2754
      %v7508 = vunpack.c.l.b16 %v2755
      %v7509 = vunpack.c.l.b16 %v2756
      %v7510 = vunpack.c.l.b16 %v2757
      %v7511 = vunpack.c.l.b16 %v2758
      %v7512 = vunpack.c.l.b16 %v2759
      %v7513 = vunpack.c.l.b16 %v2760
      %v7514 = vunpack.c.l.b16 %v2761
      %v7515 = vunpack.c.l.b16 %v2762
      %v7516 = vunpack.c.l.b16 %v2763
      %v7517 = vunpack.c.l.b16 %v2764
      %v7518 = vunpack.c.l.b16 %v2765
      %v7519 = vunpack.c.l.b16 %v2766
      %v7520 = vunpack.c.l.b16 %v2767
      %v7521 = vunpack.c.l.b16 %v2768
      %v7522 = vunpack.c.l.b16 %v2769
      %v7523 = vunpack.c.l.b16 %v2770
      %v7524 = vunpack.c.l.b16 %v2771
      %v7525 = vunpack.c.l.b16 %v2772
      %v7526 = vunpack.c.l.b16 %v2773
      %v7527 = vunpack.c.l.b16 %v2774
      %v7528 = vunpack.c.l.b16 %v2775
      %v7529 = vunpack.c.l.b16 %v2776
      %v7530 = vunpack.c.l.b16 %v2777
      %v7531 = vunpack.c.l.b16 %v2778
      %v7532 = vunpack.c.l.b16 %v2779
      %v7533 = vunpack.c.l.b16 %v2780
      %v7534 = vunpack.c.l.b16 %v2781
      %v7535 = vunpack.c.l.b16 %v2782
      %v7536 = vunpack.c.l.b16 %v2783
      %v7537 = vunpack.c.l.b16 %v2784
      %v7538 = vunpack.c.l.b16 %v2785
      %v7539 = vunpack.c.l.b16 %v2786
      %v7540 = vunpack.c.l.b16 %v2787
      %v7541 = vunpack.c.l.b16 %v2788
      %v7542 = vunpack.c.l.b16 %v2789
      %v7543 = vunpack.c.l.b16 %v2790
      %v7544 = vunpack.c.l.b16 %v2791
      %v7545 = vunpack.c.l.b16 %v2792
      %v7546 = vunpack.c.l.b16 %v2793
      %v7547 = vunpack.c.l.b16 %v2794
      %v7548 = vunpack.c.l.b16 %v2795
      %v7549 = vunpack.c.l.b16 %v2796
      %v7550 = vunpack.c.l.b16 %v2797
      %v7551 = vunpack.c.l.b16 %v2798
      %v7552 = vunpack.c.l.b16 %v2799
      %v7553 = vunpack.c.l.b16 %v2800
      %v7554 = vunpack.c.l.b16 %v2801
      %v7555 = vunpack.c.l.b16 %v2802
      %v7556 = vunpack.c.l.b16 %v2803
      %v7557 = vunpack.c.l.b16 %v2804
      %v7558 = vunpack.c.l.b16 %v2805
      %v7559 = vunpack.c.l.b16 %v2806
      %v7560 = vunpack.c.l.b16 %v2807
      %v7561 = vunpack.c.l.b16 %v2808
      %v7562 = vunpack.c.l.b16 %v2809
      %v7563 = vunpack.c.l.b16 %v2810
      %v7564 = vunpack.c.l.b16 %v2811
      %v7565 = vunpack.c.l.b16 %v2812
      %v7566 = vunpack.c.l.b16 %v2813
      %v7567 = vunpack.c.l.b16 %v2814
      %v7568 = vunpack.c.l.b16 %v2815
      %v7569 = vunpack.c.l.b16 %v2816
      %v7570 = vunpack.c.l.b16 %v2817
      %v7571 = vunpack.c.l.b16 %v2818
      %v7572 = vunpack.c.l.b16 %v2819
      %v7573 = vunpack.c.l.b16 %v2820
      %v7574 = vunpack.c.l.b16 %v2821
      %v7575 = vunpack.c.l.b16 %v2822
      %v7576 = vunpack.c.l.b16 %v2823
      %v7577 = vunpack.c.l.b16 %v2824
      %v7578 = vunpack.c.l.b16 %v2825
      %v7579 = vunpack.c.l.b16 %v2826
      %v7580 = vunpack.c.l.b16 %v2827
      %v7581 = vunpack.c.l.b16 %v2828
      %v7582 = vunpack.c.l.b16 %v2829
      %v7583 = vunpack.c.l.b16 %v2830
      %v7584 = vunpack.c.l.b16 %v2831
      %v7585 = vunpack.c.l.b16 %v2832
      %v7586 = vunpack.c.l.b16 %v2833
      %v7587 = vunpack.c.l.b16 %v2834
      %v7588 = vunpack.c.l.b16 %v2835
      %v7589 = vunpack.c.l.b16 %v2836
      %v7590 = vunpack.c.l.b16 %v2837
      %v7591 = vunpack.c.l.b16 %v2838
      %v7592 = vunpack.c.l.b16 %v2839
      %v7593 = vunpack.c.l.b16 %v2840
      %v7594 = vunpack.c.l.b16 %v2841
      %v7595 = vunpack.c.l.b16 %v2842
      %v7596 = vunpack.c.l.b16 %v2843
      %v7597 = vunpack.c.l.b16 %v2844
      %v7598 = vunpack.c.l.b16 %v2845
      %v7599 = vunpack.c.l.b16 %v2846
      %v7600 = vunpack.c.l.b16 %v2847
      %v7601 = vunpack.c.l.b16 %v2848
      %v7602 = vunpack.c.l.b16 %v2849
      %v7603 = vunpack.c.l.b16 %v2850
      %v7604 = vunpack.c.l.b16 %v2851
      %v7605 = vunpack.c.l.b16 %v2852
      %v7606 = vunpack.c.l.b16 %v2853
      %v7607 = vunpack.c.l.b16 %v2854
      %v7608 = vunpack.c.l.b16 %v2855
      %v7609 = vunpack.c.l.b16 %v2856
      %v7610 = vunpack.c.l.b16 %v2857
      %v7611 = vunpack.c.l.b16 %v2858
      %v7612 = vunpack.c.l.b16 %v2859
      %v7613 = vunpack.c.l.b16 %v2860
      %v7614 = vunpack.c.l.b16 %v2861
      %v7615 = vunpack.c.l.b16 %v2862
      %v7616 = vunpack.c.l.b16 %v2863
      %v7617 = vunpack.c.l.b16 %v2864
      %v7618 = vunpack.c.l.b16 %v2865
      %v7619 = vunpack.c.l.b16 %v2866
      %v7620 = vunpack.c.l.b16 %v2867
      %v7621 = vunpack.c.l.b16 %v2868
      %v7622 = vunpack.c.l.b16 %v2869
      %v7623 = vunpack.c.l.b16 %v2870
      %v7624 = vunpack.c.l.b16 %v2871
      %v7625 = vunpack.c.l.b16 %v2872
      %v7626 = vunpack.c.l.b16 %v2873
      %v7627 = vunpack.c.l.b16 %v2874
      %v7628 = vunpack.c.l.b16 %v2875
      %v7629 = vunpack.c.l.b16 %v2876
      %v7630 = vunpack.c.l.b16 %v2877
      %v7631 = vunpack.c.l.b16 %v2878
      %v7632 = vunpack.c.l.b16 %v2879
      %v7633 = vunpack.c.l.b16 %v2880
      %v7634 = vunpack.c.l.b16 %v2881
      %v7635 = vunpack.c.l.b16 %v2882
      %v7636 = vunpack.c.l.b16 %v2883
      %v7637 = vunpack.c.l.b16 %v2884
      %v7638 = vunpack.c.l.b16 %v2885
      %v7639 = vunpack.c.l.b16 %v2886
      %v7640 = vunpack.c.l.b16 %v2887
      %v7641 = vunpack.c.l.b16 %v2888
      %v7642 = vunpack.c.l.b16 %v2889
      %v7643 = vunpack.c.l.b16 %v2890
      %v7644 = vunpack.c.l.b16 %v2891
      %v7645 = vunpack.c.l.b16 %v2892
      %v7646 = vunpack.c.l.b16 %v2893
      %v7647 = vunpack.c.l.b16 %v2894
      %v7648 = vunpack.c.l.b16 %v2895
      %v7649 = vunpack.c.l.b16 %v2896
      %v7650 = vunpack.c.l.b16 %v2897
      %v7651 = vunpack.c.l.b16 %v2898
      %v7652 = vunpack.c.l.b16 %v2899
      %v7653 = vunpack.c.l.b16 %v2900
      %v7654 = vunpack.c.l.b16 %v2901
      %v7655 = vunpack.c.l.b16 %v2902
      %v7656 = vunpack.c.l.b16 %v2903
      %v7657 = vunpack.c.l.b16 %v2904
      %v7658 = vunpack.c.l.b16 %v2905
      %v7659 = vunpack.c.l.b16 %v2906
      %v7660 = vunpack.c.l.b16 %v2907
      %v7661 = vunpack.c.l.b16 %v2908
      %v7662 = vunpack.c.l.b16 %v2909
      %v7663 = vunpack.c.l.b16 %v2910
      %v7664 = vunpack.c.l.b16 %v2911
      %v7665 = vunpack.c.l.b16 %v2912
      %v7666 = vunpack.c.l.b16 %v2913
      %v7667 = vunpack.c.l.b16 %v2914
      %v7668 = vunpack.c.l.b16 %v2915
      %v7669 = vunpack.c.l.b16 %v2916
      %v7670 = vunpack.c.l.b16 %v2917
      %v7671 = vunpack.c.l.b16 %v2918
      %v7672 = vunpack.c.l.b16 %v2919
      %v7673 = vunpack.c.l.b16 %v2920
      %v7674 = vunpack.c.l.b16 %v2921
      %v7675 = vunpack.c.l.b16 %v2922
      %v7676 = vunpack.c.l.b16 %v2923
      %v7677 = vunpack.c.l.b16 %v2924
      %v7678 = vunpack.c.l.b16 %v2925
      %v7679 = vunpack.c.l.b16 %v2926
      %v7680 = vunpack.c.l.b16 %v2927
      %v7681 = vunpack.c.l.b16 %v2928
      %v7682 = vunpack.c.l.b16 %v2929
      %v7683 = vunpack.c.l.b16 %v2930
      %v7684 = vunpack.c.l.b16 %v2931
      %v7685 = vunpack.c.l.b16 %v2932
      %v7686 = vunpack.c.l.b16 %v2933
      %v7687 = vunpack.c.l.b16 %v2934
      %v7688 = vunpack.c.l.b16 %v2935
      %v7689 = vunpack.c.l.b16 %v2936
      %v7690 = vunpack.c.l.b16 %v2937
      %v7691 = vunpack.c.l.b16 %v2938
      %v7692 = vunpack.c.l.b16 %v2939
      %v7693 = vunpack.c.l.b16 %v2940
      %v7694 = vunpack.c.l.b16 %v2941
      %v7695 = vunpack.c.l.b16 %v2942
      %v7696 = vunpack.c.l.b16 %v2943
      %v7697 = vunpack.c.l.b16 %v2944
      %v7698 = vunpack.c.l.b16 %v2945
      %v7699 = vunpack.c.l.b16 %v2946
      %v7700 = vunpack.c.l.b16 %v2947
      %v7701 = vunpack.c.l.b16 %v2948
      %v7702 = vunpack.c.l.b16 %v2949
      %v7703 = vunpack.c.l.b16 %v2950
      %v7704 = vunpack.c.l.b16 %v2951
      %v7705 = vunpack.c.l.b16 %v2952
      %v7706 = vunpack.c.l.b16 %v2953
      %v7707 = vunpack.c.l.b16 %v2954
      %v7708 = vunpack.c.l.b16 %v2955
      %v7709 = vunpack.c.l.b16 %v2956
      %v7710 = vunpack.c.l.b16 %v2957
      %v7711 = vunpack.c.l.b16 %v2958
      %v7712 = vunpack.c.l.b16 %v2959
      %v7713 = vunpack.c.l.b16 %v2960
      %v7714 = vunpack.c.l.b16 %v2961
      %v7715 = vunpack.c.l.b16 %v2962
      %v7716 = vunpack.c.l.b16 %v2963
      %v7717 = vunpack.c.l.b16 %v2964
      %v7718 = vunpack.c.l.b16 %v2965
      %v7719 = vunpack.c.l.b16 %v2966
      %v7720 = vunpack.c.l.b16 %v2967
      %v7721 = vunpack.c.l.b16 %v2968
      %v7722 = vunpack.c.l.b16 %v2969
      %v7723 = vunpack.c.l.b16 %v2970
      %v7724 = vunpack.c.l.b16 %v2971
      %v7725 = vunpack.c.l.b16 %v2972
      %v7726 = vunpack.c.l.b16 %v2973
      %v7727 = vunpack.c.l.b16 %v2974
      %v7728 = vunpack.c.l.b16 %v2975
      %v7729 = vunpack.c.l.b16 %v2976
      %v7730 = vunpack.c.l.b16 %v2977
      %v7731 = vunpack.c.l.b16 %v2978
      %v7732 = vunpack.c.l.b16 %v2979
      %v7733 = vunpack.c.l.b16 %v2980
      %v7734 = vunpack.c.l.b16 %v2981
      %v7735 = vunpack.c.l.b16 %v2982
      %v7736 = vunpack.c.l.b16 %v2983
      %v7737 = vunpack.c.l.b16 %v2984
      %v7738 = vunpack.c.l.b16 %v2985
      %v7739 = vunpack.c.l.b16 %v2986
      %v7740 = vunpack.c.l.b16 %v2987
      %v7741 = vunpack.c.l.b16 %v2988
      %v7742 = vunpack.c.l.b16 %v2989
      %v7743 = vunpack.c.l.b16 %v2990
      %v7744 = vunpack.c.l.b16 %v2991
      %v7745 = vunpack.c.l.b16 %v2992
      %v7746 = vunpack.c.l.b16 %v2993
      %v7747 = vunpack.c.l.b16 %v2994
      %v7748 = vunpack.c.l.b16 %v2995
      %v7749 = vunpack.c.l.b16 %v2996
      %v7750 = vunpack.c.l.b16 %v2997
      %v7751 = vunpack.c.l.b16 %v2998
      %v7752 = vunpack.c.l.b16 %v2999
      %v7753 = vunpack.c.l.b16 %v3000
      %v7754 = vunpack.c.l.b16 %v3001
      %v7755 = vunpack.c.l.b16 %v3002
      %v7756 = vunpack.c.l.b16 %v3003
      %v7757 = vunpack.c.l.b16 %v3004
      %v7758 = vunpack.c.l.b16 %v3005
      %v7759 = vunpack.c.l.b16 %v3006
      %v7760 = vunpack.c.l.b16 %v3007
      %v7761 = vunpack.c.l.b16 %v3008
      %v7762 = vunpack.c.l.b16 %v3009
      %v7763 = vunpack.c.l.b16 %v3010
      %v7764 = vunpack.c.l.b16 %v3011
      %v7765 = vunpack.c.l.b16 %v3012
      %v7766 = vunpack.c.l.b16 %v3013
      %v7767 = vunpack.c.l.b16 %v3014
      %v7768 = vunpack.c.l.b16 %v3015
      %v7769 = vunpack.c.l.b16 %v3016
      %v7770 = vunpack.c.l.b16 %v3017
      %v7771 = vunpack.c.l.b16 %v3018
      %v7772 = vunpack.c.l.b16 %v3019
      %v7773 = vunpack.c.l.b16 %v3020
      %v7774 = vunpack.c.l.b16 %v3021
      %v7775 = vunpack.c.l.b16 %v3022
      %v7776 = vunpack.c.l.b16 %v3023
      %v7777 = vunpack.c.l.b16 %v3024
      %v7778 = vunpack.c.l.b16 %v3025
      %v7779 = vunpack.c.l.b16 %v3026
      %v7780 = vunpack.c.l.b16 %v3027
      %v7781 = vunpack.c.l.b16 %v3028
      %v7782 = vunpack.c.l.b16 %v3029
      %v7783 = vunpack.c.l.b16 %v3030
      %v7784 = vunpack.c.l.b16 %v3031
      %v7785 = vunpack.c.l.b16 %v3032
      %v7786 = vunpack.c.l.b16 %v3033
      %v7787 = vunpack.c.l.b16 %v3034
      %v7788 = vunpack.c.l.b16 %v3035
      %v7789 = vunpack.c.l.b16 %v3036
      %v7790 = vunpack.c.l.b16 %v3037
      %v7791 = vunpack.c.l.b16 %v3038
      %v7792 = vunpack.c.l.b16 %v3039
      %v7793 = vunpack.c.l.b16 %v3040
      %v7794 = vunpack.c.l.b16 %v3041
      %v7795 = vunpack.c.l.b16 %v3042
      %v7796 = vunpack.c.l.b16 %v3043
      %v7797 = vunpack.c.l.b16 %v3044
      %v7798 = vunpack.c.l.b16 %v3045
      %v7799 = vunpack.c.l.b16 %v3046
      %v7800 = vunpack.c.l.b16 %v3047
      %v7801 = vunpack.c.l.b16 %v3048
      %v7802 = vunpack.c.l.b16 %v3049
      %v7803 = vunpack.c.l.b16 %v3050
      %v7804 = vunpack.c.l.b16 %v3051
      %v7805 = vunpack.c.l.b16 %v3052
      %v7806 = vunpack.c.l.b16 %v3053
      %v7807 = vunpack.c.l.b16 %v3054
      %v7808 = vunpack.c.l.b16 %v3055
      %v7809 = vunpack.c.l.b16 %v3056
      %v7810 = vunpack.c.l.b16 %v3057
      %v7811 = vunpack.c.l.b16 %v3058
      %v7812 = vunpack.c.l.b16 %v3059
      %v7813 = vunpack.c.l.b16 %v3060
      %v7814 = vunpack.c.l.b16 %v3061
      %v7815 = vunpack.c.l.b16 %v3062
      %v7816 = vunpack.c.l.b16 %v3063
      %v7817 = vunpack.c.l.b16 %v3064
      %v7818 = vunpack.c.l.b16 %v3065
      %v7819 = vunpack.c.l.b16 %v3066
      %v7820 = vunpack.c.l.b16 %v3067
      %v7821 = vunpack.c.l.b16 %v3068
      %v7822 = vunpack.c.l.b16 %v3069
      %v7823 = vunpack.c.l.b16 %v3070
      %v7824 = vunpack.c.l.b16 %v3071
      %v7825 = vunpack.c.l.b16 %v3072
      %v7826 = vunpack.c.l.b16 %v3073
      %v7827 = vunpack.c.l.b16 %v3074
      %v7828 = vunpack.c.l.b16 %v3075
      %v7829 = vunpack.c.l.b16 %v3076
      %v7830 = vunpack.c.l.b16 %v3077
      %v7831 = vunpack.c.l.b16 %v3078
      %v7832 = vunpack.c.l.b16 %v3079
      %v7833 = vunpack.c.l.b16 %v3080
      %v7834 = vunpack.c.l.b16 %v3081
      %v7835 = vunpack.c.l.b16 %v3082
      %v7836 = vunpack.c.l.b16 %v3083
      %v7837 = vunpack.c.l.b16 %v3084
      %v7838 = vunpack.c.l.b16 %v3085
      %v7839 = vunpack.c.l.b16 %v3086
      %v7840 = vunpack.c.l.b16 %v3087
      %v7841 = vunpack.c.l.b16 %v3088
      %v7842 = vunpack.c.l.b16 %v3089
      %v7843 = vunpack.c.l.b16 %v3090
      %v7844 = vunpack.c.l.b16 %v3091
      %v7845 = vunpack.c.l.b16 %v3092
      %v7846 = vunpack.c.l.b16 %v3093
      %v7847 = vunpack.c.l.b16 %v3094
      %v7848 = vunpack.c.l.b16 %v3095
      %v7849 = vunpack.c.l.b16 %v3096
      %v7850 = vunpack.c.l.b16 %v3097
      %v7851 = vunpack.c.l.b16 %v3098
      %v7852 = vunpack.c.l.b16 %v3099
      %v7853 = vunpack.c.l.b16 %v3100
      %v7854 = vunpack.c.l.b16 %v3101
      %v7855 = vunpack.c.l.b16 %v3102
      %v7856 = vunpack.c.l.b16 %v3103
      %v7857 = vunpack.c.l.b16 %v3104
      %v7858 = vunpack.c.l.b16 %v3105
      %v7859 = vunpack.c.l.b16 %v3106
      %v7860 = vunpack.c.l.b16 %v3107
      %v7861 = vunpack.c.l.b16 %v3108
      %v7862 = vunpack.c.l.b16 %v3109
      %v7863 = vunpack.c.l.b16 %v3110
      %v7864 = vunpack.c.l.b16 %v3111
      %v7865 = vunpack.c.l.b16 %v3112
      %v7866 = vunpack.c.l.b16 %v3113
      %v7867 = vunpack.c.l.b16 %v3114
      %v7868 = vunpack.c.l.b16 %v3115
      %v7869 = vunpack.c.l.b16 %v3116
      %v7870 = vunpack.c.l.b16 %v3117
      %v7871 = vunpack.c.l.b16 %v3118
      %v7872 = vunpack.c.l.b16 %v3119
      %v7873 = vunpack.c.l.b16 %v3120
      %v7874 = vunpack.c.l.b16 %v3121
      %v7875 = vunpack.c.l.b16 %v3122
      %v7876 = vunpack.c.l.b16 %v3123
      %v7877 = vunpack.c.l.b16 %v3124
      %v7878 = vunpack.c.l.b16 %v3125
      %v7879 = vunpack.c.l.b16 %v3126
      %v7880 = vunpack.c.l.b16 %v3127
      %v7881 = vunpack.c.l.b16 %v3128
      %v7882 = vunpack.c.l.b16 %v3129
      %v7883 = vunpack.c.l.b16 %v3130
      %v7884 = vunpack.c.l.b16 %v3131
      %v7885 = vunpack.c.l.b16 %v3132
      %v7886 = vunpack.c.l.b16 %v3133
      %v7887 = vunpack.c.l.b16 %v3134
      %v7888 = vunpack.c.l.b16 %v3135
      %v7889 = vunpack.c.l.b16 %v3136
      %v7890 = vunpack.c.l.b16 %v3137
      %v7891 = vunpack.c.l.b16 %v3138
      %v7892 = vunpack.c.l.b16 %v3139
      %v7893 = vunpack.c.l.b16 %v3140
      %v7894 = vunpack.c.l.b16 %v3141
      %v7895 = vunpack.c.l.b16 %v3142
      %v7896 = vunpack.c.l.b16 %v3143
      %v7897 = vunpack.c.l.b16 %v3144
      %v7898 = vunpack.c.l.b16 %v3145
      %v7899 = vunpack.c.l.b16 %v3146
      %v7900 = vunpack.c.l.b16 %v3147
      %v7901 = vunpack.c.l.b16 %v3148
      %v7902 = vunpack.c.l.b16 %v3149
      %v7903 = vunpack.c.l.b16 %v3150
      %v7904 = vunpack.c.l.b16 %v3151
      %v7905 = vunpack.c.l.b16 %v3152
      %v7906 = vunpack.c.l.b16 %v3153
      %v7907 = vunpack.c.l.b16 %v3154
      %v7908 = vunpack.c.l.b16 %v3155
      %v7909 = vunpack.c.l.b16 %v3156
      %v7910 = vunpack.c.l.b16 %v3157
      %v7911 = vunpack.c.l.b16 %v3158
      %v7912 = vunpack.c.l.b16 %v3159
      %v7913 = vunpack.c.l.b16 %v3160
      %v7914 = vunpack.c.l.b16 %v3161
      %v7915 = vunpack.c.l.b16 %v3162
      %v7916 = vunpack.c.l.b16 %v3163
      %v7917 = vunpack.c.l.b16 %v3164
      %v7918 = vunpack.c.l.b16 %v3165
      %v7919 = vunpack.c.l.b16 %v3166
      %v7920 = vunpack.c.l.b16 %v3167
      %v7921 = vunpack.c.l.b16 %v3168
      %v7922 = vunpack.c.l.b16 %v3169
      %v7923 = vunpack.c.l.b16 %v3170
      %v7924 = vunpack.c.l.b16 %v3171
      %v7925 = vunpack.c.l.b16 %v3172
      %v7926 = vunpack.c.l.b16 %v3173
      %v7927 = vunpack.c.l.b16 %v3174
      %v7928 = vunpack.c.l.b16 %v3175
      %v7929 = vunpack.c.l.b16 %v3176
      %v7930 = vunpack.c.l.b16 %v3177
      %v7931 = vunpack.c.l.b16 %v3178
      %v7932 = vunpack.c.l.b16 %v3179
      %v7933 = vunpack.c.l.b16 %v3180
      %v7934 = vunpack.c.l.b16 %v3181
      %v7935 = vunpack.c.l.b16 %v3182
      %v7936 = vunpack.c.l.b16 %v3183
      %v7937 = vunpack.c.l.b16 %v3184
      %v7938 = vunpack.c.l.b16 %v3185
      %v7939 = vunpack.c.l.b16 %v3186
      %v7940 = vunpack.c.l.b16 %v3187
      %v7941 = vunpack.c.l.b16 %v3188
      %v7942 = vunpack.c.l.b16 %v3189
      %v7943 = vunpack.c.l.b16 %v3190
      %v7944 = vunpack.c.l.b16 %v3191
      %v7945 = vunpack.c.l.b16 %v3192
      %v7946 = vunpack.c.l.b16 %v3193
      %v7947 = vunpack.c.l.b16 %v3194
      %v7948 = vunpack.c.l.b16 %v3195
      %v7949 = vunpack.c.l.b16 %v3196
      %v7950 = vunpack.c.l.b16 %v3197
      %v7951 = vunpack.c.l.b16 %v3198
      %v7952 = vunpack.c.l.b16 %v3199
      %v7953 = vunpack.c.l.b16 %v3200
      %v7954 = vunpack.c.l.b16 %v3201
      %v7955 = vunpack.c.l.b16 %v3202
      %v7956 = vunpack.c.l.b16 %v3203
      %v7957 = vunpack.c.l.b16 %v3204
      %v7958 = vunpack.c.l.b16 %v3205
      %v7959 = vunpack.c.l.b16 %v3206
      %v7960 = vunpack.c.l.b16 %v3207
      %v7961 = vunpack.c.l.b16 %v3208
      %v7962 = vunpack.c.l.b16 %v3209
      %v7963 = vunpack.c.l.b16 %v3210
      %v7964 = vunpack.c.l.b16 %v3211
      %v7965 = vunpack.c.l.b16 %v3212
      %v7966 = vunpack.c.l.b16 %v3213
      %v7967 = vunpack.c.l.b16 %v3214
      %v7968 = vunpack.c.l.b16 %v3215
      %v7969 = vunpack.c.l.b16 %v3216
      %v7970 = vunpack.c.l.b16 %v3217
      %v7971 = vunpack.c.l.b16 %v3218
      %v7972 = vunpack.c.l.b16 %v3219
      %v7973 = vunpack.c.l.b16 %v3220
      %v7974 = vunpack.c.l.b16 %v3221
      %v7975 = vunpack.c.l.b16 %v3222
      %v7976 = vunpack.c.l.b16 %v3223
      %v7977 = vunpack.c.l.b16 %v3224
      %v7978 = vunpack.c.l.b16 %v3225
      %v7979 = vunpack.c.l.b16 %v3226
      %v7980 = vunpack.c.l.b16 %v3227
      %v7981 = vunpack.c.l.b16 %v3228
      %v7982 = vunpack.c.l.b16 %v3229
      %v7983 = vunpack.c.l.b16 %v3230
      %v7984 = vunpack.c.l.b16 %v3231
      %v7985 = vunpack.c.l.b16 %v3232
      %v7986 = vunpack.c.l.b16 %v3233
      %v7987 = vunpack.c.l.b16 %v3234
      %v7988 = vunpack.c.l.b16 %v3235
      %v7989 = vunpack.c.l.b16 %v3236
      %v7990 = vunpack.c.l.b16 %v3237
      %v7991 = vunpack.c.l.b16 %v3238
      %v7992 = vunpack.c.l.b16 %v3239
      %v7993 = vunpack.c.l.b16 %v3240
      %v7994 = vunpack.c.l.b16 %v3241
      %v7995 = vunpack.c.l.b16 %v3242
      %v7996 = vunpack.c.l.b16 %v3243
      %v7997 = vunpack.c.l.b16 %v3244
      %v7998 = vunpack.c.l.b16 %v3245
      %v7999 = vunpack.c.l.b16 %v3246
      %v8000 = vunpack.c.l.b16 %v3247
      %v8001 = vunpack.c.l.b16 %v3248
      %v8002 = vunpack.c.l.b16 %v3249
      %v8003 = vunpack.c.l.b16 %v3250
      %v8004 = vunpack.c.l.b16 %v3251
      %v8005 = vunpack.c.l.b16 %v3252
      %v8006 = vunpack.c.l.b16 %v3253
      %v8007 = vunpack.c.l.b16 %v3254
      %v8008 = vunpack.c.l.b16 %v3255
      %v8009 = vunpack.c.l.b16 %v3256
      %v8010 = vunpack.c.l.b16 %v3257
      %v8011 = vunpack.c.l.b16 %v3258
      %v8012 = vunpack.c.l.b16 %v3259
      %v8013 = vunpack.c.l.b16 %v3260
      %v8014 = vunpack.c.l.b16 %v3261
      %v8015 = vunpack.c.l.b16 %v3262
      %v8016 = vunpack.c.l.b16 %v3263
      %v8017 = vunpack.c.l.b16 %v3264
      %v8018 = vunpack.c.l.b16 %v3265
      %v8019 = vunpack.c.l.b16 %v3266
      %v8020 = vunpack.c.l.b16 %v3267
      %v8021 = vunpack.c.l.b16 %v3268
      %v8022 = vunpack.c.l.b16 %v3269
      %v8023 = vunpack.c.l.b16 %v3270
      %v8024 = vunpack.c.l.b16 %v3271
      %v8025 = vunpack.c.l.b16 %v3272
      %v8026 = vunpack.c.l.b16 %v3273
      %v8027 = vunpack.c.l.b16 %v3274
      %v8028 = vunpack.c.l.b16 %v3275
      %v8029 = vunpack.c.l.b16 %v3276
      %v8030 = vunpack.c.l.b16 %v3277
      %v8031 = vunpack.c.l.b16 %v3278
      %v8032 = vunpack.c.l.b16 %v3279
      %v8033 = vunpack.c.l.b16 %v3280
      %v8034 = vunpack.c.l.b16 %v3281
      %v8035 = vunpack.c.l.b16 %v3282
      %v8036 = vunpack.c.l.b16 %v3283
      %v8037 = vunpack.c.l.b16 %v3284
      %v8038 = vunpack.c.l.b16 %v3285
      %v8039 = vunpack.c.l.b16 %v3286
      %v8040 = vunpack.c.l.b16 %v3287
      %v8041 = vunpack.c.l.b16 %v3288
      %v8042 = vunpack.c.l.b16 %v3289
      %v8043 = vunpack.c.l.b16 %v3290
      %v8044 = vunpack.c.l.b16 %v3291
      %v8045 = vunpack.c.l.b16 %v3292
      %v8046 = vunpack.c.l.b16 %v3293
      %v8047 = vunpack.c.l.b16 %v3294
      %v8048 = vunpack.c.l.b16 %v3295
      %v8049 = vunpack.c.l.b16 %v3296
      %v8050 = vunpack.c.l.b16 %v3297
      %v8051 = vunpack.c.l.b16 %v3298
      %v8052 = vunpack.c.l.b16 %v3299
      %v8053 = vunpack.c.l.b16 %v3300
      %v8054 = vunpack.c.l.b16 %v3301
      %v8055 = vunpack.c.l.b16 %v3302
      %v8056 = vunpack.c.l.b16 %v3303
      %v8057 = vunpack.c.l.b16 %v3304
      %v8058 = vunpack.c.l.b16 %v3305
      %v8059 = vunpack.c.l.b16 %v3306
      %v8060 = vunpack.c.l.b16 %v3307
      %v8061 = vunpack.c.l.b16 %v3308
      %v8062 = vunpack.c.l.b16 %v3309
      %v8063 = vunpack.c.l.b16 %v3310
      %v8064 = vunpack.c.l.b16 %v3311
      %v8065 = vunpack.c.l.b16 %v3312
      %v8066 = vunpack.c.l.b16 %v3313
      %v8067 = vunpack.c.l.b16 %v3314
      %v8068 = vunpack.c.l.b16 %v3315
      %v8069 = vunpack.c.l.b16 %v3316
      %v8070 = vunpack.c.l.b16 %v3317
      %v8071 = vunpack.c.l.b16 %v3318
      %v8072 = vunpack.c.l.b16 %v3319
      %v8073 = vunpack.c.l.b16 %v3320
      %v8074 = vunpack.c.l.b16 %v3321
      %v8075 = vunpack.c.l.b16 %v3322
      %v8076 = vunpack.c.l.b16 %v3323
      %v8077 = vunpack.c.l.b16 %v3324
      %v8078 = vunpack.c.l.b16 %v3325
      %v8079 = vunpack.c.l.b16 %v3326
      %v8080 = vunpack.c.l.b16 %v3327
      %v8081 = vunpack.c.l.b16 %v3328
      %v8082 = vunpack.c.l.b16 %v3329
      %v8083 = vunpack.c.l.b16 %v3330
      %v8084 = vunpack.c.l.b16 %v3331
      %v8085 = vunpack.c.l.b16 %v3332
      %v8086 = vunpack.c.l.b16 %v3333
      %v8087 = vunpack.c.l.b16 %v3334
      %v8088 = vunpack.c.l.b16 %v3335
      %v8089 = vunpack.c.l.b16 %v3336
      %v8090 = vunpack.c.l.b16 %v3337
      %v8091 = vunpack.c.l.b16 %v3338
      %v8092 = vunpack.c.l.b16 %v3339
      %v8093 = vunpack.c.l.b16 %v3340
      %v8094 = vunpack.c.l.b16 %v3341
      %v8095 = vunpack.c.l.b16 %v3342
      %v8096 = vunpack.c.l.b16 %v3343
      %v8097 = vunpack.c.l.b16 %v3344
      %v8098 = vunpack.c.l.b16 %v3345
      %v8099 = vunpack.c.l.b16 %v3346
      %v8100 = vunpack.c.l.b16 %v3347
      %v8101 = vunpack.c.l.b16 %v3348
      %v8102 = vunpack.c.l.b16 %v3349
      %v8103 = vunpack.c.l.b16 %v3350
      %v8104 = vunpack.c.l.b16 %v3351
      %v8105 = vunpack.c.l.b16 %v3352
      %v8106 = vunpack.c.l.b16 %v3353
      %v8107 = vunpack.c.l.b16 %v3354
      %v8108 = vunpack.c.l.b16 %v3355
      %v8109 = vunpack.c.l.b16 %v3356
      %v8110 = vunpack.c.l.b16 %v3357
      %v8111 = vunpack.c.l.b16 %v3358
      %v8112 = vunpack.c.l.b16 %v3359
      %v8113 = vunpack.c.l.b16 %v3360
      %v8114 = vunpack.c.l.b16 %v3361
      %v8115 = vunpack.c.l.b16 %v3362
      %v8116 = vunpack.c.l.b16 %v3363
      %v8117 = vunpack.c.l.b16 %v3364
      %v8118 = vunpack.c.l.b16 %v3365
      %v8119 = vunpack.c.l.b16 %v3366
      %v8120 = vunpack.c.l.b16 %v3367
      %v8121 = vunpack.c.l.b16 %v3368
      %v8122 = vunpack.c.l.b16 %v3369
      %v8123 = vunpack.c.l.b16 %v3370
      %v8124 = vunpack.c.l.b16 %v3371
      %v8125 = vunpack.c.l.b16 %v3372
      %v8126 = vunpack.c.l.b16 %v3373
      %v8127 = vunpack.c.l.b16 %v3374
      %v8128 = vunpack.c.l.b16 %v3375
      %v8129 = vunpack.c.l.b16 %v3376
      %v8130 = vunpack.c.l.b16 %v3377
      %v8131 = vunpack.c.l.b16 %v3378
      %v8132 = vunpack.c.l.b16 %v3379
      %v8133 = vunpack.c.l.b16 %v3380
      %v8134 = vunpack.c.l.b16 %v3381
      %v8135 = vunpack.c.l.b16 %v3382
      %v8136 = vunpack.c.l.b16 %v3383
      %v8137 = vunpack.c.l.b16 %v3384
      %v8138 = vunpack.c.l.b16 %v3385
      %v8139 = vunpack.c.l.b16 %v3386
      %v8140 = vunpack.c.l.b16 %v3387
      %v8141 = vunpack.c.l.b16 %v3388
      %v8142 = vunpack.c.l.b16 %v3389
      %v8143 = vunpack.c.l.b16 %v3390
      %v8144 = vunpack.c.l.b16 %v3391
      %v8145 = vunpack.c.l.b16 %v3392
      %v8146 = vunpack.c.l.b16 %v3393
      %v8147 = vunpack.c.l.b16 %v3394
      %v8148 = vunpack.c.l.b16 %v3395
      %v8149 = vunpack.c.l.b16 %v3396
      %v8150 = vunpack.c.l.b16 %v3397
      %v8151 = vunpack.c.l.b16 %v3398
      %v8152 = vunpack.c.l.b16 %v3399
      %v8153 = vunpack.c.l.b16 %v3400
      %v8154 = vunpack.c.l.b16 %v3401
      %v8155 = vunpack.c.l.b16 %v3402
      %v8156 = vunpack.c.l.b16 %v3403
      %v8157 = vunpack.c.l.b16 %v3404
      %v8158 = vunpack.c.l.b16 %v3405
      %v8159 = vunpack.c.l.b16 %v3406
      %v8160 = vunpack.c.l.b16 %v3407
      %v8161 = vunpack.c.l.b16 %v3408
      %v8162 = vunpack.c.l.b16 %v3409
      %v8163 = vunpack.c.l.b16 %v3410
      %v8164 = vunpack.c.l.b16 %v3411
      %v8165 = vunpack.c.l.b16 %v3412
      %v8166 = vunpack.c.l.b16 %v3413
      %v8167 = vunpack.c.l.b16 %v3414
      %v8168 = vunpack.c.l.b16 %v3415
      %v8169 = vunpack.c.l.b16 %v3416
      %v8170 = vunpack.c.l.b16 %v3417
      %v8171 = vunpack.c.l.b16 %v3418
      %v8172 = vunpack.c.l.b16 %v3419
      %v8173 = vunpack.c.l.b16 %v3420
      %v8174 = vunpack.c.l.b16 %v3421
      %v8175 = vunpack.c.l.b16 %v3422
      %v8176 = vunpack.c.l.b16 %v3423
      %v8177 = vunpack.c.l.b16 %v3424
      %v8178 = vunpack.c.l.b16 %v3425
      %v8179 = vunpack.c.l.b16 %v3426
      %v8180 = vunpack.c.l.b16 %v3427
      %v8181 = vunpack.c.l.b16 %v3428
      %v8182 = vunpack.c.l.b16 %v3429
      %v8183 = vunpack.c.l.b16 %v3430
      %v8184 = vunpack.c.l.b16 %v3431
      %v8185 = vunpack.c.l.b16 %v3432
      %v8186 = vunpack.c.l.b16 %v3433
      %v8187 = vunpack.c.l.b16 %v3434
      %v8188 = vunpack.c.l.b16 %v3435
      %v8189 = vunpack.c.l.b16 %v3436
      %v8190 = vunpack.c.l.b16 %v3437
      %v8191 = vunpack.c.l.b16 %v3438
      %v8192 = vunpack.c.l.b16 %v3439
      %v8193 = vunpack.c.l.b16 %v3440
      %v8194 = vunpack.c.l.b16 %v3441
      %v8195 = vunpack.c.l.b16 %v3442
      %v8196 = vunpack.c.l.b16 %v3443
      %v8197 = vunpack.c.l.b16 %v3444
      %v8198 = vunpack.c.l.b16 %v3445
      %v8199 = vunpack.c.l.b16 %v3446
      %v8200 = vunpack.c.l.b16 %v3447
      %v8201 = vunpack.c.l.b16 %v3448
      %v8202 = vunpack.c.l.b16 %v3449
      %v8203 = vunpack.c.l.b16 %v3450
      %v8204 = vunpack.c.l.b16 %v3451
      %v8205 = vunpack.c.l.b16 %v3452
      %v8206 = vunpack.c.l.b16 %v3453
      %v8207 = vunpack.c.l.b16 %v3454
      %v8208 = vunpack.c.l.b16 %v3455
      %v8209 = vunpack.c.l.b16 %v3456
      %v8210 = vunpack.c.l.b16 %v3457
      %v8211 = vunpack.c.l.b16 %v3458
      %v8212 = vunpack.c.l.b16 %v3459
      %v8213 = vunpack.c.l.b16 %v3460
      %v8214 = vunpack.c.l.b16 %v3461
      %v8215 = vunpack.c.l.b16 %v3462
      %v8216 = vunpack.c.l.b16 %v3463
      %v8217 = vunpack.c.l.b16 %v3464
      %v8218 = vunpack.c.l.b16 %v3465
      %v8219 = vunpack.c.l.b16 %v3466
      %v8220 = vunpack.c.l.b16 %v3467
      %v8221 = vunpack.c.l.b16 %v3468
      %v8222 = vunpack.c.l.b16 %v3469
      %v8223 = vunpack.c.l.b16 %v3470
      %v8224 = vunpack.c.l.b16 %v3471
      %v8225 = vunpack.c.l.b16 %v3472
      %v8226 = vunpack.c.l.b16 %v3473
      %v8227 = vunpack.c.l.b16 %v3474
      %v8228 = vunpack.c.l.b16 %v3475
      %v8229 = vunpack.c.l.b16 %v3476
      %v8230 = vunpack.c.l.b16 %v3477
      %v8231 = vunpack.c.l.b16 %v3478
      %v8232 = vunpack.c.l.b16 %v3479
      %v8233 = vunpack.c.l.b16 %v3480
      %v8234 = vunpack.c.l.b16 %v3481
      %v8235 = vunpack.c.l.b16 %v3482
      %v8236 = vunpack.c.l.b16 %v3483
      %v8237 = vunpack.c.l.b16 %v3484
      %v8238 = vunpack.c.l.b16 %v3485
      %v8239 = vunpack.c.l.b16 %v3486
      %v8240 = vunpack.c.l.b16 %v3487
      %v8241 = vunpack.c.l.b16 %v3488
      %v8242 = vunpack.c.l.b16 %v3489
      %v8243 = vunpack.c.l.b16 %v3490
      %v8244 = vunpack.c.l.b16 %v3491
      %v8245 = vunpack.c.l.b16 %v3492
      %v8246 = vunpack.c.l.b16 %v3493
      %v8247 = vunpack.c.l.b16 %v3494
      %v8248 = vunpack.c.l.b16 %v3495
      %v8249 = vunpack.c.l.b16 %v3496
      %v8250 = vunpack.c.l.b16 %v3497
      %v8251 = vunpack.c.l.b16 %v3498
      %v8252 = vunpack.c.l.b16 %v3499
      %v8253 = vunpack.c.l.b16 %v3500
      %v8254 = vunpack.c.l.b16 %v3501
      %v8255 = vunpack.c.l.b16 %v3502
      %v8256 = vunpack.c.l.b16 %v3503
      %v8257 = vunpack.c.l.b16 %v3504
      %v8258 = vunpack.c.l.b16 %v3505
      %v8259 = vunpack.c.l.b16 %v3506
      %v8260 = vunpack.c.l.b16 %v3507
      %v8261 = vunpack.c.l.b16 %v3508
      %v8262 = vunpack.c.l.b16 %v3509
      %v8263 = vunpack.c.l.b16 %v3510
      %v8264 = vunpack.c.l.b16 %v3511
      %v8265 = vunpack.c.l.b16 %v3512
      %v8266 = vunpack.c.l.b16 %v3513
      %v8267 = vunpack.c.l.b16 %v3514
      %v8268 = vunpack.c.l.b16 %v3515
      %v8269 = vunpack.c.l.b16 %v3516
      %v8270 = vunpack.c.l.b16 %v3517
      %v8271 = vunpack.c.l.b16 %v3518
      %v8272 = vunpack.c.l.b16 %v3519
      %v8273 = vunpack.c.l.b16 %v3520
      %v8274 = vunpack.c.l.b16 %v3521
      %v8275 = vunpack.c.l.b16 %v3522
      %v8276 = vunpack.c.l.b16 %v3523
      %v8277 = vunpack.c.l.b16 %v3524
      %v8278 = vunpack.c.l.b16 %v3525
      %v8279 = vunpack.c.l.b16 %v3526
      %v8280 = vunpack.c.l.b16 %v3527
      %v8281 = vunpack.c.l.b16 %v3528
      %v8282 = vunpack.c.l.b16 %v3529
      %v8283 = vunpack.c.l.b16 %v3530
      %v8284 = vunpack.c.l.b16 %v3531
      %v8285 = vunpack.c.l.b16 %v3532
      %v8286 = vunpack.c.l.b16 %v3533
      %v8287 = vunpack.c.l.b16 %v3534
      %v8288 = vunpack.c.l.b16 %v3535
      %v8289 = vunpack.c.l.b16 %v3536
      %v8290 = vunpack.c.l.b16 %v3537
      %v8291 = vunpack.c.l.b16 %v3538
      %v8292 = vunpack.c.l.b16 %v3539
      %v8293 = vunpack.c.l.b16 %v3540
      %v8294 = vunpack.c.l.b16 %v3541
      %v8295 = vunpack.c.l.b16 %v3542
      %v8296 = vunpack.c.l.b16 %v3543
      %v8297 = vunpack.c.l.b16 %v3544
      %v8298 = vunpack.c.l.b16 %v3545
      %v8299 = vunpack.c.l.b16 %v3546
      %v8300 = vunpack.c.l.b16 %v3547
      %v8301 = vunpack.c.l.b16 %v3548
      %v8302 = vunpack.c.l.b16 %v3549
      %v8303 = vunpack.c.l.b16 %v3550
      %v8304 = vunpack.c.l.b16 %v3551
      %v8305 = vunpack.c.l.b16 %v3552
      %v8306 = vunpack.c.l.b16 %v3553
      %v8307 = vunpack.c.l.b16 %v3554
      %v8308 = vunpack.c.l.b16 %v3555
      %v8309 = vunpack.c.l.b16 %v3556
      %v8310 = vunpack.c.l.b16 %v3557
      %v8311 = vunpack.c.l.b16 %v3558
      %v8312 = vunpack.c.l.b16 %v3559
      %v8313 = vunpack.c.l.b16 %v3560
      %v8314 = vunpack.c.l.b16 %v3561
      %v8315 = vunpack.c.l.b16 %v3562
      %v8316 = vunpack.c.l.b16 %v3563
      %v8317 = vunpack.c.l.b16 %v3564
      %v8318 = vunpack.c.l.b16 %v3565
      %v8319 = vunpack.c.l.b16 %v3566
      %v8320 = vunpack.c.l.b16 %v3567
      %v8321 = vunpack.c.l.b16 %v3568
      %v8322 = vunpack.c.l.b16 %v3569
      %v8323 = vunpack.c.l.b16 %v3570
      %v8324 = vunpack.c.l.b16 %v3571
      %v8325 = vunpack.c.l.b16 %v3572
      %v8326 = vunpack.c.l.b16 %v3573
      %v8327 = vunpack.c.l.b16 %v3574
      %v8328 = vunpack.c.l.b16 %v3575
      %v8329 = vunpack.c.l.b16 %v3576
      %v8330 = vunpack.c.l.b16 %v3577
      %v8331 = vunpack.c.l.b16 %v3578
      %v8332 = vunpack.c.l.b16 %v3579
      %v8333 = vunpack.c.l.b16 %v3580
      %v8334 = vunpack.c.l.b16 %v3581
      %v8335 = vunpack.c.l.b16 %v3582
      %v8336 = vunpack.c.l.b16 %v3583
      %v8337 = vunpack.c.l.b16 %v3584
      %v8338 = vunpack.c.l.b16 %v3585
      %v8339 = vunpack.c.l.b16 %v3586
      %v8340 = vunpack.c.l.b16 %v3587
      %v8341 = vunpack.c.l.b16 %v3588
      %v8342 = vunpack.c.l.b16 %v3589
      %v8343 = vunpack.c.l.b16 %v3590
      %v8344 = vunpack.c.l.b16 %v3591
      %v8345 = vunpack.c.l.b16 %v3592
      %v8346 = vunpack.c.l.b16 %v3593
      %v8347 = vunpack.c.l.b16 %v3594
      %v8348 = vunpack.c.l.b16 %v3595
      %v8349 = vunpack.c.l.b16 %v3596
      %v8350 = vunpack.c.l.b16 %v3597
      %v8351 = vunpack.c.l.b16 %v3598
      %v8352 = vunpack.c.l.b16 %v3599
      %v8353 = vunpack.c.l.b16 %v3600
      %v8354 = vunpack.c.l.b16 %v3601
      %v8355 = vunpack.c.l.b16 %v3602
      %v8356 = vunpack.c.l.b16 %v3603
      %v8357 = vunpack.c.l.b16 %v3604
      %v8358 = vunpack.c.l.b16 %v3605
      %v8359 = vunpack.c.l.b16 %v3606
      %v8360 = vunpack.c.l.b16 %v3607
      %v8361 = vunpack.c.l.b16 %v3608
      %v8362 = vunpack.c.l.b16 %v3609
      %v8363 = vunpack.c.l.b16 %v3610
      %v8364 = vunpack.c.l.b16 %v3611
      %v8365 = vunpack.c.l.b16 %v3612
      %v8366 = vunpack.c.l.b16 %v3613
      %v8367 = vunpack.c.l.b16 %v3614
      %v8368 = vunpack.c.l.b16 %v3615
      %v8369 = vunpack.c.l.b16 %v3616
      %v8370 = vunpack.c.l.b16 %v3617
      %v8371 = vunpack.c.l.b16 %v3618
      %v8372 = vunpack.c.l.b16 %v3619
      %v8373 = vunpack.c.l.b16 %v3620
      %v8374 = vunpack.c.l.b16 %v3621
      %v8375 = vunpack.c.l.b16 %v3622
      %v8376 = vunpack.c.l.b16 %v3623
      %v8377 = vunpack.c.l.b16 %v3624
      %v8378 = vunpack.c.l.b16 %v3625
      %v8379 = vunpack.c.l.b16 %v3626
      %v8380 = vunpack.c.l.b16 %v3627
      %v8381 = vunpack.c.l.b16 %v3628
      %v8382 = vunpack.c.l.b16 %v3629
      %v8383 = vunpack.c.l.b16 %v3630
      %v8384 = vunpack.c.l.b16 %v3631
      %v8385 = vunpack.c.l.b16 %v3632
      %v8386 = vunpack.c.l.b16 %v3633
      %v8387 = vunpack.c.l.b16 %v3634
      %v8388 = vunpack.c.l.b16 %v3635
      %v8389 = vunpack.c.l.b16 %v3636
      %v8390 = vunpack.c.l.b16 %v3637
      %v8391 = vunpack.c.l.b16 %v3638
      %v8392 = vunpack.c.l.b16 %v3639
      %v8393 = vunpack.c.l.b16 %v3640
      %v8394 = vunpack.c.l.b16 %v3641
      %v8395 = vunpack.c.l.b16 %v3642
      %v8396 = vunpack.c.l.b16 %v3643
      %v8397 = vunpack.c.l.b16 %v3644
      %v8398 = vunpack.c.l.b16 %v3645
      %v8399 = vunpack.c.l.b16 %v3646
      %v8400 = vunpack.c.l.b16 %v3647
      %v8401 = vunpack.c.l.b16 %v3648
      %v8402 = vunpack.c.l.b16 %v3649
      %v8403 = vunpack.c.l.b16 %v3650
      %v8404 = vunpack.c.l.b16 %v3651
      %v8405 = vunpack.c.l.b16 %v3652
      %v8406 = vunpack.c.l.b16 %v3653
      %v8407 = vunpack.c.l.b16 %v3654
      %v8408 = vunpack.c.l.b16 %v3655
      %v8409 = vunpack.c.l.b16 %v3656
      %v8410 = vunpack.c.l.b16 %v3657
      %v8411 = vunpack.c.l.b16 %v3658
      %v8412 = vunpack.c.l.b16 %v3659
      %v8413 = vunpack.c.l.b16 %v3660
      %v8414 = vunpack.c.l.b16 %v3661
      %v8415 = vunpack.c.l.b16 %v3662
      %v8416 = vunpack.c.l.b16 %v3663
      %v8417 = vunpack.c.l.b16 %v3664
      %v8418 = vunpack.c.l.b16 %v3665
      %v8419 = vunpack.c.l.b16 %v3666
      %v8420 = vunpack.c.l.b16 %v3667
      %v8421 = vunpack.c.l.b16 %v3668
      %v8422 = vunpack.c.l.b16 %v3669
      %v8423 = vunpack.c.l.b16 %v3670
      %v8424 = vunpack.c.l.b16 %v3671
      %v8425 = vunpack.c.l.b16 %v3672
      %v8426 = vunpack.c.l.b16 %v3673
      %v8427 = vunpack.c.l.b16 %v3674
      %v8428 = vunpack.c.l.b16 %v3675
      %v8429 = vunpack.c.l.b16 %v3676
      %v8430 = vunpack.c.l.b16 %v3677
      %v8431 = vunpack.c.l.b16 %v3678
      %v8432 = vunpack.c.l.b16 %v3679
      %v8433 = vunpack.c.l.b16 %v3680
      %v8434 = vunpack.c.l.b16 %v3681
      %v8435 = vunpack.c.l.b16 %v3682
      %v8436 = vunpack.c.l.b16 %v3683
      %v8437 = vunpack.c.l.b16 %v3684
      %v8438 = vunpack.c.l.b16 %v3685
      %v8439 = vunpack.c.l.b16 %v3686
      %v8440 = vunpack.c.l.b16 %v3687
      %v8441 = vunpack.c.l.b16 %v3688
      %v8442 = vunpack.c.l.b16 %v3689
      %v8443 = vunpack.c.l.b16 %v3690
      %v8444 = vunpack.c.l.b16 %v3691
      %v8445 = vunpack.c.l.b16 %v3692
      %v8446 = vunpack.c.l.b16 %v3693
      %v8447 = vunpack.c.l.b16 %v3694
      %v8448 = vunpack.c.l.b16 %v3695
      %v8449 = vunpack.c.l.b16 %v3696
      %v8450 = vunpack.c.l.b16 %v3697
      %v8451 = vunpack.c.l.b16 %v3698
      %v8452 = vunpack.c.l.b16 %v3699
      %v8453 = vunpack.c.l.b16 %v3700
      %v8454 = vunpack.c.l.b16 %v3701
      %v8455 = vunpack.c.l.b16 %v3702
      %v8456 = vunpack.c.l.b16 %v3703
      %v8457 = vunpack.c.l.b16 %v3704
      %v8458 = vunpack.c.l.b16 %v3705
      %v8459 = vunpack.c.l.b16 %v3706
      %v8460 = vunpack.c.l.b16 %v3707
      %v8461 = vunpack.c.l.b16 %v3708
      %v8462 = vunpack.c.l.b16 %v3709
      %v8463 = vunpack.c.l.b16 %v3710
      %v8464 = vunpack.c.l.b16 %v3711
      %v8465 = vunpack.c.l.b16 %v3712
      %v8466 = vunpack.c.l.b16 %v3713
      %v8467 = vunpack.c.l.b16 %v3714
      %v8468 = vunpack.c.l.b16 %v3715
      %v8469 = vunpack.c.l.b16 %v3716
      %v8470 = vunpack.c.l.b16 %v3717
      %v8471 = vunpack.c.l.b16 %v3718
      %v8472 = vunpack.c.l.b16 %v3719
      %v8473 = vunpack.c.l.b16 %v3720
      %v8474 = vunpack.c.l.b16 %v3721
      %v8475 = vunpack.c.l.b16 %v3722
      %v8476 = vunpack.c.l.b16 %v3723
      %v8477 = vunpack.c.l.b16 %v3724
      %v8478 = vunpack.c.l.b16 %v3725
      %v8479 = vunpack.c.l.b16 %v3726
      %v8480 = vunpack.c.l.b16 %v3727
      %v8481 = vunpack.c.l.b16 %v3728
      %v8482 = vunpack.c.l.b16 %v3729
      %v8483 = vunpack.c.l.b16 %v3730
      %v8484 = vunpack.c.l.b16 %v3731
      %v8485 = vunpack.c.l.b16 %v3732
      %v8486 = vunpack.c.l.b16 %v3733
      %v8487 = vunpack.c.l.b16 %v3734
      %v8488 = vunpack.c.l.b16 %v3735
      %v8489 = vunpack.c.l.b16 %v3736
      %v8490 = vunpack.c.l.b16 %v3737
      %v8491 = vunpack.c.l.b16 %v3738
      %v8492 = vunpack.c.l.b16 %v3739
      %v8493 = vunpack.c.l.b16 %v3740
      %v8494 = vunpack.c.l.b16 %v3741
      %v8495 = vunpack.c.l.b16 %v3742
      %v8496 = vunpack.c.l.b16 %v3743
      %v8497 = vunpack.c.l.b16 %v3744
      %v8498 = vunpack.c.l.b16 %v3745
      %v8499 = vunpack.c.l.b16 %v3746
      %v8500 = vunpack.c.l.b16 %v3747
      %v8501 = vunpack.c.l.b16 %v3748
      %v8502 = vunpack.c.l.b16 %v3749
      %v8503 = vunpack.c.l.b16 %v3750
      %v8504 = vunpack.c.l.b16 %v3751
      %v8505 = vunpack.c.l.b16 %v3752
      %v8506 = vunpack.c.l.b16 %v3753
      %v8507 = vunpack.c.l.b16 %v3754
      %v8508 = vunpack.c.l.b16 %v3755
      %v8509 = vunpack.c.l.b16 %v3756
      %v8510 = vunpack.c.l.b16 %v3757
      %v8511 = vunpack.c.l.b16 %v3758
      %v8512 = vunpack.c.l.b16 %v3759
      %v8513 = vunpack.c.l.b16 %v3760
      %v8514 = vunpack.c.l.b16 %v3761
      %v8515 = vunpack.c.l.b16 %v3762
      %v8516 = vunpack.c.l.b16 %v3763
      %v8517 = vunpack.c.l.b16 %v3764
      %v8518 = vunpack.c.l.b16 %v3765
      %v8519 = vunpack.c.l.b16 %v3766
      %v8520 = vunpack.c.l.b16 %v3767
      %v8521 = vunpack.c.l.b16 %v3768
      %v8522 = vunpack.c.l.b16 %v3769
      %v8523 = vunpack.c.l.b16 %v3770
      %v8524 = vunpack.c.l.b16 %v3771
      %v8525 = vunpack.c.l.b16 %v3772
      %v8526 = vunpack.c.l.b16 %v3773
      %v8527 = vunpack.c.l.b16 %v3774
      %v8528 = vunpack.c.l.b16 %v3775
      %v8529 = vunpack.c.l.b16 %v3776
      %v8530 = vunpack.c.l.b16 %v3777
      %v8531 = vunpack.c.l.b16 %v3778
      %v8532 = vunpack.c.l.b16 %v3779
      %v8533 = vunpack.c.l.b16 %v3780
      %v8534 = vunpack.c.l.b16 %v3781
      %v8535 = vunpack.c.l.b16 %v3782
      %v8536 = vunpack.c.l.b16 %v3783
      %v8537 = vunpack.c.l.b16 %v3784
      %v8538 = vunpack.c.l.b16 %v3785
      %v8539 = vunpack.c.l.b16 %v3786
      %v8540 = vunpack.c.l.b16 %v3787
      %v8541 = vunpack.c.l.b16 %v3788
      %v8542 = vunpack.c.l.b16 %v3789
      %v8543 = vunpack.c.l.b16 %v3790
      %v8544 = vunpack.c.l.b16 %v3791
      %v8545 = vunpack.c.l.b16 %v3792
      %v8546 = vunpack.c.l.b16 %v3793
      %v8547 = vunpack.c.l.b16 %v3794
      %v8548 = vunpack.c.l.b16 %v3795
      %v8549 = vunpack.c.l.b16 %v3796
      %v8550 = vunpack.c.l.b16 %v3797
      %v8551 = vunpack.c.l.b16 %v3798
      %v8552 = vunpack.c.l.b16 %v3799
      %v8553 = vunpack.c.l.b16 %v3800
      %v8554 = vunpack.c.l.b16 %v3801
      %v8555 = vunpack.c.l.b16 %v3802
      %v8556 = vunpack.c.l.b16 %v3803
      %v8557 = vunpack.c.l.b16 %v3804
      %v8558 = vunpack.c.l.b16 %v3805
      %v8559 = vunpack.c.l.b16 %v3806
      %v8560 = vunpack.c.l.b16 %v3807
      %v8561 = vunpack.c.l.b16 %v3808
      %v8562 = vunpack.c.l.b16 %v3809
      %v8563 = vunpack.c.l.b16 %v3810
      %v8564 = vunpack.c.l.b16 %v3811
      %v8565 = vunpack.c.l.b16 %v3812
      %v8566 = vunpack.c.l.b16 %v3813
      %v8567 = vunpack.c.l.b16 %v3814
      %v8568 = vunpack.c.l.b16 %v3815
      %v8569 = vunpack.c.l.b16 %v3816
      %v8570 = vunpack.c.l.b16 %v3817
      %v8571 = vunpack.c.l.b16 %v3818
      %v8572 = vunpack.c.l.b16 %v3819
      %v8573 = vunpack.c.l.b16 %v3820
      %v8574 = vunpack.c.l.b16 %v3821
      %v8575 = vunpack.c.l.b16 %v3822
      %v8576 = vunpack.c.l.b16 %v3823
      %v8577 = vunpack.c.l.b16 %v3824
      %v8578 = vunpack.c.l.b16 %v3825
      %v8579 = vunpack.c.l.b16 %v3826
      %v8580 = vunpack.c.l.b16 %v3827
      %v8581 = vunpack.c.l.b16 %v3828
      %v8582 = vunpack.c.l.b16 %v3829
      %v8583 = vunpack.c.l.b16 %v3830
      %v8584 = vunpack.c.l.b16 %v3831
      %v8585 = vunpack.c.l.b16 %v3832
      %v8586 = vunpack.c.l.b16 %v3833
      %v8587 = vunpack.c.l.b16 %v3834
      %v8588 = vunpack.c.l.b16 %v3835
      %v8589 = vunpack.c.l.b16 %v3836
      %v8590 = vunpack.c.l.b16 %v3837
      %v8591 = vunpack.c.l.b16 %v3838
      %v8592 = vunpack.c.l.b16 %v3839
      %v8593 = vunpack.c.l.b16 %v3840
      %v8594 = vunpack.c.l.b16 %v3841
      %v8595 = vunpack.c.l.b16 %v3842
      %v8596 = vunpack.c.l.b16 %v3843
      %v8597 = vunpack.c.l.b16 %v3844
      %v8598 = vunpack.c.l.b16 %v3845
      %v8599 = vunpack.c.l.b16 %v3846
      %v8600 = vunpack.c.l.b16 %v3847
      %v8601 = vunpack.c.l.b16 %v3848
      %v8602 = vunpack.c.l.b16 %v3849
      %v8603 = vunpack.c.l.b16 %v3850
      %v8604 = vunpack.c.l.b16 %v3851
      %v8605 = vunpack.c.l.b16 %v3852
      %v8606 = vunpack.c.l.b16 %v3853
      %v8607 = vunpack.c.l.b16 %v3854
      %v8608 = vunpack.c.l.b16 %v3855
      %v8609 = vunpack.c.l.b16 %v3856
      %v8610 = vunpack.c.l.b16 %v3857
      %v8611 = vunpack.c.l.b16 %v3858
      %v8612 = vunpack.c.l.b16 %v3859
      %v8613 = vunpack.c.l.b16 %v3860
      %v8614 = vunpack.c.l.b16 %v3861
      %v8615 = vunpack.c.l.b16 %v3862
      %v8616 = vunpack.c.l.b16 %v3863
      %v8617 = vunpack.c.l.b16 %v3864
      %v8618 = vunpack.c.l.b16 %v3865
      %v8619 = vunpack.c.l.b16 %v3866
      %v8620 = vunpack.c.l.b16 %v3867
      %v8621 = vunpack.c.l.b16 %v3868
      %v8622 = vunpack.c.l.b16 %v3869
      %v8623 = vunpack.c.l.b16 %v3870
      %v8624 = vunpack.c.l.b16 %v3871
      %v8625 = vunpack.c.l.b16 %v3872
      %v8626 = vunpack.c.l.b16 %v3873
      %v8627 = vunpack.c.l.b16 %v3874
      %v8628 = vunpack.c.l.b16 %v3875
      %v8629 = vunpack.c.l.b16 %v3876
      %v8630 = vunpack.c.l.b16 %v3877
      %v8631 = vunpack.c.l.b16 %v3878
      %v8632 = vunpack.c.l.b16 %v3879
      %v8633 = vunpack.c.l.b16 %v3880
      %v8634 = vunpack.c.l.b16 %v3881
      %v8635 = vunpack.c.l.b16 %v3882
      %v8636 = vunpack.c.l.b16 %v3883
      %v8637 = vunpack.c.l.b16 %v3884
      %v8638 = vunpack.c.l.b16 %v3885
      %v8639 = vunpack.c.l.b16 %v3886
      %v8640 = vunpack.c.l.b16 %v3887
      %v8641 = vunpack.c.l.b16 %v3888
      %v8642 = vunpack.c.l.b16 %v3889
      %v8643 = vunpack.c.l.b16 %v3890
      %v8644 = vunpack.c.l.b16 %v3891
      %v8645 = vunpack.c.l.b16 %v3892
      %v8646 = vunpack.c.l.b16 %v3893
      %v8647 = vunpack.c.l.b16 %v3894
      %v8648 = vunpack.c.l.b16 %v3895
      %v8649 = vunpack.c.l.b16 %v3896
      %v8650 = vunpack.c.l.b16 %v3897
      %v8651 = vunpack.c.l.b16 %v3898
      %v8652 = vunpack.c.l.b16 %v3899
      %v8653 = vunpack.c.l.b16 %v3900
      %v8654 = vunpack.c.l.b16 %v3901
      %v8655 = vunpack.c.l.b16 %v3902
      %v8656 = vunpack.c.l.b16 %v3903
      %v8657 = vunpack.c.l.b16 %v3904
      %v8658 = vunpack.c.l.b16 %v3905
      %v8659 = vunpack.c.l.b16 %v3906
      %v8660 = vunpack.c.l.b16 %v3907
      %v8661 = vunpack.c.l.b16 %v3908
      %v8662 = vunpack.c.l.b16 %v3909
      %v8663 = vunpack.c.l.b16 %v3910
      %v8664 = vunpack.c.l.b16 %v3911
      %v8665 = vunpack.c.l.b16 %v3912
      %v8666 = vunpack.c.l.b16 %v3913
      %v8667 = vunpack.c.l.b16 %v3914
      %v8668 = vunpack.c.l.b16 %v3915
      %v8669 = vunpack.c.l.b16 %v3916
      %v8670 = vunpack.c.l.b16 %v3917
      %v8671 = vunpack.c.l.b16 %v3918
      %v8672 = vunpack.c.l.b16 %v3919
      %v8673 = vunpack.c.l.b16 %v3920
      %v8674 = vunpack.c.l.b16 %v3921
      %v8675 = vunpack.c.l.b16 %v3922
      %v8676 = vunpack.c.l.b16 %v3923
      %v8677 = vunpack.c.l.b16 %v3924
      %v8678 = vunpack.c.l.b16 %v3925
      %v8679 = vunpack.c.l.b16 %v3926
      %v8680 = vunpack.c.l.b16 %v3927
      %v8681 = vunpack.c.l.b16 %v3928
      %v8682 = vunpack.c.l.b16 %v3929
      %v8683 = vunpack.c.l.b16 %v3930
      %v8684 = vunpack.c.l.b16 %v3931
      %v8685 = vunpack.c.l.b16 %v3932
      %v8686 = vunpack.c.l.b16 %v3933
      %v8687 = vunpack.c.l.b16 %v3934
      %v8688 = vunpack.c.l.b16 %v3935
      %v8689 = vunpack.c.l.b16 %v3936
      %v8690 = vunpack.c.l.b16 %v3937
      %v8691 = vunpack.c.l.b16 %v3938
      %v8692 = vunpack.c.l.b16 %v3939
      %v8693 = vunpack.c.l.b16 %v3940
      %v8694 = vunpack.c.l.b16 %v3941
      %v8695 = vunpack.c.l.b16 %v3942
      %v8696 = vunpack.c.l.b16 %v3943
      %v8697 = vunpack.c.l.b16 %v3944
      %v8698 = vunpack.c.l.b16 %v3945
      %v8699 = vunpack.c.l.b16 %v3946
      %v8700 = vunpack.c.l.b16 %v3947
      %v8701 = vunpack.c.l.b16 %v3948
      %v8702 = vunpack.c.l.b16 %v3949
      %v8703 = vunpack.c.l.b16 %v3950
      %v8704 = vunpack.c.l.b16 %v3951
      %v8705 = vunpack.c.l.b16 %v3952
      %v8706 = vunpack.c.l.b16 %v3953
      %v8707 = vunpack.c.l.b16 %v3954
      %v8708 = vunpack.c.l.b16 %v3955
      %v8709 = vunpack.c.l.b16 %v3956
      %v8710 = vunpack.c.l.b16 %v3957
      %v8711 = vunpack.c.l.b16 %v3958
      %v8712 = vunpack.c.l.b16 %v3959
      %v8713 = vunpack.c.l.b16 %v3960
      %v8714 = vunpack.c.l.b16 %v3961
      %v8715 = vunpack.c.l.b16 %v3962
      %v8716 = vunpack.c.l.b16 %v3963
      %v8717 = vunpack.c.l.b16 %v3964
      %v8718 = vunpack.c.l.b16 %v3965
      %v8719 = vunpack.c.l.b16 %v3966
      %v8720 = vunpack.c.l.b16 %v3967
      %v8721 = vunpack.c.l.b16 %v3968
      %v8722 = vunpack.c.l.b16 %v3969
      %v8723 = vunpack.c.l.b16 %v3970
      %v8724 = vunpack.c.l.b16 %v3971
      %v8725 = vunpack.c.l.b16 %v3972
      %v8726 = vunpack.c.l.b16 %v3973
      %v8727 = vunpack.c.l.b16 %v3974
      %v8728 = vunpack.c.l.b16 %v3975
      %v8729 = vunpack.c.l.b16 %v3976
      %v8730 = vunpack.c.l.b16 %v3977
      %v8731 = vunpack.c.l.b16 %v3978
      %v8732 = vunpack.c.l.b16 %v3979
      %v8733 = vunpack.c.l.b16 %v3980
      %v8734 = vunpack.c.l.b16 %v3981
      %v8735 = vunpack.c.l.b16 %v3982
      %v8736 = vunpack.c.l.b16 %v3983
      %v8737 = vunpack.c.l.b16 %v3984
      %v8738 = vunpack.c.l.b16 %v3985
      %v8739 = vunpack.c.l.b16 %v3986
      %v8740 = vunpack.c.l.b16 %v3987
      %v8741 = vunpack.c.l.b16 %v3988
      %v8742 = vunpack.c.l.b16 %v3989
      %v8743 = vunpack.c.l.b16 %v3990
      %v8744 = vunpack.c.l.b16 %v3991
      %v8745 = vunpack.c.l.b16 %v3992
      %v8746 = vunpack.c.l.b16 %v3993
      %v8747 = vunpack.c.l.b16 %v3994
      %v8748 = vunpack.c.l.b16 %v3995
      %v8749 = vunpack.c.l.b16 %v3996
      %v8750 = vunpack.c.l.b16 %v3997
      %v8751 = vunpack.c.l.b16 %v3998
      %v8752 = vunpack.c.l.b16 %v3999
      %v8753 = vunpack.c.l.b16 %v4000
      %v8754 = vunpack.c.l.b16 %v4001
      %v8755 = vunpack.c.l.b16 %v4002
      %v8756 = vunpack.c.l.b16 %v4003
      %v8757 = vunpack.c.l.b16 %v4004
      %v8758 = vunpack.c.l.b16 %v4005
      %v8759 = vunpack.c.l.b16 %v4006
      %v8760 = vunpack.c.l.b16 %v4007
      %v8761 = vunpack.c.l.b16 %v4008
      %v8762 = vunpack.c.l.b16 %v4009
      %v8763 = vunpack.c.l.b16 %v4010
      %v8764 = vunpack.c.l.b16 %v4011
      %v8765 = vunpack.c.l.b16 %v4012
      %v8766 = vunpack.c.l.b16 %v4013
      %v8767 = vunpack.c.l.b16 %v4014
      %v8768 = vunpack.c.l.b16 %v4015
      %v8769 = vunpack.c.l.b16 %v4016
      %v8770 = vunpack.c.l.b16 %v4017
      %v8771 = vunpack.c.l.b16 %v4018
      %v8772 = vunpack.c.l.b16 %v4019
      %v8773 = vunpack.c.l.b16 %v4020
      %v8774 = vunpack.c.l.b16 %v4021
      %v8775 = vunpack.c.l.b16 %v4022
      %v8776 = vunpack.c.l.b16 %v4023
      %v8777 = vunpack.c.l.b16 %v4024
      %v8778 = vunpack.c.l.b16 %v4025
      %v8779 = vunpack.c.l.b16 %v4026
      %v8780 = vunpack.c.l.b16 %v4027
      %v8781 = vunpack.c.l.b16 %v4028
      %v8782 = vunpack.c.l.b16 %v4029
      %v8783 = vunpack.c.l.b16 %v4030
      %v8784 = vunpack.c.l.b16 %v4031
      %v8785 = vunpack.c.l.b16 %v4032
      %v8786 = vunpack.c.l.b16 %v4033
      %v8787 = vunpack.c.l.b16 %v4034
      %v8788 = vunpack.c.l.b16 %v4035
      %v8789 = vunpack.c.l.b16 %v4036
      %v8790 = vunpack.c.l.b16 %v4037
      %v8791 = vunpack.c.l.b16 %v4038
      %v8792 = vunpack.c.l.b16 %v4039
      %v8793 = vunpack.c.l.b16 %v4040
      %v8794 = vunpack.c.l.b16 %v4041
      %v8795 = vunpack.c.l.b16 %v4042
      %v8796 = vunpack.c.l.b16 %v4043
      %v8797 = vunpack.c.l.b16 %v4044
      %v8798 = vunpack.c.l.b16 %v4045
      %v8799 = vunpack.c.l.b16 %v4046
      %v8800 = vunpack.c.l.b16 %v4047
      %v8801 = vunpack.c.l.b16 %v4048
      %v8802 = vunpack.c.l.b16 %v4049
      %v8803 = vunpack.c.l.b16 %v4050
      %v8804 = vunpack.c.l.b16 %v4051
      %v8805 = vunpack.c.l.b16 %v4052
      %v8806 = vunpack.c.l.b16 %v4053
      %v8807 = vunpack.c.l.b16 %v4054
      %v8808 = vunpack.c.l.b16 %v4055
      %v8809 = vunpack.c.l.b16 %v4056
      %v8810 = vunpack.c.l.b16 %v4057
      %v8811 = vunpack.c.l.b16 %v4058
      %v8812 = vunpack.c.l.b16 %v4059
      %v8813 = vunpack.c.l.b16 %v4060
      %v8814 = vunpack.c.l.b16 %v4061
      %v8815 = vunpack.c.l.b16 %v4062
      %v8816 = vunpack.c.l.b16 %v4063
      %v8817 = vunpack.c.l.b16 %v4064
      %v8818 = vunpack.c.l.b16 %v4065
      %v8819 = vunpack.c.l.b16 %v4066
      %v8820 = vunpack.c.l.b16 %v4067
      %v8821 = vunpack.c.l.b16 %v4068
      %v8822 = vunpack.c.l.b16 %v4069
      %v8823 = vunpack.c.l.b16 %v4070
      %v8824 = vunpack.c.l.b16 %v4071
      %v8825 = vunpack.c.l.b16 %v4072
      %v8826 = vunpack.c.l.b16 %v4073
      %v8827 = vpack.c.b16 %v6780, %v6779
      %v8828 = vpack.c.b16 %v6782, %v6781
      %v8829 = vpack.c.b16 %v6784, %v6783
      %v8830 = vpack.c.b16 %v6786, %v6785
      %v8831 = vpack.c.b16 %v6788, %v6787
      %v8832 = vpack.c.b16 %v6790, %v6789
      %v8833 = vpack.c.b16 %v6792, %v6791
      %v8834 = vpack.c.b16 %v6794, %v6793
      %v8835 = vpack.c.b16 %v6796, %v6795
      %v8836 = vpack.c.b16 %v6798, %v6797
      %v8837 = vpack.c.b16 %v6800, %v6799
      %v8838 = vpack.c.b16 %v6802, %v6801
      %v8839 = vpack.c.b16 %v6804, %v6803
      %v8840 = vpack.c.b16 %v6806, %v6805
      %v8841 = vpack.c.b16 %v6808, %v6807
      %v8842 = vpack.c.b16 %v6810, %v6809
      %v8843 = vpack.c.b16 %v6812, %v6811
      %v8844 = vpack.c.b16 %v6814, %v6813
      %v8845 = vpack.c.b16 %v6816, %v6815
      %v8846 = vpack.c.b16 %v6818, %v6817
      %v8847 = vpack.c.b16 %v6820, %v6819
      %v8848 = vpack.c.b16 %v6822, %v6821
      %v8849 = vpack.c.b16 %v6824, %v6823
      %v8850 = vpack.c.b16 %v6826, %v6825
      %v8851 = vpack.c.b16 %v6828, %v6827
      %v8852 = vpack.c.b16 %v6830, %v6829
      %v8853 = vpack.c.b16 %v6832, %v6831
      %v8854 = vpack.c.b16 %v6834, %v6833
      %v8855 = vpack.c.b16 %v6836, %v6835
      %v8856 = vpack.c.b16 %v6838, %v6837
      %v8857 = vpack.c.b16 %v6840, %v6839
      %v8858 = vpack.c.b16 %v6842, %v6841
      %v8859 = vpack.c.b16 %v6844, %v6843
      %v8860 = vpack.c.b16 %v6846, %v6845
      %v8861 = vpack.c.b16 %v6848, %v6847
      %v8862 = vpack.c.b16 %v6850, %v6849
      %v8863 = vpack.c.b16 %v6852, %v6851
      %v8864 = vpack.c.b16 %v6854, %v6853
      %v8865 = vpack.c.b16 %v6856, %v6855
      %v8866 = vpack.c.b16 %v6858, %v6857
      %v8867 = vpack.c.b16 %v6860, %v6859
      %v8868 = vpack.c.b16 %v6862, %v6861
      %v8869 = vpack.c.b16 %v6864, %v6863
      %v8870 = vpack.c.b16 %v6866, %v6865
      %v8871 = vpack.c.b16 %v6868, %v6867
      %v8872 = vpack.c.b16 %v6870, %v6869
      %v8873 = vpack.c.b16 %v6872, %v6871
      %v8874 = vpack.c.b16 %v6874, %v6873
      %v8875 = vpack.c.b16 %v6876, %v6875
      %v8876 = vpack.c.b16 %v6878, %v6877
      %v8877 = vpack.c.b16 %v6880, %v6879
      %v8878 = vpack.c.b16 %v6882, %v6881
      %v8879 = vpack.c.b16 %v6884, %v6883
      %v8880 = vpack.c.b16 %v6886, %v6885
      %v8881 = vpack.c.b16 %v6888, %v6887
      %v8882 = vpack.c.b16 %v6890, %v6889
      %v8883 = vpack.c.b16 %v6892, %v6891
      %v8884 = vpack.c.b16 %v6894, %v6893
      %v8885 = vpack.c.b16 %v6896, %v6895
      %v8886 = vpack.c.b16 %v6898, %v6897
      %v8887 = vpack.c.b16 %v6900, %v6899
      %v8888 = vpack.c.b16 %v6902, %v6901
      %v8889 = vpack.c.b16 %v6904, %v6903
      %v8890 = vpack.c.b16 %v6906, %v6905
      %v8891 = vpack.c.b16 %v6908, %v6907
      %v8892 = vpack.c.b16 %v6910, %v6909
      %v8893 = vpack.c.b16 %v6912, %v6911
      %v8894 = vpack.c.b16 %v6914, %v6913
      %v8895 = vpack.c.b16 %v6916, %v6915
      %v8896 = vpack.c.b16 %v6918, %v6917
      %v8897 = vpack.c.b16 %v6920, %v6919
      %v8898 = vpack.c.b16 %v6922, %v6921
      %v8899 = vpack.c.b16 %v6924, %v6923
      %v8900 = vpack.c.b16 %v6926, %v6925
      %v8901 = vpack.c.b16 %v6928, %v6927
      %v8902 = vpack.c.b16 %v6930, %v6929
      %v8903 = vpack.c.b16 %v6932, %v6931
      %v8904 = vpack.c.b16 %v6934, %v6933
      %v8905 = vpack.c.b16 %v6936, %v6935
      %v8906 = vpack.c.b16 %v6938, %v6937
      %v8907 = vpack.c.b16 %v6940, %v6939
      %v8908 = vpack.c.b16 %v6942, %v6941
      %v8909 = vpack.c.b16 %v6944, %v6943
      %v8910 = vpack.c.b16 %v6946, %v6945
      %v8911 = vpack.c.b16 %v6948, %v6947
      %v8912 = vpack.c.b16 %v6950, %v6949
      %v8913 = vpack.c.b16 %v6952, %v6951
      %v8914 = vpack.c.b16 %v6954, %v6953
      %v8915 = vpack.c.b16 %v6956, %v6955
      %v8916 = vpack.c.b16 %v6958, %v6957
      %v8917 = vpack.c.b16 %v6960, %v6959
      %v8918 = vpack.c.b16 %v6962, %v6961
      %v8919 = vpack.c.b16 %v6964, %v6963
      %v8920 = vpack.c.b16 %v6966, %v6965
      %v8921 = vpack.c.b16 %v6968, %v6967
      %v8922 = vpack.c.b16 %v6970, %v6969
      %v8923 = vpack.c.b16 %v6972, %v6971
      %v8924 = vpack.c.b16 %v6974, %v6973
      %v8925 = vpack.c.b16 %v6976, %v6975
      %v8926 = vpack.c.b16 %v6978, %v6977
      %v8927 = vpack.c.b16 %v6980, %v6979
      %v8928 = vpack.c.b16 %v6982, %v6981
      %v8929 = vpack.c.b16 %v6984, %v6983
      %v8930 = vpack.c.b16 %v6986, %v6985
      %v8931 = vpack.c.b16 %v6988, %v6987
      %v8932 = vpack.c.b16 %v6990, %v6989
      %v8933 = vpack.c.b16 %v6992, %v6991
      %v8934 = vpack.c.b16 %v6994, %v6993
      %v8935 = vpack.c.b16 %v6996, %v6995
      %v8936 = vpack.c.b16 %v6998, %v6997
      %v8937 = vpack.c.b16 %v7000, %v6999
      %v8938 = vpack.c.b16 %v7002, %v7001
      %v8939 = vpack.c.b16 %v7004, %v7003
      %v8940 = vpack.c.b16 %v7006, %v7005
      %v8941 = vpack.c.b16 %v7008, %v7007
      %v8942 = vpack.c.b16 %v7010, %v7009
      %v8943 = vpack.c.b16 %v7012, %v7011
      %v8944 = vpack.c.b16 %v7014, %v7013
      %v8945 = vpack.c.b16 %v7016, %v7015
      %v8946 = vpack.c.b16 %v7018, %v7017
      %v8947 = vpack.c.b16 %v7020, %v7019
      %v8948 = vpack.c.b16 %v7022, %v7021
      %v8949 = vpack.c.b16 %v7024, %v7023
      %v8950 = vpack.c.b16 %v7026, %v7025
      %v8951 = vpack.c.b16 %v7028, %v7027
      %v8952 = vpack.c.b16 %v7030, %v7029
      %v8953 = vpack.c.b16 %v7032, %v7031
      %v8954 = vpack.c.b16 %v7034, %v7033
      %v8955 = vpack.c.b16 %v7036, %v7035
      %v8956 = vpack.c.b16 %v7038, %v7037
      %v8957 = vpack.c.b16 %v7040, %v7039
      %v8958 = vpack.c.b16 %v7042, %v7041
      %v8959 = vpack.c.b16 %v7044, %v7043
      %v8960 = vpack.c.b16 %v7046, %v7045
      %v8961 = vpack.c.b16 %v7048, %v7047
      %v8962 = vpack.c.b16 %v7050, %v7049
      %v8963 = vpack.c.b16 %v7052, %v7051
      %v8964 = vpack.c.b16 %v7054, %v7053
      %v8965 = vpack.c.b16 %v7056, %v7055
      %v8966 = vpack.c.b16 %v7058, %v7057
      %v8967 = vpack.c.b16 %v7060, %v7059
      %v8968 = vpack.c.b16 %v7062, %v7061
      %v8969 = vpack.c.b16 %v7064, %v7063
      %v8970 = vpack.c.b16 %v7066, %v7065
      %v8971 = vpack.c.b16 %v7068, %v7067
      %v8972 = vpack.c.b16 %v7070, %v7069
      %v8973 = vpack.c.b16 %v7072, %v7071
      %v8974 = vpack.c.b16 %v7074, %v7073
      %v8975 = vpack.c.b16 %v7076, %v7075
      %v8976 = vpack.c.b16 %v7078, %v7077
      %v8977 = vpack.c.b16 %v7080, %v7079
      %v8978 = vpack.c.b16 %v7082, %v7081
      %v8979 = vpack.c.b16 %v7084, %v7083
      %v8980 = vpack.c.b16 %v7086, %v7085
      %v8981 = vpack.c.b16 %v7088, %v7087
      %v8982 = vpack.c.b16 %v7090, %v7089
      %v8983 = vpack.c.b16 %v7092, %v7091
      %v8984 = vpack.c.b16 %v7094, %v7093
      %v8985 = vpack.c.b16 %v7096, %v7095
      %v8986 = vpack.c.b16 %v7098, %v7097
      %v8987 = vpack.c.b16 %v7100, %v7099
      %v8988 = vpack.c.b16 %v7102, %v7101
      %v8989 = vpack.c.b16 %v7104, %v7103
      %v8990 = vpack.c.b16 %v7106, %v7105
      %v8991 = vpack.c.b16 %v7108, %v7107
      %v8992 = vpack.c.b16 %v7110, %v7109
      %v8993 = vpack.c.b16 %v7112, %v7111
      %v8994 = vpack.c.b16 %v7114, %v7113
      %v8995 = vpack.c.b16 %v7116, %v7115
      %v8996 = vpack.c.b16 %v7118, %v7117
      %v8997 = vpack.c.b16 %v7120, %v7119
      %v8998 = vpack.c.b16 %v7122, %v7121
      %v8999 = vpack.c.b16 %v7124, %v7123
      %v9000 = vpack.c.b16 %v7126, %v7125
      %v9001 = vpack.c.b16 %v7128, %v7127
      %v9002 = vpack.c.b16 %v7130, %v7129
      %v9003 = vpack.c.b16 %v7132, %v7131
      %v9004 = vpack.c.b16 %v7134, %v7133
      %v9005 = vpack.c.b16 %v7136, %v7135
      %v9006 = vpack.c.b16 %v7138, %v7137
      %v9007 = vpack.c.b16 %v7140, %v7139
      %v9008 = vpack.c.b16 %v7142, %v7141
      %v9009 = vpack.c.b16 %v7144, %v7143
      %v9010 = vpack.c.b16 %v7146, %v7145
      %v9011 = vpack.c.b16 %v7148, %v7147
      %v9012 = vpack.c.b16 %v7150, %v7149
      %v9013 = vpack.c.b16 %v7152, %v7151
      %v9014 = vpack.c.b16 %v7154, %v7153
      %v9015 = vpack.c.b16 %v7156, %v7155
      %v9016 = vpack.c.b16 %v7158, %v7157
      %v9017 = vpack.c.b16 %v7160, %v7159
      %v9018 = vpack.c.b16 %v7162, %v7161
      %v9019 = vpack.c.b16 %v7164, %v7163
      %v9020 = vpack.c.b16 %v7166, %v7165
      %v9021 = vpack.c.b16 %v7168, %v7167
      %v9022 = vpack.c.b16 %v7170, %v7169
      %v9023 = vpack.c.b16 %v7172, %v7171
      %v9024 = vpack.c.b16 %v7174, %v7173
      %v9025 = vpack.c.b16 %v7176, %v7175
      %v9026 = vpack.c.b16 %v7178, %v7177
      %v9027 = vpack.c.b16 %v7180, %v7179
      %v9028 = vpack.c.b16 %v7182, %v7181
      %v9029 = vpack.c.b16 %v7184, %v7183
      %v9030 = vpack.c.b16 %v7186, %v7185
      %v9031 = vpack.c.b16 %v7188, %v7187
      %v9032 = vpack.c.b16 %v7190, %v7189
      %v9033 = vpack.c.b16 %v7192, %v7191
      %v9034 = vpack.c.b16 %v7194, %v7193
      %v9035 = vpack.c.b16 %v7196, %v7195
      %v9036 = vpack.c.b16 %v7198, %v7197
      %v9037 = vpack.c.b16 %v7200, %v7199
      %v9038 = vpack.c.b16 %v7202, %v7201
      %v9039 = vpack.c.b16 %v7204, %v7203
      %v9040 = vpack.c.b16 %v7206, %v7205
      %v9041 = vpack.c.b16 %v7208, %v7207
      %v9042 = vpack.c.b16 %v7210, %v7209
      %v9043 = vpack.c.b16 %v7212, %v7211
      %v9044 = vpack.c.b16 %v7214, %v7213
      %v9045 = vpack.c.b16 %v7216, %v7215
      %v9046 = vpack.c.b16 %v7218, %v7217
      %v9047 = vpack.c.b16 %v7220, %v7219
      %v9048 = vpack.c.b16 %v7222, %v7221
      %v9049 = vpack.c.b16 %v7224, %v7223
      %v9050 = vpack.c.b16 %v7226, %v7225
      %v9051 = vpack.c.b16 %v7228, %v7227
      %v9052 = vpack.c.b16 %v7230, %v7229
      %v9053 = vpack.c.b16 %v7232, %v7231
      %v9054 = vpack.c.b16 %v7234, %v7233
      %v9055 = vpack.c.b16 %v7236, %v7235
      %v9056 = vpack.c.b16 %v7238, %v7237
      %v9057 = vpack.c.b16 %v7240, %v7239
      %v9058 = vpack.c.b16 %v7242, %v7241
      %v9059 = vpack.c.b16 %v7244, %v7243
      %v9060 = vpack.c.b16 %v7246, %v7245
      %v9061 = vpack.c.b16 %v7248, %v7247
      %v9062 = vpack.c.b16 %v7250, %v7249
      %v9063 = vpack.c.b16 %v7252, %v7251
      %v9064 = vpack.c.b16 %v7254, %v7253
      %v9065 = vpack.c.b16 %v7256, %v7255
      %v9066 = vpack.c.b16 %v7258, %v7257
      %v9067 = vpack.c.b16 %v7260, %v7259
      %v9068 = vpack.c.b16 %v7262, %v7261
      %v9069 = vpack.c.b16 %v7264, %v7263
      %v9070 = vpack.c.b16 %v7266, %v7265
      %v9071 = vpack.c.b16 %v7268, %v7267
      %v9072 = vpack.c.b16 %v7270, %v7269
      %v9073 = vpack.c.b16 %v7272, %v7271
      %v9074 = vpack.c.b16 %v7274, %v7273
      %v9075 = vpack.c.b16 %v7276, %v7275
      %v9076 = vpack.c.b16 %v7278, %v7277
      %v9077 = vpack.c.b16 %v7280, %v7279
      %v9078 = vpack.c.b16 %v7282, %v7281
      %v9079 = vpack.c.b16 %v7284, %v7283
      %v9080 = vpack.c.b16 %v7286, %v7285
      %v9081 = vpack.c.b16 %v7288, %v7287
      %v9082 = vpack.c.b16 %v7290, %v7289
      %v9083 = vpack.c.b16 %v7292, %v7291
      %v9084 = vpack.c.b16 %v7294, %v7293
      %v9085 = vpack.c.b16 %v7296, %v7295
      %v9086 = vpack.c.b16 %v7298, %v7297
      %v9087 = vpack.c.b16 %v7300, %v7299
      %v9088 = vpack.c.b16 %v7302, %v7301
      %v9089 = vpack.c.b16 %v7304, %v7303
      %v9090 = vpack.c.b16 %v7306, %v7305
      %v9091 = vpack.c.b16 %v7308, %v7307
      %v9092 = vpack.c.b16 %v7310, %v7309
      %v9093 = vpack.c.b16 %v7312, %v7311
      %v9094 = vpack.c.b16 %v7314, %v7313
      %v9095 = vpack.c.b16 %v7316, %v7315
      %v9096 = vpack.c.b16 %v7318, %v7317
      %v9097 = vpack.c.b16 %v7320, %v7319
      %v9098 = vpack.c.b16 %v7322, %v7321
      %v9099 = vpack.c.b16 %v7324, %v7323
      %v9100 = vpack.c.b16 %v7326, %v7325
      %v9101 = vpack.c.b16 %v7328, %v7327
      %v9102 = vpack.c.b16 %v7330, %v7329
      %v9103 = vpack.c.b16 %v7332, %v7331
      %v9104 = vpack.c.b16 %v7334, %v7333
      %v9105 = vpack.c.b16 %v7336, %v7335
      %v9106 = vpack.c.b16 %v7338, %v7337
      %v9107 = vpack.c.b16 %v7340, %v7339
      %v9108 = vpack.c.b16 %v7342, %v7341
      %v9109 = vpack.c.b16 %v7344, %v7343
      %v9110 = vpack.c.b16 %v7346, %v7345
      %v9111 = vpack.c.b16 %v7348, %v7347
      %v9112 = vpack.c.b16 %v7350, %v7349
      %v9113 = vpack.c.b16 %v7352, %v7351
      %v9114 = vpack.c.b16 %v7354, %v7353
      %v9115 = vpack.c.b16 %v7356, %v7355
      %v9116 = vpack.c.b16 %v7358, %v7357
      %v9117 = vpack.c.b16 %v7360, %v7359
      %v9118 = vpack.c.b16 %v7362, %v7361
      %v9119 = vpack.c.b16 %v7364, %v7363
      %v9120 = vpack.c.b16 %v7366, %v7365
      %v9121 = vpack.c.b16 %v7368, %v7367
      %v9122 = vpack.c.b16 %v7370, %v7369
      %v9123 = vpack.c.b16 %v7372, %v7371
      %v9124 = vpack.c.b16 %v7374, %v7373
      %v9125 = vpack.c.b16 %v7376, %v7375
      %v9126 = vpack.c.b16 %v7378, %v7377
      %v9127 = vpack.c.b16 %v7380, %v7379
      %v9128 = vpack.c.b16 %v7382, %v7381
      %v9129 = vpack.c.b16 %v7384, %v7383
      %v9130 = vpack.c.b16 %v7386, %v7385
      %v9131 = vpack.c.b16 %v7388, %v7387
      %v9132 = vpack.c.b16 %v7390, %v7389
      %v9133 = vpack.c.b16 %v7392, %v7391
      %v9134 = vpack.c.b16 %v7394, %v7393
      %v9135 = vpack.c.b16 %v7396, %v7395
      %v9136 = vpack.c.b16 %v7398, %v7397
      %v9137 = vpack.c.b16 %v7400, %v7399
      %v9138 = vpack.c.b16 %v7402, %v7401
      %v9139 = vpack.c.b16 %v7404, %v7403
      %v9140 = vpack.c.b16 %v7406, %v7405
      %v9141 = vpack.c.b16 %v7408, %v7407
      %v9142 = vpack.c.b16 %v7410, %v7409
      %v9143 = vpack.c.b16 %v7412, %v7411
      %v9144 = vpack.c.b16 %v7414, %v7413
      %v9145 = vpack.c.b16 %v7416, %v7415
      %v9146 = vpack.c.b16 %v7418, %v7417
      %v9147 = vpack.c.b16 %v7420, %v7419
      %v9148 = vpack.c.b16 %v7422, %v7421
      %v9149 = vpack.c.b16 %v7424, %v7423
      %v9150 = vpack.c.b16 %v7426, %v7425
      %v9151 = vpack.c.b16 %v7428, %v7427
      %v9152 = vpack.c.b16 %v7430, %v7429
      %v9153 = vpack.c.b16 %v7432, %v7431
      %v9154 = vpack.c.b16 %v7434, %v7433
      %v9155 = vpack.c.b16 %v7436, %v7435
      %v9156 = vpack.c.b16 %v7438, %v7437
      %v9157 = vpack.c.b16 %v7440, %v7439
      %v9158 = vpack.c.b16 %v7442, %v7441
      %v9159 = vpack.c.b16 %v7444, %v7443
      %v9160 = vpack.c.b16 %v7446, %v7445
      %v9161 = vpack.c.b16 %v7448, %v7447
      %v9162 = vpack.c.b16 %v7450, %v7449
      %v9163 = vpack.c.b16 %v7452, %v7451
      %v9164 = vpack.c.b16 %v7454, %v7453
      %v9165 = vpack.c.b16 %v7456, %v7455
      %v9166 = vpack.c.b16 %v7458, %v7457
      %v9167 = vpack.c.b16 %v7460, %v7459
      %v9168 = vpack.c.b16 %v7462, %v7461
      %v9169 = vpack.c.b16 %v7464, %v7463
      %v9170 = vpack.c.b16 %v7466, %v7465
      %v9171 = vpack.c.b16 %v7468, %v7467
      %v9172 = vpack.c.b16 %v7470, %v7469
      %v9173 = vpack.c.b16 %v7472, %v7471
      %v9174 = vpack.c.b16 %v7474, %v7473
      %v9175 = vpack.c.b16 %v7476, %v7475
      %v9176 = vpack.c.b16 %v7478, %v7477
      %v9177 = vpack.c.b16 %v7480, %v7479
      %v9178 = vpack.c.b16 %v7482, %v7481
      %v9179 = vpack.c.b16 %v7484, %v7483
      %v9180 = vpack.c.b16 %v7486, %v7485
      %v9181 = vpack.c.b16 %v7488, %v7487
      %v9182 = vpack.c.b16 %v7490, %v7489
      %v9183 = vpack.c.b16 %v7492, %v7491
      %v9184 = vpack.c.b16 %v7494, %v7493
      %v9185 = vpack.c.b16 %v7496, %v7495
      %v9186 = vpack.c.b16 %v7498, %v7497
      %v9187 = vpack.c.b16 %v7500, %v7499
      %v9188 = vpack.c.b16 %v7502, %v7501
      %v9189 = vpack.c.b16 %v7504, %v7503
      %v9190 = vpack.c.b16 %v7506, %v7505
      %v9191 = vpack.c.b16 %v7508, %v7507
      %v9192 = vpack.c.b16 %v7510, %v7509
      %v9193 = vpack.c.b16 %v7512, %v7511
      %v9194 = vpack.c.b16 %v7514, %v7513
      %v9195 = vpack.c.b16 %v7516, %v7515
      %v9196 = vpack.c.b16 %v7518, %v7517
      %v9197 = vpack.c.b16 %v7520, %v7519
      %v9198 = vpack.c.b16 %v7522, %v7521
      %v9199 = vpack.c.b16 %v7524, %v7523
      %v9200 = vpack.c.b16 %v7526, %v7525
      %v9201 = vpack.c.b16 %v7528, %v7527
      %v9202 = vpack.c.b16 %v7530, %v7529
      %v9203 = vpack.c.b16 %v7532, %v7531
      %v9204 = vpack.c.b16 %v7534, %v7533
      %v9205 = vpack.c.b16 %v7536, %v7535
      %v9206 = vpack.c.b16 %v7538, %v7537
      %v9207 = vpack.c.b16 %v7540, %v7539
      %v9208 = vpack.c.b16 %v7542, %v7541
      %v9209 = vpack.c.b16 %v7544, %v7543
      %v9210 = vpack.c.b16 %v7546, %v7545
      %v9211 = vpack.c.b16 %v7548, %v7547
      %v9212 = vpack.c.b16 %v7550, %v7549
      %v9213 = vpack.c.b16 %v7552, %v7551
      %v9214 = vpack.c.b16 %v7554, %v7553
      %v9215 = vpack.c.b16 %v7556, %v7555
      %v9216 = vpack.c.b16 %v7558, %v7557
      %v9217 = vpack.c.b16 %v7560, %v7559
      %v9218 = vpack.c.b16 %v7562, %v7561
      %v9219 = vpack.c.b16 %v7564, %v7563
      %v9220 = vpack.c.b16 %v7566, %v7565
      %v9221 = vpack.c.b16 %v7568, %v7567
      %v9222 = vpack.c.b16 %v7570, %v7569
      %v9223 = vpack.c.b16 %v7572, %v7571
      %v9224 = vpack.c.b16 %v7574, %v7573
      %v9225 = vpack.c.b16 %v7576, %v7575
      %v9226 = vpack.c.b16 %v7578, %v7577
      %v9227 = vpack.c.b16 %v7580, %v7579
      %v9228 = vpack.c.b16 %v7582, %v7581
      %v9229 = vpack.c.b16 %v7584, %v7583
      %v9230 = vpack.c.b16 %v7586, %v7585
      %v9231 = vpack.c.b16 %v7588, %v7587
      %v9232 = vpack.c.b16 %v7590, %v7589
      %v9233 = vpack.c.b16 %v7592, %v7591
      %v9234 = vpack.c.b16 %v7594, %v7593
      %v9235 = vpack.c.b16 %v7596, %v7595
      %v9236 = vpack.c.b16 %v7598, %v7597
      %v9237 = vpack.c.b16 %v7600, %v7599
      %v9238 = vpack.c.b16 %v7602, %v7601
      %v9239 = vpack.c.b16 %v7604, %v7603
      %v9240 = vpack.c.b16 %v7606, %v7605
      %v9241 = vpack.c.b16 %v7608, %v7607
      %v9242 = vpack.c.b16 %v7610, %v7609
      %v9243 = vpack.c.b16 %v7612, %v7611
      %v9244 = vpack.c.b16 %v7614, %v7613
      %v9245 = vpack.c.b16 %v7616, %v7615
      %v9246 = vpack.c.b16 %v7618, %v7617
      %v9247 = vpack.c.b16 %v7620, %v7619
      %v9248 = vpack.c.b16 %v7622, %v7621
      %v9249 = vpack.c.b16 %v7624, %v7623
      %v9250 = vpack.c.b16 %v7626, %v7625
      %v9251 = vpack.c.b16 %v7628, %v7627
      %v9252 = vpack.c.b16 %v7630, %v7629
      %v9253 = vpack.c.b16 %v7632, %v7631
      %v9254 = vpack.c.b16 %v7634, %v7633
      %v9255 = vpack.c.b16 %v7636, %v7635
      %v9256 = vpack.c.b16 %v7638, %v7637
      %v9257 = vpack.c.b16 %v7640, %v7639
      %v9258 = vpack.c.b16 %v7642, %v7641
      %v9259 = vpack.c.b16 %v7644, %v7643
      %v9260 = vpack.c.b16 %v7646, %v7645
      %v9261 = vpack.c.b16 %v7648, %v7647
      %v9262 = vpack.c.b16 %v7650, %v7649
      %v9263 = vpack.c.b16 %v7652, %v7651
      %v9264 = vpack.c.b16 %v7654, %v7653
      %v9265 = vpack.c.b16 %v7656, %v7655
      %v9266 = vpack.c.b16 %v7658, %v7657
      %v9267 = vpack.c.b16 %v7660, %v7659
      %v9268 = vpack.c.b16 %v7662, %v7661
      %v9269 = vpack.c.b16 %v7664, %v7663
      %v9270 = vpack.c.b16 %v7666, %v7665
      %v9271 = vpack.c.b16 %v7668, %v7667
      %v9272 = vpack.c.b16 %v7670, %v7669
      %v9273 = vpack.c.b16 %v7672, %v7671
      %v9274 = vpack.c.b16 %v7674, %v7673
      %v9275 = vpack.c.b16 %v7676, %v7675
      %v9276 = vpack.c.b16 %v7678, %v7677
      %v9277 = vpack.c.b16 %v7680, %v7679
      %v9278 = vpack.c.b16 %v7682, %v7681
      %v9279 = vpack.c.b16 %v7684, %v7683
      %v9280 = vpack.c.b16 %v7686, %v7685
      %v9281 = vpack.c.b16 %v7688, %v7687
      %v9282 = vpack.c.b16 %v7690, %v7689
      %v9283 = vpack.c.b16 %v7692, %v7691
      %v9284 = vpack.c.b16 %v7694, %v7693
      %v9285 = vpack.c.b16 %v7696, %v7695
      %v9286 = vpack.c.b16 %v7698, %v7697
      %v9287 = vpack.c.b16 %v7700, %v7699
      %v9288 = vpack.c.b16 %v7702, %v7701
      %v9289 = vpack.c.b16 %v7704, %v7703
      %v9290 = vpack.c.b16 %v7706, %v7705
      %v9291 = vpack.c.b16 %v7708, %v7707
      %v9292 = vpack.c.b16 %v7710, %v7709
      %v9293 = vpack.c.b16 %v7712, %v7711
      %v9294 = vpack.c.b16 %v7714, %v7713
      %v9295 = vpack.c.b16 %v7716, %v7715
      %v9296 = vpack.c.b16 %v7718, %v7717
      %v9297 = vpack.c.b16 %v7720, %v7719
      %v9298 = vpack.c.b16 %v7722, %v7721
      %v9299 = vpack.c.b16 %v7724, %v7723
      %v9300 = vpack.c.b16 %v7726, %v7725
      %v9301 = vpack.c.b16 %v7728, %v7727
      %v9302 = vpack.c.b16 %v7730, %v7729
      %v9303 = vpack.c.b16 %v7732, %v7731
      %v9304 = vpack.c.b16 %v7734, %v7733
      %v9305 = vpack.c.b16 %v7736, %v7735
      %v9306 = vpack.c.b16 %v7738, %v7737
      %v9307 = vpack.c.b16 %v7740, %v7739
      %v9308 = vpack.c.b16 %v7742, %v7741
      %v9309 = vpack.c.b16 %v7744, %v7743
      %v9310 = vpack.c.b16 %v7746, %v7745
      %v9311 = vpack.c.b16 %v7748, %v7747
      %v9312 = vpack.c.b16 %v7750, %v7749
      %v9313 = vpack.c.b16 %v7752, %v7751
      %v9314 = vpack.c.b16 %v7754, %v7753
      %v9315 = vpack.c.b16 %v7756, %v7755
      %v9316 = vpack.c.b16 %v7758, %v7757
      %v9317 = vpack.c.b16 %v7760, %v7759
      %v9318 = vpack.c.b16 %v7762, %v7761
      %v9319 = vpack.c.b16 %v7764, %v7763
      %v9320 = vpack.c.b16 %v7766, %v7765
      %v9321 = vpack.c.b16 %v7768, %v7767
      %v9322 = vpack.c.b16 %v7770, %v7769
      %v9323 = vpack.c.b16 %v7772, %v7771
      %v9324 = vpack.c.b16 %v7774, %v7773
      %v9325 = vpack.c.b16 %v7776, %v7775
      %v9326 = vpack.c.b16 %v7778, %v7777
      %v9327 = vpack.c.b16 %v7780, %v7779
      %v9328 = vpack.c.b16 %v7782, %v7781
      %v9329 = vpack.c.b16 %v7784, %v7783
      %v9330 = vpack.c.b16 %v7786, %v7785
      %v9331 = vpack.c.b16 %v7788, %v7787
      %v9332 = vpack.c.b16 %v7790, %v7789
      %v9333 = vpack.c.b16 %v7792, %v7791
      %v9334 = vpack.c.b16 %v7794, %v7793
      %v9335 = vpack.c.b16 %v7796, %v7795
      %v9336 = vpack.c.b16 %v7798, %v7797
      %v9337 = vpack.c.b16 %v7800, %v7799
      %v9338 = vpack.c.b16 %v7802, %v7801
      %v9339 = vpack.c.b16 %v7804, %v7803
      %v9340 = vpack.c.b16 %v7806, %v7805
      %v9341 = vpack.c.b16 %v7808, %v7807
      %v9342 = vpack.c.b16 %v7810, %v7809
      %v9343 = vpack.c.b16 %v7812, %v7811
      %v9344 = vpack.c.b16 %v7814, %v7813
      %v9345 = vpack.c.b16 %v7816, %v7815
      %v9346 = vpack.c.b16 %v7818, %v7817
      %v9347 = vpack.c.b16 %v7820, %v7819
      %v9348 = vpack.c.b16 %v7822, %v7821
      %v9349 = vpack.c.b16 %v7824, %v7823
      %v9350 = vpack.c.b16 %v7826, %v7825
      %v9351 = vpack.c.b16 %v7828, %v7827
      %v9352 = vpack.c.b16 %v7830, %v7829
      %v9353 = vpack.c.b16 %v7832, %v7831
      %v9354 = vpack.c.b16 %v7834, %v7833
      %v9355 = vpack.c.b16 %v7836, %v7835
      %v9356 = vpack.c.b16 %v7838, %v7837
      %v9357 = vpack.c.b16 %v7840, %v7839
      %v9358 = vpack.c.b16 %v7842, %v7841
      %v9359 = vpack.c.b16 %v7844, %v7843
      %v9360 = vpack.c.b16 %v7846, %v7845
      %v9361 = vpack.c.b16 %v7848, %v7847
      %v9362 = vpack.c.b16 %v7850, %v7849
      %v9363 = vpack.c.b16 %v7852, %v7851
      %v9364 = vpack.c.b16 %v7854, %v7853
      %v9365 = vpack.c.b16 %v7856, %v7855
      %v9366 = vpack.c.b16 %v7858, %v7857
      %v9367 = vpack.c.b16 %v7860, %v7859
      %v9368 = vpack.c.b16 %v7862, %v7861
      %v9369 = vpack.c.b16 %v7864, %v7863
      %v9370 = vpack.c.b16 %v7866, %v7865
      %v9371 = vpack.c.b16 %v7868, %v7867
      %v9372 = vpack.c.b16 %v7870, %v7869
      %v9373 = vpack.c.b16 %v7872, %v7871
      %v9374 = vpack.c.b16 %v7874, %v7873
      %v9375 = vpack.c.b16 %v7876, %v7875
      %v9376 = vpack.c.b16 %v7878, %v7877
      %v9377 = vpack.c.b16 %v7880, %v7879
      %v9378 = vpack.c.b16 %v7882, %v7881
      %v9379 = vpack.c.b16 %v7884, %v7883
      %v9380 = vpack.c.b16 %v7886, %v7885
      %v9381 = vpack.c.b16 %v7888, %v7887
      %v9382 = vpack.c.b16 %v7890, %v7889
      %v9383 = vpack.c.b16 %v7892, %v7891
      %v9384 = vpack.c.b16 %v7894, %v7893
      %v9385 = vpack.c.b16 %v7896, %v7895
      %v9386 = vpack.c.b16 %v7898, %v7897
      %v9387 = vpack.c.b16 %v7900, %v7899
      %v9388 = vpack.c.b16 %v7902, %v7901
      %v9389 = vpack.c.b16 %v7904, %v7903
      %v9390 = vpack.c.b16 %v7906, %v7905
      %v9391 = vpack.c.b16 %v7908, %v7907
      %v9392 = vpack.c.b16 %v7910, %v7909
      %v9393 = vpack.c.b16 %v7912, %v7911
      %v9394 = vpack.c.b16 %v7914, %v7913
      %v9395 = vpack.c.b16 %v7916, %v7915
      %v9396 = vpack.c.b16 %v7918, %v7917
      %v9397 = vpack.c.b16 %v7920, %v7919
      %v9398 = vpack.c.b16 %v7922, %v7921
      %v9399 = vpack.c.b16 %v7924, %v7923
      %v9400 = vpack.c.b16 %v7926, %v7925
      %v9401 = vpack.c.b16 %v7928, %v7927
      %v9402 = vpack.c.b16 %v7930, %v7929
      %v9403 = vpack.c.b16 %v7932, %v7931
      %v9404 = vpack.c.b16 %v7934, %v7933
      %v9405 = vpack.c.b16 %v7936, %v7935
      %v9406 = vpack.c.b16 %v7938, %v7937
      %v9407 = vpack.c.b16 %v7940, %v7939
      %v9408 = vpack.c.b16 %v7942, %v7941
      %v9409 = vpack.c.b16 %v7944, %v7943
      %v9410 = vpack.c.b16 %v7946, %v7945
      %v9411 = vpack.c.b16 %v7948, %v7947
      %v9412 = vpack.c.b16 %v7950, %v7949
      %v9413 = vpack.c.b16 %v7952, %v7951
      %v9414 = vpack.c.b16 %v7954, %v7953
      %v9415 = vpack.c.b16 %v7956, %v7955
      %v9416 = vpack.c.b16 %v7958, %v7957
      %v9417 = vpack.c.b16 %v7960, %v7959
      %v9418 = vpack.c.b16 %v7962, %v7961
      %v9419 = vpack.c.b16 %v7964, %v7963
      %v9420 = vpack.c.b16 %v7966, %v7965
      %v9421 = vpack.c.b16 %v7968, %v7967
      %v9422 = vpack.c.b16 %v7970, %v7969
      %v9423 = vpack.c.b16 %v7972, %v7971
      %v9424 = vpack.c.b16 %v7974, %v7973
      %v9425 = vpack.c.b16 %v7976, %v7975
      %v9426 = vpack.c.b16 %v7978, %v7977
      %v9427 = vpack.c.b16 %v7980, %v7979
      %v9428 = vpack.c.b16 %v7982, %v7981
      %v9429 = vpack.c.b16 %v7984, %v7983
      %v9430 = vpack.c.b16 %v7986, %v7985
      %v9431 = vpack.c.b16 %v7988, %v7987
      %v9432 = vpack.c.b16 %v7990, %v7989
      %v9433 = vpack.c.b16 %v7992, %v7991
      %v9434 = vpack.c.b16 %v7994, %v7993
      %v9435 = vpack.c.b16 %v7996, %v7995
      %v9436 = vpack.c.b16 %v7998, %v7997
      %v9437 = vpack.c.b16 %v8000, %v7999
      %v9438 = vpack.c.b16 %v8002, %v8001
      %v9439 = vpack.c.b16 %v8004, %v8003
      %v9440 = vpack.c.b16 %v8006, %v8005
      %v9441 = vpack.c.b16 %v8008, %v8007
      %v9442 = vpack.c.b16 %v8010, %v8009
      %v9443 = vpack.c.b16 %v8012, %v8011
      %v9444 = vpack.c.b16 %v8014, %v8013
      %v9445 = vpack.c.b16 %v8016, %v8015
      %v9446 = vpack.c.b16 %v8018, %v8017
      %v9447 = vpack.c.b16 %v8020, %v8019
      %v9448 = vpack.c.b16 %v8022, %v8021
      %v9449 = vpack.c.b16 %v8024, %v8023
      %v9450 = vpack.c.b16 %v8026, %v8025
      %v9451 = vpack.c.b16 %v8028, %v8027
      %v9452 = vpack.c.b16 %v8030, %v8029
      %v9453 = vpack.c.b16 %v8032, %v8031
      %v9454 = vpack.c.b16 %v8034, %v8033
      %v9455 = vpack.c.b16 %v8036, %v8035
      %v9456 = vpack.c.b16 %v8038, %v8037
      %v9457 = vpack.c.b16 %v8040, %v8039
      %v9458 = vpack.c.b16 %v8042, %v8041
      %v9459 = vpack.c.b16 %v8044, %v8043
      %v9460 = vpack.c.b16 %v8046, %v8045
      %v9461 = vpack.c.b16 %v8048, %v8047
      %v9462 = vpack.c.b16 %v8050, %v8049
      %v9463 = vpack.c.b16 %v8052, %v8051
      %v9464 = vpack.c.b16 %v8054, %v8053
      %v9465 = vpack.c.b16 %v8056, %v8055
      %v9466 = vpack.c.b16 %v8058, %v8057
      %v9467 = vpack.c.b16 %v8060, %v8059
      %v9468 = vpack.c.b16 %v8062, %v8061
      %v9469 = vpack.c.b16 %v8064, %v8063
      %v9470 = vpack.c.b16 %v8066, %v8065
      %v9471 = vpack.c.b16 %v8068, %v8067
      %v9472 = vpack.c.b16 %v8070, %v8069
      %v9473 = vpack.c.b16 %v8072, %v8071
      %v9474 = vpack.c.b16 %v8074, %v8073
      %v9475 = vpack.c.b16 %v8076, %v8075
      %v9476 = vpack.c.b16 %v8078, %v8077
      %v9477 = vpack.c.b16 %v8080, %v8079
      %v9478 = vpack.c.b16 %v8082, %v8081
      %v9479 = vpack.c.b16 %v8084, %v8083
      %v9480 = vpack.c.b16 %v8086, %v8085
      %v9481 = vpack.c.b16 %v8088, %v8087
      %v9482 = vpack.c.b16 %v8090, %v8089
      %v9483 = vpack.c.b16 %v8092, %v8091
      %v9484 = vpack.c.b16 %v8094, %v8093
      %v9485 = vpack.c.b16 %v8096, %v8095
      %v9486 = vpack.c.b16 %v8098, %v8097
      %v9487 = vpack.c.b16 %v8100, %v8099
      %v9488 = vpack.c.b16 %v8102, %v8101
      %v9489 = vpack.c.b16 %v8104, %v8103
      %v9490 = vpack.c.b16 %v8106, %v8105
      %v9491 = vpack.c.b16 %v8108, %v8107
      %v9492 = vpack.c.b16 %v8110, %v8109
      %v9493 = vpack.c.b16 %v8112, %v8111
      %v9494 = vpack.c.b16 %v8114, %v8113
      %v9495 = vpack.c.b16 %v8116, %v8115
      %v9496 = vpack.c.b16 %v8118, %v8117
      %v9497 = vpack.c.b16 %v8120, %v8119
      %v9498 = vpack.c.b16 %v8122, %v8121
      %v9499 = vpack.c.b16 %v8124, %v8123
      %v9500 = vpack.c.b16 %v8126, %v8125
      %v9501 = vpack.c.b16 %v8128, %v8127
      %v9502 = vpack.c.b16 %v8130, %v8129
      %v9503 = vpack.c.b16 %v8132, %v8131
      %v9504 = vpack.c.b16 %v8134, %v8133
      %v9505 = vpack.c.b16 %v8136, %v8135
      %v9506 = vpack.c.b16 %v8138, %v8137
      %v9507 = vpack.c.b16 %v8140, %v8139
      %v9508 = vpack.c.b16 %v8142, %v8141
      %v9509 = vpack.c.b16 %v8144, %v8143
      %v9510 = vpack.c.b16 %v8146, %v8145
      %v9511 = vpack.c.b16 %v8148, %v8147
      %v9512 = vpack.c.b16 %v8150, %v8149
      %v9513 = vpack.c.b16 %v8152, %v8151
      %v9514 = vpack.c.b16 %v8154, %v8153
      %v9515 = vpack.c.b16 %v8156, %v8155
      %v9516 = vpack.c.b16 %v8158, %v8157
      %v9517 = vpack.c.b16 %v8160, %v8159
      %v9518 = vpack.c.b16 %v8162, %v8161
      %v9519 = vpack.c.b16 %v8164, %v8163
      %v9520 = vpack.c.b16 %v8166, %v8165
      %v9521 = vpack.c.b16 %v8168, %v8167
      %v9522 = vpack.c.b16 %v8170, %v8169
      %v9523 = vpack.c.b16 %v8172, %v8171
      %v9524 = vpack.c.b16 %v8174, %v8173
      %v9525 = vpack.c.b16 %v8176, %v8175
      %v9526 = vpack.c.b16 %v8178, %v8177
      %v9527 = vpack.c.b16 %v8180, %v8179
      %v9528 = vpack.c.b16 %v8182, %v8181
      %v9529 = vpack.c.b16 %v8184, %v8183
      %v9530 = vpack.c.b16 %v8186, %v8185
      %v9531 = vpack.c.b16 %v8188, %v8187
      %v9532 = vpack.c.b16 %v8190, %v8189
      %v9533 = vpack.c.b16 %v8192, %v8191
      %v9534 = vpack.c.b16 %v8194, %v8193
      %v9535 = vpack.c.b16 %v8196, %v8195
      %v9536 = vpack.c.b16 %v8198, %v8197
      %v9537 = vpack.c.b16 %v8200, %v8199
      %v9538 = vpack.c.b16 %v8202, %v8201
      %v9539 = vpack.c.b16 %v8204, %v8203
      %v9540 = vpack.c.b16 %v8206, %v8205
      %v9541 = vpack.c.b16 %v8208, %v8207
      %v9542 = vpack.c.b16 %v8210, %v8209
      %v9543 = vpack.c.b16 %v8212, %v8211
      %v9544 = vpack.c.b16 %v8214, %v8213
      %v9545 = vpack.c.b16 %v8216, %v8215
      %v9546 = vpack.c.b16 %v8218, %v8217
      %v9547 = vpack.c.b16 %v8220, %v8219
      %v9548 = vpack.c.b16 %v8222, %v8221
      %v9549 = vpack.c.b16 %v8224, %v8223
      %v9550 = vpack.c.b16 %v8226, %v8225
      %v9551 = vpack.c.b16 %v8228, %v8227
      %v9552 = vpack.c.b16 %v8230, %v8229
      %v9553 = vpack.c.b16 %v8232, %v8231
      %v9554 = vpack.c.b16 %v8234, %v8233
      %v9555 = vpack.c.b16 %v8236, %v8235
      %v9556 = vpack.c.b16 %v8238, %v8237
      %v9557 = vpack.c.b16 %v8240, %v8239
      %v9558 = vpack.c.b16 %v8242, %v8241
      %v9559 = vpack.c.b16 %v8244, %v8243
      %v9560 = vpack.c.b16 %v8246, %v8245
      %v9561 = vpack.c.b16 %v8248, %v8247
      %v9562 = vpack.c.b16 %v8250, %v8249
      %v9563 = vpack.c.b16 %v8252, %v8251
      %v9564 = vpack.c.b16 %v8254, %v8253
      %v9565 = vpack.c.b16 %v8256, %v8255
      %v9566 = vpack.c.b16 %v8258, %v8257
      %v9567 = vpack.c.b16 %v8260, %v8259
      %v9568 = vpack.c.b16 %v8262, %v8261
      %v9569 = vpack.c.b16 %v8264, %v8263
      %v9570 = vpack.c.b16 %v8266, %v8265
      %v9571 = vpack.c.b16 %v8268, %v8267
      %v9572 = vpack.c.b16 %v8270, %v8269
      %v9573 = vpack.c.b16 %v8272, %v8271
      %v9574 = vpack.c.b16 %v8274, %v8273
      %v9575 = vpack.c.b16 %v8276, %v8275
      %v9576 = vpack.c.b16 %v8278, %v8277
      %v9577 = vpack.c.b16 %v8280, %v8279
      %v9578 = vpack.c.b16 %v8282, %v8281
      %v9579 = vpack.c.b16 %v8284, %v8283
      %v9580 = vpack.c.b16 %v8286, %v8285
      %v9581 = vpack.c.b16 %v8288, %v8287
      %v9582 = vpack.c.b16 %v8290, %v8289
      %v9583 = vpack.c.b16 %v8292, %v8291
      %v9584 = vpack.c.b16 %v8294, %v8293
      %v9585 = vpack.c.b16 %v8296, %v8295
      %v9586 = vpack.c.b16 %v8298, %v8297
      %v9587 = vpack.c.b16 %v8300, %v8299
      %v9588 = vpack.c.b16 %v8302, %v8301
      %v9589 = vpack.c.b16 %v8304, %v8303
      %v9590 = vpack.c.b16 %v8306, %v8305
      %v9591 = vpack.c.b16 %v8308, %v8307
      %v9592 = vpack.c.b16 %v8310, %v8309
      %v9593 = vpack.c.b16 %v8312, %v8311
      %v9594 = vpack.c.b16 %v8314, %v8313
      %v9595 = vpack.c.b16 %v8316, %v8315
      %v9596 = vpack.c.b16 %v8318, %v8317
      %v9597 = vpack.c.b16 %v8320, %v8319
      %v9598 = vpack.c.b16 %v8322, %v8321
      %v9599 = vpack.c.b16 %v8324, %v8323
      %v9600 = vpack.c.b16 %v8326, %v8325
      %v9601 = vpack.c.b16 %v8328, %v8327
      %v9602 = vpack.c.b16 %v8330, %v8329
      %v9603 = vpack.c.b16 %v8332, %v8331
      %v9604 = vpack.c.b16 %v8334, %v8333
      %v9605 = vpack.c.b16 %v8336, %v8335
      %v9606 = vpack.c.b16 %v8338, %v8337
      %v9607 = vpack.c.b16 %v8340, %v8339
      %v9608 = vpack.c.b16 %v8342, %v8341
      %v9609 = vpack.c.b16 %v8344, %v8343
      %v9610 = vpack.c.b16 %v8346, %v8345
      %v9611 = vpack.c.b16 %v8348, %v8347
      %v9612 = vpack.c.b16 %v8350, %v8349
      %v9613 = vpack.c.b16 %v8352, %v8351
      %v9614 = vpack.c.b16 %v8354, %v8353
      %v9615 = vpack.c.b16 %v8356, %v8355
      %v9616 = vpack.c.b16 %v8358, %v8357
      %v9617 = vpack.c.b16 %v8360, %v8359
      %v9618 = vpack.c.b16 %v8362, %v8361
      %v9619 = vpack.c.b16 %v8364, %v8363
      %v9620 = vpack.c.b16 %v8366, %v8365
      %v9621 = vpack.c.b16 %v8368, %v8367
      %v9622 = vpack.c.b16 %v8370, %v8369
      %v9623 = vpack.c.b16 %v8372, %v8371
      %v9624 = vpack.c.b16 %v8374, %v8373
      %v9625 = vpack.c.b16 %v8376, %v8375
      %v9626 = vpack.c.b16 %v8378, %v8377
      %v9627 = vpack.c.b16 %v8380, %v8379
      %v9628 = vpack.c.b16 %v8382, %v8381
      %v9629 = vpack.c.b16 %v8384, %v8383
      %v9630 = vpack.c.b16 %v8386, %v8385
      %v9631 = vpack.c.b16 %v8388, %v8387
      %v9632 = vpack.c.b16 %v8390, %v8389
      %v9633 = vpack.c.b16 %v8392, %v8391
      %v9634 = vpack.c.b16 %v8394, %v8393
      %v9635 = vpack.c.b16 %v8396, %v8395
      %v9636 = vpack.c.b16 %v8398, %v8397
      %v9637 = vpack.c.b16 %v8400, %v8399
      %v9638 = vpack.c.b16 %v8402, %v8401
      %v9639 = vpack.c.b16 %v8404, %v8403
      %v9640 = vpack.c.b16 %v8406, %v8405
      %v9641 = vpack.c.b16 %v8408, %v8407
      %v9642 = vpack.c.b16 %v8410, %v8409
      %v9643 = vpack.c.b16 %v8412, %v8411
      %v9644 = vpack.c.b16 %v8414, %v8413
      %v9645 = vpack.c.b16 %v8416, %v8415
      %v9646 = vpack.c.b16 %v8418, %v8417
      %v9647 = vpack.c.b16 %v8420, %v8419
      %v9648 = vpack.c.b16 %v8422, %v8421
      %v9649 = vpack.c.b16 %v8424, %v8423
      %v9650 = vpack.c.b16 %v8426, %v8425
      %v9651 = vpack.c.b16 %v8428, %v8427
      %v9652 = vpack.c.b16 %v8430, %v8429
      %v9653 = vpack.c.b16 %v8432, %v8431
      %v9654 = vpack.c.b16 %v8434, %v8433
      %v9655 = vpack.c.b16 %v8436, %v8435
      %v9656 = vpack.c.b16 %v8438, %v8437
      %v9657 = vpack.c.b16 %v8440, %v8439
      %v9658 = vpack.c.b16 %v8442, %v8441
      %v9659 = vpack.c.b16 %v8444, %v8443
      %v9660 = vpack.c.b16 %v8446, %v8445
      %v9661 = vpack.c.b16 %v8448, %v8447
      %v9662 = vpack.c.b16 %v8450, %v8449
      %v9663 = vpack.c.b16 %v8452, %v8451
      %v9664 = vpack.c.b16 %v8454, %v8453
      %v9665 = vpack.c.b16 %v8456, %v8455
      %v9666 = vpack.c.b16 %v8458, %v8457
      %v9667 = vpack.c.b16 %v8460, %v8459
      %v9668 = vpack.c.b16 %v8462, %v8461
      %v9669 = vpack.c.b16 %v8464, %v8463
      %v9670 = vpack.c.b16 %v8466, %v8465
      %v9671 = vpack.c.b16 %v8468, %v8467
      %v9672 = vpack.c.b16 %v8470, %v8469
      %v9673 = vpack.c.b16 %v8472, %v8471
      %v9674 = vpack.c.b16 %v8474, %v8473
      %v9675 = vpack.c.b16 %v8476, %v8475
      %v9676 = vpack.c.b16 %v8478, %v8477
      %v9677 = vpack.c.b16 %v8480, %v8479
      %v9678 = vpack.c.b16 %v8482, %v8481
      %v9679 = vpack.c.b16 %v8484, %v8483
      %v9680 = vpack.c.b16 %v8486, %v8485
      %v9681 = vpack.c.b16 %v8488, %v8487
      %v9682 = vpack.c.b16 %v8490, %v8489
      %v9683 = vpack.c.b16 %v8492, %v8491
      %v9684 = vpack.c.b16 %v8494, %v8493
      %v9685 = vpack.c.b16 %v8496, %v8495
      %v9686 = vpack.c.b16 %v8498, %v8497
      %v9687 = vpack.c.b16 %v8500, %v8499
      %v9688 = vpack.c.b16 %v8502, %v8501
      %v9689 = vpack.c.b16 %v8504, %v8503
      %v9690 = vpack.c.b16 %v8506, %v8505
      %v9691 = vpack.c.b16 %v8508, %v8507
      %v9692 = vpack.c.b16 %v8510, %v8509
      %v9693 = vpack.c.b16 %v8512, %v8511
      %v9694 = vpack.c.b16 %v8514, %v8513
      %v9695 = vpack.c.b16 %v8516, %v8515
      %v9696 = vpack.c.b16 %v8518, %v8517
      %v9697 = vpack.c.b16 %v8520, %v8519
      %v9698 = vpack.c.b16 %v8522, %v8521
      %v9699 = vpack.c.b16 %v8524, %v8523
      %v9700 = vpack.c.b16 %v8526, %v8525
      %v9701 = vpack.c.b16 %v8528, %v8527
      %v9702 = vpack.c.b16 %v8530, %v8529
      %v9703 = vpack.c.b16 %v8532, %v8531
      %v9704 = vpack.c.b16 %v8534, %v8533
      %v9705 = vpack.c.b16 %v8536, %v8535
      %v9706 = vpack.c.b16 %v8538, %v8537
      %v9707 = vpack.c.b16 %v8540, %v8539
      %v9708 = vpack.c.b16 %v8542, %v8541
      %v9709 = vpack.c.b16 %v8544, %v8543
      %v9710 = vpack.c.b16 %v8546, %v8545
      %v9711 = vpack.c.b16 %v8548, %v8547
      %v9712 = vpack.c.b16 %v8550, %v8549
      %v9713 = vpack.c.b16 %v8552, %v8551
      %v9714 = vpack.c.b16 %v8554, %v8553
      %v9715 = vpack.c.b16 %v8556, %v8555
      %v9716 = vpack.c.b16 %v8558, %v8557
      %v9717 = vpack.c.b16 %v8560, %v8559
      %v9718 = vpack.c.b16 %v8562, %v8561
      %v9719 = vpack.c.b16 %v8564, %v8563
      %v9720 = vpack.c.b16 %v8566, %v8565
      %v9721 = vpack.c.b16 %v8568, %v8567
      %v9722 = vpack.c.b16 %v8570, %v8569
      %v9723 = vpack.c.b16 %v8572, %v8571
      %v9724 = vpack.c.b16 %v8574, %v8573
      %v9725 = vpack.c.b16 %v8576, %v8575
      %v9726 = vpack.c.b16 %v8578, %v8577
      %v9727 = vpack.c.b16 %v8580, %v8579
      %v9728 = vpack.c.b16 %v8582, %v8581
      %v9729 = vpack.c.b16 %v8584, %v8583
      %v9730 = vpack.c.b16 %v8586, %v8585
      %v9731 = vpack.c.b16 %v8588, %v8587
      %v9732 = vpack.c.b16 %v8590, %v8589
      %v9733 = vpack.c.b16 %v8592, %v8591
      %v9734 = vpack.c.b16 %v8594, %v8593
      %v9735 = vpack.c.b16 %v8596, %v8595
      %v9736 = vpack.c.b16 %v8598, %v8597
      %v9737 = vpack.c.b16 %v8600, %v8599
      %v9738 = vpack.c.b16 %v8602, %v8601
      %v9739 = vpack.c.b16 %v8604, %v8603
      %v9740 = vpack.c.b16 %v8606, %v8605
      %v9741 = vpack.c.b16 %v8608, %v8607
      %v9742 = vpack.c.b16 %v8610, %v8609
      %v9743 = vpack.c.b16 %v8612, %v8611
      %v9744 = vpack.c.b16 %v8614, %v8613
      %v9745 = vpack.c.b16 %v8616, %v8615
      %v9746 = vpack.c.b16 %v8618, %v8617
      %v9747 = vpack.c.b16 %v8620, %v8619
      %v9748 = vpack.c.b16 %v8622, %v8621
      %v9749 = vpack.c.b16 %v8624, %v8623
      %v9750 = vpack.c.b16 %v8626, %v8625
      %v9751 = vpack.c.b16 %v8628, %v8627
      %v9752 = vpack.c.b16 %v8630, %v8629
      %v9753 = vpack.c.b16 %v8632, %v8631
      %v9754 = vpack.c.b16 %v8634, %v8633
      %v9755 = vpack.c.b16 %v8636, %v8635
      %v9756 = vpack.c.b16 %v8638, %v8637
      %v9757 = vpack.c.b16 %v8640, %v8639
      %v9758 = vpack.c.b16 %v8642, %v8641
      %v9759 = vpack.c.b16 %v8644, %v8643
      %v9760 = vpack.c.b16 %v8646, %v8645
      %v9761 = vpack.c.b16 %v8648, %v8647
      %v9762 = vpack.c.b16 %v8650, %v8649
      %v9763 = vpack.c.b16 %v8652, %v8651
      %v9764 = vpack.c.b16 %v8654, %v8653
      %v9765 = vpack.c.b16 %v8656, %v8655
      %v9766 = vpack.c.b16 %v8658, %v8657
      %v9767 = vpack.c.b16 %v8660, %v8659
      %v9768 = vpack.c.b16 %v8662, %v8661
      %v9769 = vpack.c.b16 %v8664, %v8663
      %v9770 = vpack.c.b16 %v8666, %v8665
      %v9771 = vpack.c.b16 %v8668, %v8667
      %v9772 = vpack.c.b16 %v8670, %v8669
      %v9773 = vpack.c.b16 %v8672, %v8671
      %v9774 = vpack.c.b16 %v8674, %v8673
      %v9775 = vpack.c.b16 %v8676, %v8675
      %v9776 = vpack.c.b16 %v8678, %v8677
      %v9777 = vpack.c.b16 %v8680, %v8679
      %v9778 = vpack.c.b16 %v8682, %v8681
      %v9779 = vpack.c.b16 %v8684, %v8683
      %v9780 = vpack.c.b16 %v8686, %v8685
      %v9781 = vpack.c.b16 %v8688, %v8687
      %v9782 = vpack.c.b16 %v8690, %v8689
      %v9783 = vpack.c.b16 %v8692, %v8691
      %v9784 = vpack.c.b16 %v8694, %v8693
      %v9785 = vpack.c.b16 %v8696, %v8695
      %v9786 = vpack.c.b16 %v8698, %v8697
      %v9787 = vpack.c.b16 %v8700, %v8699
      %v9788 = vpack.c.b16 %v8702, %v8701
      %v9789 = vpack.c.b16 %v8704, %v8703
      %v9790 = vpack.c.b16 %v8706, %v8705
      %v9791 = vpack.c.b16 %v8708, %v8707
      %v9792 = vpack.c.b16 %v8710, %v8709
      %v9793 = vpack.c.b16 %v8712, %v8711
      %v9794 = vpack.c.b16 %v8714, %v8713
      %v9795 = vpack.c.b16 %v8716, %v8715
      %v9796 = vpack.c.b16 %v8718, %v8717
      %v9797 = vpack.c.b16 %v8720, %v8719
      %v9798 = vpack.c.b16 %v8722, %v8721
      %v9799 = vpack.c.b16 %v8724, %v8723
      %v9800 = vpack.c.b16 %v8726, %v8725
      %v9801 = vpack.c.b16 %v8728, %v8727
      %v9802 = vpack.c.b16 %v8730, %v8729
      %v9803 = vpack.c.b16 %v8732, %v8731
      %v9804 = vpack.c.b16 %v8734, %v8733
      %v9805 = vpack.c.b16 %v8736, %v8735
      %v9806 = vpack.c.b16 %v8738, %v8737
      %v9807 = vpack.c.b16 %v8740, %v8739
      %v9808 = vpack.c.b16 %v8742, %v8741
      %v9809 = vpack.c.b16 %v8744, %v8743
      %v9810 = vpack.c.b16 %v8746, %v8745
      %v9811 = vpack.c.b16 %v8748, %v8747
      %v9812 = vpack.c.b16 %v8750, %v8749
      %v9813 = vpack.c.b16 %v8752, %v8751
      %v9814 = vpack.c.b16 %v8754, %v8753
      %v9815 = vpack.c.b16 %v8756, %v8755
      %v9816 = vpack.c.b16 %v8758, %v8757
      %v9817 = vpack.c.b16 %v8760, %v8759
      %v9818 = vpack.c.b16 %v8762, %v8761
      %v9819 = vpack.c.b16 %v8764, %v8763
      %v9820 = vpack.c.b16 %v8766, %v8765
      %v9821 = vpack.c.b16 %v8768, %v8767
      %v9822 = vpack.c.b16 %v8770, %v8769
      %v9823 = vpack.c.b16 %v8772, %v8771
      %v9824 = vpack.c.b16 %v8774, %v8773
      %v9825 = vpack.c.b16 %v8776, %v8775
      %v9826 = vpack.c.b16 %v8778, %v8777
      %v9827 = vpack.c.b16 %v8780, %v8779
      %v9828 = vpack.c.b16 %v8782, %v8781
      %v9829 = vpack.c.b16 %v8784, %v8783
      %v9830 = vpack.c.b16 %v8786, %v8785
      %v9831 = vpack.c.b16 %v8788, %v8787
      %v9832 = vpack.c.b16 %v8790, %v8789
      %v9833 = vpack.c.b16 %v8792, %v8791
      %v9834 = vpack.c.b16 %v8794, %v8793
      %v9835 = vpack.c.b16 %v8796, %v8795
      %v9836 = vpack.c.b16 %v8798, %v8797
      %v9837 = vpack.c.b16 %v8800, %v8799
      %v9838 = vpack.c.b16 %v8802, %v8801
      %v9839 = vpack.c.b16 %v8804, %v8803
      %v9840 = vpack.c.b16 %v8806, %v8805
      %v9841 = vpack.c.b16 %v8808, %v8807
      %v9842 = vpack.c.b16 %v8810, %v8809
      %v9843 = vpack.c.b16 %v8812, %v8811
      %v9844 = vpack.c.b16 %v8814, %v8813
      %v9845 = vpack.c.b16 %v8816, %v8815
      %v9846 = vpack.c.b16 %v8818, %v8817
      %v9847 = vpack.c.b16 %v8820, %v8819
      %v9848 = vpack.c.b16 %v8822, %v8821
      %v9849 = vpack.c.b16 %v8824, %v8823
      %v9850 = vpack.c.b16 %v8826, %v8825
      %10875 = vmatprep.subr.bf16.mxu0 0
      %10876 = vmatpush1.bf16.msra.mxu0 %v8834
      %10877 = vmatprep.subr.bf16.mxu0 0
      %10878 = vmatpush1.bf16.msra.mxu0 %v8833
      %10879 = vmatprep.subr.bf16.mxu0 0
      %10880 = vmatpush1.bf16.msra.mxu0 %v8832
      %10881 = vmatprep.subr.bf16.mxu0 0
      %10882 = vmatpush1.bf16.msra.mxu0 %v8831
      %10883 = vmatprep.subr.bf16.mxu0 0
      %10884 = vmatpush1.bf16.msra.mxu0 %v8830
      %10885 = vmatprep.subr.bf16.mxu0 0
      %10886 = vmatpush1.bf16.msra.mxu0 %v8829
      %10887 = vmatprep.subr.bf16.mxu0 0
      %10888 = vmatpush1.bf16.msra.mxu0 %v8828
      %10889 = vmatprep.subr.bf16.mxu0 0
      %10890 = vmatpush1.bf16.msra.mxu0 %v8827
      %10891 = vmatprep.subr.bf16.mxu0 0
      %10892 = vmatpush2.bf16.msra.mxu0 %v8842
      %10893 = vmatprep.subr.bf16.mxu0 0
      %10894 = vmatpush2.bf16.msra.mxu0 %v8841
      %10895 = vmatprep.subr.bf16.mxu0 0
      %10896 = vmatpush2.bf16.msra.mxu0 %v8840
      %10897 = vmatprep.subr.bf16.mxu0 0
      %10898 = vmatpush2.bf16.msra.mxu0 %v8839
      %10899 = vmatprep.subr.bf16.mxu0 0
      %10900 = vmatpush2.bf16.msra.mxu0 %v8838
      %10901 = vmatprep.subr.bf16.mxu0 0
      %10902 = vmatpush2.bf16.msra.mxu0 %v8837
      %10903 = vmatprep.subr.bf16.mxu0 0
      %10904 = vmatpush2.bf16.msra.mxu0 %v8836
      %10905 = vmatprep.subr.bf16.mxu0 0
      %10906 = vmatpush2.bf16.msra.mxu0 %v8835
      %10907 = vmatprep.mubr.bf16.mxu0 %v4098
      %10908 = vmatmul.mubr.bf16.gmra.mxu0 %v4094
      %v10909 = vpop.f32.mrf.mxu0
      %v10910 = vadd.f32 %v4074, %v10909
      %v10911 = vpop.f32.mrf.mxu0
      %v10912 = vpop.f32.mrf.mxu0
      %v10913 = vpop.f32.mrf.mxu0
      %10914 = vdwg.mxu0
      %10915 = vmatprep.subr.bf16.mxu0 0
      %10916 = vmatpush1.bf16.msra.mxu0 %v8850
      %10917 = vmatprep.subr.bf16.mxu0 0
      %10918 = vmatpush1.bf16.msra.mxu0 %v8849
      %10919 = vmatprep.subr.bf16.mxu0 0
      %10920 = vmatpush1.bf16.msra.mxu0 %v8848
      %10921 = vmatprep.subr.bf16.mxu0 0
      %10922 = vmatpush1.bf16.msra.mxu0 %v8847
      %10923 = vmatprep.subr.bf16.mxu0 0
      %10924 = vmatpush1.bf16.msra.mxu0 %v8846
      %10925 = vmatprep.subr.bf16.mxu0 0
      %10926 = vmatpush1.bf16.msra.mxu0 %v8845
      %10927 = vmatprep.subr.bf16.mxu0 0
      %10928 = vmatpush1.bf16.msra.mxu0 %v8844
      %10929 = vmatprep.subr.bf16.mxu0 0
      %10930 = vmatpush1.bf16.msra.mxu0 %v8843
      %10931 = vmatprep.subr.bf16.mxu0 0
      %10932 = vmatpush2.bf16.msra.mxu0 %v8858
      %10933 = vmatprep.subr.bf16.mxu0 0
      %10934 = vmatpush2.bf16.msra.mxu0 %v8857
      %10935 = vmatprep.subr.bf16.mxu0 0
      %10936 = vmatpush2.bf16.msra.mxu0 %v8856
      %10937 = vmatprep.subr.bf16.mxu0 0
      %10938 = vmatpush2.bf16.msra.mxu0 %v8855
      %10939 = vmatprep.subr.bf16.mxu0 0
      %10940 = vmatpush2.bf16.msra.mxu0 %v8854
      %10941 = vmatprep.subr.bf16.mxu0 0
      %10942 = vmatpush2.bf16.msra.mxu0 %v8853
      %10943 = vmatprep.subr.bf16.mxu0 0
      %10944 = vmatpush2.bf16.msra.mxu0 %v8852
      %10945 = vmatprep.subr.bf16.mxu0 0
      %10946 = vmatpush2.bf16.msra.mxu0 %v8851
      %10947 = vmatprep.mubr.bf16.mxu0 %v4106
      %10948 = vmatmul.mubr.bf16.gmra.mxu0 %v4102
      %v10949 = vpop.f32.mrf.mxu0
      %v10950 = vadd.f32 %v10910, %v10949
      %v10951 = vpop.f32.mrf.mxu0
      %v10952 = vpop.f32.mrf.mxu0
      %v10953 = vpop.f32.mrf.mxu0
      %10954 = vdwg.mxu0
      %10955 = vmatprep.subr.bf16.mxu0 0
      %10956 = vmatpush1.bf16.msra.mxu0 %v8866
      %10957 = vmatprep.subr.bf16.mxu0 0
      %10958 = vmatpush1.bf16.msra.mxu0 %v8865
      %10959 = vmatprep.subr.bf16.mxu0 0
      %10960 = vmatpush1.bf16.msra.mxu0 %v8864
      %10961 = vmatprep.subr.bf16.mxu0 0
      %10962 = vmatpush1.bf16.msra.mxu0 %v8863
      %10963 = vmatprep.subr.bf16.mxu0 0
      %10964 = vmatpush1.bf16.msra.mxu0 %v8862
      %10965 = vmatprep.subr.bf16.mxu0 0
      %10966 = vmatpush1.bf16.msra.mxu0 %v8861
      %10967 = vmatprep.subr.bf16.mxu0 0
      %10968 = vmatpush1.bf16.msra.mxu0 %v8860
      %10969 = vmatprep.subr.bf16.mxu0 0
      %10970 = vmatpush1.bf16.msra.mxu0 %v8859
      %10971 = vmatprep.subr.bf16.mxu0 0
      %10972 = vmatpush2.bf16.msra.mxu0 %v8874
      %10973 = vmatprep.subr.bf16.mxu0 0
      %10974 = vmatpush2.bf16.msra.mxu0 %v8873
      %10975 = vmatprep.subr.bf16.mxu0 0
      %10976 = vmatpush2.bf16.msra.mxu0 %v8872
      %10977 = vmatprep.subr.bf16.mxu0 0
      %10978 = vmatpush2.bf16.msra.mxu0 %v8871
      %10979 = vmatprep.subr.bf16.mxu0 0
      %10980 = vmatpush2.bf16.msra.mxu0 %v8870
      %10981 = vmatprep.subr.bf16.mxu0 0
      %10982 = vmatpush2.bf16.msra.mxu0 %v8869
      %10983 = vmatprep.subr.bf16.mxu0 0
      %10984 = vmatpush2.bf16.msra.mxu0 %v8868
      %10985 = vmatprep.subr.bf16.mxu0 0
      %10986 = vmatpush2.bf16.msra.mxu0 %v8867
      %10987 = vmatprep.mubr.bf16.mxu0 %v4114
      %10988 = vmatmul.mubr.bf16.gmra.mxu0 %v4110
      %v10989 = vpop.f32.mrf.mxu0
      %v10990 = vadd.f32 %v10950, %v10989
      %v10991 = vpop.f32.mrf.mxu0
      %v10992 = vpop.f32.mrf.mxu0
      %v10993 = vpop.f32.mrf.mxu0
      %10994 = vdwg.mxu0
      %10995 = vmatprep.subr.bf16.mxu0 0
      %10996 = vmatpush1.bf16.msra.mxu0 %v8882
      %10997 = vmatprep.subr.bf16.mxu0 0
      %10998 = vmatpush1.bf16.msra.mxu0 %v8881
      %10999 = vmatprep.subr.bf16.mxu0 0
      %11000 = vmatpush1.bf16.msra.mxu0 %v8880
      %11001 = vmatprep.subr.bf16.mxu0 0
      %11002 = vmatpush1.bf16.msra.mxu0 %v8879
      %11003 = vmatprep.subr.bf16.mxu0 0
      %11004 = vmatpush1.bf16.msra.mxu0 %v8878
      %11005 = vmatprep.subr.bf16.mxu0 0
      %11006 = vmatpush1.bf16.msra.mxu0 %v8877
      %11007 = vmatprep.subr.bf16.mxu0 0
      %11008 = vmatpush1.bf16.msra.mxu0 %v8876
      %11009 = vmatprep.subr.bf16.mxu0 0
      %11010 = vmatpush1.bf16.msra.mxu0 %v8875
      %11011 = vmatprep.subr.bf16.mxu0 0
      %11012 = vmatpush2.bf16.msra.mxu0 %v8890
      %11013 = vmatprep.subr.bf16.mxu0 0
      %11014 = vmatpush2.bf16.msra.mxu0 %v8889
      %11015 = vmatprep.subr.bf16.mxu0 0
      %11016 = vmatpush2.bf16.msra.mxu0 %v8888
      %11017 = vmatprep.subr.bf16.mxu0 0
      %11018 = vmatpush2.bf16.msra.mxu0 %v8887
      %11019 = vmatprep.subr.bf16.mxu0 0
      %11020 = vmatpush2.bf16.msra.mxu0 %v8886
      %11021 = vmatprep.subr.bf16.mxu0 0
      %11022 = vmatpush2.bf16.msra.mxu0 %v8885
      %11023 = vmatprep.subr.bf16.mxu0 0
      %11024 = vmatpush2.bf16.msra.mxu0 %v8884
      %11025 = vmatprep.subr.bf16.mxu0 0
      %11026 = vmatpush2.bf16.msra.mxu0 %v8883
      %11027 = vmatprep.mubr.bf16.mxu0 %v4122
      %11028 = vmatmul.mubr.bf16.gmra.mxu0 %v4118
      %v11029 = vpop.f32.mrf.mxu0
      %v11030 = vadd.f32 %v10990, %v11029
      %v11031 = vpop.f32.mrf.mxu0
      %v11032 = vpop.f32.mrf.mxu0
      %v11033 = vpop.f32.mrf.mxu0
      %11034 = vdwg.mxu0
      %11035 = vmatprep.subr.bf16.mxu0 0
      %11036 = vmatpush1.bf16.msra.mxu0 %v8898
      %11037 = vmatprep.subr.bf16.mxu0 0
      %11038 = vmatpush1.bf16.msra.mxu0 %v8897
      %11039 = vmatprep.subr.bf16.mxu0 0
      %11040 = vmatpush1.bf16.msra.mxu0 %v8896
      %11041 = vmatprep.subr.bf16.mxu0 0
      %11042 = vmatpush1.bf16.msra.mxu0 %v8895
      %11043 = vmatprep.subr.bf16.mxu0 0
      %11044 = vmatpush1.bf16.msra.mxu0 %v8894
      %11045 = vmatprep.subr.bf16.mxu0 0
      %11046 = vmatpush1.bf16.msra.mxu0 %v8893
      %11047 = vmatprep.subr.bf16.mxu0 0
      %11048 = vmatpush1.bf16.msra.mxu0 %v8892
      %11049 = vmatprep.subr.bf16.mxu0 0
      %11050 = vmatpush1.bf16.msra.mxu0 %v8891
      %11051 = vmatprep.subr.bf16.mxu0 0
      %11052 = vmatpush2.bf16.msra.mxu0 %v8906
      %11053 = vmatprep.subr.bf16.mxu0 0
      %11054 = vmatpush2.bf16.msra.mxu0 %v8905
      %11055 = vmatprep.subr.bf16.mxu0 0
      %11056 = vmatpush2.bf16.msra.mxu0 %v8904
      %11057 = vmatprep.subr.bf16.mxu0 0
      %11058 = vmatpush2.bf16.msra.mxu0 %v8903
      %11059 = vmatprep.subr.bf16.mxu0 0
      %11060 = vmatpush2.bf16.msra.mxu0 %v8902
      %11061 = vmatprep.subr.bf16.mxu0 0
      %11062 = vmatpush2.bf16.msra.mxu0 %v8901
      %11063 = vmatprep.subr.bf16.mxu0 0
      %11064 = vmatpush2.bf16.msra.mxu0 %v8900
      %11065 = vmatprep.subr.bf16.mxu0 0
      %11066 = vmatpush2.bf16.msra.mxu0 %v8899
      %11067 = vmatprep.mubr.bf16.mxu0 %v4130
      %11068 = vmatmul.mubr.bf16.gmra.mxu0 %v4126
      %v11069 = vpop.f32.mrf.mxu0
      %v11070 = vadd.f32 %v11030, %v11069
      %v11071 = vpop.f32.mrf.mxu0
      %v11072 = vpop.f32.mrf.mxu0
      %v11073 = vpop.f32.mrf.mxu0
      %11074 = vdwg.mxu0
      %11075 = vmatprep.subr.bf16.mxu0 0
      %11076 = vmatpush1.bf16.msra.mxu0 %v8914
      %11077 = vmatprep.subr.bf16.mxu0 0
      %11078 = vmatpush1.bf16.msra.mxu0 %v8913
      %11079 = vmatprep.subr.bf16.mxu0 0
      %11080 = vmatpush1.bf16.msra.mxu0 %v8912
      %11081 = vmatprep.subr.bf16.mxu0 0
      %11082 = vmatpush1.bf16.msra.mxu0 %v8911
      %11083 = vmatprep.subr.bf16.mxu0 0
      %11084 = vmatpush1.bf16.msra.mxu0 %v8910
      %11085 = vmatprep.subr.bf16.mxu0 0
      %11086 = vmatpush1.bf16.msra.mxu0 %v8909
      %11087 = vmatprep.subr.bf16.mxu0 0
      %11088 = vmatpush1.bf16.msra.mxu0 %v8908
      %11089 = vmatprep.subr.bf16.mxu0 0
      %11090 = vmatpush1.bf16.msra.mxu0 %v8907
      %11091 = vmatprep.subr.bf16.mxu0 0
      %11092 = vmatpush2.bf16.msra.mxu0 %v8922
      %11093 = vmatprep.subr.bf16.mxu0 0
      %11094 = vmatpush2.bf16.msra.mxu0 %v8921
      %11095 = vmatprep.subr.bf16.mxu0 0
      %11096 = vmatpush2.bf16.msra.mxu0 %v8920
      %11097 = vmatprep.subr.bf16.mxu0 0
      %11098 = vmatpush2.bf16.msra.mxu0 %v8919
      %11099 = vmatprep.subr.bf16.mxu0 0
      %11100 = vmatpush2.bf16.msra.mxu0 %v8918
      %11101 = vmatprep.subr.bf16.mxu0 0
      %11102 = vmatpush2.bf16.msra.mxu0 %v8917
      %11103 = vmatprep.subr.bf16.mxu0 0
      %11104 = vmatpush2.bf16.msra.mxu0 %v8916
      %11105 = vmatprep.subr.bf16.mxu0 0
      %11106 = vmatpush2.bf16.msra.mxu0 %v8915
      %11107 = vmatprep.mubr.bf16.mxu0 %v4138
      %11108 = vmatmul.mubr.bf16.gmra.mxu0 %v4134
      %v11109 = vpop.f32.mrf.mxu0
      %v11110 = vadd.f32 %v11070, %v11109
      %v11111 = vpop.f32.mrf.mxu0
      %v11112 = vpop.f32.mrf.mxu0
      %v11113 = vpop.f32.mrf.mxu0
      %11114 = vdwg.mxu0
      %11115 = vmatprep.subr.bf16.mxu0 0
      %11116 = vmatpush1.bf16.msra.mxu0 %v8930
      %11117 = vmatprep.subr.bf16.mxu0 0
      %11118 = vmatpush1.bf16.msra.mxu0 %v8929
      %11119 = vmatprep.subr.bf16.mxu0 0
      %11120 = vmatpush1.bf16.msra.mxu0 %v8928
      %11121 = vmatprep.subr.bf16.mxu0 0
      %11122 = vmatpush1.bf16.msra.mxu0 %v8927
      %11123 = vmatprep.subr.bf16.mxu0 0
      %11124 = vmatpush1.bf16.msra.mxu0 %v8926
      %11125 = vmatprep.subr.bf16.mxu0 0
      %11126 = vmatpush1.bf16.msra.mxu0 %v8925
      %11127 = vmatprep.subr.bf16.mxu0 0
      %11128 = vmatpush1.bf16.msra.mxu0 %v8924
      %11129 = vmatprep.subr.bf16.mxu0 0
      %11130 = vmatpush1.bf16.msra.mxu0 %v8923
      %11131 = vmatprep.subr.bf16.mxu0 0
      %11132 = vmatpush2.bf16.msra.mxu0 %v8938
      %11133 = vmatprep.subr.bf16.mxu0 0
      %11134 = vmatpush2.bf16.msra.mxu0 %v8937
      %11135 = vmatprep.subr.bf16.mxu0 0
      %11136 = vmatpush2.bf16.msra.mxu0 %v8936
      %11137 = vmatprep.subr.bf16.mxu0 0
      %11138 = vmatpush2.bf16.msra.mxu0 %v8935
      %11139 = vmatprep.subr.bf16.mxu0 0
      %11140 = vmatpush2.bf16.msra.mxu0 %v8934
      %11141 = vmatprep.subr.bf16.mxu0 0
      %11142 = vmatpush2.bf16.msra.mxu0 %v8933
      %11143 = vmatprep.subr.bf16.mxu0 0
      %11144 = vmatpush2.bf16.msra.mxu0 %v8932
      %11145 = vmatprep.subr.bf16.mxu0 0
      %11146 = vmatpush2.bf16.msra.mxu0 %v8931
      %11147 = vmatprep.mubr.bf16.mxu0 %v4146
      %11148 = vmatmul.mubr.bf16.gmra.mxu0 %v4142
      %v11149 = vpop.f32.mrf.mxu0
      %v11150 = vadd.f32 %v11110, %v11149
      %v11151 = vpop.f32.mrf.mxu0
      %v11152 = vpop.f32.mrf.mxu0
      %v11153 = vpop.f32.mrf.mxu0
      %11154 = vdwg.mxu0
      %11155 = vmatprep.subr.bf16.mxu0 0
      %11156 = vmatpush1.bf16.msra.mxu0 %v8946
      %11157 = vmatprep.subr.bf16.mxu0 0
      %11158 = vmatpush1.bf16.msra.mxu0 %v8945
      %11159 = vmatprep.subr.bf16.mxu0 0
      %11160 = vmatpush1.bf16.msra.mxu0 %v8944
      %11161 = vmatprep.subr.bf16.mxu0 0
      %11162 = vmatpush1.bf16.msra.mxu0 %v8943
      %11163 = vmatprep.subr.bf16.mxu0 0
      %11164 = vmatpush1.bf16.msra.mxu0 %v8942
      %11165 = vmatprep.subr.bf16.mxu0 0
      %11166 = vmatpush1.bf16.msra.mxu0 %v8941
      %11167 = vmatprep.subr.bf16.mxu0 0
      %11168 = vmatpush1.bf16.msra.mxu0 %v8940
      %11169 = vmatprep.subr.bf16.mxu0 0
      %11170 = vmatpush1.bf16.msra.mxu0 %v8939
      %11171 = vmatprep.subr.bf16.mxu0 0
      %11172 = vmatpush2.bf16.msra.mxu0 %v8954
      %11173 = vmatprep.subr.bf16.mxu0 0
      %11174 = vmatpush2.bf16.msra.mxu0 %v8953
      %11175 = vmatprep.subr.bf16.mxu0 0
      %11176 = vmatpush2.bf16.msra.mxu0 %v8952
      %11177 = vmatprep.subr.bf16.mxu0 0
      %11178 = vmatpush2.bf16.msra.mxu0 %v8951
      %11179 = vmatprep.subr.bf16.mxu0 0
      %11180 = vmatpush2.bf16.msra.mxu0 %v8950
      %11181 = vmatprep.subr.bf16.mxu0 0
      %11182 = vmatpush2.bf16.msra.mxu0 %v8949
      %11183 = vmatprep.subr.bf16.mxu0 0
      %11184 = vmatpush2.bf16.msra.mxu0 %v8948
      %11185 = vmatprep.subr.bf16.mxu0 0
      %11186 = vmatpush2.bf16.msra.mxu0 %v8947
      %11187 = vmatprep.mubr.bf16.mxu0 %v4154
      %11188 = vmatmul.mubr.bf16.gmra.mxu0 %v4150
      %v11189 = vpop.f32.mrf.mxu0
      %v11190 = vadd.f32 %v11150, %v11189
      %v11191 = vpop.f32.mrf.mxu0
      %v11192 = vpop.f32.mrf.mxu0
      %v11193 = vpop.f32.mrf.mxu0
      %11194 = vdwg.mxu0
      %11195 = vmatprep.subr.bf16.mxu0 0
      %11196 = vmatpush1.bf16.msra.mxu0 %v8962
      %11197 = vmatprep.subr.bf16.mxu0 0
      %11198 = vmatpush1.bf16.msra.mxu0 %v8961
      %11199 = vmatprep.subr.bf16.mxu0 0
      %11200 = vmatpush1.bf16.msra.mxu0 %v8960
      %11201 = vmatprep.subr.bf16.mxu0 0
      %11202 = vmatpush1.bf16.msra.mxu0 %v8959
      %11203 = vmatprep.subr.bf16.mxu0 0
      %11204 = vmatpush1.bf16.msra.mxu0 %v8958
      %11205 = vmatprep.subr.bf16.mxu0 0
      %11206 = vmatpush1.bf16.msra.mxu0 %v8957
      %11207 = vmatprep.subr.bf16.mxu0 0
      %11208 = vmatpush1.bf16.msra.mxu0 %v8956
      %11209 = vmatprep.subr.bf16.mxu0 0
      %11210 = vmatpush1.bf16.msra.mxu0 %v8955
      %11211 = vmatprep.subr.bf16.mxu0 0
      %11212 = vmatpush2.bf16.msra.mxu0 %v8970
      %11213 = vmatprep.subr.bf16.mxu0 0
      %11214 = vmatpush2.bf16.msra.mxu0 %v8969
      %11215 = vmatprep.subr.bf16.mxu0 0
      %11216 = vmatpush2.bf16.msra.mxu0 %v8968
      %11217 = vmatprep.subr.bf16.mxu0 0
      %11218 = vmatpush2.bf16.msra.mxu0 %v8967
      %11219 = vmatprep.subr.bf16.mxu0 0
      %11220 = vmatpush2.bf16.msra.mxu0 %v8966
      %11221 = vmatprep.subr.bf16.mxu0 0
      %11222 = vmatpush2.bf16.msra.mxu0 %v8965
      %11223 = vmatprep.subr.bf16.mxu0 0
      %11224 = vmatpush2.bf16.msra.mxu0 %v8964
      %11225 = vmatprep.subr.bf16.mxu0 0
      %11226 = vmatpush2.bf16.msra.mxu0 %v8963
      %11227 = vmatprep.mubr.bf16.mxu0 %v4162
      %11228 = vmatmul.mubr.bf16.gmra.mxu0 %v4158
      %v11229 = vpop.f32.mrf.mxu0
      %v11230 = vadd.f32 %v11190, %v11229
      %v11231 = vpop.f32.mrf.mxu0
      %v11232 = vpop.f32.mrf.mxu0
      %v11233 = vpop.f32.mrf.mxu0
      %11234 = vdwg.mxu0
      %11235 = vmatprep.subr.bf16.mxu0 0
      %11236 = vmatpush1.bf16.msra.mxu0 %v8978
      %11237 = vmatprep.subr.bf16.mxu0 0
      %11238 = vmatpush1.bf16.msra.mxu0 %v8977
      %11239 = vmatprep.subr.bf16.mxu0 0
      %11240 = vmatpush1.bf16.msra.mxu0 %v8976
      %11241 = vmatprep.subr.bf16.mxu0 0
      %11242 = vmatpush1.bf16.msra.mxu0 %v8975
      %11243 = vmatprep.subr.bf16.mxu0 0
      %11244 = vmatpush1.bf16.msra.mxu0 %v8974
      %11245 = vmatprep.subr.bf16.mxu0 0
      %11246 = vmatpush1.bf16.msra.mxu0 %v8973
      %11247 = vmatprep.subr.bf16.mxu0 0
      %11248 = vmatpush1.bf16.msra.mxu0 %v8972
      %11249 = vmatprep.subr.bf16.mxu0 0
      %11250 = vmatpush1.bf16.msra.mxu0 %v8971
      %11251 = vmatprep.subr.bf16.mxu0 0
      %11252 = vmatpush2.bf16.msra.mxu0 %v8986
      %11253 = vmatprep.subr.bf16.mxu0 0
      %11254 = vmatpush2.bf16.msra.mxu0 %v8985
      %11255 = vmatprep.subr.bf16.mxu0 0
      %11256 = vmatpush2.bf16.msra.mxu0 %v8984
      %11257 = vmatprep.subr.bf16.mxu0 0
      %11258 = vmatpush2.bf16.msra.mxu0 %v8983
      %11259 = vmatprep.subr.bf16.mxu0 0
      %11260 = vmatpush2.bf16.msra.mxu0 %v8982
      %11261 = vmatprep.subr.bf16.mxu0 0
      %11262 = vmatpush2.bf16.msra.mxu0 %v8981
      %11263 = vmatprep.subr.bf16.mxu0 0
      %11264 = vmatpush2.bf16.msra.mxu0 %v8980
      %11265 = vmatprep.subr.bf16.mxu0 0
      %11266 = vmatpush2.bf16.msra.mxu0 %v8979
      %11267 = vmatprep.mubr.bf16.mxu0 %v4170
      %11268 = vmatmul.mubr.bf16.gmra.mxu0 %v4166
      %v11269 = vpop.f32.mrf.mxu0
      %v11270 = vadd.f32 %v11230, %v11269
      %v11271 = vpop.f32.mrf.mxu0
      %v11272 = vpop.f32.mrf.mxu0
      %v11273 = vpop.f32.mrf.mxu0
      %11274 = vdwg.mxu0
      %11275 = vmatprep.subr.bf16.mxu0 0
      %11276 = vmatpush1.bf16.msra.mxu0 %v8994
      %11277 = vmatprep.subr.bf16.mxu0 0
      %11278 = vmatpush1.bf16.msra.mxu0 %v8993
      %11279 = vmatprep.subr.bf16.mxu0 0
      %11280 = vmatpush1.bf16.msra.mxu0 %v8992
      %11281 = vmatprep.subr.bf16.mxu0 0
      %11282 = vmatpush1.bf16.msra.mxu0 %v8991
      %11283 = vmatprep.subr.bf16.mxu0 0
      %11284 = vmatpush1.bf16.msra.mxu0 %v8990
      %11285 = vmatprep.subr.bf16.mxu0 0
      %11286 = vmatpush1.bf16.msra.mxu0 %v8989
      %11287 = vmatprep.subr.bf16.mxu0 0
      %11288 = vmatpush1.bf16.msra.mxu0 %v8988
      %11289 = vmatprep.subr.bf16.mxu0 0
      %11290 = vmatpush1.bf16.msra.mxu0 %v8987
      %11291 = vmatprep.subr.bf16.mxu0 0
      %11292 = vmatpush2.bf16.msra.mxu0 %v9002
      %11293 = vmatprep.subr.bf16.mxu0 0
      %11294 = vmatpush2.bf16.msra.mxu0 %v9001
      %11295 = vmatprep.subr.bf16.mxu0 0
      %11296 = vmatpush2.bf16.msra.mxu0 %v9000
      %11297 = vmatprep.subr.bf16.mxu0 0
      %11298 = vmatpush2.bf16.msra.mxu0 %v8999
      %11299 = vmatprep.subr.bf16.mxu0 0
      %11300 = vmatpush2.bf16.msra.mxu0 %v8998
      %11301 = vmatprep.subr.bf16.mxu0 0
      %11302 = vmatpush2.bf16.msra.mxu0 %v8997
      %11303 = vmatprep.subr.bf16.mxu0 0
      %11304 = vmatpush2.bf16.msra.mxu0 %v8996
      %11305 = vmatprep.subr.bf16.mxu0 0
      %11306 = vmatpush2.bf16.msra.mxu0 %v8995
      %11307 = vmatprep.mubr.bf16.mxu0 %v4178
      %11308 = vmatmul.mubr.bf16.gmra.mxu0 %v4174
      %v11309 = vpop.f32.mrf.mxu0
      %v11310 = vadd.f32 %v11270, %v11309
      %v11311 = vpop.f32.mrf.mxu0
      %v11312 = vpop.f32.mrf.mxu0
      %v11313 = vpop.f32.mrf.mxu0
      %11314 = vdwg.mxu0
      %11315 = vmatprep.subr.bf16.mxu0 0
      %11316 = vmatpush1.bf16.msra.mxu0 %v9010
      %11317 = vmatprep.subr.bf16.mxu0 0
      %11318 = vmatpush1.bf16.msra.mxu0 %v9009
      %11319 = vmatprep.subr.bf16.mxu0 0
      %11320 = vmatpush1.bf16.msra.mxu0 %v9008
      %11321 = vmatprep.subr.bf16.mxu0 0
      %11322 = vmatpush1.bf16.msra.mxu0 %v9007
      %11323 = vmatprep.subr.bf16.mxu0 0
      %11324 = vmatpush1.bf16.msra.mxu0 %v9006
      %11325 = vmatprep.subr.bf16.mxu0 0
      %11326 = vmatpush1.bf16.msra.mxu0 %v9005
      %11327 = vmatprep.subr.bf16.mxu0 0
      %11328 = vmatpush1.bf16.msra.mxu0 %v9004
      %11329 = vmatprep.subr.bf16.mxu0 0
      %11330 = vmatpush1.bf16.msra.mxu0 %v9003
      %11331 = vmatprep.subr.bf16.mxu0 0
      %11332 = vmatpush2.bf16.msra.mxu0 %v9018
      %11333 = vmatprep.subr.bf16.mxu0 0
      %11334 = vmatpush2.bf16.msra.mxu0 %v9017
      %11335 = vmatprep.subr.bf16.mxu0 0
      %11336 = vmatpush2.bf16.msra.mxu0 %v9016
      %11337 = vmatprep.subr.bf16.mxu0 0
      %11338 = vmatpush2.bf16.msra.mxu0 %v9015
      %11339 = vmatprep.subr.bf16.mxu0 0
      %11340 = vmatpush2.bf16.msra.mxu0 %v9014
      %11341 = vmatprep.subr.bf16.mxu0 0
      %11342 = vmatpush2.bf16.msra.mxu0 %v9013
      %11343 = vmatprep.subr.bf16.mxu0 0
      %11344 = vmatpush2.bf16.msra.mxu0 %v9012
      %11345 = vmatprep.subr.bf16.mxu0 0
      %11346 = vmatpush2.bf16.msra.mxu0 %v9011
      %11347 = vmatprep.mubr.bf16.mxu0 %v4186
      %11348 = vmatmul.mubr.bf16.gmra.mxu0 %v4182
      %v11349 = vpop.f32.mrf.mxu0
      %v11350 = vadd.f32 %v11310, %v11349
      %v11351 = vpop.f32.mrf.mxu0
      %v11352 = vpop.f32.mrf.mxu0
      %v11353 = vpop.f32.mrf.mxu0
      %11354 = vdwg.mxu0
      %11355 = vmatprep.subr.bf16.mxu0 0
      %11356 = vmatpush1.bf16.msra.mxu0 %v9026
      %11357 = vmatprep.subr.bf16.mxu0 0
      %11358 = vmatpush1.bf16.msra.mxu0 %v9025
      %11359 = vmatprep.subr.bf16.mxu0 0
      %11360 = vmatpush1.bf16.msra.mxu0 %v9024
      %11361 = vmatprep.subr.bf16.mxu0 0
      %11362 = vmatpush1.bf16.msra.mxu0 %v9023
      %11363 = vmatprep.subr.bf16.mxu0 0
      %11364 = vmatpush1.bf16.msra.mxu0 %v9022
      %11365 = vmatprep.subr.bf16.mxu0 0
      %11366 = vmatpush1.bf16.msra.mxu0 %v9021
      %11367 = vmatprep.subr.bf16.mxu0 0
      %11368 = vmatpush1.bf16.msra.mxu0 %v9020
      %11369 = vmatprep.subr.bf16.mxu0 0
      %11370 = vmatpush1.bf16.msra.mxu0 %v9019
      %11371 = vmatprep.subr.bf16.mxu0 0
      %11372 = vmatpush2.bf16.msra.mxu0 %v9034
      %11373 = vmatprep.subr.bf16.mxu0 0
      %11374 = vmatpush2.bf16.msra.mxu0 %v9033
      %11375 = vmatprep.subr.bf16.mxu0 0
      %11376 = vmatpush2.bf16.msra.mxu0 %v9032
      %11377 = vmatprep.subr.bf16.mxu0 0
      %11378 = vmatpush2.bf16.msra.mxu0 %v9031
      %11379 = vmatprep.subr.bf16.mxu0 0
      %11380 = vmatpush2.bf16.msra.mxu0 %v9030
      %11381 = vmatprep.subr.bf16.mxu0 0
      %11382 = vmatpush2.bf16.msra.mxu0 %v9029
      %11383 = vmatprep.subr.bf16.mxu0 0
      %11384 = vmatpush2.bf16.msra.mxu0 %v9028
      %11385 = vmatprep.subr.bf16.mxu0 0
      %11386 = vmatpush2.bf16.msra.mxu0 %v9027
      %11387 = vmatprep.mubr.bf16.mxu0 %v4194
      %11388 = vmatmul.mubr.bf16.gmra.mxu0 %v4190
      %v11389 = vpop.f32.mrf.mxu0
      %v11390 = vadd.f32 %v11350, %v11389
      %v11391 = vpop.f32.mrf.mxu0
      %v11392 = vpop.f32.mrf.mxu0
      %v11393 = vpop.f32.mrf.mxu0
      %11394 = vdwg.mxu0
      %11395 = vmatprep.subr.bf16.mxu0 0
      %11396 = vmatpush1.bf16.msra.mxu0 %v9042
      %11397 = vmatprep.subr.bf16.mxu0 0
      %11398 = vmatpush1.bf16.msra.mxu0 %v9041
      %11399 = vmatprep.subr.bf16.mxu0 0
      %11400 = vmatpush1.bf16.msra.mxu0 %v9040
      %11401 = vmatprep.subr.bf16.mxu0 0
      %11402 = vmatpush1.bf16.msra.mxu0 %v9039
      %11403 = vmatprep.subr.bf16.mxu0 0
      %11404 = vmatpush1.bf16.msra.mxu0 %v9038
      %11405 = vmatprep.subr.bf16.mxu0 0
      %11406 = vmatpush1.bf16.msra.mxu0 %v9037
      %11407 = vmatprep.subr.bf16.mxu0 0
      %11408 = vmatpush1.bf16.msra.mxu0 %v9036
      %11409 = vmatprep.subr.bf16.mxu0 0
      %11410 = vmatpush1.bf16.msra.mxu0 %v9035
      %11411 = vmatprep.subr.bf16.mxu0 0
      %11412 = vmatpush2.bf16.msra.mxu0 %v9050
      %11413 = vmatprep.subr.bf16.mxu0 0
      %11414 = vmatpush2.bf16.msra.mxu0 %v9049
      %11415 = vmatprep.subr.bf16.mxu0 0
      %11416 = vmatpush2.bf16.msra.mxu0 %v9048
      %11417 = vmatprep.subr.bf16.mxu0 0
      %11418 = vmatpush2.bf16.msra.mxu0 %v9047
      %11419 = vmatprep.subr.bf16.mxu0 0
      %11420 = vmatpush2.bf16.msra.mxu0 %v9046
      %11421 = vmatprep.subr.bf16.mxu0 0
      %11422 = vmatpush2.bf16.msra.mxu0 %v9045
      %11423 = vmatprep.subr.bf16.mxu0 0
      %11424 = vmatpush2.bf16.msra.mxu0 %v9044
      %11425 = vmatprep.subr.bf16.mxu0 0
      %11426 = vmatpush2.bf16.msra.mxu0 %v9043
      %11427 = vmatprep.mubr.bf16.mxu0 %v4202
      %11428 = vmatmul.mubr.bf16.gmra.mxu0 %v4198
      %v11429 = vpop.f32.mrf.mxu0
      %v11430 = vadd.f32 %v11390, %v11429
      %v11431 = vpop.f32.mrf.mxu0
      %v11432 = vpop.f32.mrf.mxu0
      %v11433 = vpop.f32.mrf.mxu0
      %11434 = vdwg.mxu0
      %11435 = vmatprep.subr.bf16.mxu0 0
      %11436 = vmatpush1.bf16.msra.mxu0 %v9058
      %11437 = vmatprep.subr.bf16.mxu0 0
      %11438 = vmatpush1.bf16.msra.mxu0 %v9057
      %11439 = vmatprep.subr.bf16.mxu0 0
      %11440 = vmatpush1.bf16.msra.mxu0 %v9056
      %11441 = vmatprep.subr.bf16.mxu0 0
      %11442 = vmatpush1.bf16.msra.mxu0 %v9055
      %11443 = vmatprep.subr.bf16.mxu0 0
      %11444 = vmatpush1.bf16.msra.mxu0 %v9054
      %11445 = vmatprep.subr.bf16.mxu0 0
      %11446 = vmatpush1.bf16.msra.mxu0 %v9053
      %11447 = vmatprep.subr.bf16.mxu0 0
      %11448 = vmatpush1.bf16.msra.mxu0 %v9052
      %11449 = vmatprep.subr.bf16.mxu0 0
      %11450 = vmatpush1.bf16.msra.mxu0 %v9051
      %11451 = vmatprep.subr.bf16.mxu0 0
      %11452 = vmatpush2.bf16.msra.mxu0 %v9066
      %11453 = vmatprep.subr.bf16.mxu0 0
      %11454 = vmatpush2.bf16.msra.mxu0 %v9065
      %11455 = vmatprep.subr.bf16.mxu0 0
      %11456 = vmatpush2.bf16.msra.mxu0 %v9064
      %11457 = vmatprep.subr.bf16.mxu0 0
      %11458 = vmatpush2.bf16.msra.mxu0 %v9063
      %11459 = vmatprep.subr.bf16.mxu0 0
      %11460 = vmatpush2.bf16.msra.mxu0 %v9062
      %11461 = vmatprep.subr.bf16.mxu0 0
      %11462 = vmatpush2.bf16.msra.mxu0 %v9061
      %11463 = vmatprep.subr.bf16.mxu0 0
      %11464 = vmatpush2.bf16.msra.mxu0 %v9060
      %11465 = vmatprep.subr.bf16.mxu0 0
      %11466 = vmatpush2.bf16.msra.mxu0 %v9059
      %11467 = vmatprep.mubr.bf16.mxu0 %v4210
      %11468 = vmatmul.mubr.bf16.gmra.mxu0 %v4206
      %v11469 = vpop.f32.mrf.mxu0
      %v11470 = vadd.f32 %v11430, %v11469
      %v11471 = vpop.f32.mrf.mxu0
      %v11472 = vpop.f32.mrf.mxu0
      %v11473 = vpop.f32.mrf.mxu0
      %11474 = vdwg.mxu0
      %11475 = vmatprep.subr.bf16.mxu0 0
      %11476 = vmatpush1.bf16.msra.mxu0 %v9074
      %11477 = vmatprep.subr.bf16.mxu0 0
      %11478 = vmatpush1.bf16.msra.mxu0 %v9073
      %11479 = vmatprep.subr.bf16.mxu0 0
      %11480 = vmatpush1.bf16.msra.mxu0 %v9072
      %11481 = vmatprep.subr.bf16.mxu0 0
      %11482 = vmatpush1.bf16.msra.mxu0 %v9071
      %11483 = vmatprep.subr.bf16.mxu0 0
      %11484 = vmatpush1.bf16.msra.mxu0 %v9070
      %11485 = vmatprep.subr.bf16.mxu0 0
      %11486 = vmatpush1.bf16.msra.mxu0 %v9069
      %11487 = vmatprep.subr.bf16.mxu0 0
      %11488 = vmatpush1.bf16.msra.mxu0 %v9068
      %11489 = vmatprep.subr.bf16.mxu0 0
      %11490 = vmatpush1.bf16.msra.mxu0 %v9067
      %11491 = vmatprep.subr.bf16.mxu0 0
      %11492 = vmatpush2.bf16.msra.mxu0 %v9082
      %11493 = vmatprep.subr.bf16.mxu0 0
      %11494 = vmatpush2.bf16.msra.mxu0 %v9081
      %11495 = vmatprep.subr.bf16.mxu0 0
      %11496 = vmatpush2.bf16.msra.mxu0 %v9080
      %11497 = vmatprep.subr.bf16.mxu0 0
      %11498 = vmatpush2.bf16.msra.mxu0 %v9079
      %11499 = vmatprep.subr.bf16.mxu0 0
      %11500 = vmatpush2.bf16.msra.mxu0 %v9078
      %11501 = vmatprep.subr.bf16.mxu0 0
      %11502 = vmatpush2.bf16.msra.mxu0 %v9077
      %11503 = vmatprep.subr.bf16.mxu0 0
      %11504 = vmatpush2.bf16.msra.mxu0 %v9076
      %11505 = vmatprep.subr.bf16.mxu0 0
      %11506 = vmatpush2.bf16.msra.mxu0 %v9075
      %11507 = vmatprep.mubr.bf16.mxu0 %v4218
      %11508 = vmatmul.mubr.bf16.gmra.mxu0 %v4214
      %v11509 = vpop.f32.mrf.mxu0
      %v11510 = vadd.f32 %v11470, %v11509
      %v11511 = vpop.f32.mrf.mxu0
      %v11512 = vpop.f32.mrf.mxu0
      %v11513 = vpop.f32.mrf.mxu0
      %11514 = vdwg.mxu0
      %11515 = vmatprep.subr.bf16.mxu0 0
      %11516 = vmatpush1.bf16.msra.mxu0 %v9090
      %11517 = vmatprep.subr.bf16.mxu0 0
      %11518 = vmatpush1.bf16.msra.mxu0 %v9089
      %11519 = vmatprep.subr.bf16.mxu0 0
      %11520 = vmatpush1.bf16.msra.mxu0 %v9088
      %11521 = vmatprep.subr.bf16.mxu0 0
      %11522 = vmatpush1.bf16.msra.mxu0 %v9087
      %11523 = vmatprep.subr.bf16.mxu0 0
      %11524 = vmatpush1.bf16.msra.mxu0 %v9086
      %11525 = vmatprep.subr.bf16.mxu0 0
      %11526 = vmatpush1.bf16.msra.mxu0 %v9085
      %11527 = vmatprep.subr.bf16.mxu0 0
      %11528 = vmatpush1.bf16.msra.mxu0 %v9084
      %11529 = vmatprep.subr.bf16.mxu0 0
      %11530 = vmatpush1.bf16.msra.mxu0 %v9083
      %11531 = vmatprep.subr.bf16.mxu0 0
      %11532 = vmatpush2.bf16.msra.mxu0 %v9098
      %11533 = vmatprep.subr.bf16.mxu0 0
      %11534 = vmatpush2.bf16.msra.mxu0 %v9097
      %11535 = vmatprep.subr.bf16.mxu0 0
      %11536 = vmatpush2.bf16.msra.mxu0 %v9096
      %11537 = vmatprep.subr.bf16.mxu0 0
      %11538 = vmatpush2.bf16.msra.mxu0 %v9095
      %11539 = vmatprep.subr.bf16.mxu0 0
      %11540 = vmatpush2.bf16.msra.mxu0 %v9094
      %11541 = vmatprep.subr.bf16.mxu0 0
      %11542 = vmatpush2.bf16.msra.mxu0 %v9093
      %11543 = vmatprep.subr.bf16.mxu0 0
      %11544 = vmatpush2.bf16.msra.mxu0 %v9092
      %11545 = vmatprep.subr.bf16.mxu0 0
      %11546 = vmatpush2.bf16.msra.mxu0 %v9091
      %11547 = vmatprep.mubr.bf16.mxu0 %v4226
      %11548 = vmatmul.mubr.bf16.gmra.mxu0 %v4222
      %v11549 = vpop.f32.mrf.mxu0
      %v11550 = vadd.f32 %v11510, %v11549
      %v11551 = vpop.f32.mrf.mxu0
      %v11552 = vpop.f32.mrf.mxu0
      %v11553 = vpop.f32.mrf.mxu0
      %11554 = vdwg.mxu0
      %11555 = vmatprep.subr.bf16.mxu0 0
      %11556 = vmatpush1.bf16.msra.mxu0 %v9106
      %11557 = vmatprep.subr.bf16.mxu0 0
      %11558 = vmatpush1.bf16.msra.mxu0 %v9105
      %11559 = vmatprep.subr.bf16.mxu0 0
      %11560 = vmatpush1.bf16.msra.mxu0 %v9104
      %11561 = vmatprep.subr.bf16.mxu0 0
      %11562 = vmatpush1.bf16.msra.mxu0 %v9103
      %11563 = vmatprep.subr.bf16.mxu0 0
      %11564 = vmatpush1.bf16.msra.mxu0 %v9102
      %11565 = vmatprep.subr.bf16.mxu0 0
      %11566 = vmatpush1.bf16.msra.mxu0 %v9101
      %11567 = vmatprep.subr.bf16.mxu0 0
      %11568 = vmatpush1.bf16.msra.mxu0 %v9100
      %11569 = vmatprep.subr.bf16.mxu0 0
      %11570 = vmatpush1.bf16.msra.mxu0 %v9099
      %11571 = vmatprep.subr.bf16.mxu0 0
      %11572 = vmatpush2.bf16.msra.mxu0 %v9114
      %11573 = vmatprep.subr.bf16.mxu0 0
      %11574 = vmatpush2.bf16.msra.mxu0 %v9113
      %11575 = vmatprep.subr.bf16.mxu0 0
      %11576 = vmatpush2.bf16.msra.mxu0 %v9112
      %11577 = vmatprep.subr.bf16.mxu0 0
      %11578 = vmatpush2.bf16.msra.mxu0 %v9111
      %11579 = vmatprep.subr.bf16.mxu0 0
      %11580 = vmatpush2.bf16.msra.mxu0 %v9110
      %11581 = vmatprep.subr.bf16.mxu0 0
      %11582 = vmatpush2.bf16.msra.mxu0 %v9109
      %11583 = vmatprep.subr.bf16.mxu0 0
      %11584 = vmatpush2.bf16.msra.mxu0 %v9108
      %11585 = vmatprep.subr.bf16.mxu0 0
      %11586 = vmatpush2.bf16.msra.mxu0 %v9107
      %11587 = vmatprep.mubr.bf16.mxu0 %v4234
      %11588 = vmatmul.mubr.bf16.gmra.mxu0 %v4230
      %v11589 = vpop.f32.mrf.mxu0
      %v11590 = vadd.f32 %v11550, %v11589
      %v11591 = vpop.f32.mrf.mxu0
      %v11592 = vpop.f32.mrf.mxu0
      %v11593 = vpop.f32.mrf.mxu0
      %11594 = vdwg.mxu0
      %11595 = vmatprep.subr.bf16.mxu0 0
      %11596 = vmatpush1.bf16.msra.mxu0 %v9122
      %11597 = vmatprep.subr.bf16.mxu0 0
      %11598 = vmatpush1.bf16.msra.mxu0 %v9121
      %11599 = vmatprep.subr.bf16.mxu0 0
      %11600 = vmatpush1.bf16.msra.mxu0 %v9120
      %11601 = vmatprep.subr.bf16.mxu0 0
      %11602 = vmatpush1.bf16.msra.mxu0 %v9119
      %11603 = vmatprep.subr.bf16.mxu0 0
      %11604 = vmatpush1.bf16.msra.mxu0 %v9118
      %11605 = vmatprep.subr.bf16.mxu0 0
      %11606 = vmatpush1.bf16.msra.mxu0 %v9117
      %11607 = vmatprep.subr.bf16.mxu0 0
      %11608 = vmatpush1.bf16.msra.mxu0 %v9116
      %11609 = vmatprep.subr.bf16.mxu0 0
      %11610 = vmatpush1.bf16.msra.mxu0 %v9115
      %11611 = vmatprep.subr.bf16.mxu0 0
      %11612 = vmatpush2.bf16.msra.mxu0 %v9130
      %11613 = vmatprep.subr.bf16.mxu0 0
      %11614 = vmatpush2.bf16.msra.mxu0 %v9129
      %11615 = vmatprep.subr.bf16.mxu0 0
      %11616 = vmatpush2.bf16.msra.mxu0 %v9128
      %11617 = vmatprep.subr.bf16.mxu0 0
      %11618 = vmatpush2.bf16.msra.mxu0 %v9127
      %11619 = vmatprep.subr.bf16.mxu0 0
      %11620 = vmatpush2.bf16.msra.mxu0 %v9126
      %11621 = vmatprep.subr.bf16.mxu0 0
      %11622 = vmatpush2.bf16.msra.mxu0 %v9125
      %11623 = vmatprep.subr.bf16.mxu0 0
      %11624 = vmatpush2.bf16.msra.mxu0 %v9124
      %11625 = vmatprep.subr.bf16.mxu0 0
      %11626 = vmatpush2.bf16.msra.mxu0 %v9123
      %11627 = vmatprep.mubr.bf16.mxu0 %v4242
      %11628 = vmatmul.mubr.bf16.gmra.mxu0 %v4238
      %v11629 = vpop.f32.mrf.mxu0
      %v11630 = vadd.f32 %v11590, %v11629
      %v11631 = vpop.f32.mrf.mxu0
      %v11632 = vpop.f32.mrf.mxu0
      %v11633 = vpop.f32.mrf.mxu0
      %11634 = vdwg.mxu0
      %11635 = vmatprep.subr.bf16.mxu0 0
      %11636 = vmatpush1.bf16.msra.mxu0 %v9138
      %11637 = vmatprep.subr.bf16.mxu0 0
      %11638 = vmatpush1.bf16.msra.mxu0 %v9137
      %11639 = vmatprep.subr.bf16.mxu0 0
      %11640 = vmatpush1.bf16.msra.mxu0 %v9136
      %11641 = vmatprep.subr.bf16.mxu0 0
      %11642 = vmatpush1.bf16.msra.mxu0 %v9135
      %11643 = vmatprep.subr.bf16.mxu0 0
      %11644 = vmatpush1.bf16.msra.mxu0 %v9134
      %11645 = vmatprep.subr.bf16.mxu0 0
      %11646 = vmatpush1.bf16.msra.mxu0 %v9133
      %11647 = vmatprep.subr.bf16.mxu0 0
      %11648 = vmatpush1.bf16.msra.mxu0 %v9132
      %11649 = vmatprep.subr.bf16.mxu0 0
      %11650 = vmatpush1.bf16.msra.mxu0 %v9131
      %11651 = vmatprep.subr.bf16.mxu0 0
      %11652 = vmatpush2.bf16.msra.mxu0 %v9146
      %11653 = vmatprep.subr.bf16.mxu0 0
      %11654 = vmatpush2.bf16.msra.mxu0 %v9145
      %11655 = vmatprep.subr.bf16.mxu0 0
      %11656 = vmatpush2.bf16.msra.mxu0 %v9144
      %11657 = vmatprep.subr.bf16.mxu0 0
      %11658 = vmatpush2.bf16.msra.mxu0 %v9143
      %11659 = vmatprep.subr.bf16.mxu0 0
      %11660 = vmatpush2.bf16.msra.mxu0 %v9142
      %11661 = vmatprep.subr.bf16.mxu0 0
      %11662 = vmatpush2.bf16.msra.mxu0 %v9141
      %11663 = vmatprep.subr.bf16.mxu0 0
      %11664 = vmatpush2.bf16.msra.mxu0 %v9140
      %11665 = vmatprep.subr.bf16.mxu0 0
      %11666 = vmatpush2.bf16.msra.mxu0 %v9139
      %11667 = vmatprep.mubr.bf16.mxu0 %v4250
      %11668 = vmatmul.mubr.bf16.gmra.mxu0 %v4246
      %v11669 = vpop.f32.mrf.mxu0
      %v11670 = vadd.f32 %v11630, %v11669
      %v11671 = vpop.f32.mrf.mxu0
      %v11672 = vpop.f32.mrf.mxu0
      %v11673 = vpop.f32.mrf.mxu0
      %11674 = vdwg.mxu0
      %11675 = vmatprep.subr.bf16.mxu0 0
      %11676 = vmatpush1.bf16.msra.mxu0 %v9154
      %11677 = vmatprep.subr.bf16.mxu0 0
      %11678 = vmatpush1.bf16.msra.mxu0 %v9153
      %11679 = vmatprep.subr.bf16.mxu0 0
      %11680 = vmatpush1.bf16.msra.mxu0 %v9152
      %11681 = vmatprep.subr.bf16.mxu0 0
      %11682 = vmatpush1.bf16.msra.mxu0 %v9151
      %11683 = vmatprep.subr.bf16.mxu0 0
      %11684 = vmatpush1.bf16.msra.mxu0 %v9150
      %11685 = vmatprep.subr.bf16.mxu0 0
      %11686 = vmatpush1.bf16.msra.mxu0 %v9149
      %11687 = vmatprep.subr.bf16.mxu0 0
      %11688 = vmatpush1.bf16.msra.mxu0 %v9148
      %11689 = vmatprep.subr.bf16.mxu0 0
      %11690 = vmatpush1.bf16.msra.mxu0 %v9147
      %11691 = vmatprep.subr.bf16.mxu0 0
      %11692 = vmatpush2.bf16.msra.mxu0 %v9162
      %11693 = vmatprep.subr.bf16.mxu0 0
      %11694 = vmatpush2.bf16.msra.mxu0 %v9161
      %11695 = vmatprep.subr.bf16.mxu0 0
      %11696 = vmatpush2.bf16.msra.mxu0 %v9160
      %11697 = vmatprep.subr.bf16.mxu0 0
      %11698 = vmatpush2.bf16.msra.mxu0 %v9159
      %11699 = vmatprep.subr.bf16.mxu0 0
      %11700 = vmatpush2.bf16.msra.mxu0 %v9158
      %11701 = vmatprep.subr.bf16.mxu0 0
      %11702 = vmatpush2.bf16.msra.mxu0 %v9157
      %11703 = vmatprep.subr.bf16.mxu0 0
      %11704 = vmatpush2.bf16.msra.mxu0 %v9156
      %11705 = vmatprep.subr.bf16.mxu0 0
      %11706 = vmatpush2.bf16.msra.mxu0 %v9155
      %11707 = vmatprep.mubr.bf16.mxu0 %v4258
      %11708 = vmatmul.mubr.bf16.gmra.mxu0 %v4254
      %v11709 = vpop.f32.mrf.mxu0
      %v11710 = vadd.f32 %v11670, %v11709
      %v11711 = vpop.f32.mrf.mxu0
      %v11712 = vpop.f32.mrf.mxu0
      %v11713 = vpop.f32.mrf.mxu0
      %11714 = vdwg.mxu0
      %11715 = vmatprep.subr.bf16.mxu0 0
      %11716 = vmatpush1.bf16.msra.mxu0 %v9170
      %11717 = vmatprep.subr.bf16.mxu0 0
      %11718 = vmatpush1.bf16.msra.mxu0 %v9169
      %11719 = vmatprep.subr.bf16.mxu0 0
      %11720 = vmatpush1.bf16.msra.mxu0 %v9168
      %11721 = vmatprep.subr.bf16.mxu0 0
      %11722 = vmatpush1.bf16.msra.mxu0 %v9167
      %11723 = vmatprep.subr.bf16.mxu0 0
      %11724 = vmatpush1.bf16.msra.mxu0 %v9166
      %11725 = vmatprep.subr.bf16.mxu0 0
      %11726 = vmatpush1.bf16.msra.mxu0 %v9165
      %11727 = vmatprep.subr.bf16.mxu0 0
      %11728 = vmatpush1.bf16.msra.mxu0 %v9164
      %11729 = vmatprep.subr.bf16.mxu0 0
      %11730 = vmatpush1.bf16.msra.mxu0 %v9163
      %11731 = vmatprep.subr.bf16.mxu0 0
      %11732 = vmatpush2.bf16.msra.mxu0 %v9178
      %11733 = vmatprep.subr.bf16.mxu0 0
      %11734 = vmatpush2.bf16.msra.mxu0 %v9177
      %11735 = vmatprep.subr.bf16.mxu0 0
      %11736 = vmatpush2.bf16.msra.mxu0 %v9176
      %11737 = vmatprep.subr.bf16.mxu0 0
      %11738 = vmatpush2.bf16.msra.mxu0 %v9175
      %11739 = vmatprep.subr.bf16.mxu0 0
      %11740 = vmatpush2.bf16.msra.mxu0 %v9174
      %11741 = vmatprep.subr.bf16.mxu0 0
      %11742 = vmatpush2.bf16.msra.mxu0 %v9173
      %11743 = vmatprep.subr.bf16.mxu0 0
      %11744 = vmatpush2.bf16.msra.mxu0 %v9172
      %11745 = vmatprep.subr.bf16.mxu0 0
      %11746 = vmatpush2.bf16.msra.mxu0 %v9171
      %11747 = vmatprep.mubr.bf16.mxu0 %v4266
      %11748 = vmatmul.mubr.bf16.gmra.mxu0 %v4262
      %v11749 = vpop.f32.mrf.mxu0
      %v11750 = vadd.f32 %v11710, %v11749
      %v11751 = vpop.f32.mrf.mxu0
      %v11752 = vpop.f32.mrf.mxu0
      %v11753 = vpop.f32.mrf.mxu0
      %11754 = vdwg.mxu0
      %11755 = vmatprep.subr.bf16.mxu0 0
      %11756 = vmatpush1.bf16.msra.mxu0 %v9186
      %11757 = vmatprep.subr.bf16.mxu0 0
      %11758 = vmatpush1.bf16.msra.mxu0 %v9185
      %11759 = vmatprep.subr.bf16.mxu0 0
      %11760 = vmatpush1.bf16.msra.mxu0 %v9184
      %11761 = vmatprep.subr.bf16.mxu0 0
      %11762 = vmatpush1.bf16.msra.mxu0 %v9183
      %11763 = vmatprep.subr.bf16.mxu0 0
      %11764 = vmatpush1.bf16.msra.mxu0 %v9182
      %11765 = vmatprep.subr.bf16.mxu0 0
      %11766 = vmatpush1.bf16.msra.mxu0 %v9181
      %11767 = vmatprep.subr.bf16.mxu0 0
      %11768 = vmatpush1.bf16.msra.mxu0 %v9180
      %11769 = vmatprep.subr.bf16.mxu0 0
      %11770 = vmatpush1.bf16.msra.mxu0 %v9179
      %11771 = vmatprep.subr.bf16.mxu0 0
      %11772 = vmatpush2.bf16.msra.mxu0 %v9194
      %11773 = vmatprep.subr.bf16.mxu0 0
      %11774 = vmatpush2.bf16.msra.mxu0 %v9193
      %11775 = vmatprep.subr.bf16.mxu0 0
      %11776 = vmatpush2.bf16.msra.mxu0 %v9192
      %11777 = vmatprep.subr.bf16.mxu0 0
      %11778 = vmatpush2.bf16.msra.mxu0 %v9191
      %11779 = vmatprep.subr.bf16.mxu0 0
      %11780 = vmatpush2.bf16.msra.mxu0 %v9190
      %11781 = vmatprep.subr.bf16.mxu0 0
      %11782 = vmatpush2.bf16.msra.mxu0 %v9189
      %11783 = vmatprep.subr.bf16.mxu0 0
      %11784 = vmatpush2.bf16.msra.mxu0 %v9188
      %11785 = vmatprep.subr.bf16.mxu0 0
      %11786 = vmatpush2.bf16.msra.mxu0 %v9187
      %11787 = vmatprep.mubr.bf16.mxu0 %v4274
      %11788 = vmatmul.mubr.bf16.gmra.mxu0 %v4270
      %v11789 = vpop.f32.mrf.mxu0
      %v11790 = vadd.f32 %v11750, %v11789
      %v11791 = vpop.f32.mrf.mxu0
      %v11792 = vpop.f32.mrf.mxu0
      %v11793 = vpop.f32.mrf.mxu0
      %11794 = vdwg.mxu0
      %11795 = vmatprep.subr.bf16.mxu0 0
      %11796 = vmatpush1.bf16.msra.mxu0 %v9202
      %11797 = vmatprep.subr.bf16.mxu0 0
      %11798 = vmatpush1.bf16.msra.mxu0 %v9201
      %11799 = vmatprep.subr.bf16.mxu0 0
      %11800 = vmatpush1.bf16.msra.mxu0 %v9200
      %11801 = vmatprep.subr.bf16.mxu0 0
      %11802 = vmatpush1.bf16.msra.mxu0 %v9199
      %11803 = vmatprep.subr.bf16.mxu0 0
      %11804 = vmatpush1.bf16.msra.mxu0 %v9198
      %11805 = vmatprep.subr.bf16.mxu0 0
      %11806 = vmatpush1.bf16.msra.mxu0 %v9197
      %11807 = vmatprep.subr.bf16.mxu0 0
      %11808 = vmatpush1.bf16.msra.mxu0 %v9196
      %11809 = vmatprep.subr.bf16.mxu0 0
      %11810 = vmatpush1.bf16.msra.mxu0 %v9195
      %11811 = vmatprep.subr.bf16.mxu0 0
      %11812 = vmatpush2.bf16.msra.mxu0 %v9210
      %11813 = vmatprep.subr.bf16.mxu0 0
      %11814 = vmatpush2.bf16.msra.mxu0 %v9209
      %11815 = vmatprep.subr.bf16.mxu0 0
      %11816 = vmatpush2.bf16.msra.mxu0 %v9208
      %11817 = vmatprep.subr.bf16.mxu0 0
      %11818 = vmatpush2.bf16.msra.mxu0 %v9207
      %11819 = vmatprep.subr.bf16.mxu0 0
      %11820 = vmatpush2.bf16.msra.mxu0 %v9206
      %11821 = vmatprep.subr.bf16.mxu0 0
      %11822 = vmatpush2.bf16.msra.mxu0 %v9205
      %11823 = vmatprep.subr.bf16.mxu0 0
      %11824 = vmatpush2.bf16.msra.mxu0 %v9204
      %11825 = vmatprep.subr.bf16.mxu0 0
      %11826 = vmatpush2.bf16.msra.mxu0 %v9203
      %11827 = vmatprep.mubr.bf16.mxu0 %v4282
      %11828 = vmatmul.mubr.bf16.gmra.mxu0 %v4278
      %v11829 = vpop.f32.mrf.mxu0
      %v11830 = vadd.f32 %v11790, %v11829
      %v11831 = vpop.f32.mrf.mxu0
      %v11832 = vpop.f32.mrf.mxu0
      %v11833 = vpop.f32.mrf.mxu0
      %11834 = vdwg.mxu0
      %11835 = vmatprep.subr.bf16.mxu0 0
      %11836 = vmatpush1.bf16.msra.mxu0 %v9218
      %11837 = vmatprep.subr.bf16.mxu0 0
      %11838 = vmatpush1.bf16.msra.mxu0 %v9217
      %11839 = vmatprep.subr.bf16.mxu0 0
      %11840 = vmatpush1.bf16.msra.mxu0 %v9216
      %11841 = vmatprep.subr.bf16.mxu0 0
      %11842 = vmatpush1.bf16.msra.mxu0 %v9215
      %11843 = vmatprep.subr.bf16.mxu0 0
      %11844 = vmatpush1.bf16.msra.mxu0 %v9214
      %11845 = vmatprep.subr.bf16.mxu0 0
      %11846 = vmatpush1.bf16.msra.mxu0 %v9213
      %11847 = vmatprep.subr.bf16.mxu0 0
      %11848 = vmatpush1.bf16.msra.mxu0 %v9212
      %11849 = vmatprep.subr.bf16.mxu0 0
      %11850 = vmatpush1.bf16.msra.mxu0 %v9211
      %11851 = vmatprep.subr.bf16.mxu0 0
      %11852 = vmatpush2.bf16.msra.mxu0 %v9226
      %11853 = vmatprep.subr.bf16.mxu0 0
      %11854 = vmatpush2.bf16.msra.mxu0 %v9225
      %11855 = vmatprep.subr.bf16.mxu0 0
      %11856 = vmatpush2.bf16.msra.mxu0 %v9224
      %11857 = vmatprep.subr.bf16.mxu0 0
      %11858 = vmatpush2.bf16.msra.mxu0 %v9223
      %11859 = vmatprep.subr.bf16.mxu0 0
      %11860 = vmatpush2.bf16.msra.mxu0 %v9222
      %11861 = vmatprep.subr.bf16.mxu0 0
      %11862 = vmatpush2.bf16.msra.mxu0 %v9221
      %11863 = vmatprep.subr.bf16.mxu0 0
      %11864 = vmatpush2.bf16.msra.mxu0 %v9220
      %11865 = vmatprep.subr.bf16.mxu0 0
      %11866 = vmatpush2.bf16.msra.mxu0 %v9219
      %11867 = vmatprep.mubr.bf16.mxu0 %v4290
      %11868 = vmatmul.mubr.bf16.gmra.mxu0 %v4286
      %v11869 = vpop.f32.mrf.mxu0
      %v11870 = vadd.f32 %v11830, %v11869
      %v11871 = vpop.f32.mrf.mxu0
      %v11872 = vpop.f32.mrf.mxu0
      %v11873 = vpop.f32.mrf.mxu0
      %11874 = vdwg.mxu0
      %11875 = vmatprep.subr.bf16.mxu0 0
      %11876 = vmatpush1.bf16.msra.mxu0 %v9234
      %11877 = vmatprep.subr.bf16.mxu0 0
      %11878 = vmatpush1.bf16.msra.mxu0 %v9233
      %11879 = vmatprep.subr.bf16.mxu0 0
      %11880 = vmatpush1.bf16.msra.mxu0 %v9232
      %11881 = vmatprep.subr.bf16.mxu0 0
      %11882 = vmatpush1.bf16.msra.mxu0 %v9231
      %11883 = vmatprep.subr.bf16.mxu0 0
      %11884 = vmatpush1.bf16.msra.mxu0 %v9230
      %11885 = vmatprep.subr.bf16.mxu0 0
      %11886 = vmatpush1.bf16.msra.mxu0 %v9229
      %11887 = vmatprep.subr.bf16.mxu0 0
      %11888 = vmatpush1.bf16.msra.mxu0 %v9228
      %11889 = vmatprep.subr.bf16.mxu0 0
      %11890 = vmatpush1.bf16.msra.mxu0 %v9227
      %11891 = vmatprep.subr.bf16.mxu0 0
      %11892 = vmatpush2.bf16.msra.mxu0 %v9242
      %11893 = vmatprep.subr.bf16.mxu0 0
      %11894 = vmatpush2.bf16.msra.mxu0 %v9241
      %11895 = vmatprep.subr.bf16.mxu0 0
      %11896 = vmatpush2.bf16.msra.mxu0 %v9240
      %11897 = vmatprep.subr.bf16.mxu0 0
      %11898 = vmatpush2.bf16.msra.mxu0 %v9239
      %11899 = vmatprep.subr.bf16.mxu0 0
      %11900 = vmatpush2.bf16.msra.mxu0 %v9238
      %11901 = vmatprep.subr.bf16.mxu0 0
      %11902 = vmatpush2.bf16.msra.mxu0 %v9237
      %11903 = vmatprep.subr.bf16.mxu0 0
      %11904 = vmatpush2.bf16.msra.mxu0 %v9236
      %11905 = vmatprep.subr.bf16.mxu0 0
      %11906 = vmatpush2.bf16.msra.mxu0 %v9235
      %11907 = vmatprep.mubr.bf16.mxu0 %v4298
      %11908 = vmatmul.mubr.bf16.gmra.mxu0 %v4294
      %v11909 = vpop.f32.mrf.mxu0
      %v11910 = vadd.f32 %v11870, %v11909
      %v11911 = vpop.f32.mrf.mxu0
      %v11912 = vpop.f32.mrf.mxu0
      %v11913 = vpop.f32.mrf.mxu0
      %11914 = vdwg.mxu0
      %11915 = vmatprep.subr.bf16.mxu0 0
      %11916 = vmatpush1.bf16.msra.mxu0 %v9250
      %11917 = vmatprep.subr.bf16.mxu0 0
      %11918 = vmatpush1.bf16.msra.mxu0 %v9249
      %11919 = vmatprep.subr.bf16.mxu0 0
      %11920 = vmatpush1.bf16.msra.mxu0 %v9248
      %11921 = vmatprep.subr.bf16.mxu0 0
      %11922 = vmatpush1.bf16.msra.mxu0 %v9247
      %11923 = vmatprep.subr.bf16.mxu0 0
      %11924 = vmatpush1.bf16.msra.mxu0 %v9246
      %11925 = vmatprep.subr.bf16.mxu0 0
      %11926 = vmatpush1.bf16.msra.mxu0 %v9245
      %11927 = vmatprep.subr.bf16.mxu0 0
      %11928 = vmatpush1.bf16.msra.mxu0 %v9244
      %11929 = vmatprep.subr.bf16.mxu0 0
      %11930 = vmatpush1.bf16.msra.mxu0 %v9243
      %11931 = vmatprep.subr.bf16.mxu0 0
      %11932 = vmatpush2.bf16.msra.mxu0 %v9258
      %11933 = vmatprep.subr.bf16.mxu0 0
      %11934 = vmatpush2.bf16.msra.mxu0 %v9257
      %11935 = vmatprep.subr.bf16.mxu0 0
      %11936 = vmatpush2.bf16.msra.mxu0 %v9256
      %11937 = vmatprep.subr.bf16.mxu0 0
      %11938 = vmatpush2.bf16.msra.mxu0 %v9255
      %11939 = vmatprep.subr.bf16.mxu0 0
      %11940 = vmatpush2.bf16.msra.mxu0 %v9254
      %11941 = vmatprep.subr.bf16.mxu0 0
      %11942 = vmatpush2.bf16.msra.mxu0 %v9253
      %11943 = vmatprep.subr.bf16.mxu0 0
      %11944 = vmatpush2.bf16.msra.mxu0 %v9252
      %11945 = vmatprep.subr.bf16.mxu0 0
      %11946 = vmatpush2.bf16.msra.mxu0 %v9251
      %11947 = vmatprep.mubr.bf16.mxu0 %v4306
      %11948 = vmatmul.mubr.bf16.gmra.mxu0 %v4302
      %v11949 = vpop.f32.mrf.mxu0
      %v11950 = vadd.f32 %v11910, %v11949
      %v11951 = vpop.f32.mrf.mxu0
      %v11952 = vpop.f32.mrf.mxu0
      %v11953 = vpop.f32.mrf.mxu0
      %11954 = vdwg.mxu0
      %11955 = vmatprep.subr.bf16.mxu0 0
      %11956 = vmatpush1.bf16.msra.mxu0 %v9266
      %11957 = vmatprep.subr.bf16.mxu0 0
      %11958 = vmatpush1.bf16.msra.mxu0 %v9265
      %11959 = vmatprep.subr.bf16.mxu0 0
      %11960 = vmatpush1.bf16.msra.mxu0 %v9264
      %11961 = vmatprep.subr.bf16.mxu0 0
      %11962 = vmatpush1.bf16.msra.mxu0 %v9263
      %11963 = vmatprep.subr.bf16.mxu0 0
      %11964 = vmatpush1.bf16.msra.mxu0 %v9262
      %11965 = vmatprep.subr.bf16.mxu0 0
      %11966 = vmatpush1.bf16.msra.mxu0 %v9261
      %11967 = vmatprep.subr.bf16.mxu0 0
      %11968 = vmatpush1.bf16.msra.mxu0 %v9260
      %11969 = vmatprep.subr.bf16.mxu0 0
      %11970 = vmatpush1.bf16.msra.mxu0 %v9259
      %11971 = vmatprep.subr.bf16.mxu0 0
      %11972 = vmatpush2.bf16.msra.mxu0 %v9274
      %11973 = vmatprep.subr.bf16.mxu0 0
      %11974 = vmatpush2.bf16.msra.mxu0 %v9273
      %11975 = vmatprep.subr.bf16.mxu0 0
      %11976 = vmatpush2.bf16.msra.mxu0 %v9272
      %11977 = vmatprep.subr.bf16.mxu0 0
      %11978 = vmatpush2.bf16.msra.mxu0 %v9271
      %11979 = vmatprep.subr.bf16.mxu0 0
      %11980 = vmatpush2.bf16.msra.mxu0 %v9270
      %11981 = vmatprep.subr.bf16.mxu0 0
      %11982 = vmatpush2.bf16.msra.mxu0 %v9269
      %11983 = vmatprep.subr.bf16.mxu0 0
      %11984 = vmatpush2.bf16.msra.mxu0 %v9268
      %11985 = vmatprep.subr.bf16.mxu0 0
      %11986 = vmatpush2.bf16.msra.mxu0 %v9267
      %11987 = vmatprep.mubr.bf16.mxu0 %v4314
      %11988 = vmatmul.mubr.bf16.gmra.mxu0 %v4310
      %v11989 = vpop.f32.mrf.mxu0
      %v11990 = vadd.f32 %v11950, %v11989
      %v11991 = vpop.f32.mrf.mxu0
      %v11992 = vpop.f32.mrf.mxu0
      %v11993 = vpop.f32.mrf.mxu0
      %11994 = vdwg.mxu0
      %11995 = vmatprep.subr.bf16.mxu0 0
      %11996 = vmatpush1.bf16.msra.mxu0 %v9282
      %11997 = vmatprep.subr.bf16.mxu0 0
      %11998 = vmatpush1.bf16.msra.mxu0 %v9281
      %11999 = vmatprep.subr.bf16.mxu0 0
      %12000 = vmatpush1.bf16.msra.mxu0 %v9280
      %12001 = vmatprep.subr.bf16.mxu0 0
      %12002 = vmatpush1.bf16.msra.mxu0 %v9279
      %12003 = vmatprep.subr.bf16.mxu0 0
      %12004 = vmatpush1.bf16.msra.mxu0 %v9278
      %12005 = vmatprep.subr.bf16.mxu0 0
      %12006 = vmatpush1.bf16.msra.mxu0 %v9277
      %12007 = vmatprep.subr.bf16.mxu0 0
      %12008 = vmatpush1.bf16.msra.mxu0 %v9276
      %12009 = vmatprep.subr.bf16.mxu0 0
      %12010 = vmatpush1.bf16.msra.mxu0 %v9275
      %12011 = vmatprep.subr.bf16.mxu0 0
      %12012 = vmatpush2.bf16.msra.mxu0 %v9290
      %12013 = vmatprep.subr.bf16.mxu0 0
      %12014 = vmatpush2.bf16.msra.mxu0 %v9289
      %12015 = vmatprep.subr.bf16.mxu0 0
      %12016 = vmatpush2.bf16.msra.mxu0 %v9288
      %12017 = vmatprep.subr.bf16.mxu0 0
      %12018 = vmatpush2.bf16.msra.mxu0 %v9287
      %12019 = vmatprep.subr.bf16.mxu0 0
      %12020 = vmatpush2.bf16.msra.mxu0 %v9286
      %12021 = vmatprep.subr.bf16.mxu0 0
      %12022 = vmatpush2.bf16.msra.mxu0 %v9285
      %12023 = vmatprep.subr.bf16.mxu0 0
      %12024 = vmatpush2.bf16.msra.mxu0 %v9284
      %12025 = vmatprep.subr.bf16.mxu0 0
      %12026 = vmatpush2.bf16.msra.mxu0 %v9283
      %12027 = vmatprep.mubr.bf16.mxu0 %v4322
      %12028 = vmatmul.mubr.bf16.gmra.mxu0 %v4318
      %v12029 = vpop.f32.mrf.mxu0
      %v12030 = vadd.f32 %v11990, %v12029
      %v12031 = vpop.f32.mrf.mxu0
      %v12032 = vpop.f32.mrf.mxu0
      %v12033 = vpop.f32.mrf.mxu0
      %12034 = vdwg.mxu0
      %12035 = vmatprep.subr.bf16.mxu0 0
      %12036 = vmatpush1.bf16.msra.mxu0 %v9298
      %12037 = vmatprep.subr.bf16.mxu0 0
      %12038 = vmatpush1.bf16.msra.mxu0 %v9297
      %12039 = vmatprep.subr.bf16.mxu0 0
      %12040 = vmatpush1.bf16.msra.mxu0 %v9296
      %12041 = vmatprep.subr.bf16.mxu0 0
      %12042 = vmatpush1.bf16.msra.mxu0 %v9295
      %12043 = vmatprep.subr.bf16.mxu0 0
      %12044 = vmatpush1.bf16.msra.mxu0 %v9294
      %12045 = vmatprep.subr.bf16.mxu0 0
      %12046 = vmatpush1.bf16.msra.mxu0 %v9293
      %12047 = vmatprep.subr.bf16.mxu0 0
      %12048 = vmatpush1.bf16.msra.mxu0 %v9292
      %12049 = vmatprep.subr.bf16.mxu0 0
      %12050 = vmatpush1.bf16.msra.mxu0 %v9291
      %12051 = vmatprep.subr.bf16.mxu0 0
      %12052 = vmatpush2.bf16.msra.mxu0 %v9306
      %12053 = vmatprep.subr.bf16.mxu0 0
      %12054 = vmatpush2.bf16.msra.mxu0 %v9305
      %12055 = vmatprep.subr.bf16.mxu0 0
      %12056 = vmatpush2.bf16.msra.mxu0 %v9304
      %12057 = vmatprep.subr.bf16.mxu0 0
      %12058 = vmatpush2.bf16.msra.mxu0 %v9303
      %12059 = vmatprep.subr.bf16.mxu0 0
      %12060 = vmatpush2.bf16.msra.mxu0 %v9302
      %12061 = vmatprep.subr.bf16.mxu0 0
      %12062 = vmatpush2.bf16.msra.mxu0 %v9301
      %12063 = vmatprep.subr.bf16.mxu0 0
      %12064 = vmatpush2.bf16.msra.mxu0 %v9300
      %12065 = vmatprep.subr.bf16.mxu0 0
      %12066 = vmatpush2.bf16.msra.mxu0 %v9299
      %12067 = vmatprep.mubr.bf16.mxu0 %v4330
      %12068 = vmatmul.mubr.bf16.gmra.mxu0 %v4326
      %v12069 = vpop.f32.mrf.mxu0
      %v12070 = vadd.f32 %v12030, %v12069
      %v12071 = vpop.f32.mrf.mxu0
      %v12072 = vpop.f32.mrf.mxu0
      %v12073 = vpop.f32.mrf.mxu0
      %12074 = vdwg.mxu0
      %12075 = vmatprep.subr.bf16.mxu0 0
      %12076 = vmatpush1.bf16.msra.mxu0 %v9314
      %12077 = vmatprep.subr.bf16.mxu0 0
      %12078 = vmatpush1.bf16.msra.mxu0 %v9313
      %12079 = vmatprep.subr.bf16.mxu0 0
      %12080 = vmatpush1.bf16.msra.mxu0 %v9312
      %12081 = vmatprep.subr.bf16.mxu0 0
      %12082 = vmatpush1.bf16.msra.mxu0 %v9311
      %12083 = vmatprep.subr.bf16.mxu0 0
      %12084 = vmatpush1.bf16.msra.mxu0 %v9310
      %12085 = vmatprep.subr.bf16.mxu0 0
      %12086 = vmatpush1.bf16.msra.mxu0 %v9309
      %12087 = vmatprep.subr.bf16.mxu0 0
      %12088 = vmatpush1.bf16.msra.mxu0 %v9308
      %12089 = vmatprep.subr.bf16.mxu0 0
      %12090 = vmatpush1.bf16.msra.mxu0 %v9307
      %12091 = vmatprep.subr.bf16.mxu0 0
      %12092 = vmatpush2.bf16.msra.mxu0 %v9322
      %12093 = vmatprep.subr.bf16.mxu0 0
      %12094 = vmatpush2.bf16.msra.mxu0 %v9321
      %12095 = vmatprep.subr.bf16.mxu0 0
      %12096 = vmatpush2.bf16.msra.mxu0 %v9320
      %12097 = vmatprep.subr.bf16.mxu0 0
      %12098 = vmatpush2.bf16.msra.mxu0 %v9319
      %12099 = vmatprep.subr.bf16.mxu0 0
      %12100 = vmatpush2.bf16.msra.mxu0 %v9318
      %12101 = vmatprep.subr.bf16.mxu0 0
      %12102 = vmatpush2.bf16.msra.mxu0 %v9317
      %12103 = vmatprep.subr.bf16.mxu0 0
      %12104 = vmatpush2.bf16.msra.mxu0 %v9316
      %12105 = vmatprep.subr.bf16.mxu0 0
      %12106 = vmatpush2.bf16.msra.mxu0 %v9315
      %12107 = vmatprep.mubr.bf16.mxu0 %v4338
      %12108 = vmatmul.mubr.bf16.gmra.mxu0 %v4334
      %v12109 = vpop.f32.mrf.mxu0
      %v12110 = vadd.f32 %v12070, %v12109
      %v12111 = vpop.f32.mrf.mxu0
      %v12112 = vpop.f32.mrf.mxu0
      %v12113 = vpop.f32.mrf.mxu0
      %12114 = vdwg.mxu0
      %12115 = vmatprep.subr.bf16.mxu0 0
      %12116 = vmatpush1.bf16.msra.mxu0 %v9330
      %12117 = vmatprep.subr.bf16.mxu0 0
      %12118 = vmatpush1.bf16.msra.mxu0 %v9329
      %12119 = vmatprep.subr.bf16.mxu0 0
      %12120 = vmatpush1.bf16.msra.mxu0 %v9328
      %12121 = vmatprep.subr.bf16.mxu0 0
      %12122 = vmatpush1.bf16.msra.mxu0 %v9327
      %12123 = vmatprep.subr.bf16.mxu0 0
      %12124 = vmatpush1.bf16.msra.mxu0 %v9326
      %12125 = vmatprep.subr.bf16.mxu0 0
      %12126 = vmatpush1.bf16.msra.mxu0 %v9325
      %12127 = vmatprep.subr.bf16.mxu0 0
      %12128 = vmatpush1.bf16.msra.mxu0 %v9324
      %12129 = vmatprep.subr.bf16.mxu0 0
      %12130 = vmatpush1.bf16.msra.mxu0 %v9323
      %12131 = vmatprep.subr.bf16.mxu0 0
      %12132 = vmatpush2.bf16.msra.mxu0 %v9338
      %12133 = vmatprep.subr.bf16.mxu0 0
      %12134 = vmatpush2.bf16.msra.mxu0 %v9337
      %12135 = vmatprep.subr.bf16.mxu0 0
      %12136 = vmatpush2.bf16.msra.mxu0 %v9336
      %12137 = vmatprep.subr.bf16.mxu0 0
      %12138 = vmatpush2.bf16.msra.mxu0 %v9335
      %12139 = vmatprep.subr.bf16.mxu0 0
      %12140 = vmatpush2.bf16.msra.mxu0 %v9334
      %12141 = vmatprep.subr.bf16.mxu0 0
      %12142 = vmatpush2.bf16.msra.mxu0 %v9333
      %12143 = vmatprep.subr.bf16.mxu0 0
      %12144 = vmatpush2.bf16.msra.mxu0 %v9332
      %12145 = vmatprep.subr.bf16.mxu0 0
      %12146 = vmatpush2.bf16.msra.mxu0 %v9331
      %12147 = vmatprep.mubr.bf16.mxu0 %v4346
      %12148 = vmatmul.mubr.bf16.gmra.mxu0 %v4342
      %v12149 = vpop.f32.mrf.mxu0
      %v12150 = vadd.f32 %v12110, %v12149
      %v12151 = vpop.f32.mrf.mxu0
      %v12152 = vpop.f32.mrf.mxu0
      %v12153 = vpop.f32.mrf.mxu0
      %12154 = vdwg.mxu0
      %12155 = vmatprep.subr.bf16.mxu0 0
      %12156 = vmatpush1.bf16.msra.mxu0 %v9346
      %12157 = vmatprep.subr.bf16.mxu0 0
      %12158 = vmatpush1.bf16.msra.mxu0 %v9345
      %12159 = vmatprep.subr.bf16.mxu0 0
      %12160 = vmatpush1.bf16.msra.mxu0 %v9344
      %12161 = vmatprep.subr.bf16.mxu0 0
      %12162 = vmatpush1.bf16.msra.mxu0 %v9343
      %12163 = vmatprep.subr.bf16.mxu0 0
      %12164 = vmatpush1.bf16.msra.mxu0 %v9342
      %12165 = vmatprep.subr.bf16.mxu0 0
      %12166 = vmatpush1.bf16.msra.mxu0 %v9341
      %12167 = vmatprep.subr.bf16.mxu0 0
      %12168 = vmatpush1.bf16.msra.mxu0 %v9340
      %12169 = vmatprep.subr.bf16.mxu0 0
      %12170 = vmatpush1.bf16.msra.mxu0 %v9339
      %12171 = vmatprep.subr.bf16.mxu0 0
      %12172 = vmatpush2.bf16.msra.mxu0 %v9354
      %12173 = vmatprep.subr.bf16.mxu0 0
      %12174 = vmatpush2.bf16.msra.mxu0 %v9353
      %12175 = vmatprep.subr.bf16.mxu0 0
      %12176 = vmatpush2.bf16.msra.mxu0 %v9352
      %12177 = vmatprep.subr.bf16.mxu0 0
      %12178 = vmatpush2.bf16.msra.mxu0 %v9351
      %12179 = vmatprep.subr.bf16.mxu0 0
      %12180 = vmatpush2.bf16.msra.mxu0 %v9350
      %12181 = vmatprep.subr.bf16.mxu0 0
      %12182 = vmatpush2.bf16.msra.mxu0 %v9349
      %12183 = vmatprep.subr.bf16.mxu0 0
      %12184 = vmatpush2.bf16.msra.mxu0 %v9348
      %12185 = vmatprep.subr.bf16.mxu0 0
      %12186 = vmatpush2.bf16.msra.mxu0 %v9347
      %12187 = vmatprep.mubr.bf16.mxu0 %v4354
      %12188 = vmatmul.mubr.bf16.gmra.mxu0 %v4350
      %v12189 = vpop.f32.mrf.mxu0
      %v12190 = vadd.f32 %v12150, %v12189
      %v12191 = vpop.f32.mrf.mxu0
      %v12192 = vpop.f32.mrf.mxu0
      %v12193 = vpop.f32.mrf.mxu0
      %12194 = vdwg.mxu0
      %12195 = vmatprep.subr.bf16.mxu0 0
      %12196 = vmatpush1.bf16.msra.mxu0 %v9362
      %12197 = vmatprep.subr.bf16.mxu0 0
      %12198 = vmatpush1.bf16.msra.mxu0 %v9361
      %12199 = vmatprep.subr.bf16.mxu0 0
      %12200 = vmatpush1.bf16.msra.mxu0 %v9360
      %12201 = vmatprep.subr.bf16.mxu0 0
      %12202 = vmatpush1.bf16.msra.mxu0 %v9359
      %12203 = vmatprep.subr.bf16.mxu0 0
      %12204 = vmatpush1.bf16.msra.mxu0 %v9358
      %12205 = vmatprep.subr.bf16.mxu0 0
      %12206 = vmatpush1.bf16.msra.mxu0 %v9357
      %12207 = vmatprep.subr.bf16.mxu0 0
      %12208 = vmatpush1.bf16.msra.mxu0 %v9356
      %12209 = vmatprep.subr.bf16.mxu0 0
      %12210 = vmatpush1.bf16.msra.mxu0 %v9355
      %12211 = vmatprep.subr.bf16.mxu0 0
      %12212 = vmatpush2.bf16.msra.mxu0 %v9370
      %12213 = vmatprep.subr.bf16.mxu0 0
      %12214 = vmatpush2.bf16.msra.mxu0 %v9369
      %12215 = vmatprep.subr.bf16.mxu0 0
      %12216 = vmatpush2.bf16.msra.mxu0 %v9368
      %12217 = vmatprep.subr.bf16.mxu0 0
      %12218 = vmatpush2.bf16.msra.mxu0 %v9367
      %12219 = vmatprep.subr.bf16.mxu0 0
      %12220 = vmatpush2.bf16.msra.mxu0 %v9366
      %12221 = vmatprep.subr.bf16.mxu0 0
      %12222 = vmatpush2.bf16.msra.mxu0 %v9365
      %12223 = vmatprep.subr.bf16.mxu0 0
      %12224 = vmatpush2.bf16.msra.mxu0 %v9364
      %12225 = vmatprep.subr.bf16.mxu0 0
      %12226 = vmatpush2.bf16.msra.mxu0 %v9363
      %12227 = vmatprep.mubr.bf16.mxu0 %v4362
      %12228 = vmatmul.mubr.bf16.gmra.mxu0 %v4358
      %v12229 = vpop.f32.mrf.mxu0
      %v12230 = vadd.f32 %v12190, %v12229
      %v12231 = vpop.f32.mrf.mxu0
      %v12232 = vpop.f32.mrf.mxu0
      %v12233 = vpop.f32.mrf.mxu0
      %12234 = vdwg.mxu0
      %12235 = vmatprep.subr.bf16.mxu0 0
      %12236 = vmatpush1.bf16.msra.mxu0 %v9378
      %12237 = vmatprep.subr.bf16.mxu0 0
      %12238 = vmatpush1.bf16.msra.mxu0 %v9377
      %12239 = vmatprep.subr.bf16.mxu0 0
      %12240 = vmatpush1.bf16.msra.mxu0 %v9376
      %12241 = vmatprep.subr.bf16.mxu0 0
      %12242 = vmatpush1.bf16.msra.mxu0 %v9375
      %12243 = vmatprep.subr.bf16.mxu0 0
      %12244 = vmatpush1.bf16.msra.mxu0 %v9374
      %12245 = vmatprep.subr.bf16.mxu0 0
      %12246 = vmatpush1.bf16.msra.mxu0 %v9373
      %12247 = vmatprep.subr.bf16.mxu0 0
      %12248 = vmatpush1.bf16.msra.mxu0 %v9372
      %12249 = vmatprep.subr.bf16.mxu0 0
      %12250 = vmatpush1.bf16.msra.mxu0 %v9371
      %12251 = vmatprep.subr.bf16.mxu0 0
      %12252 = vmatpush2.bf16.msra.mxu0 %v9386
      %12253 = vmatprep.subr.bf16.mxu0 0
      %12254 = vmatpush2.bf16.msra.mxu0 %v9385
      %12255 = vmatprep.subr.bf16.mxu0 0
      %12256 = vmatpush2.bf16.msra.mxu0 %v9384
      %12257 = vmatprep.subr.bf16.mxu0 0
      %12258 = vmatpush2.bf16.msra.mxu0 %v9383
      %12259 = vmatprep.subr.bf16.mxu0 0
      %12260 = vmatpush2.bf16.msra.mxu0 %v9382
      %12261 = vmatprep.subr.bf16.mxu0 0
      %12262 = vmatpush2.bf16.msra.mxu0 %v9381
      %12263 = vmatprep.subr.bf16.mxu0 0
      %12264 = vmatpush2.bf16.msra.mxu0 %v9380
      %12265 = vmatprep.subr.bf16.mxu0 0
      %12266 = vmatpush2.bf16.msra.mxu0 %v9379
      %12267 = vmatprep.mubr.bf16.mxu0 %v4370
      %12268 = vmatmul.mubr.bf16.gmra.mxu0 %v4366
      %v12269 = vpop.f32.mrf.mxu0
      %v12270 = vadd.f32 %v12230, %v12269
      %v12271 = vpop.f32.mrf.mxu0
      %v12272 = vpop.f32.mrf.mxu0
      %v12273 = vpop.f32.mrf.mxu0
      %12274 = vdwg.mxu0
      %12275 = vmatprep.subr.bf16.mxu0 0
      %12276 = vmatpush1.bf16.msra.mxu0 %v9394
      %12277 = vmatprep.subr.bf16.mxu0 0
      %12278 = vmatpush1.bf16.msra.mxu0 %v9393
      %12279 = vmatprep.subr.bf16.mxu0 0
      %12280 = vmatpush1.bf16.msra.mxu0 %v9392
      %12281 = vmatprep.subr.bf16.mxu0 0
      %12282 = vmatpush1.bf16.msra.mxu0 %v9391
      %12283 = vmatprep.subr.bf16.mxu0 0
      %12284 = vmatpush1.bf16.msra.mxu0 %v9390
      %12285 = vmatprep.subr.bf16.mxu0 0
      %12286 = vmatpush1.bf16.msra.mxu0 %v9389
      %12287 = vmatprep.subr.bf16.mxu0 0
      %12288 = vmatpush1.bf16.msra.mxu0 %v9388
      %12289 = vmatprep.subr.bf16.mxu0 0
      %12290 = vmatpush1.bf16.msra.mxu0 %v9387
      %12291 = vmatprep.subr.bf16.mxu0 0
      %12292 = vmatpush2.bf16.msra.mxu0 %v9402
      %12293 = vmatprep.subr.bf16.mxu0 0
      %12294 = vmatpush2.bf16.msra.mxu0 %v9401
      %12295 = vmatprep.subr.bf16.mxu0 0
      %12296 = vmatpush2.bf16.msra.mxu0 %v9400
      %12297 = vmatprep.subr.bf16.mxu0 0
      %12298 = vmatpush2.bf16.msra.mxu0 %v9399
      %12299 = vmatprep.subr.bf16.mxu0 0
      %12300 = vmatpush2.bf16.msra.mxu0 %v9398
      %12301 = vmatprep.subr.bf16.mxu0 0
      %12302 = vmatpush2.bf16.msra.mxu0 %v9397
      %12303 = vmatprep.subr.bf16.mxu0 0
      %12304 = vmatpush2.bf16.msra.mxu0 %v9396
      %12305 = vmatprep.subr.bf16.mxu0 0
      %12306 = vmatpush2.bf16.msra.mxu0 %v9395
      %12307 = vmatprep.mubr.bf16.mxu0 %v4378
      %12308 = vmatmul.mubr.bf16.gmra.mxu0 %v4374
      %v12309 = vpop.f32.mrf.mxu0
      %v12310 = vadd.f32 %v12270, %v12309
      %v12311 = vpop.f32.mrf.mxu0
      %v12312 = vpop.f32.mrf.mxu0
      %v12313 = vpop.f32.mrf.mxu0
      %12314 = vdwg.mxu0
      %12315 = vmatprep.subr.bf16.mxu0 0
      %12316 = vmatpush1.bf16.msra.mxu0 %v9410
      %12317 = vmatprep.subr.bf16.mxu0 0
      %12318 = vmatpush1.bf16.msra.mxu0 %v9409
      %12319 = vmatprep.subr.bf16.mxu0 0
      %12320 = vmatpush1.bf16.msra.mxu0 %v9408
      %12321 = vmatprep.subr.bf16.mxu0 0
      %12322 = vmatpush1.bf16.msra.mxu0 %v9407
      %12323 = vmatprep.subr.bf16.mxu0 0
      %12324 = vmatpush1.bf16.msra.mxu0 %v9406
      %12325 = vmatprep.subr.bf16.mxu0 0
      %12326 = vmatpush1.bf16.msra.mxu0 %v9405
      %12327 = vmatprep.subr.bf16.mxu0 0
      %12328 = vmatpush1.bf16.msra.mxu0 %v9404
      %12329 = vmatprep.subr.bf16.mxu0 0
      %12330 = vmatpush1.bf16.msra.mxu0 %v9403
      %12331 = vmatprep.subr.bf16.mxu0 0
      %12332 = vmatpush2.bf16.msra.mxu0 %v9418
      %12333 = vmatprep.subr.bf16.mxu0 0
      %12334 = vmatpush2.bf16.msra.mxu0 %v9417
      %12335 = vmatprep.subr.bf16.mxu0 0
      %12336 = vmatpush2.bf16.msra.mxu0 %v9416
      %12337 = vmatprep.subr.bf16.mxu0 0
      %12338 = vmatpush2.bf16.msra.mxu0 %v9415
      %12339 = vmatprep.subr.bf16.mxu0 0
      %12340 = vmatpush2.bf16.msra.mxu0 %v9414
      %12341 = vmatprep.subr.bf16.mxu0 0
      %12342 = vmatpush2.bf16.msra.mxu0 %v9413
      %12343 = vmatprep.subr.bf16.mxu0 0
      %12344 = vmatpush2.bf16.msra.mxu0 %v9412
      %12345 = vmatprep.subr.bf16.mxu0 0
      %12346 = vmatpush2.bf16.msra.mxu0 %v9411
      %12347 = vmatprep.mubr.bf16.mxu0 %v4386
      %12348 = vmatmul.mubr.bf16.gmra.mxu0 %v4382
      %v12349 = vpop.f32.mrf.mxu0
      %v12350 = vadd.f32 %v12310, %v12349
      %v12351 = vpop.f32.mrf.mxu0
      %v12352 = vpop.f32.mrf.mxu0
      %v12353 = vpop.f32.mrf.mxu0
      %12354 = vdwg.mxu0
      %12355 = vmatprep.subr.bf16.mxu0 0
      %12356 = vmatpush1.bf16.msra.mxu0 %v9426
      %12357 = vmatprep.subr.bf16.mxu0 0
      %12358 = vmatpush1.bf16.msra.mxu0 %v9425
      %12359 = vmatprep.subr.bf16.mxu0 0
      %12360 = vmatpush1.bf16.msra.mxu0 %v9424
      %12361 = vmatprep.subr.bf16.mxu0 0
      %12362 = vmatpush1.bf16.msra.mxu0 %v9423
      %12363 = vmatprep.subr.bf16.mxu0 0
      %12364 = vmatpush1.bf16.msra.mxu0 %v9422
      %12365 = vmatprep.subr.bf16.mxu0 0
      %12366 = vmatpush1.bf16.msra.mxu0 %v9421
      %12367 = vmatprep.subr.bf16.mxu0 0
      %12368 = vmatpush1.bf16.msra.mxu0 %v9420
      %12369 = vmatprep.subr.bf16.mxu0 0
      %12370 = vmatpush1.bf16.msra.mxu0 %v9419
      %12371 = vmatprep.subr.bf16.mxu0 0
      %12372 = vmatpush2.bf16.msra.mxu0 %v9434
      %12373 = vmatprep.subr.bf16.mxu0 0
      %12374 = vmatpush2.bf16.msra.mxu0 %v9433
      %12375 = vmatprep.subr.bf16.mxu0 0
      %12376 = vmatpush2.bf16.msra.mxu0 %v9432
      %12377 = vmatprep.subr.bf16.mxu0 0
      %12378 = vmatpush2.bf16.msra.mxu0 %v9431
      %12379 = vmatprep.subr.bf16.mxu0 0
      %12380 = vmatpush2.bf16.msra.mxu0 %v9430
      %12381 = vmatprep.subr.bf16.mxu0 0
      %12382 = vmatpush2.bf16.msra.mxu0 %v9429
      %12383 = vmatprep.subr.bf16.mxu0 0
      %12384 = vmatpush2.bf16.msra.mxu0 %v9428
      %12385 = vmatprep.subr.bf16.mxu0 0
      %12386 = vmatpush2.bf16.msra.mxu0 %v9427
      %12387 = vmatprep.mubr.bf16.mxu0 %v4394
      %12388 = vmatmul.mubr.bf16.gmra.mxu0 %v4390
      %v12389 = vpop.f32.mrf.mxu0
      %v12390 = vadd.f32 %v12350, %v12389
      %v12391 = vpop.f32.mrf.mxu0
      %v12392 = vpop.f32.mrf.mxu0
      %v12393 = vpop.f32.mrf.mxu0
      %12394 = vdwg.mxu0
      %12395 = vmatprep.subr.bf16.mxu0 0
      %12396 = vmatpush1.bf16.msra.mxu0 %v9442
      %12397 = vmatprep.subr.bf16.mxu0 0
      %12398 = vmatpush1.bf16.msra.mxu0 %v9441
      %12399 = vmatprep.subr.bf16.mxu0 0
      %12400 = vmatpush1.bf16.msra.mxu0 %v9440
      %12401 = vmatprep.subr.bf16.mxu0 0
      %12402 = vmatpush1.bf16.msra.mxu0 %v9439
      %12403 = vmatprep.subr.bf16.mxu0 0
      %12404 = vmatpush1.bf16.msra.mxu0 %v9438
      %12405 = vmatprep.subr.bf16.mxu0 0
      %12406 = vmatpush1.bf16.msra.mxu0 %v9437
      %12407 = vmatprep.subr.bf16.mxu0 0
      %12408 = vmatpush1.bf16.msra.mxu0 %v9436
      %12409 = vmatprep.subr.bf16.mxu0 0
      %12410 = vmatpush1.bf16.msra.mxu0 %v9435
      %12411 = vmatprep.subr.bf16.mxu0 0
      %12412 = vmatpush2.bf16.msra.mxu0 %v9450
      %12413 = vmatprep.subr.bf16.mxu0 0
      %12414 = vmatpush2.bf16.msra.mxu0 %v9449
      %12415 = vmatprep.subr.bf16.mxu0 0
      %12416 = vmatpush2.bf16.msra.mxu0 %v9448
      %12417 = vmatprep.subr.bf16.mxu0 0
      %12418 = vmatpush2.bf16.msra.mxu0 %v9447
      %12419 = vmatprep.subr.bf16.mxu0 0
      %12420 = vmatpush2.bf16.msra.mxu0 %v9446
      %12421 = vmatprep.subr.bf16.mxu0 0
      %12422 = vmatpush2.bf16.msra.mxu0 %v9445
      %12423 = vmatprep.subr.bf16.mxu0 0
      %12424 = vmatpush2.bf16.msra.mxu0 %v9444
      %12425 = vmatprep.subr.bf16.mxu0 0
      %12426 = vmatpush2.bf16.msra.mxu0 %v9443
      %12427 = vmatprep.mubr.bf16.mxu0 %v4402
      %12428 = vmatmul.mubr.bf16.gmra.mxu0 %v4398
      %v12429 = vpop.f32.mrf.mxu0
      %v12430 = vadd.f32 %v12390, %v12429
      %v12431 = vpop.f32.mrf.mxu0
      %v12432 = vpop.f32.mrf.mxu0
      %v12433 = vpop.f32.mrf.mxu0
      %12434 = vdwg.mxu0
      %12435 = vmatprep.subr.bf16.mxu0 0
      %12436 = vmatpush1.bf16.msra.mxu0 %v9458
      %12437 = vmatprep.subr.bf16.mxu0 0
      %12438 = vmatpush1.bf16.msra.mxu0 %v9457
      %12439 = vmatprep.subr.bf16.mxu0 0
      %12440 = vmatpush1.bf16.msra.mxu0 %v9456
      %12441 = vmatprep.subr.bf16.mxu0 0
      %12442 = vmatpush1.bf16.msra.mxu0 %v9455
      %12443 = vmatprep.subr.bf16.mxu0 0
      %12444 = vmatpush1.bf16.msra.mxu0 %v9454
      %12445 = vmatprep.subr.bf16.mxu0 0
      %12446 = vmatpush1.bf16.msra.mxu0 %v9453
      %12447 = vmatprep.subr.bf16.mxu0 0
      %12448 = vmatpush1.bf16.msra.mxu0 %v9452
      %12449 = vmatprep.subr.bf16.mxu0 0
      %12450 = vmatpush1.bf16.msra.mxu0 %v9451
      %12451 = vmatprep.subr.bf16.mxu0 0
      %12452 = vmatpush2.bf16.msra.mxu0 %v9466
      %12453 = vmatprep.subr.bf16.mxu0 0
      %12454 = vmatpush2.bf16.msra.mxu0 %v9465
      %12455 = vmatprep.subr.bf16.mxu0 0
      %12456 = vmatpush2.bf16.msra.mxu0 %v9464
      %12457 = vmatprep.subr.bf16.mxu0 0
      %12458 = vmatpush2.bf16.msra.mxu0 %v9463
      %12459 = vmatprep.subr.bf16.mxu0 0
      %12460 = vmatpush2.bf16.msra.mxu0 %v9462
      %12461 = vmatprep.subr.bf16.mxu0 0
      %12462 = vmatpush2.bf16.msra.mxu0 %v9461
      %12463 = vmatprep.subr.bf16.mxu0 0
      %12464 = vmatpush2.bf16.msra.mxu0 %v9460
      %12465 = vmatprep.subr.bf16.mxu0 0
      %12466 = vmatpush2.bf16.msra.mxu0 %v9459
      %12467 = vmatprep.mubr.bf16.mxu0 %v4410
      %12468 = vmatmul.mubr.bf16.gmra.mxu0 %v4406
      %v12469 = vpop.f32.mrf.mxu0
      %v12470 = vadd.f32 %v12430, %v12469
      %v12471 = vpop.f32.mrf.mxu0
      %v12472 = vpop.f32.mrf.mxu0
      %v12473 = vpop.f32.mrf.mxu0
      %12474 = vdwg.mxu0
      %12475 = vmatprep.subr.bf16.mxu0 0
      %12476 = vmatpush1.bf16.msra.mxu0 %v9474
      %12477 = vmatprep.subr.bf16.mxu0 0
      %12478 = vmatpush1.bf16.msra.mxu0 %v9473
      %12479 = vmatprep.subr.bf16.mxu0 0
      %12480 = vmatpush1.bf16.msra.mxu0 %v9472
      %12481 = vmatprep.subr.bf16.mxu0 0
      %12482 = vmatpush1.bf16.msra.mxu0 %v9471
      %12483 = vmatprep.subr.bf16.mxu0 0
      %12484 = vmatpush1.bf16.msra.mxu0 %v9470
      %12485 = vmatprep.subr.bf16.mxu0 0
      %12486 = vmatpush1.bf16.msra.mxu0 %v9469
      %12487 = vmatprep.subr.bf16.mxu0 0
      %12488 = vmatpush1.bf16.msra.mxu0 %v9468
      %12489 = vmatprep.subr.bf16.mxu0 0
      %12490 = vmatpush1.bf16.msra.mxu0 %v9467
      %12491 = vmatprep.subr.bf16.mxu0 0
      %12492 = vmatpush2.bf16.msra.mxu0 %v9482
      %12493 = vmatprep.subr.bf16.mxu0 0
      %12494 = vmatpush2.bf16.msra.mxu0 %v9481
      %12495 = vmatprep.subr.bf16.mxu0 0
      %12496 = vmatpush2.bf16.msra.mxu0 %v9480
      %12497 = vmatprep.subr.bf16.mxu0 0
      %12498 = vmatpush2.bf16.msra.mxu0 %v9479
      %12499 = vmatprep.subr.bf16.mxu0 0
      %12500 = vmatpush2.bf16.msra.mxu0 %v9478
      %12501 = vmatprep.subr.bf16.mxu0 0
      %12502 = vmatpush2.bf16.msra.mxu0 %v9477
      %12503 = vmatprep.subr.bf16.mxu0 0
      %12504 = vmatpush2.bf16.msra.mxu0 %v9476
      %12505 = vmatprep.subr.bf16.mxu0 0
      %12506 = vmatpush2.bf16.msra.mxu0 %v9475
      %12507 = vmatprep.mubr.bf16.mxu0 %v4418
      %12508 = vmatmul.mubr.bf16.gmra.mxu0 %v4414
      %v12509 = vpop.f32.mrf.mxu0
      %v12510 = vadd.f32 %v12470, %v12509
      %v12511 = vpop.f32.mrf.mxu0
      %v12512 = vpop.f32.mrf.mxu0
      %v12513 = vpop.f32.mrf.mxu0
      %12514 = vdwg.mxu0
      %12515 = vmatprep.subr.bf16.mxu0 0
      %12516 = vmatpush1.bf16.msra.mxu0 %v9490
      %12517 = vmatprep.subr.bf16.mxu0 0
      %12518 = vmatpush1.bf16.msra.mxu0 %v9489
      %12519 = vmatprep.subr.bf16.mxu0 0
      %12520 = vmatpush1.bf16.msra.mxu0 %v9488
      %12521 = vmatprep.subr.bf16.mxu0 0
      %12522 = vmatpush1.bf16.msra.mxu0 %v9487
      %12523 = vmatprep.subr.bf16.mxu0 0
      %12524 = vmatpush1.bf16.msra.mxu0 %v9486
      %12525 = vmatprep.subr.bf16.mxu0 0
      %12526 = vmatpush1.bf16.msra.mxu0 %v9485
      %12527 = vmatprep.subr.bf16.mxu0 0
      %12528 = vmatpush1.bf16.msra.mxu0 %v9484
      %12529 = vmatprep.subr.bf16.mxu0 0
      %12530 = vmatpush1.bf16.msra.mxu0 %v9483
      %12531 = vmatprep.subr.bf16.mxu0 0
      %12532 = vmatpush2.bf16.msra.mxu0 %v9498
      %12533 = vmatprep.subr.bf16.mxu0 0
      %12534 = vmatpush2.bf16.msra.mxu0 %v9497
      %12535 = vmatprep.subr.bf16.mxu0 0
      %12536 = vmatpush2.bf16.msra.mxu0 %v9496
      %12537 = vmatprep.subr.bf16.mxu0 0
      %12538 = vmatpush2.bf16.msra.mxu0 %v9495
      %12539 = vmatprep.subr.bf16.mxu0 0
      %12540 = vmatpush2.bf16.msra.mxu0 %v9494
      %12541 = vmatprep.subr.bf16.mxu0 0
      %12542 = vmatpush2.bf16.msra.mxu0 %v9493
      %12543 = vmatprep.subr.bf16.mxu0 0
      %12544 = vmatpush2.bf16.msra.mxu0 %v9492
      %12545 = vmatprep.subr.bf16.mxu0 0
      %12546 = vmatpush2.bf16.msra.mxu0 %v9491
      %12547 = vmatprep.mubr.bf16.mxu0 %v4426
      %12548 = vmatmul.mubr.bf16.gmra.mxu0 %v4422
      %v12549 = vpop.f32.mrf.mxu0
      %v12550 = vadd.f32 %v12510, %v12549
      %v12551 = vpop.f32.mrf.mxu0
      %v12552 = vpop.f32.mrf.mxu0
      %v12553 = vpop.f32.mrf.mxu0
      %12554 = vdwg.mxu0
      %12555 = vmatprep.subr.bf16.mxu0 0
      %12556 = vmatpush1.bf16.msra.mxu0 %v9506
      %12557 = vmatprep.subr.bf16.mxu0 0
      %12558 = vmatpush1.bf16.msra.mxu0 %v9505
      %12559 = vmatprep.subr.bf16.mxu0 0
      %12560 = vmatpush1.bf16.msra.mxu0 %v9504
      %12561 = vmatprep.subr.bf16.mxu0 0
      %12562 = vmatpush1.bf16.msra.mxu0 %v9503
      %12563 = vmatprep.subr.bf16.mxu0 0
      %12564 = vmatpush1.bf16.msra.mxu0 %v9502
      %12565 = vmatprep.subr.bf16.mxu0 0
      %12566 = vmatpush1.bf16.msra.mxu0 %v9501
      %12567 = vmatprep.subr.bf16.mxu0 0
      %12568 = vmatpush1.bf16.msra.mxu0 %v9500
      %12569 = vmatprep.subr.bf16.mxu0 0
      %12570 = vmatpush1.bf16.msra.mxu0 %v9499
      %12571 = vmatprep.subr.bf16.mxu0 0
      %12572 = vmatpush2.bf16.msra.mxu0 %v9514
      %12573 = vmatprep.subr.bf16.mxu0 0
      %12574 = vmatpush2.bf16.msra.mxu0 %v9513
      %12575 = vmatprep.subr.bf16.mxu0 0
      %12576 = vmatpush2.bf16.msra.mxu0 %v9512
      %12577 = vmatprep.subr.bf16.mxu0 0
      %12578 = vmatpush2.bf16.msra.mxu0 %v9511
      %12579 = vmatprep.subr.bf16.mxu0 0
      %12580 = vmatpush2.bf16.msra.mxu0 %v9510
      %12581 = vmatprep.subr.bf16.mxu0 0
      %12582 = vmatpush2.bf16.msra.mxu0 %v9509
      %12583 = vmatprep.subr.bf16.mxu0 0
      %12584 = vmatpush2.bf16.msra.mxu0 %v9508
      %12585 = vmatprep.subr.bf16.mxu0 0
      %12586 = vmatpush2.bf16.msra.mxu0 %v9507
      %12587 = vmatprep.mubr.bf16.mxu0 %v4434
      %12588 = vmatmul.mubr.bf16.gmra.mxu0 %v4430
      %v12589 = vpop.f32.mrf.mxu0
      %v12590 = vadd.f32 %v12550, %v12589
      %v12591 = vpop.f32.mrf.mxu0
      %v12592 = vpop.f32.mrf.mxu0
      %v12593 = vpop.f32.mrf.mxu0
      %12594 = vdwg.mxu0
      %12595 = vmatprep.subr.bf16.mxu0 0
      %12596 = vmatpush1.bf16.msra.mxu0 %v9522
      %12597 = vmatprep.subr.bf16.mxu0 0
      %12598 = vmatpush1.bf16.msra.mxu0 %v9521
      %12599 = vmatprep.subr.bf16.mxu0 0
      %12600 = vmatpush1.bf16.msra.mxu0 %v9520
      %12601 = vmatprep.subr.bf16.mxu0 0
      %12602 = vmatpush1.bf16.msra.mxu0 %v9519
      %12603 = vmatprep.subr.bf16.mxu0 0
      %12604 = vmatpush1.bf16.msra.mxu0 %v9518
      %12605 = vmatprep.subr.bf16.mxu0 0
      %12606 = vmatpush1.bf16.msra.mxu0 %v9517
      %12607 = vmatprep.subr.bf16.mxu0 0
      %12608 = vmatpush1.bf16.msra.mxu0 %v9516
      %12609 = vmatprep.subr.bf16.mxu0 0
      %12610 = vmatpush1.bf16.msra.mxu0 %v9515
      %12611 = vmatprep.subr.bf16.mxu0 0
      %12612 = vmatpush2.bf16.msra.mxu0 %v9530
      %12613 = vmatprep.subr.bf16.mxu0 0
      %12614 = vmatpush2.bf16.msra.mxu0 %v9529
      %12615 = vmatprep.subr.bf16.mxu0 0
      %12616 = vmatpush2.bf16.msra.mxu0 %v9528
      %12617 = vmatprep.subr.bf16.mxu0 0
      %12618 = vmatpush2.bf16.msra.mxu0 %v9527
      %12619 = vmatprep.subr.bf16.mxu0 0
      %12620 = vmatpush2.bf16.msra.mxu0 %v9526
      %12621 = vmatprep.subr.bf16.mxu0 0
      %12622 = vmatpush2.bf16.msra.mxu0 %v9525
      %12623 = vmatprep.subr.bf16.mxu0 0
      %12624 = vmatpush2.bf16.msra.mxu0 %v9524
      %12625 = vmatprep.subr.bf16.mxu0 0
      %12626 = vmatpush2.bf16.msra.mxu0 %v9523
      %12627 = vmatprep.mubr.bf16.mxu0 %v4442
      %12628 = vmatmul.mubr.bf16.gmra.mxu0 %v4438
      %v12629 = vpop.f32.mrf.mxu0
      %v12630 = vadd.f32 %v12590, %v12629
      %v12631 = vpop.f32.mrf.mxu0
      %v12632 = vpop.f32.mrf.mxu0
      %v12633 = vpop.f32.mrf.mxu0
      %12634 = vdwg.mxu0
      %12635 = vmatprep.subr.bf16.mxu0 0
      %12636 = vmatpush1.bf16.msra.mxu0 %v9538
      %12637 = vmatprep.subr.bf16.mxu0 0
      %12638 = vmatpush1.bf16.msra.mxu0 %v9537
      %12639 = vmatprep.subr.bf16.mxu0 0
      %12640 = vmatpush1.bf16.msra.mxu0 %v9536
      %12641 = vmatprep.subr.bf16.mxu0 0
      %12642 = vmatpush1.bf16.msra.mxu0 %v9535
      %12643 = vmatprep.subr.bf16.mxu0 0
      %12644 = vmatpush1.bf16.msra.mxu0 %v9534
      %12645 = vmatprep.subr.bf16.mxu0 0
      %12646 = vmatpush1.bf16.msra.mxu0 %v9533
      %12647 = vmatprep.subr.bf16.mxu0 0
      %12648 = vmatpush1.bf16.msra.mxu0 %v9532
      %12649 = vmatprep.subr.bf16.mxu0 0
      %12650 = vmatpush1.bf16.msra.mxu0 %v9531
      %12651 = vmatprep.subr.bf16.mxu0 0
      %12652 = vmatpush2.bf16.msra.mxu0 %v9546
      %12653 = vmatprep.subr.bf16.mxu0 0
      %12654 = vmatpush2.bf16.msra.mxu0 %v9545
      %12655 = vmatprep.subr.bf16.mxu0 0
      %12656 = vmatpush2.bf16.msra.mxu0 %v9544
      %12657 = vmatprep.subr.bf16.mxu0 0
      %12658 = vmatpush2.bf16.msra.mxu0 %v9543
      %12659 = vmatprep.subr.bf16.mxu0 0
      %12660 = vmatpush2.bf16.msra.mxu0 %v9542
      %12661 = vmatprep.subr.bf16.mxu0 0
      %12662 = vmatpush2.bf16.msra.mxu0 %v9541
      %12663 = vmatprep.subr.bf16.mxu0 0
      %12664 = vmatpush2.bf16.msra.mxu0 %v9540
      %12665 = vmatprep.subr.bf16.mxu0 0
      %12666 = vmatpush2.bf16.msra.mxu0 %v9539
      %12667 = vmatprep.mubr.bf16.mxu0 %v4450
      %12668 = vmatmul.mubr.bf16.gmra.mxu0 %v4446
      %v12669 = vpop.f32.mrf.mxu0
      %v12670 = vadd.f32 %v12630, %v12669
      %v12671 = vpop.f32.mrf.mxu0
      %v12672 = vpop.f32.mrf.mxu0
      %v12673 = vpop.f32.mrf.mxu0
      %12674 = vdwg.mxu0
      %12675 = vmatprep.subr.bf16.mxu0 0
      %12676 = vmatpush1.bf16.msra.mxu0 %v9554
      %12677 = vmatprep.subr.bf16.mxu0 0
      %12678 = vmatpush1.bf16.msra.mxu0 %v9553
      %12679 = vmatprep.subr.bf16.mxu0 0
      %12680 = vmatpush1.bf16.msra.mxu0 %v9552
      %12681 = vmatprep.subr.bf16.mxu0 0
      %12682 = vmatpush1.bf16.msra.mxu0 %v9551
      %12683 = vmatprep.subr.bf16.mxu0 0
      %12684 = vmatpush1.bf16.msra.mxu0 %v9550
      %12685 = vmatprep.subr.bf16.mxu0 0
      %12686 = vmatpush1.bf16.msra.mxu0 %v9549
      %12687 = vmatprep.subr.bf16.mxu0 0
      %12688 = vmatpush1.bf16.msra.mxu0 %v9548
      %12689 = vmatprep.subr.bf16.mxu0 0
      %12690 = vmatpush1.bf16.msra.mxu0 %v9547
      %12691 = vmatprep.subr.bf16.mxu0 0
      %12692 = vmatpush2.bf16.msra.mxu0 %v9562
      %12693 = vmatprep.subr.bf16.mxu0 0
      %12694 = vmatpush2.bf16.msra.mxu0 %v9561
      %12695 = vmatprep.subr.bf16.mxu0 0
      %12696 = vmatpush2.bf16.msra.mxu0 %v9560
      %12697 = vmatprep.subr.bf16.mxu0 0
      %12698 = vmatpush2.bf16.msra.mxu0 %v9559
      %12699 = vmatprep.subr.bf16.mxu0 0
      %12700 = vmatpush2.bf16.msra.mxu0 %v9558
      %12701 = vmatprep.subr.bf16.mxu0 0
      %12702 = vmatpush2.bf16.msra.mxu0 %v9557
      %12703 = vmatprep.subr.bf16.mxu0 0
      %12704 = vmatpush2.bf16.msra.mxu0 %v9556
      %12705 = vmatprep.subr.bf16.mxu0 0
      %12706 = vmatpush2.bf16.msra.mxu0 %v9555
      %12707 = vmatprep.mubr.bf16.mxu0 %v4458
      %12708 = vmatmul.mubr.bf16.gmra.mxu0 %v4454
      %v12709 = vpop.f32.mrf.mxu0
      %v12710 = vadd.f32 %v12670, %v12709
      %v12711 = vpop.f32.mrf.mxu0
      %v12712 = vpop.f32.mrf.mxu0
      %v12713 = vpop.f32.mrf.mxu0
      %12714 = vdwg.mxu0
      %12715 = vmatprep.subr.bf16.mxu0 0
      %12716 = vmatpush1.bf16.msra.mxu0 %v9570
      %12717 = vmatprep.subr.bf16.mxu0 0
      %12718 = vmatpush1.bf16.msra.mxu0 %v9569
      %12719 = vmatprep.subr.bf16.mxu0 0
      %12720 = vmatpush1.bf16.msra.mxu0 %v9568
      %12721 = vmatprep.subr.bf16.mxu0 0
      %12722 = vmatpush1.bf16.msra.mxu0 %v9567
      %12723 = vmatprep.subr.bf16.mxu0 0
      %12724 = vmatpush1.bf16.msra.mxu0 %v9566
      %12725 = vmatprep.subr.bf16.mxu0 0
      %12726 = vmatpush1.bf16.msra.mxu0 %v9565
      %12727 = vmatprep.subr.bf16.mxu0 0
      %12728 = vmatpush1.bf16.msra.mxu0 %v9564
      %12729 = vmatprep.subr.bf16.mxu0 0
      %12730 = vmatpush1.bf16.msra.mxu0 %v9563
      %12731 = vmatprep.subr.bf16.mxu0 0
      %12732 = vmatpush2.bf16.msra.mxu0 %v9578
      %12733 = vmatprep.subr.bf16.mxu0 0
      %12734 = vmatpush2.bf16.msra.mxu0 %v9577
      %12735 = vmatprep.subr.bf16.mxu0 0
      %12736 = vmatpush2.bf16.msra.mxu0 %v9576
      %12737 = vmatprep.subr.bf16.mxu0 0
      %12738 = vmatpush2.bf16.msra.mxu0 %v9575
      %12739 = vmatprep.subr.bf16.mxu0 0
      %12740 = vmatpush2.bf16.msra.mxu0 %v9574
      %12741 = vmatprep.subr.bf16.mxu0 0
      %12742 = vmatpush2.bf16.msra.mxu0 %v9573
      %12743 = vmatprep.subr.bf16.mxu0 0
      %12744 = vmatpush2.bf16.msra.mxu0 %v9572
      %12745 = vmatprep.subr.bf16.mxu0 0
      %12746 = vmatpush2.bf16.msra.mxu0 %v9571
      %12747 = vmatprep.mubr.bf16.mxu0 %v4466
      %12748 = vmatmul.mubr.bf16.gmra.mxu0 %v4462
      %v12749 = vpop.f32.mrf.mxu0
      %v12750 = vadd.f32 %v12710, %v12749
      %v12751 = vpop.f32.mrf.mxu0
      %v12752 = vpop.f32.mrf.mxu0
      %v12753 = vpop.f32.mrf.mxu0
      %12754 = vdwg.mxu0
      %12755 = vmatprep.subr.bf16.mxu0 0
      %12756 = vmatpush1.bf16.msra.mxu0 %v9586
      %12757 = vmatprep.subr.bf16.mxu0 0
      %12758 = vmatpush1.bf16.msra.mxu0 %v9585
      %12759 = vmatprep.subr.bf16.mxu0 0
      %12760 = vmatpush1.bf16.msra.mxu0 %v9584
      %12761 = vmatprep.subr.bf16.mxu0 0
      %12762 = vmatpush1.bf16.msra.mxu0 %v9583
      %12763 = vmatprep.subr.bf16.mxu0 0
      %12764 = vmatpush1.bf16.msra.mxu0 %v9582
      %12765 = vmatprep.subr.bf16.mxu0 0
      %12766 = vmatpush1.bf16.msra.mxu0 %v9581
      %12767 = vmatprep.subr.bf16.mxu0 0
      %12768 = vmatpush1.bf16.msra.mxu0 %v9580
      %12769 = vmatprep.subr.bf16.mxu0 0
      %12770 = vmatpush1.bf16.msra.mxu0 %v9579
      %12771 = vmatprep.subr.bf16.mxu0 0
      %12772 = vmatpush2.bf16.msra.mxu0 %v9594
      %12773 = vmatprep.subr.bf16.mxu0 0
      %12774 = vmatpush2.bf16.msra.mxu0 %v9593
      %12775 = vmatprep.subr.bf16.mxu0 0
      %12776 = vmatpush2.bf16.msra.mxu0 %v9592
      %12777 = vmatprep.subr.bf16.mxu0 0
      %12778 = vmatpush2.bf16.msra.mxu0 %v9591
      %12779 = vmatprep.subr.bf16.mxu0 0
      %12780 = vmatpush2.bf16.msra.mxu0 %v9590
      %12781 = vmatprep.subr.bf16.mxu0 0
      %12782 = vmatpush2.bf16.msra.mxu0 %v9589
      %12783 = vmatprep.subr.bf16.mxu0 0
      %12784 = vmatpush2.bf16.msra.mxu0 %v9588
      %12785 = vmatprep.subr.bf16.mxu0 0
      %12786 = vmatpush2.bf16.msra.mxu0 %v9587
      %12787 = vmatprep.mubr.bf16.mxu0 %v4474
      %12788 = vmatmul.mubr.bf16.gmra.mxu0 %v4470
      %v12789 = vpop.f32.mrf.mxu0
      %v12790 = vadd.f32 %v12750, %v12789
      %v12791 = vpop.f32.mrf.mxu0
      %v12792 = vpop.f32.mrf.mxu0
      %v12793 = vpop.f32.mrf.mxu0
      %12794 = vdwg.mxu0
      %12795 = vmatprep.subr.bf16.mxu0 0
      %12796 = vmatpush1.bf16.msra.mxu0 %v9602
      %12797 = vmatprep.subr.bf16.mxu0 0
      %12798 = vmatpush1.bf16.msra.mxu0 %v9601
      %12799 = vmatprep.subr.bf16.mxu0 0
      %12800 = vmatpush1.bf16.msra.mxu0 %v9600
      %12801 = vmatprep.subr.bf16.mxu0 0
      %12802 = vmatpush1.bf16.msra.mxu0 %v9599
      %12803 = vmatprep.subr.bf16.mxu0 0
      %12804 = vmatpush1.bf16.msra.mxu0 %v9598
      %12805 = vmatprep.subr.bf16.mxu0 0
      %12806 = vmatpush1.bf16.msra.mxu0 %v9597
      %12807 = vmatprep.subr.bf16.mxu0 0
      %12808 = vmatpush1.bf16.msra.mxu0 %v9596
      %12809 = vmatprep.subr.bf16.mxu0 0
      %12810 = vmatpush1.bf16.msra.mxu0 %v9595
      %12811 = vmatprep.subr.bf16.mxu0 0
      %12812 = vmatpush2.bf16.msra.mxu0 %v9610
      %12813 = vmatprep.subr.bf16.mxu0 0
      %12814 = vmatpush2.bf16.msra.mxu0 %v9609
      %12815 = vmatprep.subr.bf16.mxu0 0
      %12816 = vmatpush2.bf16.msra.mxu0 %v9608
      %12817 = vmatprep.subr.bf16.mxu0 0
      %12818 = vmatpush2.bf16.msra.mxu0 %v9607
      %12819 = vmatprep.subr.bf16.mxu0 0
      %12820 = vmatpush2.bf16.msra.mxu0 %v9606
      %12821 = vmatprep.subr.bf16.mxu0 0
      %12822 = vmatpush2.bf16.msra.mxu0 %v9605
      %12823 = vmatprep.subr.bf16.mxu0 0
      %12824 = vmatpush2.bf16.msra.mxu0 %v9604
      %12825 = vmatprep.subr.bf16.mxu0 0
      %12826 = vmatpush2.bf16.msra.mxu0 %v9603
      %12827 = vmatprep.mubr.bf16.mxu0 %v4482
      %12828 = vmatmul.mubr.bf16.gmra.mxu0 %v4478
      %v12829 = vpop.f32.mrf.mxu0
      %v12830 = vadd.f32 %v12790, %v12829
      %v12831 = vpop.f32.mrf.mxu0
      %v12832 = vpop.f32.mrf.mxu0
      %v12833 = vpop.f32.mrf.mxu0
      %12834 = vdwg.mxu0
      %12835 = vmatprep.subr.bf16.mxu0 0
      %12836 = vmatpush1.bf16.msra.mxu0 %v9618
      %12837 = vmatprep.subr.bf16.mxu0 0
      %12838 = vmatpush1.bf16.msra.mxu0 %v9617
      %12839 = vmatprep.subr.bf16.mxu0 0
      %12840 = vmatpush1.bf16.msra.mxu0 %v9616
      %12841 = vmatprep.subr.bf16.mxu0 0
      %12842 = vmatpush1.bf16.msra.mxu0 %v9615
      %12843 = vmatprep.subr.bf16.mxu0 0
      %12844 = vmatpush1.bf16.msra.mxu0 %v9614
      %12845 = vmatprep.subr.bf16.mxu0 0
      %12846 = vmatpush1.bf16.msra.mxu0 %v9613
      %12847 = vmatprep.subr.bf16.mxu0 0
      %12848 = vmatpush1.bf16.msra.mxu0 %v9612
      %12849 = vmatprep.subr.bf16.mxu0 0
      %12850 = vmatpush1.bf16.msra.mxu0 %v9611
      %12851 = vmatprep.subr.bf16.mxu0 0
      %12852 = vmatpush2.bf16.msra.mxu0 %v9626
      %12853 = vmatprep.subr.bf16.mxu0 0
      %12854 = vmatpush2.bf16.msra.mxu0 %v9625
      %12855 = vmatprep.subr.bf16.mxu0 0
      %12856 = vmatpush2.bf16.msra.mxu0 %v9624
      %12857 = vmatprep.subr.bf16.mxu0 0
      %12858 = vmatpush2.bf16.msra.mxu0 %v9623
      %12859 = vmatprep.subr.bf16.mxu0 0
      %12860 = vmatpush2.bf16.msra.mxu0 %v9622
      %12861 = vmatprep.subr.bf16.mxu0 0
      %12862 = vmatpush2.bf16.msra.mxu0 %v9621
      %12863 = vmatprep.subr.bf16.mxu0 0
      %12864 = vmatpush2.bf16.msra.mxu0 %v9620
      %12865 = vmatprep.subr.bf16.mxu0 0
      %12866 = vmatpush2.bf16.msra.mxu0 %v9619
      %12867 = vmatprep.mubr.bf16.mxu0 %v4490
      %12868 = vmatmul.mubr.bf16.gmra.mxu0 %v4486
      %v12869 = vpop.f32.mrf.mxu0
      %v12870 = vadd.f32 %v12830, %v12869
      %v12871 = vpop.f32.mrf.mxu0
      %v12872 = vpop.f32.mrf.mxu0
      %v12873 = vpop.f32.mrf.mxu0
      %12874 = vdwg.mxu0
      %12875 = vmatprep.subr.bf16.mxu0 0
      %12876 = vmatpush1.bf16.msra.mxu0 %v9634
      %12877 = vmatprep.subr.bf16.mxu0 0
      %12878 = vmatpush1.bf16.msra.mxu0 %v9633
      %12879 = vmatprep.subr.bf16.mxu0 0
      %12880 = vmatpush1.bf16.msra.mxu0 %v9632
      %12881 = vmatprep.subr.bf16.mxu0 0
      %12882 = vmatpush1.bf16.msra.mxu0 %v9631
      %12883 = vmatprep.subr.bf16.mxu0 0
      %12884 = vmatpush1.bf16.msra.mxu0 %v9630
      %12885 = vmatprep.subr.bf16.mxu0 0
      %12886 = vmatpush1.bf16.msra.mxu0 %v9629
      %12887 = vmatprep.subr.bf16.mxu0 0
      %12888 = vmatpush1.bf16.msra.mxu0 %v9628
      %12889 = vmatprep.subr.bf16.mxu0 0
      %12890 = vmatpush1.bf16.msra.mxu0 %v9627
      %12891 = vmatprep.subr.bf16.mxu0 0
      %12892 = vmatpush2.bf16.msra.mxu0 %v9642
      %12893 = vmatprep.subr.bf16.mxu0 0
      %12894 = vmatpush2.bf16.msra.mxu0 %v9641
      %12895 = vmatprep.subr.bf16.mxu0 0
      %12896 = vmatpush2.bf16.msra.mxu0 %v9640
      %12897 = vmatprep.subr.bf16.mxu0 0
      %12898 = vmatpush2.bf16.msra.mxu0 %v9639
      %12899 = vmatprep.subr.bf16.mxu0 0
      %12900 = vmatpush2.bf16.msra.mxu0 %v9638
      %12901 = vmatprep.subr.bf16.mxu0 0
      %12902 = vmatpush2.bf16.msra.mxu0 %v9637
      %12903 = vmatprep.subr.bf16.mxu0 0
      %12904 = vmatpush2.bf16.msra.mxu0 %v9636
      %12905 = vmatprep.subr.bf16.mxu0 0
      %12906 = vmatpush2.bf16.msra.mxu0 %v9635
      %12907 = vmatprep.mubr.bf16.mxu0 %v4498
      %12908 = vmatmul.mubr.bf16.gmra.mxu0 %v4494
      %v12909 = vpop.f32.mrf.mxu0
      %v12910 = vadd.f32 %v12870, %v12909
      %v12911 = vpop.f32.mrf.mxu0
      %v12912 = vpop.f32.mrf.mxu0
      %v12913 = vpop.f32.mrf.mxu0
      %12914 = vdwg.mxu0
      %12915 = vmatprep.subr.bf16.mxu0 0
      %12916 = vmatpush1.bf16.msra.mxu0 %v9650
      %12917 = vmatprep.subr.bf16.mxu0 0
      %12918 = vmatpush1.bf16.msra.mxu0 %v9649
      %12919 = vmatprep.subr.bf16.mxu0 0
      %12920 = vmatpush1.bf16.msra.mxu0 %v9648
      %12921 = vmatprep.subr.bf16.mxu0 0
      %12922 = vmatpush1.bf16.msra.mxu0 %v9647
      %12923 = vmatprep.subr.bf16.mxu0 0
      %12924 = vmatpush1.bf16.msra.mxu0 %v9646
      %12925 = vmatprep.subr.bf16.mxu0 0
      %12926 = vmatpush1.bf16.msra.mxu0 %v9645
      %12927 = vmatprep.subr.bf16.mxu0 0
      %12928 = vmatpush1.bf16.msra.mxu0 %v9644
      %12929 = vmatprep.subr.bf16.mxu0 0
      %12930 = vmatpush1.bf16.msra.mxu0 %v9643
      %12931 = vmatprep.subr.bf16.mxu0 0
      %12932 = vmatpush2.bf16.msra.mxu0 %v9658
      %12933 = vmatprep.subr.bf16.mxu0 0
      %12934 = vmatpush2.bf16.msra.mxu0 %v9657
      %12935 = vmatprep.subr.bf16.mxu0 0
      %12936 = vmatpush2.bf16.msra.mxu0 %v9656
      %12937 = vmatprep.subr.bf16.mxu0 0
      %12938 = vmatpush2.bf16.msra.mxu0 %v9655
      %12939 = vmatprep.subr.bf16.mxu0 0
      %12940 = vmatpush2.bf16.msra.mxu0 %v9654
      %12941 = vmatprep.subr.bf16.mxu0 0
      %12942 = vmatpush2.bf16.msra.mxu0 %v9653
      %12943 = vmatprep.subr.bf16.mxu0 0
      %12944 = vmatpush2.bf16.msra.mxu0 %v9652
      %12945 = vmatprep.subr.bf16.mxu0 0
      %12946 = vmatpush2.bf16.msra.mxu0 %v9651
      %12947 = vmatprep.mubr.bf16.mxu0 %v4506
      %12948 = vmatmul.mubr.bf16.gmra.mxu0 %v4502
      %v12949 = vpop.f32.mrf.mxu0
      %v12950 = vadd.f32 %v12910, %v12949
      %v12951 = vpop.f32.mrf.mxu0
      %v12952 = vpop.f32.mrf.mxu0
      %v12953 = vpop.f32.mrf.mxu0
      %12954 = vdwg.mxu0
      %12955 = vmatprep.subr.bf16.mxu0 0
      %12956 = vmatpush1.bf16.msra.mxu0 %v9666
      %12957 = vmatprep.subr.bf16.mxu0 0
      %12958 = vmatpush1.bf16.msra.mxu0 %v9665
      %12959 = vmatprep.subr.bf16.mxu0 0
      %12960 = vmatpush1.bf16.msra.mxu0 %v9664
      %12961 = vmatprep.subr.bf16.mxu0 0
      %12962 = vmatpush1.bf16.msra.mxu0 %v9663
      %12963 = vmatprep.subr.bf16.mxu0 0
      %12964 = vmatpush1.bf16.msra.mxu0 %v9662
      %12965 = vmatprep.subr.bf16.mxu0 0
      %12966 = vmatpush1.bf16.msra.mxu0 %v9661
      %12967 = vmatprep.subr.bf16.mxu0 0
      %12968 = vmatpush1.bf16.msra.mxu0 %v9660
      %12969 = vmatprep.subr.bf16.mxu0 0
      %12970 = vmatpush1.bf16.msra.mxu0 %v9659
      %12971 = vmatprep.subr.bf16.mxu0 0
      %12972 = vmatpush2.bf16.msra.mxu0 %v9674
      %12973 = vmatprep.subr.bf16.mxu0 0
      %12974 = vmatpush2.bf16.msra.mxu0 %v9673
      %12975 = vmatprep.subr.bf16.mxu0 0
      %12976 = vmatpush2.bf16.msra.mxu0 %v9672
      %12977 = vmatprep.subr.bf16.mxu0 0
      %12978 = vmatpush2.bf16.msra.mxu0 %v9671
      %12979 = vmatprep.subr.bf16.mxu0 0
      %12980 = vmatpush2.bf16.msra.mxu0 %v9670
      %12981 = vmatprep.subr.bf16.mxu0 0
      %12982 = vmatpush2.bf16.msra.mxu0 %v9669
      %12983 = vmatprep.subr.bf16.mxu0 0
      %12984 = vmatpush2.bf16.msra.mxu0 %v9668
      %12985 = vmatprep.subr.bf16.mxu0 0
      %12986 = vmatpush2.bf16.msra.mxu0 %v9667
      %12987 = vmatprep.mubr.bf16.mxu0 %v4514
      %12988 = vmatmul.mubr.bf16.gmra.mxu0 %v4510
      %v12989 = vpop.f32.mrf.mxu0
      %v12990 = vadd.f32 %v12950, %v12989
      %v12991 = vpop.f32.mrf.mxu0
      %v12992 = vpop.f32.mrf.mxu0
      %v12993 = vpop.f32.mrf.mxu0
      %12994 = vdwg.mxu0
      %12995 = vmatprep.subr.bf16.mxu0 0
      %12996 = vmatpush1.bf16.msra.mxu0 %v9682
      %12997 = vmatprep.subr.bf16.mxu0 0
      %12998 = vmatpush1.bf16.msra.mxu0 %v9681
      %12999 = vmatprep.subr.bf16.mxu0 0
      %13000 = vmatpush1.bf16.msra.mxu0 %v9680
      %13001 = vmatprep.subr.bf16.mxu0 0
      %13002 = vmatpush1.bf16.msra.mxu0 %v9679
      %13003 = vmatprep.subr.bf16.mxu0 0
      %13004 = vmatpush1.bf16.msra.mxu0 %v9678
      %13005 = vmatprep.subr.bf16.mxu0 0
      %13006 = vmatpush1.bf16.msra.mxu0 %v9677
      %13007 = vmatprep.subr.bf16.mxu0 0
      %13008 = vmatpush1.bf16.msra.mxu0 %v9676
      %13009 = vmatprep.subr.bf16.mxu0 0
      %13010 = vmatpush1.bf16.msra.mxu0 %v9675
      %13011 = vmatprep.subr.bf16.mxu0 0
      %13012 = vmatpush2.bf16.msra.mxu0 %v9690
      %13013 = vmatprep.subr.bf16.mxu0 0
      %13014 = vmatpush2.bf16.msra.mxu0 %v9689
      %13015 = vmatprep.subr.bf16.mxu0 0
      %13016 = vmatpush2.bf16.msra.mxu0 %v9688
      %13017 = vmatprep.subr.bf16.mxu0 0
      %13018 = vmatpush2.bf16.msra.mxu0 %v9687
      %13019 = vmatprep.subr.bf16.mxu0 0
      %13020 = vmatpush2.bf16.msra.mxu0 %v9686
      %13021 = vmatprep.subr.bf16.mxu0 0
      %13022 = vmatpush2.bf16.msra.mxu0 %v9685
      %13023 = vmatprep.subr.bf16.mxu0 0
      %13024 = vmatpush2.bf16.msra.mxu0 %v9684
      %13025 = vmatprep.subr.bf16.mxu0 0
      %13026 = vmatpush2.bf16.msra.mxu0 %v9683
      %13027 = vmatprep.mubr.bf16.mxu0 %v4522
      %13028 = vmatmul.mubr.bf16.gmra.mxu0 %v4518
      %v13029 = vpop.f32.mrf.mxu0
      %v13030 = vadd.f32 %v12990, %v13029
      %v13031 = vpop.f32.mrf.mxu0
      %v13032 = vpop.f32.mrf.mxu0
      %v13033 = vpop.f32.mrf.mxu0
      %13034 = vdwg.mxu0
      %13035 = vmatprep.subr.bf16.mxu0 0
      %13036 = vmatpush1.bf16.msra.mxu0 %v9698
      %13037 = vmatprep.subr.bf16.mxu0 0
      %13038 = vmatpush1.bf16.msra.mxu0 %v9697
      %13039 = vmatprep.subr.bf16.mxu0 0
      %13040 = vmatpush1.bf16.msra.mxu0 %v9696
      %13041 = vmatprep.subr.bf16.mxu0 0
      %13042 = vmatpush1.bf16.msra.mxu0 %v9695
      %13043 = vmatprep.subr.bf16.mxu0 0
      %13044 = vmatpush1.bf16.msra.mxu0 %v9694
      %13045 = vmatprep.subr.bf16.mxu0 0
      %13046 = vmatpush1.bf16.msra.mxu0 %v9693
      %13047 = vmatprep.subr.bf16.mxu0 0
      %13048 = vmatpush1.bf16.msra.mxu0 %v9692
      %13049 = vmatprep.subr.bf16.mxu0 0
      %13050 = vmatpush1.bf16.msra.mxu0 %v9691
      %13051 = vmatprep.subr.bf16.mxu0 0
      %13052 = vmatpush2.bf16.msra.mxu0 %v9706
      %13053 = vmatprep.subr.bf16.mxu0 0
      %13054 = vmatpush2.bf16.msra.mxu0 %v9705
      %13055 = vmatprep.subr.bf16.mxu0 0
      %13056 = vmatpush2.bf16.msra.mxu0 %v9704
      %13057 = vmatprep.subr.bf16.mxu0 0
      %13058 = vmatpush2.bf16.msra.mxu0 %v9703
      %13059 = vmatprep.subr.bf16.mxu0 0
      %13060 = vmatpush2.bf16.msra.mxu0 %v9702
      %13061 = vmatprep.subr.bf16.mxu0 0
      %13062 = vmatpush2.bf16.msra.mxu0 %v9701
      %13063 = vmatprep.subr.bf16.mxu0 0
      %13064 = vmatpush2.bf16.msra.mxu0 %v9700
      %13065 = vmatprep.subr.bf16.mxu0 0
      %13066 = vmatpush2.bf16.msra.mxu0 %v9699
      %13067 = vmatprep.mubr.bf16.mxu0 %v4530
      %13068 = vmatmul.mubr.bf16.gmra.mxu0 %v4526
      %v13069 = vpop.f32.mrf.mxu0
      %v13070 = vadd.f32 %v13030, %v13069
      %v13071 = vpop.f32.mrf.mxu0
      %v13072 = vpop.f32.mrf.mxu0
      %v13073 = vpop.f32.mrf.mxu0
      %13074 = vdwg.mxu0
      %13075 = vmatprep.subr.bf16.mxu0 0
      %13076 = vmatpush1.bf16.msra.mxu0 %v9714
      %13077 = vmatprep.subr.bf16.mxu0 0
      %13078 = vmatpush1.bf16.msra.mxu0 %v9713
      %13079 = vmatprep.subr.bf16.mxu0 0
      %13080 = vmatpush1.bf16.msra.mxu0 %v9712
      %13081 = vmatprep.subr.bf16.mxu0 0
      %13082 = vmatpush1.bf16.msra.mxu0 %v9711
      %13083 = vmatprep.subr.bf16.mxu0 0
      %13084 = vmatpush1.bf16.msra.mxu0 %v9710
      %13085 = vmatprep.subr.bf16.mxu0 0
      %13086 = vmatpush1.bf16.msra.mxu0 %v9709
      %13087 = vmatprep.subr.bf16.mxu0 0
      %13088 = vmatpush1.bf16.msra.mxu0 %v9708
      %13089 = vmatprep.subr.bf16.mxu0 0
      %13090 = vmatpush1.bf16.msra.mxu0 %v9707
      %13091 = vmatprep.subr.bf16.mxu0 0
      %13092 = vmatpush2.bf16.msra.mxu0 %v9722
      %13093 = vmatprep.subr.bf16.mxu0 0
      %13094 = vmatpush2.bf16.msra.mxu0 %v9721
      %13095 = vmatprep.subr.bf16.mxu0 0
      %13096 = vmatpush2.bf16.msra.mxu0 %v9720
      %13097 = vmatprep.subr.bf16.mxu0 0
      %13098 = vmatpush2.bf16.msra.mxu0 %v9719
      %13099 = vmatprep.subr.bf16.mxu0 0
      %13100 = vmatpush2.bf16.msra.mxu0 %v9718
      %13101 = vmatprep.subr.bf16.mxu0 0
      %13102 = vmatpush2.bf16.msra.mxu0 %v9717
      %13103 = vmatprep.subr.bf16.mxu0 0
      %13104 = vmatpush2.bf16.msra.mxu0 %v9716
      %13105 = vmatprep.subr.bf16.mxu0 0
      %13106 = vmatpush2.bf16.msra.mxu0 %v9715
      %13107 = vmatprep.mubr.bf16.mxu0 %v4538
      %13108 = vmatmul.mubr.bf16.gmra.mxu0 %v4534
      %v13109 = vpop.f32.mrf.mxu0
      %v13110 = vadd.f32 %v13070, %v13109
      %v13111 = vpop.f32.mrf.mxu0
      %v13112 = vpop.f32.mrf.mxu0
      %v13113 = vpop.f32.mrf.mxu0
      %13114 = vdwg.mxu0
      %13115 = vmatprep.subr.bf16.mxu0 0
      %13116 = vmatpush1.bf16.msra.mxu0 %v9730
      %13117 = vmatprep.subr.bf16.mxu0 0
      %13118 = vmatpush1.bf16.msra.mxu0 %v9729
      %13119 = vmatprep.subr.bf16.mxu0 0
      %13120 = vmatpush1.bf16.msra.mxu0 %v9728
      %13121 = vmatprep.subr.bf16.mxu0 0
      %13122 = vmatpush1.bf16.msra.mxu0 %v9727
      %13123 = vmatprep.subr.bf16.mxu0 0
      %13124 = vmatpush1.bf16.msra.mxu0 %v9726
      %13125 = vmatprep.subr.bf16.mxu0 0
      %13126 = vmatpush1.bf16.msra.mxu0 %v9725
      %13127 = vmatprep.subr.bf16.mxu0 0
      %13128 = vmatpush1.bf16.msra.mxu0 %v9724
      %13129 = vmatprep.subr.bf16.mxu0 0
      %13130 = vmatpush1.bf16.msra.mxu0 %v9723
      %13131 = vmatprep.subr.bf16.mxu0 0
      %13132 = vmatpush2.bf16.msra.mxu0 %v9738
      %13133 = vmatprep.subr.bf16.mxu0 0
      %13134 = vmatpush2.bf16.msra.mxu0 %v9737
      %13135 = vmatprep.subr.bf16.mxu0 0
      %13136 = vmatpush2.bf16.msra.mxu0 %v9736
      %13137 = vmatprep.subr.bf16.mxu0 0
      %13138 = vmatpush2.bf16.msra.mxu0 %v9735
      %13139 = vmatprep.subr.bf16.mxu0 0
      %13140 = vmatpush2.bf16.msra.mxu0 %v9734
      %13141 = vmatprep.subr.bf16.mxu0 0
      %13142 = vmatpush2.bf16.msra.mxu0 %v9733
      %13143 = vmatprep.subr.bf16.mxu0 0
      %13144 = vmatpush2.bf16.msra.mxu0 %v9732
      %13145 = vmatprep.subr.bf16.mxu0 0
      %13146 = vmatpush2.bf16.msra.mxu0 %v9731
      %13147 = vmatprep.mubr.bf16.mxu0 %v4546
      %13148 = vmatmul.mubr.bf16.gmra.mxu0 %v4542
      %v13149 = vpop.f32.mrf.mxu0
      %v13150 = vadd.f32 %v13110, %v13149
      %v13151 = vpop.f32.mrf.mxu0
      %v13152 = vpop.f32.mrf.mxu0
      %v13153 = vpop.f32.mrf.mxu0
      %13154 = vdwg.mxu0
      %13155 = vmatprep.subr.bf16.mxu0 0
      %13156 = vmatpush1.bf16.msra.mxu0 %v9746
      %13157 = vmatprep.subr.bf16.mxu0 0
      %13158 = vmatpush1.bf16.msra.mxu0 %v9745
      %13159 = vmatprep.subr.bf16.mxu0 0
      %13160 = vmatpush1.bf16.msra.mxu0 %v9744
      %13161 = vmatprep.subr.bf16.mxu0 0
      %13162 = vmatpush1.bf16.msra.mxu0 %v9743
      %13163 = vmatprep.subr.bf16.mxu0 0
      %13164 = vmatpush1.bf16.msra.mxu0 %v9742
      %13165 = vmatprep.subr.bf16.mxu0 0
      %13166 = vmatpush1.bf16.msra.mxu0 %v9741
      %13167 = vmatprep.subr.bf16.mxu0 0
      %13168 = vmatpush1.bf16.msra.mxu0 %v9740
      %13169 = vmatprep.subr.bf16.mxu0 0
      %13170 = vmatpush1.bf16.msra.mxu0 %v9739
      %13171 = vmatprep.subr.bf16.mxu0 0
      %13172 = vmatpush2.bf16.msra.mxu0 %v9754
      %13173 = vmatprep.subr.bf16.mxu0 0
      %13174 = vmatpush2.bf16.msra.mxu0 %v9753
      %13175 = vmatprep.subr.bf16.mxu0 0
      %13176 = vmatpush2.bf16.msra.mxu0 %v9752
      %13177 = vmatprep.subr.bf16.mxu0 0
      %13178 = vmatpush2.bf16.msra.mxu0 %v9751
      %13179 = vmatprep.subr.bf16.mxu0 0
      %13180 = vmatpush2.bf16.msra.mxu0 %v9750
      %13181 = vmatprep.subr.bf16.mxu0 0
      %13182 = vmatpush2.bf16.msra.mxu0 %v9749
      %13183 = vmatprep.subr.bf16.mxu0 0
      %13184 = vmatpush2.bf16.msra.mxu0 %v9748
      %13185 = vmatprep.subr.bf16.mxu0 0
      %13186 = vmatpush2.bf16.msra.mxu0 %v9747
      %13187 = vmatprep.mubr.bf16.mxu0 %v4554
      %13188 = vmatmul.mubr.bf16.gmra.mxu0 %v4550
      %v13189 = vpop.f32.mrf.mxu0
      %v13190 = vadd.f32 %v13150, %v13189
      %v13191 = vpop.f32.mrf.mxu0
      %v13192 = vpop.f32.mrf.mxu0
      %v13193 = vpop.f32.mrf.mxu0
      %13194 = vdwg.mxu0
      %13195 = vmatprep.subr.bf16.mxu0 0
      %13196 = vmatpush1.bf16.msra.mxu0 %v9762
      %13197 = vmatprep.subr.bf16.mxu0 0
      %13198 = vmatpush1.bf16.msra.mxu0 %v9761
      %13199 = vmatprep.subr.bf16.mxu0 0
      %13200 = vmatpush1.bf16.msra.mxu0 %v9760
      %13201 = vmatprep.subr.bf16.mxu0 0
      %13202 = vmatpush1.bf16.msra.mxu0 %v9759
      %13203 = vmatprep.subr.bf16.mxu0 0
      %13204 = vmatpush1.bf16.msra.mxu0 %v9758
      %13205 = vmatprep.subr.bf16.mxu0 0
      %13206 = vmatpush1.bf16.msra.mxu0 %v9757
      %13207 = vmatprep.subr.bf16.mxu0 0
      %13208 = vmatpush1.bf16.msra.mxu0 %v9756
      %13209 = vmatprep.subr.bf16.mxu0 0
      %13210 = vmatpush1.bf16.msra.mxu0 %v9755
      %13211 = vmatprep.subr.bf16.mxu0 0
      %13212 = vmatpush2.bf16.msra.mxu0 %v9770
      %13213 = vmatprep.subr.bf16.mxu0 0
      %13214 = vmatpush2.bf16.msra.mxu0 %v9769
      %13215 = vmatprep.subr.bf16.mxu0 0
      %13216 = vmatpush2.bf16.msra.mxu0 %v9768
      %13217 = vmatprep.subr.bf16.mxu0 0
      %13218 = vmatpush2.bf16.msra.mxu0 %v9767
      %13219 = vmatprep.subr.bf16.mxu0 0
      %13220 = vmatpush2.bf16.msra.mxu0 %v9766
      %13221 = vmatprep.subr.bf16.mxu0 0
      %13222 = vmatpush2.bf16.msra.mxu0 %v9765
      %13223 = vmatprep.subr.bf16.mxu0 0
      %13224 = vmatpush2.bf16.msra.mxu0 %v9764
      %13225 = vmatprep.subr.bf16.mxu0 0
      %13226 = vmatpush2.bf16.msra.mxu0 %v9763
      %13227 = vmatprep.mubr.bf16.mxu0 %v4562
      %13228 = vmatmul.mubr.bf16.gmra.mxu0 %v4558
      %v13229 = vpop.f32.mrf.mxu0
      %v13230 = vadd.f32 %v13190, %v13229
      %v13231 = vpop.f32.mrf.mxu0
      %v13232 = vpop.f32.mrf.mxu0
      %v13233 = vpop.f32.mrf.mxu0
      %13234 = vdwg.mxu0
      %13235 = vmatprep.subr.bf16.mxu0 0
      %13236 = vmatpush1.bf16.msra.mxu0 %v9778
      %13237 = vmatprep.subr.bf16.mxu0 0
      %13238 = vmatpush1.bf16.msra.mxu0 %v9777
      %13239 = vmatprep.subr.bf16.mxu0 0
      %13240 = vmatpush1.bf16.msra.mxu0 %v9776
      %13241 = vmatprep.subr.bf16.mxu0 0
      %13242 = vmatpush1.bf16.msra.mxu0 %v9775
      %13243 = vmatprep.subr.bf16.mxu0 0
      %13244 = vmatpush1.bf16.msra.mxu0 %v9774
      %13245 = vmatprep.subr.bf16.mxu0 0
      %13246 = vmatpush1.bf16.msra.mxu0 %v9773
      %13247 = vmatprep.subr.bf16.mxu0 0
      %13248 = vmatpush1.bf16.msra.mxu0 %v9772
      %13249 = vmatprep.subr.bf16.mxu0 0
      %13250 = vmatpush1.bf16.msra.mxu0 %v9771
      %13251 = vmatprep.subr.bf16.mxu0 0
      %13252 = vmatpush2.bf16.msra.mxu0 %v9786
      %13253 = vmatprep.subr.bf16.mxu0 0
      %13254 = vmatpush2.bf16.msra.mxu0 %v9785
      %13255 = vmatprep.subr.bf16.mxu0 0
      %13256 = vmatpush2.bf16.msra.mxu0 %v9784
      %13257 = vmatprep.subr.bf16.mxu0 0
      %13258 = vmatpush2.bf16.msra.mxu0 %v9783
      %13259 = vmatprep.subr.bf16.mxu0 0
      %13260 = vmatpush2.bf16.msra.mxu0 %v9782
      %13261 = vmatprep.subr.bf16.mxu0 0
      %13262 = vmatpush2.bf16.msra.mxu0 %v9781
      %13263 = vmatprep.subr.bf16.mxu0 0
      %13264 = vmatpush2.bf16.msra.mxu0 %v9780
      %13265 = vmatprep.subr.bf16.mxu0 0
      %13266 = vmatpush2.bf16.msra.mxu0 %v9779
      %13267 = vmatprep.mubr.bf16.mxu0 %v4570
      %13268 = vmatmul.mubr.bf16.gmra.mxu0 %v4566
      %v13269 = vpop.f32.mrf.mxu0
      %v13270 = vadd.f32 %v13230, %v13269
      %v13271 = vpop.f32.mrf.mxu0
      %v13272 = vpop.f32.mrf.mxu0
      %v13273 = vpop.f32.mrf.mxu0
      %13274 = vdwg.mxu0
      %13275 = vmatprep.subr.bf16.mxu0 0
      %13276 = vmatpush1.bf16.msra.mxu0 %v9794
      %13277 = vmatprep.subr.bf16.mxu0 0
      %13278 = vmatpush1.bf16.msra.mxu0 %v9793
      %13279 = vmatprep.subr.bf16.mxu0 0
      %13280 = vmatpush1.bf16.msra.mxu0 %v9792
      %13281 = vmatprep.subr.bf16.mxu0 0
      %13282 = vmatpush1.bf16.msra.mxu0 %v9791
      %13283 = vmatprep.subr.bf16.mxu0 0
      %13284 = vmatpush1.bf16.msra.mxu0 %v9790
      %13285 = vmatprep.subr.bf16.mxu0 0
      %13286 = vmatpush1.bf16.msra.mxu0 %v9789
      %13287 = vmatprep.subr.bf16.mxu0 0
      %13288 = vmatpush1.bf16.msra.mxu0 %v9788
      %13289 = vmatprep.subr.bf16.mxu0 0
      %13290 = vmatpush1.bf16.msra.mxu0 %v9787
      %13291 = vmatprep.subr.bf16.mxu0 0
      %13292 = vmatpush2.bf16.msra.mxu0 %v9802
      %13293 = vmatprep.subr.bf16.mxu0 0
      %13294 = vmatpush2.bf16.msra.mxu0 %v9801
      %13295 = vmatprep.subr.bf16.mxu0 0
      %13296 = vmatpush2.bf16.msra.mxu0 %v9800
      %13297 = vmatprep.subr.bf16.mxu0 0
      %13298 = vmatpush2.bf16.msra.mxu0 %v9799
      %13299 = vmatprep.subr.bf16.mxu0 0
      %13300 = vmatpush2.bf16.msra.mxu0 %v9798
      %13301 = vmatprep.subr.bf16.mxu0 0
      %13302 = vmatpush2.bf16.msra.mxu0 %v9797
      %13303 = vmatprep.subr.bf16.mxu0 0
      %13304 = vmatpush2.bf16.msra.mxu0 %v9796
      %13305 = vmatprep.subr.bf16.mxu0 0
      %13306 = vmatpush2.bf16.msra.mxu0 %v9795
      %13307 = vmatprep.mubr.bf16.mxu0 %v4578
      %13308 = vmatmul.mubr.bf16.gmra.mxu0 %v4574
      %v13309 = vpop.f32.mrf.mxu0
      %v13310 = vadd.f32 %v13270, %v13309
      %v13311 = vpop.f32.mrf.mxu0
      %v13312 = vpop.f32.mrf.mxu0
      %v13313 = vpop.f32.mrf.mxu0
      %13314 = vdwg.mxu0
      %13315 = vmatprep.subr.bf16.mxu0 0
      %13316 = vmatpush1.bf16.msra.mxu0 %v9810
      %13317 = vmatprep.subr.bf16.mxu0 0
      %13318 = vmatpush1.bf16.msra.mxu0 %v9809
      %13319 = vmatprep.subr.bf16.mxu0 0
      %13320 = vmatpush1.bf16.msra.mxu0 %v9808
      %13321 = vmatprep.subr.bf16.mxu0 0
      %13322 = vmatpush1.bf16.msra.mxu0 %v9807
      %13323 = vmatprep.subr.bf16.mxu0 0
      %13324 = vmatpush1.bf16.msra.mxu0 %v9806
      %13325 = vmatprep.subr.bf16.mxu0 0
      %13326 = vmatpush1.bf16.msra.mxu0 %v9805
      %13327 = vmatprep.subr.bf16.mxu0 0
      %13328 = vmatpush1.bf16.msra.mxu0 %v9804
      %13329 = vmatprep.subr.bf16.mxu0 0
      %13330 = vmatpush1.bf16.msra.mxu0 %v9803
      %13331 = vmatprep.subr.bf16.mxu0 0
      %13332 = vmatpush2.bf16.msra.mxu0 %v9818
      %13333 = vmatprep.subr.bf16.mxu0 0
      %13334 = vmatpush2.bf16.msra.mxu0 %v9817
      %13335 = vmatprep.subr.bf16.mxu0 0
      %13336 = vmatpush2.bf16.msra.mxu0 %v9816
      %13337 = vmatprep.subr.bf16.mxu0 0
      %13338 = vmatpush2.bf16.msra.mxu0 %v9815
      %13339 = vmatprep.subr.bf16.mxu0 0
      %13340 = vmatpush2.bf16.msra.mxu0 %v9814
      %13341 = vmatprep.subr.bf16.mxu0 0
      %13342 = vmatpush2.bf16.msra.mxu0 %v9813
      %13343 = vmatprep.subr.bf16.mxu0 0
      %13344 = vmatpush2.bf16.msra.mxu0 %v9812
      %13345 = vmatprep.subr.bf16.mxu0 0
      %13346 = vmatpush2.bf16.msra.mxu0 %v9811
      %13347 = vmatprep.mubr.bf16.mxu0 %v4586
      %13348 = vmatmul.mubr.bf16.gmra.mxu0 %v4582
      %v13349 = vpop.f32.mrf.mxu0
      %v13350 = vadd.f32 %v13310, %v13349
      %v13351 = vpop.f32.mrf.mxu0
      %v13352 = vpop.f32.mrf.mxu0
      %v13353 = vpop.f32.mrf.mxu0
      %13354 = vdwg.mxu0
      %13355 = vmatprep.subr.bf16.mxu0 0
      %13356 = vmatpush1.bf16.msra.mxu0 %v9826
      %13357 = vmatprep.subr.bf16.mxu0 0
      %13358 = vmatpush1.bf16.msra.mxu0 %v9825
      %13359 = vmatprep.subr.bf16.mxu0 0
      %13360 = vmatpush1.bf16.msra.mxu0 %v9824
      %13361 = vmatprep.subr.bf16.mxu0 0
      %13362 = vmatpush1.bf16.msra.mxu0 %v9823
      %13363 = vmatprep.subr.bf16.mxu0 0
      %13364 = vmatpush1.bf16.msra.mxu0 %v9822
      %13365 = vmatprep.subr.bf16.mxu0 0
      %13366 = vmatpush1.bf16.msra.mxu0 %v9821
      %13367 = vmatprep.subr.bf16.mxu0 0
      %13368 = vmatpush1.bf16.msra.mxu0 %v9820
      %13369 = vmatprep.subr.bf16.mxu0 0
      %13370 = vmatpush1.bf16.msra.mxu0 %v9819
      %13371 = vmatprep.subr.bf16.mxu0 0
      %13372 = vmatpush2.bf16.msra.mxu0 %v9834
      %13373 = vmatprep.subr.bf16.mxu0 0
      %13374 = vmatpush2.bf16.msra.mxu0 %v9833
      %13375 = vmatprep.subr.bf16.mxu0 0
      %13376 = vmatpush2.bf16.msra.mxu0 %v9832
      %13377 = vmatprep.subr.bf16.mxu0 0
      %13378 = vmatpush2.bf16.msra.mxu0 %v9831
      %13379 = vmatprep.subr.bf16.mxu0 0
      %13380 = vmatpush2.bf16.msra.mxu0 %v9830
      %13381 = vmatprep.subr.bf16.mxu0 0
      %13382 = vmatpush2.bf16.msra.mxu0 %v9829
      %13383 = vmatprep.subr.bf16.mxu0 0
      %13384 = vmatpush2.bf16.msra.mxu0 %v9828
      %13385 = vmatprep.subr.bf16.mxu0 0
      %13386 = vmatpush2.bf16.msra.mxu0 %v9827
      %13387 = vmatprep.mubr.bf16.mxu0 %v4594
      %13388 = vmatmul.mubr.bf16.gmra.mxu0 %v4590
      %v13389 = vpop.f32.mrf.mxu0
      %v13390 = vadd.f32 %v13350, %v13389
      %v13391 = vpop.f32.mrf.mxu0
      %v13392 = vpop.f32.mrf.mxu0
      %v13393 = vpop.f32.mrf.mxu0
      %13394 = vdwg.mxu0
      %13395 = vmatprep.subr.bf16.mxu0 0
      %13396 = vmatpush1.bf16.msra.mxu0 %v9842
      %13397 = vmatprep.subr.bf16.mxu0 0
      %13398 = vmatpush1.bf16.msra.mxu0 %v9841
      %13399 = vmatprep.subr.bf16.mxu0 0
      %13400 = vmatpush1.bf16.msra.mxu0 %v9840
      %13401 = vmatprep.subr.bf16.mxu0 0
      %13402 = vmatpush1.bf16.msra.mxu0 %v9839
      %13403 = vmatprep.subr.bf16.mxu0 0
      %13404 = vmatpush1.bf16.msra.mxu0 %v9838
      %13405 = vmatprep.subr.bf16.mxu0 0
      %13406 = vmatpush1.bf16.msra.mxu0 %v9837
      %13407 = vmatprep.subr.bf16.mxu0 0
      %13408 = vmatpush1.bf16.msra.mxu0 %v9836
      %13409 = vmatprep.subr.bf16.mxu0 0
      %13410 = vmatpush1.bf16.msra.mxu0 %v9835
      %13411 = vmatprep.subr.bf16.mxu0 0
      %13412 = vmatpush2.bf16.msra.mxu0 %v9850
      %13413 = vmatprep.subr.bf16.mxu0 0
      %13414 = vmatpush2.bf16.msra.mxu0 %v9849
      %13415 = vmatprep.subr.bf16.mxu0 0
      %13416 = vmatpush2.bf16.msra.mxu0 %v9848
      %13417 = vmatprep.subr.bf16.mxu0 0
      %13418 = vmatpush2.bf16.msra.mxu0 %v9847
      %13419 = vmatprep.subr.bf16.mxu0 0
      %13420 = vmatpush2.bf16.msra.mxu0 %v9846
      %13421 = vmatprep.subr.bf16.mxu0 0
      %13422 = vmatpush2.bf16.msra.mxu0 %v9845
      %13423 = vmatprep.subr.bf16.mxu0 0
      %13424 = vmatpush2.bf16.msra.mxu0 %v9844
      %13425 = vmatprep.subr.bf16.mxu0 0
      %13426 = vmatpush2.bf16.msra.mxu0 %v9843
      %13427 = vmatprep.mubr.bf16.mxu0 %v4602
      %13428 = vmatmul.mubr.bf16.gmra.mxu0 %v4598
      %v13429 = vpop.f32.mrf.mxu0
      %v13430 = vadd.f32 %v13390, %v13429
      %v13431 = vpop.f32.mrf.mxu0
      %v13432 = vpop.f32.mrf.mxu0
      %v13433 = vpop.f32.mrf.mxu0
      %13434 = vdwg.mxu0
      %vm13435 = vcmp.eq.s32.totalorder %v277, 16
      %v13436 = vtanh.pop %v13430
      %v13437 = vsel %vm13435, %v13436, %v13430
      %vm13438 = vcmask 131072
      %13439 = vst.msk [vmem:[%s274] sm:$0x1] %vm13438, %v13437
      %p13440 = scmp.lt.s32.totalorder %s18, 1
      %s13441 = scalar_select %p13440, %s18, 1
      %s13442 = scalar_lea.vmem %s7, %s13441
      // Predicated region
      $region49: #{simplenet_forward.1} parent=47 // pred_check
        %p13443 = pneg %p188
      $region50: #{simplenet_forward.1} parent=47 // pred_check_branch
        %13445 = sbr.rel (%p13443) target = $region52
      $region51: #{simplenet_forward.1} parent=47 // pred_region
        _
      $region52: #{simplenet_forward.1} parent=47 // pred_fallthru
        _
    $region48: #{simplenet_forward.1} parent=5 // pred_fallthru
      _
    %p13446 = scmp.le.s32.totalorder 2, %s13
    // Predicated region
    $region53: #{simplenet_forward.1} parent=5 // pred_check
      %p13447 = pneg %p13446
    $region54: #{simplenet_forward.1} parent=5 // pred_check_branch
      %13449 = sbr.rel (%p13447) target = $region56
    $region55: #{simplenet_forward.1} parent=5 // pred_region
      %s13450 = ssub.s32 %s13, 2
      // Predicated region
      $region57: #{simplenet_forward.1} parent=55 // pred_check
        %p13451 = pneg %p194
      $region58: #{simplenet_forward.1} parent=55 // pred_check_branch
        %13453 = sbr.rel (%p13451) target = $region60
      $region59: #{simplenet_forward.1} parent=55 // pred_region
        %p13454 = scmp.lt.s32.totalorder %s19, 1
        %s13455 = scalar_select %p13454, %s19, 1
        %s13456 = scalar_lea.vmem %s7, %s13455
      $region60: #{simplenet_forward.1} parent=55 // pred_fallthru
        _
    $region56: #{simplenet_forward.1} parent=5 // pred_fallthru
      _
  $region6: #{simplenet_forward.1} parent=0 // loop_footer
    %s17 = sadd.s32 1, %s13
  $region7: #{simplenet_forward.1} parent=0 // loop_footer_branch
    %12 = sbr.rel target = $region3
  $region8: #{simplenet_forward.1} parent=0 // loop_exit
    _

</llo_original>
